<compile_context>
chip_gen: v7x
topology: tpu7x:2x2x1
jax: 0.10.0
libtpu: 0.0.40
codegen_flags: <defaults>
</compile_context>

<pallas_src>
import functools
import math

import jax
import jax.numpy as jnp
from jax.experimental import pallas as pl
from jax.experimental.pallas import tpu as pltpu


# -----------------------------------------------------------------------------
# In-kernel helpers
# -----------------------------------------------------------------------------

def _layernorm(y, g, b):
    # LayerNorm over the last axis, eps = 1e-5 (PyTorch default).  g, b: (1, E)
    mean = jnp.mean(y, axis=-1, keepdims=True)
    var = jnp.mean((y - mean) ** 2, axis=-1, keepdims=True)
    return (y - mean) * jax.lax.rsqrt(var + 1e-5) * g + b


# -----------------------------------------------------------------------------
# Fully fused Decoder kernel (one pallas_call for the whole forward pass)
# -----------------------------------------------------------------------------

def _decoder_kernel(tok_ref, enc_ref, trg_m_ref, src_m_ref, wemb_ref, pemb_ref,
                    wkv1_ref, bkv1_ref, wo1_ref, bo1_ref, ng_ref, nb_ref,
                    wkv2_ref, bkv2_ref, wo2_ref, bo2_ref,
                    n1g_ref, n1b_ref, n2g_ref, n2b_ref,
                    w1_ref, b1_ref, w2_ref, b2_ref,
                    wout_ref, bout_ref,
                    o_ref, *, N, L, Ls, E, H, num_layers):
    D = E // H
    NL = N * L
    V = wemb_ref.shape[0]
    scale = jnp.float32(1.0 / math.sqrt(E))
    # masked_fill(-1e20) happens BEFORE the /sqrt(E) scale in the reference.
    neg = jnp.float32(-1e20 / math.sqrt(E))

    # ---- embeddings: one-hot(tokens) @ word_emb (MXU) + positional rows ------
    tok = tok_ref[...]                                           # (NL, 1) int32
    iota = jax.lax.broadcasted_iota(jnp.int32, (NL, V), 1)
    onehot = (iota == tok).astype(jnp.float32)                   # (NL, V)
    h = jnp.dot(onehot, wemb_ref[...], preferred_element_type=jnp.float32)
    pos = pemb_ref[0:L, :]                                       # (L, E)
    h = h + jnp.concatenate([pos] * N, axis=0)                   # (NL, E)
    # dropout = identity (eval semantics)

    enc = enc_ref[...]                                           # (N*Ls, E) f32

    # ---- additive mask biases: computed once, reused by all layers/heads -----
    trg_bias = [jnp.where(trg_m_ref[n] == 0.0, neg, jnp.float32(0.0))
                for n in range(N)]                               # N x (L, L)
    src_bias = [jnp.where(src_m_ref[n] == 0.0, neg, jnp.float32(0.0))
                for n in range(N)]                               # N x (1, Ls)

    def attention(q_rows, kv_rows, q_len, kv_len, wkv, bkv, wo, bo, bias):
        """Multi-head attention, bug-compatible with the PyTorch SelfAttention.

        q_rows : (N*q_len, E) RAW (unprojected) queries   -- bug-compatible
        kv_rows: (N*kv_len, E) source rows for both K and V
        wkv    : (E, 2E) fused [K | V] projection; bkv: (1, 2E)
        wo     : (E, E) output projection; bo: (1, E)
        bias   : list of N additive mask biases, (q_len or 1, kv_len)
        """
        # One fused K|V projection for all rows and all heads: a single MXU op.
        kv = jnp.dot(kv_rows, wkv, preferred_element_type=jnp.float32) + bkv
        outs = []
        for n in range(N):                                 # batch: tiny & static
            q_n = q_rows[n * q_len:(n + 1) * q_len]        # (q_len, E)
            kv_n = kv[n * kv_len:(n + 1) * kv_len]         # (kv_len, 2E)
            b_n = bias[n]
            head_outs = []
            for hh in range(H):                            # attention core only
                qh = q_n[:, hh * D:(hh + 1) * D]           # (q_len, D)
                kh = kv_n[:, hh * D:(hh + 1) * D]          # (kv_len, D)
                vh = kv_n[:, E + hh * D:E + (hh + 1) * D]  # (kv_len, D)
                s = jax.lax.dot_general(qh, kh, (((1,), (1,)), ((), ())),
                                        preferred_element_type=jnp.float32)
                s = s * scale + b_n                        # mask folded into bias
                s = s - jnp.max(s, axis=-1, keepdims=True)
                p = jnp.exp(s)
                p = p / jnp.sum(p, axis=-1, keepdims=True)  # exact reciprocal
                head_outs.append(
                    jnp.dot(p, vh, preferred_element_type=jnp.float32))
            outs.append(jnp.concatenate(head_outs, axis=1))      # (q_len, E)
        o = jnp.concatenate(outs, axis=0)                        # (N*q_len, E)
        # Single output projection on the flattened row slab.
        return jnp.dot(o, wo, preferred_element_type=jnp.float32) + bo

    # ---- num_layers x DecoderBlock, fully in VMEM ----------------------------
    for l in range(num_layers):
        # masked self-attention (values = keys = queries = h) + add & norm
        a1 = attention(h, h, L, L, wkv1_ref[l], bkv1_ref[l],
                       wo1_ref[l], bo1_ref[l], trg_bias)
        query = _layernorm(a1 + h, ng_ref[l], nb_ref[l])         # dropout = id

        # cross-attention (values = keys = enc_out) + add & norm
        a2 = attention(query, enc, L, Ls, wkv2_ref[l], bkv2_ref[l],
                       wo2_ref[l], bo2_ref[l], src_bias)
        xt = _layernorm(a2 + query, n1g_ref[l], n1b_ref[l])      # dropout = id

        # position-wise feed-forward + add & norm (on flattened rows)
        hid = jnp.maximum(
            jnp.dot(xt, w1_ref[l], preferred_element_type=jnp.float32)
            + b1_ref[l], 0.0)
        ff = jnp.dot(hid, w2_ref[l], preferred_element_type=jnp.float32) + b2_ref[l]
        h = _layernorm(ff + xt, n2g_ref[l], n2b_ref[l])          # dropout = id

    # ---- fc_out: lane-dense (NL, V) logits ------------------------------------
    o_ref[...] = (jnp.dot(h, wout_ref[...], preferred_element_type=jnp.float32)
                  + bout_ref[...]).astype(o_ref.dtype)


def _full_spec(a):
    nd = a.ndim
    return pl.BlockSpec(a.shape, lambda i, _nd=nd: (0,) * _nd)


# -----------------------------------------------------------------------------
# One-time weight layout prep (fused K|V, bias reshapes, per-layer stacking)
# -----------------------------------------------------------------------------

def prepare_pallas_params(params, E):
    def fuse_kv_w(ap):
        return jnp.concatenate([ap["Wk"], ap["Wv"]], axis=1)          # (E, 2E)

    def fuse_kv_b(ap):
        return jnp.concatenate([ap["bk"], ap["bv"]], axis=0).reshape(1, 2 * E)

    def stack(fn):
        return jnp.stack([fn(lp) for lp in params["layers"]], axis=0)

    V = params["W_out"].shape[1]
    return {
        "word_emb": params["word_emb"],
        "pos_emb": params["pos_emb"],
        "W_out": params["W_out"],
        "b_out": params["b_out"].reshape(1, V),
        "wkv1": stack(lambda lp: fuse_kv_w(lp["attn1"])),
        "bkv1": stack(lambda lp: fuse_kv_b(lp["attn1"])),
        "wo1": stack(lambda lp: lp["attn1"]["Wo"]),
        "bo1": stack(lambda lp: lp["attn1"]["bo"].reshape(1, E)),
        "ng": stack(lambda lp: lp["norm_g"].reshape(1, E)),
        "nb": stack(lambda lp: lp["norm_b"].reshape(1, E)),
        "wkv2": stack(lambda lp: fuse_kv_w(lp["attn2"])),
        "bkv2": stack(lambda lp: fuse_kv_b(lp["attn2"])),
        "wo2": stack(lambda lp: lp["attn2"]["Wo"]),
        "bo2": stack(lambda lp: lp["attn2"]["bo"].reshape(1, E)),
        "n1g": stack(lambda lp: lp["norm1_g"].reshape(1, E)),
        "n1b": stack(lambda lp: lp["norm1_b"].reshape(1, E)),
        "n2g": stack(lambda lp: lp["norm2_g"].reshape(1, E)),
        "n2b": stack(lambda lp: lp["norm2_b"].reshape(1, E)),
        "w1": stack(lambda lp: lp["W1"]),
        "b1": stack(lambda lp: lp["b1"].reshape(1, -1)),
        "w2": stack(lambda lp: lp["W2"]),
        "b2": stack(lambda lp: lp["b2"].reshape(1, E)),
    }


# -----------------------------------------------------------------------------
# Decoder forward: one pallas_call (plus a few free reshapes/slices in XLA)
# -----------------------------------------------------------------------------

def decoder_fwd(prep, tokens, enc_out, src_mask, trg_mask, *, E, H):
    N, L = tokens.shape
    Ls = enc_out.shape[1]
    V = prep["W_out"].shape[1]
    num_layers = prep["wkv1"].shape[0]
    NL = N * L

    tok = tokens.reshape(NL, 1).astype(jnp.int32)
    enc_flat = enc_out.reshape(N * Ls, E).astype(jnp.float32)
    trg3 = trg_mask[:, 0].astype(jnp.float32)      # (N, L, L)
    src3 = src_mask[:, 0].astype(jnp.float32)      # (N, 1, Ls)

    args = [tok, enc_flat, trg3, src3, prep["word_emb"], prep["pos_emb"],
            prep["wkv1"], prep["bkv1"], prep["wo1"], prep["bo1"],
            prep["ng"], prep["nb"],
            prep["wkv2"], prep["bkv2"], prep["wo2"], prep["bo2"],
            prep["n1g"], prep["n1b"], prep["n2g"], prep["n2b"],
            prep["w1"], prep["b1"], prep["w2"], prep["b2"],
            prep["W_out"], prep["b_out"]]

    kern = functools.partial(_decoder_kernel, N=N, L=L, Ls=Ls, E=E, H=H,
                             num_layers=num_layers)
    logits = pl.pallas_call(
        kern,
        out_shape=jax.ShapeDtypeStruct((NL, V), jnp.float32),
        grid=(1,),
        in_specs=[_full_spec(a) for a in args],
        out_specs=pl.BlockSpec((NL, V), lambda i: (0, 0)),
        compiler_params=pltpu.CompilerParams(
            dimension_semantics=("arbitrary",)),
    )(*args)
    return logits.reshape(N, L, V)


# -----------------------------------------------------------------------------
# Pure-JAX reference (mirrors the PyTorch module, incl. its quirks)
# -----------------------------------------------------------------------------

def _ref_layernorm(y, g, b):
    mean = jnp.mean(y, axis=-1, keepdims=True)
    var = jnp.mean((y - mean) ** 2, axis=-1, keepdims=True)
    return (y - mean) * jax.lax.rsqrt(var + 1e-5) * g + b


def _ref_attention(ap, kv_in, q_in, mask4, E, H):
    N, Lq, _ = q_in.shape
    Lk = kv_in.shape[1]
    D = E // H
    k = (kv_in @ ap["Wk"] + ap["bk"]).reshape(N, Lk, H, D)
    v = (kv_in @ ap["Wv"] + ap["bv"]).reshape(N, Lk, H, D)
    q = q_in.reshape(N, Lq, H, D)          # bug-compatible: raw queries used
    energy = jnp.einsum("nqhd,nkhd->nhqk", q, k)
    energy = jnp.where(mask4 == 0, jnp.float32(-1e20), energy)
    attn = jax.nn.softmax(energy / (E ** 0.5), axis=3)
    out = jnp.einsum("nhql,nlhd->nqhd", attn, v).reshape(N, Lq, E)
    return out @ ap["Wo"] + ap["bo"]


def _ref_decoder_layer(lp, x, enc, src_mask, trg_mask, E, H):
    a = _ref_attention(lp["attn1"], x, x, trg_mask, E, H)
    query = _ref_layernorm(a + x, lp["norm_g"], lp["norm_b"])
    a2 = _ref_attention(lp["attn2"], enc, query, src_mask, E, H)
    xt = _ref_layernorm(a2 + query, lp["norm1_g"], lp["norm1_b"])
    ff = jnp.maximum(xt @ lp["W1"] + lp["b1"], 0.0) @ lp["W2"] + lp["b2"]
    return _ref_layernorm(ff + xt, lp["norm2_g"], lp["norm2_b"])


def ref_decoder(params, tokens, enc_out, src_mask, trg_mask, E, H):
    N, L = tokens.shape
    h = params["word_emb"][tokens] + params["pos_emb"][jnp.arange(L)][None]
    for lp in params["layers"]:
        h = _ref_decoder_layer(lp, h, enc_out, src_mask, trg_mask, E, H)
    return h @ params["W_out"] + params["b_out"]


# -----------------------------------------------------------------------------
# Parameter init (deterministic, PyTorch-Linear-like uniform init)
# -----------------------------------------------------------------------------

def _init_linear(key, fan_in, fan_out):
    bound = 1.0 / math.sqrt(fan_in)
    kw, kb = jax.random.split(key)
    W = jax.random.uniform(kw, (fan_in, fan_out), jnp.float32, -bound, bound)
    b = jax.random.uniform(kb, (fan_out,), jnp.float32, -bound, bound)
    return W, b


def _init_attention(key, E):
    ks = jax.random.split(key, 3)
    Wv, bv = _init_linear(ks[0], E, E)
    Wk, bk = _init_linear(ks[1], E, E)
    Wo, bo = _init_linear(ks[2], E, E)
    # NOTE: the query-projection Linear exists in the module but its output is
    # discarded (dead code) -> omitted.
    return {"Wv": Wv, "bv": bv, "Wk": Wk, "bk": bk, "Wo": Wo, "bo": bo}


def _init_layer(key, E, FE):
    ks = jax.random.split(key, 4)
    FF = FE * E
    W1, b1 = _init_linear(ks[2], E, FF)
    W2, b2 = _init_linear(ks[3], FF, E)
    ones = jnp.ones((E,), jnp.float32)
    zeros = jnp.zeros((E,), jnp.float32)
    return {
        "attn1": _init_attention(ks[0], E),
        "norm_g": ones, "norm_b": zeros,
        "attn2": _init_attention(ks[1], E),
        "norm1_g": ones, "norm1_b": zeros,
        "norm2_g": ones, "norm2_b": zeros,
        "W1": W1, "b1": b1, "W2": W2, "b2": b2,
    }


def init_decoder(key, vocab, max_len, E, H, FE, num_layers):
    ks = jax.random.split(key, 3 + num_layers)
    word_emb = jax.random.normal(ks[0], (vocab, E), jnp.float32)
    pos_emb = jax.random.normal(ks[1], (max_len, E), jnp.float32)
    W_out, b_out = _init_linear(ks[2], E, vocab)
    layers = [_init_layer(ks[3 + i], E, FE) for i in range(num_layers)]
    return {"word_emb": word_emb, "pos_emb": pos_emb,
            "W_out": W_out, "b_out": b_out, "layers": layers}


# -----------------------------------------------------------------------------
if __name__ == "__main__":
    N, L, Ls = 2, 8, 8              # batch, target seq, source (encoder) seq
    E, H, FE = 32, 4, 4             # embed, heads, forward_expansion
    VOCAB, MAX_LEN, LAYERS = 128, 16, 2

    root = jax.random.PRNGKey(0)
    kp, kt, ke = jax.random.split(root, 3)
    params = init_decoder(kp, VOCAB, MAX_LEN, E, H, FE, LAYERS)
    tokens = jax.random.randint(kt, (N, L), 0, VOCAB, dtype=jnp.int32)
    enc_out = jax.random.normal(ke, (N, Ls, E), jnp.float32)

    # PyTorch-style masks: trg = causal (N,1,L,L), src = all-ones (N,1,1,Ls)
    trg_mask = jnp.broadcast_to(
        jnp.tril(jnp.ones((L, L), jnp.float32))[None, None], (N, 1, L, L))
    src_mask = jnp.ones((N, 1, 1, Ls), jnp.float32)

    # One-time weight layout prep (fused K|V, stacking) -- outside the hot path.
    prep = prepare_pallas_params(params, E)

    fwd = jax.jit(functools.partial(decoder_fwd, E=E, H=H))
    out = jax.block_until_ready(fwd(prep, tokens, enc_out, src_mask, trg_mask))

    with jax.default_matmul_precision("float32"):
        ref = ref_decoder(params, tokens, enc_out, src_mask, trg_mask, E, H)
    ref = jax.block_until_ready(ref)

    assert out.shape == (N, L, VOCAB), out.shape
    max_err = float(jnp.max(jnp.abs(out - ref)))
    assert jnp.allclose(out, ref, atol=5e-3, rtol=5e-3), max_err
    print("KERNEL_OK")
</pallas_src>

<mosaic_0001>
module attributes {stable_mosaic.version = 11 : i64} {
  func.func @_decoder_kernel(%arg0: i32, %arg1: memref<16x1xi32, #tpu.memory_space<vmem>>, %arg2: memref<16x32xf32, #tpu.memory_space<vmem>>, %arg3: memref<2x8x8xf32, #tpu.memory_space<vmem>>, %arg4: memref<2x1x8xf32, #tpu.memory_space<vmem>>, %arg5: memref<128x32xf32, #tpu.memory_space<vmem>>, %arg6: memref<16x32xf32, #tpu.memory_space<vmem>>, %arg7: memref<2x32x64xf32, #tpu.memory_space<vmem>>, %arg8: memref<2x1x64xf32, #tpu.memory_space<vmem>>, %arg9: memref<2x32x32xf32, #tpu.memory_space<vmem>>, %arg10: memref<2x1x32xf32, #tpu.memory_space<vmem>>, %arg11: memref<2x1x32xf32, #tpu.memory_space<vmem>>, %arg12: memref<2x1x32xf32, #tpu.memory_space<vmem>>, %arg13: memref<2x32x64xf32, #tpu.memory_space<vmem>>, %arg14: memref<2x1x64xf32, #tpu.memory_space<vmem>>, %arg15: memref<2x32x32xf32, #tpu.memory_space<vmem>>, %arg16: memref<2x1x32xf32, #tpu.memory_space<vmem>>, %arg17: memref<2x1x32xf32, #tpu.memory_space<vmem>>, %arg18: memref<2x1x32xf32, #tpu.memory_space<vmem>>, %arg19: memref<2x1x32xf32, #tpu.memory_space<vmem>>, %arg20: memref<2x1x32xf32, #tpu.memory_space<vmem>>, %arg21: memref<2x32x128xf32, #tpu.memory_space<vmem>>, %arg22: memref<2x1x128xf32, #tpu.memory_space<vmem>>, %arg23: memref<2x128x32xf32, #tpu.memory_space<vmem>>, %arg24: memref<2x1x32xf32, #tpu.memory_space<vmem>>, %arg25: memref<32x128xf32, #tpu.memory_space<vmem>>, %arg26: memref<1x128xf32, #tpu.memory_space<vmem>>, %arg27: memref<16x128xf32, #tpu.memory_space<vmem>>) attributes {dimension_semantics = [#tpu.dimension_semantics<arbitrary>], iteration_bounds = array<i64: 1>, scalar_prefetch = 0 : i64, scratch_operands = 0 : i64, tpu.core_type = #tpu.core_type<tc>, window_params = [{pipeline_mode = #tpu.pipeline_mode<synchronous>, transform_indices = @transform_0, window_bounds = array<i64: 16, 1>}, {pipeline_mode = #tpu.pipeline_mode<synchronous>, transform_indices = @transform_1, window_bounds = array<i64: 16, 32>}, {pipeline_mode = #tpu.pipeline_mode<synchronous>, transform_indices = @transform_2, window_bounds = array<i64: 2, 8, 8>}, {pipeline_mode = #tpu.pipeline_mode<synchronous>, transform_indices = @transform_3, window_bounds = array<i64: 2, 1, 8>}, {pipeline_mode = #tpu.pipeline_mode<synchronous>, transform_indices = @transform_4, window_bounds = array<i64: 128, 32>}, {pipeline_mode = #tpu.pipeline_mode<synchronous>, transform_indices = @transform_5, window_bounds = array<i64: 16, 32>}, {pipeline_mode = #tpu.pipeline_mode<synchronous>, transform_indices = @transform_6, window_bounds = array<i64: 2, 32, 64>}, {pipeline_mode = #tpu.pipeline_mode<synchronous>, transform_indices = @transform_7, window_bounds = array<i64: 2, 1, 64>}, {pipeline_mode = #tpu.pipeline_mode<synchronous>, transform_indices = @transform_8, window_bounds = array<i64: 2, 32, 32>}, {pipeline_mode = #tpu.pipeline_mode<synchronous>, transform_indices = @transform_9, window_bounds = array<i64: 2, 1, 32>}, {pipeline_mode = #tpu.pipeline_mode<synchronous>, transform_indices = @transform_10, window_bounds = array<i64: 2, 1, 32>}, {pipeline_mode = #tpu.pipeline_mode<synchronous>, transform_indices = @transform_11, window_bounds = array<i64: 2, 1, 32>}, {pipeline_mode = #tpu.pipeline_mode<synchronous>, transform_indices = @transform_12, window_bounds = array<i64: 2, 32, 64>}, {pipeline_mode = #tpu.pipeline_mode<synchronous>, transform_indices = @transform_13, window_bounds = array<i64: 2, 1, 64>}, {pipeline_mode = #tpu.pipeline_mode<synchronous>, transform_indices = @transform_14, window_bounds = array<i64: 2, 32, 32>}, {pipeline_mode = #tpu.pipeline_mode<synchronous>, transform_indices = @transform_15, window_bounds = array<i64: 2, 1, 32>}, {pipeline_mode = #tpu.pipeline_mode<synchronous>, transform_indices = @transform_16, window_bounds = array<i64: 2, 1, 32>}, {pipeline_mode = #tpu.pipeline_mode<synchronous>, transform_indices = @transform_17, window_bounds = array<i64: 2, 1, 32>}, {pipeline_mode = #tpu.pipeline_mode<synchronous>, transform_indices = @transform_18, window_bounds = array<i64: 2, 1, 32>}, {pipeline_mode = #tpu.pipeline_mode<synchronous>, transform_indices = @transform_19, window_bounds = array<i64: 2, 1, 32>}, {pipeline_mode = #tpu.pipeline_mode<synchronous>, transform_indices = @transform_20, window_bounds = array<i64: 2, 32, 128>}, {pipeline_mode = #tpu.pipeline_mode<synchronous>, transform_indices = @transform_21, window_bounds = array<i64: 2, 1, 128>}, {pipeline_mode = #tpu.pipeline_mode<synchronous>, transform_indices = @transform_22, window_bounds = array<i64: 2, 128, 32>}, {pipeline_mode = #tpu.pipeline_mode<synchronous>, transform_indices = @transform_23, window_bounds = array<i64: 2, 1, 32>}, {pipeline_mode = #tpu.pipeline_mode<synchronous>, transform_indices = @transform_24, window_bounds = array<i64: 32, 128>}, {pipeline_mode = #tpu.pipeline_mode<synchronous>, transform_indices = @transform_25, window_bounds = array<i64: 1, 128>}, {pipeline_mode = #tpu.pipeline_mode<synchronous>, transform_indices = @transform_26, window_bounds = array<i64: 16, 128>}]} {
    %c0 = arith.constant 0 : index
    %c0_0 = arith.constant 0 : index
    %0 = vector.load %arg1[%c0, %c0_0] : memref<16x1xi32, #tpu.memory_space<vmem>>, vector<16x1xi32>
    %1 = tpu.iota {dimensions = array<i32: 1>} : vector<16x128xi32>
    %2 = vector.broadcast %0 : vector<16x1xi32> to vector<16x128xi32>
    %3 = arith.cmpi eq, %1, %2 : vector<16x128xi32>
    %4 = arith.extui %3 : vector<16x128xi1> to vector<16x128xi32>
    %5 = arith.sitofp %4 : vector<16x128xi32> to vector<16x128xf32>
    %c0_1 = arith.constant 0 : index
    %c0_2 = arith.constant 0 : index
    %6 = vector.load %arg5[%c0_1, %c0_2] : memref<128x32xf32, #tpu.memory_space<vmem>>, vector<128x32xf32>
    %cst = arith.constant dense<0.000000e+00> : vector<16x32xf32>
    %7 = tpu.matmul %5, %6, %cst {dimension_numbers = #tpu.dot_dimension_numbers<[1], [0], [0], [1], [0, 0, 1, 1], [], []>} : vector<16x128xf32>, vector<128x32xf32>, vector<16x32xf32> -> vector<16x32xf32>
    %c0_3 = arith.constant 0 : index
    %c0_4 = arith.constant 0 : index
    %8 = vector.load %arg6[%c0_3, %c0_4] : memref<16x32xf32, #tpu.memory_space<vmem>>, vector<8x32xf32>
    %9 = tpu.concatenate %8, %8 in 0 : vector<8x32xf32>, vector<8x32xf32> -> vector<16x32xf32>
    %10 = arith.addf %7, %9 : vector<16x32xf32>
    %c0_5 = arith.constant 0 : index
    %c0_6 = arith.constant 0 : index
    %11 = vector.load %arg2[%c0_5, %c0_6] : memref<16x32xf32, #tpu.memory_space<vmem>>, vector<16x32xf32>
    %c0_7 = arith.constant 0 : index
    %c0_8 = arith.constant 0 : index
    %c0_9 = arith.constant 0 : index
    %12 = vector.load %arg3[%c0_7, %c0_8, %c0_9] : memref<2x8x8xf32, #tpu.memory_space<vmem>>, vector<1x8x8xf32>
    %13 = vector.shape_cast %12 : vector<1x8x8xf32> to vector<8x8xf32>
    %cst_10 = arith.constant 0.000000e+00 : f32
    %14 = vector.broadcast %cst_10 : f32 to vector<8x8xf32>
    %15 = arith.cmpf oeq, %13, %14 : vector<8x8xf32>
    %cst_11 = arith.constant -1.76776698E+19 : f32
    %cst_12 = arith.constant 0.000000e+00 : f32
    %16 = vector.broadcast %cst_11 : f32 to vector<8x8xf32>
    %17 = vector.broadcast %cst_12 : f32 to vector<8x8xf32>
    %18 = arith.select %15, %16, %17 : vector<8x8xi1>, vector<8x8xf32>
    %c1 = arith.constant 1 : index
    %c0_13 = arith.constant 0 : index
    %c0_14 = arith.constant 0 : index
    %19 = vector.load %arg3[%c1, %c0_13, %c0_14] : memref<2x8x8xf32, #tpu.memory_space<vmem>>, vector<1x8x8xf32>
    %20 = vector.shape_cast %19 : vector<1x8x8xf32> to vector<8x8xf32>
    %cst_15 = arith.constant 0.000000e+00 : f32
    %21 = vector.broadcast %cst_15 : f32 to vector<8x8xf32>
    %22 = arith.cmpf oeq, %20, %21 : vector<8x8xf32>
    %cst_16 = arith.constant -1.76776698E+19 : f32
    %cst_17 = arith.constant 0.000000e+00 : f32
    %23 = vector.broadcast %cst_16 : f32 to vector<8x8xf32>
    %24 = vector.broadcast %cst_17 : f32 to vector<8x8xf32>
    %25 = arith.select %22, %23, %24 : vector<8x8xi1>, vector<8x8xf32>
    %c0_18 = arith.constant 0 : index
    %c0_19 = arith.constant 0 : index
    %c0_20 = arith.constant 0 : index
    %26 = vector.load %arg4[%c0_18, %c0_19, %c0_20] : memref<2x1x8xf32, #tpu.memory_space<vmem>>, vector<1x1x8xf32>
    %27 = vector.shape_cast %26 : vector<1x1x8xf32> to vector<1x8xf32>
    %cst_21 = arith.constant 0.000000e+00 : f32
    %28 = vector.broadcast %cst_21 : f32 to vector<1x8xf32>
    %29 = arith.cmpf oeq, %27, %28 : vector<1x8xf32>
    %cst_22 = arith.constant -1.76776698E+19 : f32
    %cst_23 = arith.constant 0.000000e+00 : f32
    %30 = vector.broadcast %cst_22 : f32 to vector<1x8xf32>
    %31 = vector.broadcast %cst_23 : f32 to vector<1x8xf32>
    %32 = arith.select %29, %30, %31 : vector<1x8xi1>, vector<1x8xf32>
    %c1_24 = arith.constant 1 : index
    %c0_25 = arith.constant 0 : index
    %c0_26 = arith.constant 0 : index
    %33 = vector.load %arg4[%c1_24, %c0_25, %c0_26] : memref<2x1x8xf32, #tpu.memory_space<vmem>>, vector<1x1x8xf32>
    %34 = vector.shape_cast %33 : vector<1x1x8xf32> to vector<1x8xf32>
    %cst_27 = arith.constant 0.000000e+00 : f32
    %35 = vector.broadcast %cst_27 : f32 to vector<1x8xf32>
    %36 = arith.cmpf oeq, %34, %35 : vector<1x8xf32>
    %cst_28 = arith.constant -1.76776698E+19 : f32
    %cst_29 = arith.constant 0.000000e+00 : f32
    %37 = vector.broadcast %cst_28 : f32 to vector<1x8xf32>
    %38 = vector.broadcast %cst_29 : f32 to vector<1x8xf32>
    %39 = arith.select %36, %37, %38 : vector<1x8xi1>, vector<1x8xf32>
    %c0_30 = arith.constant 0 : index
    %c0_31 = arith.constant 0 : index
    %c0_32 = arith.constant 0 : index
    %40 = vector.load %arg7[%c0_30, %c0_31, %c0_32] : memref<2x32x64xf32, #tpu.memory_space<vmem>>, vector<1x32x64xf32>
    %41 = vector.shape_cast %40 : vector<1x32x64xf32> to vector<32x64xf32>
    %c0_33 = arith.constant 0 : index
    %c0_34 = arith.constant 0 : index
    %c0_35 = arith.constant 0 : index
    %42 = vector.load %arg8[%c0_33, %c0_34, %c0_35] : memref<2x1x64xf32, #tpu.memory_space<vmem>>, vector<1x1x64xf32>
    %43 = vector.shape_cast %42 : vector<1x1x64xf32> to vector<1x64xf32>
    %c0_36 = arith.constant 0 : index
    %c0_37 = arith.constant 0 : index
    %c0_38 = arith.constant 0 : index
    %44 = vector.load %arg9[%c0_36, %c0_37, %c0_38] : memref<2x32x32xf32, #tpu.memory_space<vmem>>, vector<1x32x32xf32>
    %45 = vector.shape_cast %44 : vector<1x32x32xf32> to vector<32x32xf32>
    %c0_39 = arith.constant 0 : index
    %c0_40 = arith.constant 0 : index
    %c0_41 = arith.constant 0 : index
    %46 = vector.load %arg10[%c0_39, %c0_40, %c0_41] : memref<2x1x32xf32, #tpu.memory_space<vmem>>, vector<1x1x32xf32>
    %47 = vector.shape_cast %46 : vector<1x1x32xf32> to vector<1x32xf32>
    %cst_42 = arith.constant dense<0.000000e+00> : vector<16x64xf32>
    %48 = tpu.matmul %10, %41, %cst_42 {dimension_numbers = #tpu.dot_dimension_numbers<[1], [0], [0], [1], [0, 0, 1, 1], [], []>} : vector<16x32xf32>, vector<32x64xf32>, vector<16x64xf32> -> vector<16x64xf32>
    %49 = vector.broadcast %43 : vector<1x64xf32> to vector<16x64xf32>
    %50 = arith.addf %48, %49 : vector<16x64xf32>
    %51 = vector.extract_strided_slice %10 {offsets = [0, 0], sizes = [8, 32], strides = [1, 1]} : vector<16x32xf32> to vector<8x32xf32>
    %52 = vector.extract_strided_slice %50 {offsets = [0, 0], sizes = [8, 64], strides = [1, 1]} : vector<16x64xf32> to vector<8x64xf32>
    %53 = vector.extract_strided_slice %51 {offsets = [0, 0], sizes = [8, 8], strides = [1, 1]} : vector<8x32xf32> to vector<8x8xf32>
    %54 = vector.extract_strided_slice %52 {offsets = [0, 0], sizes = [8, 8], strides = [1, 1]} : vector<8x64xf32> to vector<8x8xf32>
    %55 = vector.extract_strided_slice %52 {offsets = [0, 32], sizes = [8, 8], strides = [1, 1]} : vector<8x64xf32> to vector<8x8xf32>
    %cst_43 = arith.constant dense<0.000000e+00> : vector<8x8xf32>
    %56 = tpu.matmul %53, %54, %cst_43 {dimension_numbers = #tpu.dot_dimension_numbers<[1], [1], [0], [0], [0, 0, 1, 0], [], []>} : vector<8x8xf32>, vector<8x8xf32>, vector<8x8xf32> -> vector<8x8xf32>
    %cst_44 = arith.constant 0.176776692 : f32
    %57 = vector.broadcast %cst_44 : f32 to vector<8x8xf32>
    %58 = arith.mulf %56, %57 : vector<8x8xf32>
    %59 = arith.addf %58, %18 : vector<8x8xf32>
    %cst_45 = arith.constant dense<0xFF800000> : vector<8xf32>
    %60 = vector.multi_reduction <maximumf>, %59, %cst_45 [1] : vector<8x8xf32> to vector<8xf32>
    %61 = vector.shape_cast %60 : vector<8xf32> to vector<8x1xf32>
    %62 = vector.broadcast %61 : vector<8x1xf32> to vector<8x8xf32>
    %63 = arith.subf %59, %62 : vector<8x8xf32>
    %64 = math.exp %63 : vector<8x8xf32>
    %cst_46 = arith.constant dense<0.000000e+00> : vector<8xf32>
    %65 = vector.multi_reduction <add>, %64, %cst_46 [1] : vector<8x8xf32> to vector<8xf32>
    %66 = vector.shape_cast %65 : vector<8xf32> to vector<8x1xf32>
    %67 = vector.broadcast %66 : vector<8x1xf32> to vector<8x8xf32>
    %68 = arith.divf %64, %67 : vector<8x8xf32>
    %cst_47 = arith.constant dense<0.000000e+00> : vector<8x8xf32>
    %69 = tpu.matmul %68, %55, %cst_47 {dimension_numbers = #tpu.dot_dimension_numbers<[1], [0], [0], [1], [0, 0, 1, 1], [], []>} : vector<8x8xf32>, vector<8x8xf32>, vector<8x8xf32> -> vector<8x8xf32>
    %70 = vector.extract_strided_slice %51 {offsets = [0, 8], sizes = [8, 8], strides = [1, 1]} : vector<8x32xf32> to vector<8x8xf32>
    %71 = vector.extract_strided_slice %52 {offsets = [0, 8], sizes = [8, 8], strides = [1, 1]} : vector<8x64xf32> to vector<8x8xf32>
    %72 = vector.extract_strided_slice %52 {offsets = [0, 40], sizes = [8, 8], strides = [1, 1]} : vector<8x64xf32> to vector<8x8xf32>
    %cst_48 = arith.constant dense<0.000000e+00> : vector<8x8xf32>
    %73 = tpu.matmul %70, %71, %cst_48 {dimension_numbers = #tpu.dot_dimension_numbers<[1], [1], [0], [0], [0, 0, 1, 0], [], []>} : vector<8x8xf32>, vector<8x8xf32>, vector<8x8xf32> -> vector<8x8xf32>
    %cst_49 = arith.constant 0.176776692 : f32
    %74 = vector.broadcast %cst_49 : f32 to vector<8x8xf32>
    %75 = arith.mulf %73, %74 : vector<8x8xf32>
    %76 = arith.addf %75, %18 : vector<8x8xf32>
    %cst_50 = arith.constant dense<0xFF800000> : vector<8xf32>
    %77 = vector.multi_reduction <maximumf>, %76, %cst_50 [1] : vector<8x8xf32> to vector<8xf32>
    %78 = vector.shape_cast %77 : vector<8xf32> to vector<8x1xf32>
    %79 = vector.broadcast %78 : vector<8x1xf32> to vector<8x8xf32>
    %80 = arith.subf %76, %79 : vector<8x8xf32>
    %81 = math.exp %80 : vector<8x8xf32>
    %cst_51 = arith.constant dense<0.000000e+00> : vector<8xf32>
    %82 = vector.multi_reduction <add>, %81, %cst_51 [1] : vector<8x8xf32> to vector<8xf32>
    %83 = vector.shape_cast %82 : vector<8xf32> to vector<8x1xf32>
    %84 = vector.broadcast %83 : vector<8x1xf32> to vector<8x8xf32>
    %85 = arith.divf %81, %84 : vector<8x8xf32>
    %cst_52 = arith.constant dense<0.000000e+00> : vector<8x8xf32>
    %86 = tpu.matmul %85, %72, %cst_52 {dimension_numbers = #tpu.dot_dimension_numbers<[1], [0], [0], [1], [0, 0, 1, 1], [], []>} : vector<8x8xf32>, vector<8x8xf32>, vector<8x8xf32> -> vector<8x8xf32>
    %87 = vector.extract_strided_slice %51 {offsets = [0, 16], sizes = [8, 8], strides = [1, 1]} : vector<8x32xf32> to vector<8x8xf32>
    %88 = vector.extract_strided_slice %52 {offsets = [0, 16], sizes = [8, 8], strides = [1, 1]} : vector<8x64xf32> to vector<8x8xf32>
    %89 = vector.extract_strided_slice %52 {offsets = [0, 48], sizes = [8, 8], strides = [1, 1]} : vector<8x64xf32> to vector<8x8xf32>
    %cst_53 = arith.constant dense<0.000000e+00> : vector<8x8xf32>
    %90 = tpu.matmul %87, %88, %cst_53 {dimension_numbers = #tpu.dot_dimension_numbers<[1], [1], [0], [0], [0, 0, 1, 0], [], []>} : vector<8x8xf32>, vector<8x8xf32>, vector<8x8xf32> -> vector<8x8xf32>
    %cst_54 = arith.constant 0.176776692 : f32
    %91 = vector.broadcast %cst_54 : f32 to vector<8x8xf32>
    %92 = arith.mulf %90, %91 : vector<8x8xf32>
    %93 = arith.addf %92, %18 : vector<8x8xf32>
    %cst_55 = arith.constant dense<0xFF800000> : vector<8xf32>
    %94 = vector.multi_reduction <maximumf>, %93, %cst_55 [1] : vector<8x8xf32> to vector<8xf32>
    %95 = vector.shape_cast %94 : vector<8xf32> to vector<8x1xf32>
    %96 = vector.broadcast %95 : vector<8x1xf32> to vector<8x8xf32>
    %97 = arith.subf %93, %96 : vector<8x8xf32>
    %98 = math.exp %97 : vector<8x8xf32>
    %cst_56 = arith.constant dense<0.000000e+00> : vector<8xf32>
    %99 = vector.multi_reduction <add>, %98, %cst_56 [1] : vector<8x8xf32> to vector<8xf32>
    %100 = vector.shape_cast %99 : vector<8xf32> to vector<8x1xf32>
    %101 = vector.broadcast %100 : vector<8x1xf32> to vector<8x8xf32>
    %102 = arith.divf %98, %101 : vector<8x8xf32>
    %cst_57 = arith.constant dense<0.000000e+00> : vector<8x8xf32>
    %103 = tpu.matmul %102, %89, %cst_57 {dimension_numbers = #tpu.dot_dimension_numbers<[1], [0], [0], [1], [0, 0, 1, 1], [], []>} : vector<8x8xf32>, vector<8x8xf32>, vector<8x8xf32> -> vector<8x8xf32>
    %104 = vector.extract_strided_slice %51 {offsets = [0, 24], sizes = [8, 8], strides = [1, 1]} : vector<8x32xf32> to vector<8x8xf32>
    %105 = vector.extract_strided_slice %52 {offsets = [0, 24], sizes = [8, 8], strides = [1, 1]} : vector<8x64xf32> to vector<8x8xf32>
    %106 = vector.extract_strided_slice %52 {offsets = [0, 56], sizes = [8, 8], strides = [1, 1]} : vector<8x64xf32> to vector<8x8xf32>
    %cst_58 = arith.constant dense<0.000000e+00> : vector<8x8xf32>
    %107 = tpu.matmul %104, %105, %cst_58 {dimension_numbers = #tpu.dot_dimension_numbers<[1], [1], [0], [0], [0, 0, 1, 0], [], []>} : vector<8x8xf32>, vector<8x8xf32>, vector<8x8xf32> -> vector<8x8xf32>
    %cst_59 = arith.constant 0.176776692 : f32
    %108 = vector.broadcast %cst_59 : f32 to vector<8x8xf32>
    %109 = arith.mulf %107, %108 : vector<8x8xf32>
    %110 = arith.addf %109, %18 : vector<8x8xf32>
    %cst_60 = arith.constant dense<0xFF800000> : vector<8xf32>
    %111 = vector.multi_reduction <maximumf>, %110, %cst_60 [1] : vector<8x8xf32> to vector<8xf32>
    %112 = vector.shape_cast %111 : vector<8xf32> to vector<8x1xf32>
    %113 = vector.broadcast %112 : vector<8x1xf32> to vector<8x8xf32>
    %114 = arith.subf %110, %113 : vector<8x8xf32>
    %115 = math.exp %114 : vector<8x8xf32>
    %cst_61 = arith.constant dense<0.000000e+00> : vector<8xf32>
    %116 = vector.multi_reduction <add>, %115, %cst_61 [1] : vector<8x8xf32> to vector<8xf32>
    %117 = vector.shape_cast %116 : vector<8xf32> to vector<8x1xf32>
    %118 = vector.broadcast %117 : vector<8x1xf32> to vector<8x8xf32>
    %119 = arith.divf %115, %118 : vector<8x8xf32>
    %cst_62 = arith.constant dense<0.000000e+00> : vector<8x8xf32>
    %120 = tpu.matmul %119, %106, %cst_62 {dimension_numbers = #tpu.dot_dimension_numbers<[1], [0], [0], [1], [0, 0, 1, 1], [], []>} : vector<8x8xf32>, vector<8x8xf32>, vector<8x8xf32> -> vector<8x8xf32>
    %121 = tpu.concatenate %69, %86, %103, %120 in 1 : vector<8x8xf32>, vector<8x8xf32>, vector<8x8xf32>, vector<8x8xf32> -> vector<8x32xf32>
    %122 = vector.extract_strided_slice %10 {offsets = [8, 0], sizes = [8, 32], strides = [1, 1]} : vector<16x32xf32> to vector<8x32xf32>
    %123 = vector.extract_strided_slice %50 {offsets = [8, 0], sizes = [8, 64], strides = [1, 1]} : vector<16x64xf32> to vector<8x64xf32>
    %124 = vector.extract_strided_slice %122 {offsets = [0, 0], sizes = [8, 8], strides = [1, 1]} : vector<8x32xf32> to vector<8x8xf32>
    %125 = vector.extract_strided_slice %123 {offsets = [0, 0], sizes = [8, 8], strides = [1, 1]} : vector<8x64xf32> to vector<8x8xf32>
    %126 = vector.extract_strided_slice %123 {offsets = [0, 32], sizes = [8, 8], strides = [1, 1]} : vector<8x64xf32> to vector<8x8xf32>
    %cst_63 = arith.constant dense<0.000000e+00> : vector<8x8xf32>
    %127 = tpu.matmul %124, %125, %cst_63 {dimension_numbers = #tpu.dot_dimension_numbers<[1], [1], [0], [0], [0, 0, 1, 0], [], []>} : vector<8x8xf32>, vector<8x8xf32>, vector<8x8xf32> -> vector<8x8xf32>
    %cst_64 = arith.constant 0.176776692 : f32
    %128 = vector.broadcast %cst_64 : f32 to vector<8x8xf32>
    %129 = arith.mulf %127, %128 : vector<8x8xf32>
    %130 = arith.addf %129, %25 : vector<8x8xf32>
    %cst_65 = arith.constant dense<0xFF800000> : vector<8xf32>
    %131 = vector.multi_reduction <maximumf>, %130, %cst_65 [1] : vector<8x8xf32> to vector<8xf32>
    %132 = vector.shape_cast %131 : vector<8xf32> to vector<8x1xf32>
    %133 = vector.broadcast %132 : vector<8x1xf32> to vector<8x8xf32>
    %134 = arith.subf %130, %133 : vector<8x8xf32>
    %135 = math.exp %134 : vector<8x8xf32>
    %cst_66 = arith.constant dense<0.000000e+00> : vector<8xf32>
    %136 = vector.multi_reduction <add>, %135, %cst_66 [1] : vector<8x8xf32> to vector<8xf32>
    %137 = vector.shape_cast %136 : vector<8xf32> to vector<8x1xf32>
    %138 = vector.broadcast %137 : vector<8x1xf32> to vector<8x8xf32>
    %139 = arith.divf %135, %138 : vector<8x8xf32>
    %cst_67 = arith.constant dense<0.000000e+00> : vector<8x8xf32>
    %140 = tpu.matmul %139, %126, %cst_67 {dimension_numbers = #tpu.dot_dimension_numbers<[1], [0], [0], [1], [0, 0, 1, 1], [], []>} : vector<8x8xf32>, vector<8x8xf32>, vector<8x8xf32> -> vector<8x8xf32>
    %141 = vector.extract_strided_slice %122 {offsets = [0, 8], sizes = [8, 8], strides = [1, 1]} : vector<8x32xf32> to vector<8x8xf32>
    %142 = vector.extract_strided_slice %123 {offsets = [0, 8], sizes = [8, 8], strides = [1, 1]} : vector<8x64xf32> to vector<8x8xf32>
    %143 = vector.extract_strided_slice %123 {offsets = [0, 40], sizes = [8, 8], strides = [1, 1]} : vector<8x64xf32> to vector<8x8xf32>
    %cst_68 = arith.constant dense<0.000000e+00> : vector<8x8xf32>
    %144 = tpu.matmul %141, %142, %cst_68 {dimension_numbers = #tpu.dot_dimension_numbers<[1], [1], [0], [0], [0, 0, 1, 0], [], []>} : vector<8x8xf32>, vector<8x8xf32>, vector<8x8xf32> -> vector<8x8xf32>
    %cst_69 = arith.constant 0.176776692 : f32
    %145 = vector.broadcast %cst_69 : f32 to vector<8x8xf32>
    %146 = arith.mulf %144, %145 : vector<8x8xf32>
    %147 = arith.addf %146, %25 : vector<8x8xf32>
    %cst_70 = arith.constant dense<0xFF800000> : vector<8xf32>
    %148 = vector.multi_reduction <maximumf>, %147, %cst_70 [1] : vector<8x8xf32> to vector<8xf32>
    %149 = vector.shape_cast %148 : vector<8xf32> to vector<8x1xf32>
    %150 = vector.broadcast %149 : vector<8x1xf32> to vector<8x8xf32>
    %151 = arith.subf %147, %150 : vector<8x8xf32>
    %152 = math.exp %151 : vector<8x8xf32>
    %cst_71 = arith.constant dense<0.000000e+00> : vector<8xf32>
    %153 = vector.multi_reduction <add>, %152, %cst_71 [1] : vector<8x8xf32> to vector<8xf32>
    %154 = vector.shape_cast %153 : vector<8xf32> to vector<8x1xf32>
    %155 = vector.broadcast %154 : vector<8x1xf32> to vector<8x8xf32>
    %156 = arith.divf %152, %155 : vector<8x8xf32>
    %cst_72 = arith.constant dense<0.000000e+00> : vector<8x8xf32>
    %157 = tpu.matmul %156, %143, %cst_72 {dimension_numbers = #tpu.dot_dimension_numbers<[1], [0], [0], [1], [0, 0, 1, 1], [], []>} : vector<8x8xf32>, vector<8x8xf32>, vector<8x8xf32> -> vector<8x8xf32>
    %158 = vector.extract_strided_slice %122 {offsets = [0, 16], sizes = [8, 8], strides = [1, 1]} : vector<8x32xf32> to vector<8x8xf32>
    %159 = vector.extract_strided_slice %123 {offsets = [0, 16], sizes = [8, 8], strides = [1, 1]} : vector<8x64xf32> to vector<8x8xf32>
    %160 = vector.extract_strided_slice %123 {offsets = [0, 48], sizes = [8, 8], strides = [1, 1]} : vector<8x64xf32> to vector<8x8xf32>
    %cst_73 = arith.constant dense<0.000000e+00> : vector<8x8xf32>
    %161 = tpu.matmul %158, %159, %cst_73 {dimension_numbers = #tpu.dot_dimension_numbers<[1], [1], [0], [0], [0, 0, 1, 0], [], []>} : vector<8x8xf32>, vector<8x8xf32>, vector<8x8xf32> -> vector<8x8xf32>
    %cst_74 = arith.constant 0.176776692 : f32
    %162 = vector.broadcast %cst_74 : f32 to vector<8x8xf32>
    %163 = arith.mulf %161, %162 : vector<8x8xf32>
    %164 = arith.addf %163, %25 : vector<8x8xf32>
    %cst_75 = arith.constant dense<0xFF800000> : vector<8xf32>
    %165 = vector.multi_reduction <maximumf>, %164, %cst_75 [1] : vector<8x8xf32> to vector<8xf32>
    %166 = vector.shape_cast %165 : vector<8xf32> to vector<8x1xf32>
    %167 = vector.broadcast %166 : vector<8x1xf32> to vector<8x8xf32>
    %168 = arith.subf %164, %167 : vector<8x8xf32>
    %169 = math.exp %168 : vector<8x8xf32>
    %cst_76 = arith.constant dense<0.000000e+00> : vector<8xf32>
    %170 = vector.multi_reduction <add>, %169, %cst_76 [1] : vector<8x8xf32> to vector<8xf32>
    %171 = vector.shape_cast %170 : vector<8xf32> to vector<8x1xf32>
    %172 = vector.broadcast %171 : vector<8x1xf32> to vector<8x8xf32>
    %173 = arith.divf %169, %172 : vector<8x8xf32>
    %cst_77 = arith.constant dense<0.000000e+00> : vector<8x8xf32>
    %174 = tpu.matmul %173, %160, %cst_77 {dimension_numbers = #tpu.dot_dimension_numbers<[1], [0], [0], [1], [0, 0, 1, 1], [], []>} : vector<8x8xf32>, vector<8x8xf32>, vector<8x8xf32> -> vector<8x8xf32>
    %175 = vector.extract_strided_slice %122 {offsets = [0, 24], sizes = [8, 8], strides = [1, 1]} : vector<8x32xf32> to vector<8x8xf32>
    %176 = vector.extract_strided_slice %123 {offsets = [0, 24], sizes = [8, 8], strides = [1, 1]} : vector<8x64xf32> to vector<8x8xf32>
    %177 = vector.extract_strided_slice %123 {offsets = [0, 56], sizes = [8, 8], strides = [1, 1]} : vector<8x64xf32> to vector<8x8xf32>
    %cst_78 = arith.constant dense<0.000000e+00> : vector<8x8xf32>
    %178 = tpu.matmul %175, %176, %cst_78 {dimension_numbers = #tpu.dot_dimension_numbers<[1], [1], [0], [0], [0, 0, 1, 0], [], []>} : vector<8x8xf32>, vector<8x8xf32>, vector<8x8xf32> -> vector<8x8xf32>
    %cst_79 = arith.constant 0.176776692 : f32
    %179 = vector.broadcast %cst_79 : f32 to vector<8x8xf32>
    %180 = arith.mulf %178, %179 : vector<8x8xf32>
    %181 = arith.addf %180, %25 : vector<8x8xf32>
    %cst_80 = arith.constant dense<0xFF800000> : vector<8xf32>
    %182 = vector.multi_reduction <maximumf>, %181, %cst_80 [1] : vector<8x8xf32> to vector<8xf32>
    %183 = vector.shape_cast %182 : vector<8xf32> to vector<8x1xf32>
    %184 = vector.broadcast %183 : vector<8x1xf32> to vector<8x8xf32>
    %185 = arith.subf %181, %184 : vector<8x8xf32>
    %186 = math.exp %185 : vector<8x8xf32>
    %cst_81 = arith.constant dense<0.000000e+00> : vector<8xf32>
    %187 = vector.multi_reduction <add>, %186, %cst_81 [1] : vector<8x8xf32> to vector<8xf32>
    %188 = vector.shape_cast %187 : vector<8xf32> to vector<8x1xf32>
    %189 = vector.broadcast %188 : vector<8x1xf32> to vector<8x8xf32>
    %190 = arith.divf %186, %189 : vector<8x8xf32>
    %cst_82 = arith.constant dense<0.000000e+00> : vector<8x8xf32>
    %191 = tpu.matmul %190, %177, %cst_82 {dimension_numbers = #tpu.dot_dimension_numbers<[1], [0], [0], [1], [0, 0, 1, 1], [], []>} : vector<8x8xf32>, vector<8x8xf32>, vector<8x8xf32> -> vector<8x8xf32>
    %192 = tpu.concatenate %140, %157, %174, %191 in 1 : vector<8x8xf32>, vector<8x8xf32>, vector<8x8xf32>, vector<8x8xf32> -> vector<8x32xf32>
    %193 = tpu.concatenate %121, %192 in 0 : vector<8x32xf32>, vector<8x32xf32> -> vector<16x32xf32>
    %cst_83 = arith.constant dense<0.000000e+00> : vector<16x32xf32>
    %194 = tpu.matmul %193, %45, %cst_83 {dimension_numbers = #tpu.dot_dimension_numbers<[1], [0], [0], [1], [0, 0, 1, 1], [], []>} : vector<16x32xf32>, vector<32x32xf32>, vector<16x32xf32> -> vector<16x32xf32>
    %195 = vector.broadcast %47 : vector<1x32xf32> to vector<16x32xf32>
    %196 = arith.addf %194, %195 : vector<16x32xf32>
    %197 = arith.addf %196, %10 : vector<16x32xf32>
    %c0_84 = arith.constant 0 : index
    %c0_85 = arith.constant 0 : index
    %c0_86 = arith.constant 0 : index
    %198 = vector.load %arg11[%c0_84, %c0_85, %c0_86] : memref<2x1x32xf32, #tpu.memory_space<vmem>>, vector<1x1x32xf32>
    %199 = vector.shape_cast %198 : vector<1x1x32xf32> to vector<1x32xf32>
    %c0_87 = arith.constant 0 : index
    %c0_88 = arith.constant 0 : index
    %c0_89 = arith.constant 0 : index
    %200 = vector.load %arg12[%c0_87, %c0_88, %c0_89] : memref<2x1x32xf32, #tpu.memory_space<vmem>>, vector<1x1x32xf32>
    %201 = vector.shape_cast %200 : vector<1x1x32xf32> to vector<1x32xf32>
    %cst_90 = arith.constant dense<0.000000e+00> : vector<16xf32>
    %202 = vector.multi_reduction <add>, %197, %cst_90 [1] : vector<16x32xf32> to vector<16xf32>
    %203 = vector.shape_cast %202 : vector<16xf32> to vector<16x1xf32>
    %cst_91 = arith.constant 3.200000e+01 : f32
    %204 = vector.broadcast %cst_91 : f32 to vector<16x1xf32>
    %205 = arith.divf %203, %204 : vector<16x1xf32>
    %206 = vector.broadcast %205 : vector<16x1xf32> to vector<16x32xf32>
    %207 = arith.subf %197, %206 : vector<16x32xf32>
    %208 = arith.mulf %207, %207 : vector<16x32xf32>
    %cst_92 = arith.constant dense<0.000000e+00> : vector<16xf32>
    %209 = vector.multi_reduction <add>, %208, %cst_92 [1] : vector<16x32xf32> to vector<16xf32>
    %210 = vector.shape_cast %209 : vector<16xf32> to vector<16x1xf32>
    %cst_93 = arith.constant 3.200000e+01 : f32
    %211 = vector.broadcast %cst_93 : f32 to vector<16x1xf32>
    %212 = arith.divf %210, %211 : vector<16x1xf32>
    %213 = vector.broadcast %205 : vector<16x1xf32> to vector<16x32xf32>
    %214 = arith.subf %197, %213 : vector<16x32xf32>
    %cst_94 = arith.constant 9.99999974E-6 : f32
    %215 = vector.broadcast %cst_94 : f32 to vector<16x1xf32>
    %216 = arith.addf %212, %215 : vector<16x1xf32>
    %217 = math.rsqrt %216 : vector<16x1xf32>
    %218 = vector.broadcast %217 : vector<16x1xf32> to vector<16x32xf32>
    %219 = arith.mulf %214, %218 : vector<16x32xf32>
    %220 = vector.broadcast %199 : vector<1x32xf32> to vector<16x32xf32>
    %221 = arith.mulf %219, %220 : vector<16x32xf32>
    %222 = vector.broadcast %201 : vector<1x32xf32> to vector<16x32xf32>
    %223 = arith.addf %221, %222 : vector<16x32xf32>
    %c0_95 = arith.constant 0 : index
    %c0_96 = arith.constant 0 : index
    %c0_97 = arith.constant 0 : index
    %224 = vector.load %arg13[%c0_95, %c0_96, %c0_97] : memref<2x32x64xf32, #tpu.memory_space<vmem>>, vector<1x32x64xf32>
    %225 = vector.shape_cast %224 : vector<1x32x64xf32> to vector<32x64xf32>
    %c0_98 = arith.constant 0 : index
    %c0_99 = arith.constant 0 : index
    %c0_100 = arith.constant 0 : index
    %226 = vector.load %arg14[%c0_98, %c0_99, %c0_100] : memref<2x1x64xf32, #tpu.memory_space<vmem>>, vector<1x1x64xf32>
    %227 = vector.shape_cast %226 : vector<1x1x64xf32> to vector<1x64xf32>
    %c0_101 = arith.constant 0 : index
    %c0_102 = arith.constant 0 : index
    %c0_103 = arith.constant 0 : index
    %228 = vector.load %arg15[%c0_101, %c0_102, %c0_103] : memref<2x32x32xf32, #tpu.memory_space<vmem>>, vector<1x32x32xf32>
    %229 = vector.shape_cast %228 : vector<1x32x32xf32> to vector<32x32xf32>
    %c0_104 = arith.constant 0 : index
    %c0_105 = arith.constant 0 : index
    %c0_106 = arith.constant 0 : index
    %230 = vector.load %arg16[%c0_104, %c0_105, %c0_106] : memref<2x1x32xf32, #tpu.memory_space<vmem>>, vector<1x1x32xf32>
    %231 = vector.shape_cast %230 : vector<1x1x32xf32> to vector<1x32xf32>
    %cst_107 = arith.constant dense<0.000000e+00> : vector<16x64xf32>
    %232 = tpu.matmul %11, %225, %cst_107 {dimension_numbers = #tpu.dot_dimension_numbers<[1], [0], [0], [1], [0, 0, 1, 1], [], []>} : vector<16x32xf32>, vector<32x64xf32>, vector<16x64xf32> -> vector<16x64xf32>
    %233 = vector.broadcast %227 : vector<1x64xf32> to vector<16x64xf32>
    %234 = arith.addf %232, %233 : vector<16x64xf32>
    %235 = vector.extract_strided_slice %223 {offsets = [0, 0], sizes = [8, 32], strides = [1, 1]} : vector<16x32xf32> to vector<8x32xf32>
    %236 = vector.extract_strided_slice %234 {offsets = [0, 0], sizes = [8, 64], strides = [1, 1]} : vector<16x64xf32> to vector<8x64xf32>
    %237 = vector.extract_strided_slice %235 {offsets = [0, 0], sizes = [8, 8], strides = [1, 1]} : vector<8x32xf32> to vector<8x8xf32>
    %238 = vector.extract_strided_slice %236 {offsets = [0, 0], sizes = [8, 8], strides = [1, 1]} : vector<8x64xf32> to vector<8x8xf32>
    %239 = vector.extract_strided_slice %236 {offsets = [0, 32], sizes = [8, 8], strides = [1, 1]} : vector<8x64xf32> to vector<8x8xf32>
    %cst_108 = arith.constant dense<0.000000e+00> : vector<8x8xf32>
    %240 = tpu.matmul %237, %238, %cst_108 {dimension_numbers = #tpu.dot_dimension_numbers<[1], [1], [0], [0], [0, 0, 1, 0], [], []>} : vector<8x8xf32>, vector<8x8xf32>, vector<8x8xf32> -> vector<8x8xf32>
    %cst_109 = arith.constant 0.176776692 : f32
    %241 = vector.broadcast %cst_109 : f32 to vector<8x8xf32>
    %242 = arith.mulf %240, %241 : vector<8x8xf32>
    %243 = vector.broadcast %32 : vector<1x8xf32> to vector<8x8xf32>
    %244 = arith.addf %242, %243 : vector<8x8xf32>
    %cst_110 = arith.constant dense<0xFF800000> : vector<8xf32>
    %245 = vector.multi_reduction <maximumf>, %244, %cst_110 [1] : vector<8x8xf32> to vector<8xf32>
    %246 = vector.shape_cast %245 : vector<8xf32> to vector<8x1xf32>
    %247 = vector.broadcast %246 : vector<8x1xf32> to vector<8x8xf32>
    %248 = arith.subf %244, %247 : vector<8x8xf32>
    %249 = math.exp %248 : vector<8x8xf32>
    %cst_111 = arith.constant dense<0.000000e+00> : vector<8xf32>
    %250 = vector.multi_reduction <add>, %249, %cst_111 [1] : vector<8x8xf32> to vector<8xf32>
    %251 = vector.shape_cast %250 : vector<8xf32> to vector<8x1xf32>
    %252 = vector.broadcast %251 : vector<8x1xf32> to vector<8x8xf32>
    %253 = arith.divf %249, %252 : vector<8x8xf32>
    %cst_112 = arith.constant dense<0.000000e+00> : vector<8x8xf32>
    %254 = tpu.matmul %253, %239, %cst_112 {dimension_numbers = #tpu.dot_dimension_numbers<[1], [0], [0], [1], [0, 0, 1, 1], [], []>} : vector<8x8xf32>, vector<8x8xf32>, vector<8x8xf32> -> vector<8x8xf32>
    %255 = vector.extract_strided_slice %235 {offsets = [0, 8], sizes = [8, 8], strides = [1, 1]} : vector<8x32xf32> to vector<8x8xf32>
    %256 = vector.extract_strided_slice %236 {offsets = [0, 8], sizes = [8, 8], strides = [1, 1]} : vector<8x64xf32> to vector<8x8xf32>
    %257 = vector.extract_strided_slice %236 {offsets = [0, 40], sizes = [8, 8], strides = [1, 1]} : vector<8x64xf32> to vector<8x8xf32>
    %cst_113 = arith.constant dense<0.000000e+00> : vector<8x8xf32>
    %258 = tpu.matmul %255, %256, %cst_113 {dimension_numbers = #tpu.dot_dimension_numbers<[1], [1], [0], [0], [0, 0, 1, 0], [], []>} : vector<8x8xf32>, vector<8x8xf32>, vector<8x8xf32> -> vector<8x8xf32>
    %cst_114 = arith.constant 0.176776692 : f32
    %259 = vector.broadcast %cst_114 : f32 to vector<8x8xf32>
    %260 = arith.mulf %258, %259 : vector<8x8xf32>
    %261 = vector.broadcast %32 : vector<1x8xf32> to vector<8x8xf32>
    %262 = arith.addf %260, %261 : vector<8x8xf32>
    %cst_115 = arith.constant dense<0xFF800000> : vector<8xf32>
    %263 = vector.multi_reduction <maximumf>, %262, %cst_115 [1] : vector<8x8xf32> to vector<8xf32>
    %264 = vector.shape_cast %263 : vector<8xf32> to vector<8x1xf32>
    %265 = vector.broadcast %264 : vector<8x1xf32> to vector<8x8xf32>
    %266 = arith.subf %262, %265 : vector<8x8xf32>
    %267 = math.exp %266 : vector<8x8xf32>
    %cst_116 = arith.constant dense<0.000000e+00> : vector<8xf32>
    %268 = vector.multi_reduction <add>, %267, %cst_116 [1] : vector<8x8xf32> to vector<8xf32>
    %269 = vector.shape_cast %268 : vector<8xf32> to vector<8x1xf32>
    %270 = vector.broadcast %269 : vector<8x1xf32> to vector<8x8xf32>
    %271 = arith.divf %267, %270 : vector<8x8xf32>
    %cst_117 = arith.constant dense<0.000000e+00> : vector<8x8xf32>
    %272 = tpu.matmul %271, %257, %cst_117 {dimension_numbers = #tpu.dot_dimension_numbers<[1], [0], [0], [1], [0, 0, 1, 1], [], []>} : vector<8x8xf32>, vector<8x8xf32>, vector<8x8xf32> -> vector<8x8xf32>
    %273 = vector.extract_strided_slice %235 {offsets = [0, 16], sizes = [8, 8], strides = [1, 1]} : vector<8x32xf32> to vector<8x8xf32>
    %274 = vector.extract_strided_slice %236 {offsets = [0, 16], sizes = [8, 8], strides = [1, 1]} : vector<8x64xf32> to vector<8x8xf32>
    %275 = vector.extract_strided_slice %236 {offsets = [0, 48], sizes = [8, 8], strides = [1, 1]} : vector<8x64xf32> to vector<8x8xf32>
    %cst_118 = arith.constant dense<0.000000e+00> : vector<8x8xf32>
    %276 = tpu.matmul %273, %274, %cst_118 {dimension_numbers = #tpu.dot_dimension_numbers<[1], [1], [0], [0], [0, 0, 1, 0], [], []>} : vector<8x8xf32>, vector<8x8xf32>, vector<8x8xf32> -> vector<8x8xf32>
    %cst_119 = arith.constant 0.176776692 : f32
    %277 = vector.broadcast %cst_119 : f32 to vector<8x8xf32>
    %278 = arith.mulf %276, %277 : vector<8x8xf32>
    %279 = vector.broadcast %32 : vector<1x8xf32> to vector<8x8xf32>
    %280 = arith.addf %278, %279 : vector<8x8xf32>
    %cst_120 = arith.constant dense<0xFF800000> : vector<8xf32>
    %281 = vector.multi_reduction <maximumf>, %280, %cst_120 [1] : vector<8x8xf32> to vector<8xf32>
    %282 = vector.shape_cast %281 : vector<8xf32> to vector<8x1xf32>
    %283 = vector.broadcast %282 : vector<8x1xf32> to vector<8x8xf32>
    %284 = arith.subf %280, %283 : vector<8x8xf32>
    %285 = math.exp %284 : vector<8x8xf32>
    %cst_121 = arith.constant dense<0.000000e+00> : vector<8xf32>
    %286 = vector.multi_reduction <add>, %285, %cst_121 [1] : vector<8x8xf32> to vector<8xf32>
    %287 = vector.shape_cast %286 : vector<8xf32> to vector<8x1xf32>
    %288 = vector.broadcast %287 : vector<8x1xf32> to vector<8x8xf32>
    %289 = arith.divf %285, %288 : vector<8x8xf32>
    %cst_122 = arith.constant dense<0.000000e+00> : vector<8x8xf32>
    %290 = tpu.matmul %289, %275, %cst_122 {dimension_numbers = #tpu.dot_dimension_numbers<[1], [0], [0], [1], [0, 0, 1, 1], [], []>} : vector<8x8xf32>, vector<8x8xf32>, vector<8x8xf32> -> vector<8x8xf32>
    %291 = vector.extract_strided_slice %235 {offsets = [0, 24], sizes = [8, 8], strides = [1, 1]} : vector<8x32xf32> to vector<8x8xf32>
    %292 = vector.extract_strided_slice %236 {offsets = [0, 24], sizes = [8, 8], strides = [1, 1]} : vector<8x64xf32> to vector<8x8xf32>
    %293 = vector.extract_strided_slice %236 {offsets = [0, 56], sizes = [8, 8], strides = [1, 1]} : vector<8x64xf32> to vector<8x8xf32>
    %cst_123 = arith.constant dense<0.000000e+00> : vector<8x8xf32>
    %294 = tpu.matmul %291, %292, %cst_123 {dimension_numbers = #tpu.dot_dimension_numbers<[1], [1], [0], [0], [0, 0, 1, 0], [], []>} : vector<8x8xf32>, vector<8x8xf32>, vector<8x8xf32> -> vector<8x8xf32>
    %cst_124 = arith.constant 0.176776692 : f32
    %295 = vector.broadcast %cst_124 : f32 to vector<8x8xf32>
    %296 = arith.mulf %294, %295 : vector<8x8xf32>
    %297 = vector.broadcast %32 : vector<1x8xf32> to vector<8x8xf32>
    %298 = arith.addf %296, %297 : vector<8x8xf32>
    %cst_125 = arith.constant dense<0xFF800000> : vector<8xf32>
    %299 = vector.multi_reduction <maximumf>, %298, %cst_125 [1] : vector<8x8xf32> to vector<8xf32>
    %300 = vector.shape_cast %299 : vector<8xf32> to vector<8x1xf32>
    %301 = vector.broadcast %300 : vector<8x1xf32> to vector<8x8xf32>
    %302 = arith.subf %298, %301 : vector<8x8xf32>
    %303 = math.exp %302 : vector<8x8xf32>
    %cst_126 = arith.constant dense<0.000000e+00> : vector<8xf32>
    %304 = vector.multi_reduction <add>, %303, %cst_126 [1] : vector<8x8xf32> to vector<8xf32>
    %305 = vector.shape_cast %304 : vector<8xf32> to vector<8x1xf32>
    %306 = vector.broadcast %305 : vector<8x1xf32> to vector<8x8xf32>
    %307 = arith.divf %303, %306 : vector<8x8xf32>
    %cst_127 = arith.constant dense<0.000000e+00> : vector<8x8xf32>
    %308 = tpu.matmul %307, %293, %cst_127 {dimension_numbers = #tpu.dot_dimension_numbers<[1], [0], [0], [1], [0, 0, 1, 1], [], []>} : vector<8x8xf32>, vector<8x8xf32>, vector<8x8xf32> -> vector<8x8xf32>
    %309 = tpu.concatenate %254, %272, %290, %308 in 1 : vector<8x8xf32>, vector<8x8xf32>, vector<8x8xf32>, vector<8x8xf32> -> vector<8x32xf32>
    %310 = vector.extract_strided_slice %223 {offsets = [8, 0], sizes = [8, 32], strides = [1, 1]} : vector<16x32xf32> to vector<8x32xf32>
    %311 = vector.extract_strided_slice %234 {offsets = [8, 0], sizes = [8, 64], strides = [1, 1]} : vector<16x64xf32> to vector<8x64xf32>
    %312 = vector.extract_strided_slice %310 {offsets = [0, 0], sizes = [8, 8], strides = [1, 1]} : vector<8x32xf32> to vector<8x8xf32>
    %313 = vector.extract_strided_slice %311 {offsets = [0, 0], sizes = [8, 8], strides = [1, 1]} : vector<8x64xf32> to vector<8x8xf32>
    %314 = vector.extract_strided_slice %311 {offsets = [0, 32], sizes = [8, 8], strides = [1, 1]} : vector<8x64xf32> to vector<8x8xf32>
    %cst_128 = arith.constant dense<0.000000e+00> : vector<8x8xf32>
    %315 = tpu.matmul %312, %313, %cst_128 {dimension_numbers = #tpu.dot_dimension_numbers<[1], [1], [0], [0], [0, 0, 1, 0], [], []>} : vector<8x8xf32>, vector<8x8xf32>, vector<8x8xf32> -> vector<8x8xf32>
    %cst_129 = arith.constant 0.176776692 : f32
    %316 = vector.broadcast %cst_129 : f32 to vector<8x8xf32>
    %317 = arith.mulf %315, %316 : vector<8x8xf32>
    %318 = vector.broadcast %39 : vector<1x8xf32> to vector<8x8xf32>
    %319 = arith.addf %317, %318 : vector<8x8xf32>
    %cst_130 = arith.constant dense<0xFF800000> : vector<8xf32>
    %320 = vector.multi_reduction <maximumf>, %319, %cst_130 [1] : vector<8x8xf32> to vector<8xf32>
    %321 = vector.shape_cast %320 : vector<8xf32> to vector<8x1xf32>
    %322 = vector.broadcast %321 : vector<8x1xf32> to vector<8x8xf32>
    %323 = arith.subf %319, %322 : vector<8x8xf32>
    %324 = math.exp %323 : vector<8x8xf32>
    %cst_131 = arith.constant dense<0.000000e+00> : vector<8xf32>
    %325 = vector.multi_reduction <add>, %324, %cst_131 [1] : vector<8x8xf32> to vector<8xf32>
    %326 = vector.shape_cast %325 : vector<8xf32> to vector<8x1xf32>
    %327 = vector.broadcast %326 : vector<8x1xf32> to vector<8x8xf32>
    %328 = arith.divf %324, %327 : vector<8x8xf32>
    %cst_132 = arith.constant dense<0.000000e+00> : vector<8x8xf32>
    %329 = tpu.matmul %328, %314, %cst_132 {dimension_numbers = #tpu.dot_dimension_numbers<[1], [0], [0], [1], [0, 0, 1, 1], [], []>} : vector<8x8xf32>, vector<8x8xf32>, vector<8x8xf32> -> vector<8x8xf32>
    %330 = vector.extract_strided_slice %310 {offsets = [0, 8], sizes = [8, 8], strides = [1, 1]} : vector<8x32xf32> to vector<8x8xf32>
    %331 = vector.extract_strided_slice %311 {offsets = [0, 8], sizes = [8, 8], strides = [1, 1]} : vector<8x64xf32> to vector<8x8xf32>
    %332 = vector.extract_strided_slice %311 {offsets = [0, 40], sizes = [8, 8], strides = [1, 1]} : vector<8x64xf32> to vector<8x8xf32>
    %cst_133 = arith.constant dense<0.000000e+00> : vector<8x8xf32>
    %333 = tpu.matmul %330, %331, %cst_133 {dimension_numbers = #tpu.dot_dimension_numbers<[1], [1], [0], [0], [0, 0, 1, 0], [], []>} : vector<8x8xf32>, vector<8x8xf32>, vector<8x8xf32> -> vector<8x8xf32>
    %cst_134 = arith.constant 0.176776692 : f32
    %334 = vector.broadcast %cst_134 : f32 to vector<8x8xf32>
    %335 = arith.mulf %333, %334 : vector<8x8xf32>
    %336 = vector.broadcast %39 : vector<1x8xf32> to vector<8x8xf32>
    %337 = arith.addf %335, %336 : vector<8x8xf32>
    %cst_135 = arith.constant dense<0xFF800000> : vector<8xf32>
    %338 = vector.multi_reduction <maximumf>, %337, %cst_135 [1] : vector<8x8xf32> to vector<8xf32>
    %339 = vector.shape_cast %338 : vector<8xf32> to vector<8x1xf32>
    %340 = vector.broadcast %339 : vector<8x1xf32> to vector<8x8xf32>
    %341 = arith.subf %337, %340 : vector<8x8xf32>
    %342 = math.exp %341 : vector<8x8xf32>
    %cst_136 = arith.constant dense<0.000000e+00> : vector<8xf32>
    %343 = vector.multi_reduction <add>, %342, %cst_136 [1] : vector<8x8xf32> to vector<8xf32>
    %344 = vector.shape_cast %343 : vector<8xf32> to vector<8x1xf32>
    %345 = vector.broadcast %344 : vector<8x1xf32> to vector<8x8xf32>
    %346 = arith.divf %342, %345 : vector<8x8xf32>
    %cst_137 = arith.constant dense<0.000000e+00> : vector<8x8xf32>
    %347 = tpu.matmul %346, %332, %cst_137 {dimension_numbers = #tpu.dot_dimension_numbers<[1], [0], [0], [1], [0, 0, 1, 1], [], []>} : vector<8x8xf32>, vector<8x8xf32>, vector<8x8xf32> -> vector<8x8xf32>
    %348 = vector.extract_strided_slice %310 {offsets = [0, 16], sizes = [8, 8], strides = [1, 1]} : vector<8x32xf32> to vector<8x8xf32>
    %349 = vector.extract_strided_slice %311 {offsets = [0, 16], sizes = [8, 8], strides = [1, 1]} : vector<8x64xf32> to vector<8x8xf32>
    %350 = vector.extract_strided_slice %311 {offsets = [0, 48], sizes = [8, 8], strides = [1, 1]} : vector<8x64xf32> to vector<8x8xf32>
    %cst_138 = arith.constant dense<0.000000e+00> : vector<8x8xf32>
    %351 = tpu.matmul %348, %349, %cst_138 {dimension_numbers = #tpu.dot_dimension_numbers<[1], [1], [0], [0], [0, 0, 1, 0], [], []>} : vector<8x8xf32>, vector<8x8xf32>, vector<8x8xf32> -> vector<8x8xf32>
    %cst_139 = arith.constant 0.176776692 : f32
    %352 = vector.broadcast %cst_139 : f32 to vector<8x8xf32>
    %353 = arith.mulf %351, %352 : vector<8x8xf32>
    %354 = vector.broadcast %39 : vector<1x8xf32> to vector<8x8xf32>
    %355 = arith.addf %353, %354 : vector<8x8xf32>
    %cst_140 = arith.constant dense<0xFF800000> : vector<8xf32>
    %356 = vector.multi_reduction <maximumf>, %355, %cst_140 [1] : vector<8x8xf32> to vector<8xf32>
    %357 = vector.shape_cast %356 : vector<8xf32> to vector<8x1xf32>
    %358 = vector.broadcast %357 : vector<8x1xf32> to vector<8x8xf32>
    %359 = arith.subf %355, %358 : vector<8x8xf32>
    %360 = math.exp %359 : vector<8x8xf32>
    %cst_141 = arith.constant dense<0.000000e+00> : vector<8xf32>
    %361 = vector.multi_reduction <add>, %360, %cst_141 [1] : vector<8x8xf32> to vector<8xf32>
    %362 = vector.shape_cast %361 : vector<8xf32> to vector<8x1xf32>
    %363 = vector.broadcast %362 : vector<8x1xf32> to vector<8x8xf32>
    %364 = arith.divf %360, %363 : vector<8x8xf32>
    %cst_142 = arith.constant dense<0.000000e+00> : vector<8x8xf32>
    %365 = tpu.matmul %364, %350, %cst_142 {dimension_numbers = #tpu.dot_dimension_numbers<[1], [0], [0], [1], [0, 0, 1, 1], [], []>} : vector<8x8xf32>, vector<8x8xf32>, vector<8x8xf32> -> vector<8x8xf32>
    %366 = vector.extract_strided_slice %310 {offsets = [0, 24], sizes = [8, 8], strides = [1, 1]} : vector<8x32xf32> to vector<8x8xf32>
    %367 = vector.extract_strided_slice %311 {offsets = [0, 24], sizes = [8, 8], strides = [1, 1]} : vector<8x64xf32> to vector<8x8xf32>
    %368 = vector.extract_strided_slice %311 {offsets = [0, 56], sizes = [8, 8], strides = [1, 1]} : vector<8x64xf32> to vector<8x8xf32>
    %cst_143 = arith.constant dense<0.000000e+00> : vector<8x8xf32>
    %369 = tpu.matmul %366, %367, %cst_143 {dimension_numbers = #tpu.dot_dimension_numbers<[1], [1], [0], [0], [0, 0, 1, 0], [], []>} : vector<8x8xf32>, vector<8x8xf32>, vector<8x8xf32> -> vector<8x8xf32>
    %cst_144 = arith.constant 0.176776692 : f32
    %370 = vector.broadcast %cst_144 : f32 to vector<8x8xf32>
    %371 = arith.mulf %369, %370 : vector<8x8xf32>
    %372 = vector.broadcast %39 : vector<1x8xf32> to vector<8x8xf32>
    %373 = arith.addf %371, %372 : vector<8x8xf32>
    %cst_145 = arith.constant dense<0xFF800000> : vector<8xf32>
    %374 = vector.multi_reduction <maximumf>, %373, %cst_145 [1] : vector<8x8xf32> to vector<8xf32>
    %375 = vector.shape_cast %374 : vector<8xf32> to vector<8x1xf32>
    %376 = vector.broadcast %375 : vector<8x1xf32> to vector<8x8xf32>
    %377 = arith.subf %373, %376 : vector<8x8xf32>
    %378 = math.exp %377 : vector<8x8xf32>
    %cst_146 = arith.constant dense<0.000000e+00> : vector<8xf32>
    %379 = vector.multi_reduction <add>, %378, %cst_146 [1] : vector<8x8xf32> to vector<8xf32>
    %380 = vector.shape_cast %379 : vector<8xf32> to vector<8x1xf32>
    %381 = vector.broadcast %380 : vector<8x1xf32> to vector<8x8xf32>
    %382 = arith.divf %378, %381 : vector<8x8xf32>
    %cst_147 = arith.constant dense<0.000000e+00> : vector<8x8xf32>
    %383 = tpu.matmul %382, %368, %cst_147 {dimension_numbers = #tpu.dot_dimension_numbers<[1], [0], [0], [1], [0, 0, 1, 1], [], []>} : vector<8x8xf32>, vector<8x8xf32>, vector<8x8xf32> -> vector<8x8xf32>
    %384 = tpu.concatenate %329, %347, %365, %383 in 1 : vector<8x8xf32>, vector<8x8xf32>, vector<8x8xf32>, vector<8x8xf32> -> vector<8x32xf32>
    %385 = tpu.concatenate %309, %384 in 0 : vector<8x32xf32>, vector<8x32xf32> -> vector<16x32xf32>
    %cst_148 = arith.constant dense<0.000000e+00> : vector<16x32xf32>
    %386 = tpu.matmul %385, %229, %cst_148 {dimension_numbers = #tpu.dot_dimension_numbers<[1], [0], [0], [1], [0, 0, 1, 1], [], []>} : vector<16x32xf32>, vector<32x32xf32>, vector<16x32xf32> -> vector<16x32xf32>
    %387 = vector.broadcast %231 : vector<1x32xf32> to vector<16x32xf32>
    %388 = arith.addf %386, %387 : vector<16x32xf32>
    %389 = arith.addf %388, %223 : vector<16x32xf32>
    %c0_149 = arith.constant 0 : index
    %c0_150 = arith.constant 0 : index
    %c0_151 = arith.constant 0 : index
    %390 = vector.load %arg17[%c0_149, %c0_150, %c0_151] : memref<2x1x32xf32, #tpu.memory_space<vmem>>, vector<1x1x32xf32>
    %391 = vector.shape_cast %390 : vector<1x1x32xf32> to vector<1x32xf32>
    %c0_152 = arith.constant 0 : index
    %c0_153 = arith.constant 0 : index
    %c0_154 = arith.constant 0 : index
    %392 = vector.load %arg18[%c0_152, %c0_153, %c0_154] : memref<2x1x32xf32, #tpu.memory_space<vmem>>, vector<1x1x32xf32>
    %393 = vector.shape_cast %392 : vector<1x1x32xf32> to vector<1x32xf32>
    %cst_155 = arith.constant dense<0.000000e+00> : vector<16xf32>
    %394 = vector.multi_reduction <add>, %389, %cst_155 [1] : vector<16x32xf32> to vector<16xf32>
    %395 = vector.shape_cast %394 : vector<16xf32> to vector<16x1xf32>
    %cst_156 = arith.constant 3.200000e+01 : f32
    %396 = vector.broadcast %cst_156 : f32 to vector<16x1xf32>
    %397 = arith.divf %395, %396 : vector<16x1xf32>
    %398 = vector.broadcast %397 : vector<16x1xf32> to vector<16x32xf32>
    %399 = arith.subf %389, %398 : vector<16x32xf32>
    %400 = arith.mulf %399, %399 : vector<16x32xf32>
    %cst_157 = arith.constant dense<0.000000e+00> : vector<16xf32>
    %401 = vector.multi_reduction <add>, %400, %cst_157 [1] : vector<16x32xf32> to vector<16xf32>
    %402 = vector.shape_cast %401 : vector<16xf32> to vector<16x1xf32>
    %cst_158 = arith.constant 3.200000e+01 : f32
    %403 = vector.broadcast %cst_158 : f32 to vector<16x1xf32>
    %404 = arith.divf %402, %403 : vector<16x1xf32>
    %405 = vector.broadcast %397 : vector<16x1xf32> to vector<16x32xf32>
    %406 = arith.subf %389, %405 : vector<16x32xf32>
    %cst_159 = arith.constant 9.99999974E-6 : f32
    %407 = vector.broadcast %cst_159 : f32 to vector<16x1xf32>
    %408 = arith.addf %404, %407 : vector<16x1xf32>
    %409 = math.rsqrt %408 : vector<16x1xf32>
    %410 = vector.broadcast %409 : vector<16x1xf32> to vector<16x32xf32>
    %411 = arith.mulf %406, %410 : vector<16x32xf32>
    %412 = vector.broadcast %391 : vector<1x32xf32> to vector<16x32xf32>
    %413 = arith.mulf %411, %412 : vector<16x32xf32>
    %414 = vector.broadcast %393 : vector<1x32xf32> to vector<16x32xf32>
    %415 = arith.addf %413, %414 : vector<16x32xf32>
    %c0_160 = arith.constant 0 : index
    %c0_161 = arith.constant 0 : index
    %c0_162 = arith.constant 0 : index
    %416 = vector.load %arg21[%c0_160, %c0_161, %c0_162] : memref<2x32x128xf32, #tpu.memory_space<vmem>>, vector<1x32x128xf32>
    %417 = vector.shape_cast %416 : vector<1x32x128xf32> to vector<32x128xf32>
    %cst_163 = arith.constant dense<0.000000e+00> : vector<16x128xf32>
    %418 = tpu.matmul %415, %417, %cst_163 {dimension_numbers = #tpu.dot_dimension_numbers<[1], [0], [0], [1], [0, 0, 1, 1], [], []>} : vector<16x32xf32>, vector<32x128xf32>, vector<16x128xf32> -> vector<16x128xf32>
    %c0_164 = arith.constant 0 : index
    %c0_165 = arith.constant 0 : index
    %c0_166 = arith.constant 0 : index
    %419 = vector.load %arg22[%c0_164, %c0_165, %c0_166] : memref<2x1x128xf32, #tpu.memory_space<vmem>>, vector<1x1x128xf32>
    %420 = vector.shape_cast %419 : vector<1x1x128xf32> to vector<1x128xf32>
    %421 = vector.broadcast %420 : vector<1x128xf32> to vector<16x128xf32>
    %422 = arith.addf %418, %421 : vector<16x128xf32>
    %cst_167 = arith.constant 0.000000e+00 : f32
    %423 = vector.broadcast %cst_167 : f32 to vector<16x128xf32>
    %424 = arith.maximumf %422, %423 : vector<16x128xf32>
    %c0_168 = arith.constant 0 : index
    %c0_169 = arith.constant 0 : index
    %c0_170 = arith.constant 0 : index
    %425 = vector.load %arg23[%c0_168, %c0_169, %c0_170] : memref<2x128x32xf32, #tpu.memory_space<vmem>>, vector<1x128x32xf32>
    %426 = vector.shape_cast %425 : vector<1x128x32xf32> to vector<128x32xf32>
    %cst_171 = arith.constant dense<0.000000e+00> : vector<16x32xf32>
    %427 = tpu.matmul %424, %426, %cst_171 {dimension_numbers = #tpu.dot_dimension_numbers<[1], [0], [0], [1], [0, 0, 1, 1], [], []>} : vector<16x128xf32>, vector<128x32xf32>, vector<16x32xf32> -> vector<16x32xf32>
    %c0_172 = arith.constant 0 : index
    %c0_173 = arith.constant 0 : index
    %c0_174 = arith.constant 0 : index
    %428 = vector.load %arg24[%c0_172, %c0_173, %c0_174] : memref<2x1x32xf32, #tpu.memory_space<vmem>>, vector<1x1x32xf32>
    %429 = vector.shape_cast %428 : vector<1x1x32xf32> to vector<1x32xf32>
    %430 = vector.broadcast %429 : vector<1x32xf32> to vector<16x32xf32>
    %431 = arith.addf %427, %430 : vector<16x32xf32>
    %432 = arith.addf %431, %415 : vector<16x32xf32>
    %c0_175 = arith.constant 0 : index
    %c0_176 = arith.constant 0 : index
    %c0_177 = arith.constant 0 : index
    %433 = vector.load %arg19[%c0_175, %c0_176, %c0_177] : memref<2x1x32xf32, #tpu.memory_space<vmem>>, vector<1x1x32xf32>
    %434 = vector.shape_cast %433 : vector<1x1x32xf32> to vector<1x32xf32>
    %c0_178 = arith.constant 0 : index
    %c0_179 = arith.constant 0 : index
    %c0_180 = arith.constant 0 : index
    %435 = vector.load %arg20[%c0_178, %c0_179, %c0_180] : memref<2x1x32xf32, #tpu.memory_space<vmem>>, vector<1x1x32xf32>
    %436 = vector.shape_cast %435 : vector<1x1x32xf32> to vector<1x32xf32>
    %cst_181 = arith.constant dense<0.000000e+00> : vector<16xf32>
    %437 = vector.multi_reduction <add>, %432, %cst_181 [1] : vector<16x32xf32> to vector<16xf32>
    %438 = vector.shape_cast %437 : vector<16xf32> to vector<16x1xf32>
    %cst_182 = arith.constant 3.200000e+01 : f32
    %439 = vector.broadcast %cst_182 : f32 to vector<16x1xf32>
    %440 = arith.divf %438, %439 : vector<16x1xf32>
    %441 = vector.broadcast %440 : vector<16x1xf32> to vector<16x32xf32>
    %442 = arith.subf %432, %441 : vector<16x32xf32>
    %443 = arith.mulf %442, %442 : vector<16x32xf32>
    %cst_183 = arith.constant dense<0.000000e+00> : vector<16xf32>
    %444 = vector.multi_reduction <add>, %443, %cst_183 [1] : vector<16x32xf32> to vector<16xf32>
    %445 = vector.shape_cast %444 : vector<16xf32> to vector<16x1xf32>
    %cst_184 = arith.constant 3.200000e+01 : f32
    %446 = vector.broadcast %cst_184 : f32 to vector<16x1xf32>
    %447 = arith.divf %445, %446 : vector<16x1xf32>
    %448 = vector.broadcast %440 : vector<16x1xf32> to vector<16x32xf32>
    %449 = arith.subf %432, %448 : vector<16x32xf32>
    %cst_185 = arith.constant 9.99999974E-6 : f32
    %450 = vector.broadcast %cst_185 : f32 to vector<16x1xf32>
    %451 = arith.addf %447, %450 : vector<16x1xf32>
    %452 = math.rsqrt %451 : vector<16x1xf32>
    %453 = vector.broadcast %452 : vector<16x1xf32> to vector<16x32xf32>
    %454 = arith.mulf %449, %453 : vector<16x32xf32>
    %455 = vector.broadcast %434 : vector<1x32xf32> to vector<16x32xf32>
    %456 = arith.mulf %454, %455 : vector<16x32xf32>
    %457 = vector.broadcast %436 : vector<1x32xf32> to vector<16x32xf32>
    %458 = arith.addf %456, %457 : vector<16x32xf32>
    %c1_186 = arith.constant 1 : index
    %c0_187 = arith.constant 0 : index
    %c0_188 = arith.constant 0 : index
    %459 = vector.load %arg7[%c1_186, %c0_187, %c0_188] : memref<2x32x64xf32, #tpu.memory_space<vmem>>, vector<1x32x64xf32>
    %460 = vector.shape_cast %459 : vector<1x32x64xf32> to vector<32x64xf32>
    %c1_189 = arith.constant 1 : index
    %c0_190 = arith.constant 0 : index
    %c0_191 = arith.constant 0 : index
    %461 = vector.load %arg8[%c1_189, %c0_190, %c0_191] : memref<2x1x64xf32, #tpu.memory_space<vmem>>, vector<1x1x64xf32>
    %462 = vector.shape_cast %461 : vector<1x1x64xf32> to vector<1x64xf32>
    %c1_192 = arith.constant 1 : index
    %c0_193 = arith.constant 0 : index
    %c0_194 = arith.constant 0 : index
    %463 = vector.load %arg9[%c1_192, %c0_193, %c0_194] : memref<2x32x32xf32, #tpu.memory_space<vmem>>, vector<1x32x32xf32>
    %464 = vector.shape_cast %463 : vector<1x32x32xf32> to vector<32x32xf32>
    %c1_195 = arith.constant 1 : index
    %c0_196 = arith.constant 0 : index
    %c0_197 = arith.constant 0 : index
    %465 = vector.load %arg10[%c1_195, %c0_196, %c0_197] : memref<2x1x32xf32, #tpu.memory_space<vmem>>, vector<1x1x32xf32>
    %466 = vector.shape_cast %465 : vector<1x1x32xf32> to vector<1x32xf32>
    %cst_198 = arith.constant dense<0.000000e+00> : vector<16x64xf32>
    %467 = tpu.matmul %458, %460, %cst_198 {dimension_numbers = #tpu.dot_dimension_numbers<[1], [0], [0], [1], [0, 0, 1, 1], [], []>} : vector<16x32xf32>, vector<32x64xf32>, vector<16x64xf32> -> vector<16x64xf32>
    %468 = vector.broadcast %462 : vector<1x64xf32> to vector<16x64xf32>
    %469 = arith.addf %467, %468 : vector<16x64xf32>
    %470 = vector.extract_strided_slice %458 {offsets = [0, 0], sizes = [8, 32], strides = [1, 1]} : vector<16x32xf32> to vector<8x32xf32>
    %471 = vector.extract_strided_slice %469 {offsets = [0, 0], sizes = [8, 64], strides = [1, 1]} : vector<16x64xf32> to vector<8x64xf32>
    %472 = vector.extract_strided_slice %470 {offsets = [0, 0], sizes = [8, 8], strides = [1, 1]} : vector<8x32xf32> to vector<8x8xf32>
    %473 = vector.extract_strided_slice %471 {offsets = [0, 0], sizes = [8, 8], strides = [1, 1]} : vector<8x64xf32> to vector<8x8xf32>
    %474 = vector.extract_strided_slice %471 {offsets = [0, 32], sizes = [8, 8], strides = [1, 1]} : vector<8x64xf32> to vector<8x8xf32>
    %cst_199 = arith.constant dense<0.000000e+00> : vector<8x8xf32>
    %475 = tpu.matmul %472, %473, %cst_199 {dimension_numbers = #tpu.dot_dimension_numbers<[1], [1], [0], [0], [0, 0, 1, 0], [], []>} : vector<8x8xf32>, vector<8x8xf32>, vector<8x8xf32> -> vector<8x8xf32>
    %cst_200 = arith.constant 0.176776692 : f32
    %476 = vector.broadcast %cst_200 : f32 to vector<8x8xf32>
    %477 = arith.mulf %475, %476 : vector<8x8xf32>
    %478 = arith.addf %477, %18 : vector<8x8xf32>
    %cst_201 = arith.constant dense<0xFF800000> : vector<8xf32>
    %479 = vector.multi_reduction <maximumf>, %478, %cst_201 [1] : vector<8x8xf32> to vector<8xf32>
    %480 = vector.shape_cast %479 : vector<8xf32> to vector<8x1xf32>
    %481 = vector.broadcast %480 : vector<8x1xf32> to vector<8x8xf32>
    %482 = arith.subf %478, %481 : vector<8x8xf32>
    %483 = math.exp %482 : vector<8x8xf32>
    %cst_202 = arith.constant dense<0.000000e+00> : vector<8xf32>
    %484 = vector.multi_reduction <add>, %483, %cst_202 [1] : vector<8x8xf32> to vector<8xf32>
    %485 = vector.shape_cast %484 : vector<8xf32> to vector<8x1xf32>
    %486 = vector.broadcast %485 : vector<8x1xf32> to vector<8x8xf32>
    %487 = arith.divf %483, %486 : vector<8x8xf32>
    %cst_203 = arith.constant dense<0.000000e+00> : vector<8x8xf32>
    %488 = tpu.matmul %487, %474, %cst_203 {dimension_numbers = #tpu.dot_dimension_numbers<[1], [0], [0], [1], [0, 0, 1, 1], [], []>} : vector<8x8xf32>, vector<8x8xf32>, vector<8x8xf32> -> vector<8x8xf32>
    %489 = vector.extract_strided_slice %470 {offsets = [0, 8], sizes = [8, 8], strides = [1, 1]} : vector<8x32xf32> to vector<8x8xf32>
    %490 = vector.extract_strided_slice %471 {offsets = [0, 8], sizes = [8, 8], strides = [1, 1]} : vector<8x64xf32> to vector<8x8xf32>
    %491 = vector.extract_strided_slice %471 {offsets = [0, 40], sizes = [8, 8], strides = [1, 1]} : vector<8x64xf32> to vector<8x8xf32>
    %cst_204 = arith.constant dense<0.000000e+00> : vector<8x8xf32>
    %492 = tpu.matmul %489, %490, %cst_204 {dimension_numbers = #tpu.dot_dimension_numbers<[1], [1], [0], [0], [0, 0, 1, 0], [], []>} : vector<8x8xf32>, vector<8x8xf32>, vector<8x8xf32> -> vector<8x8xf32>
    %cst_205 = arith.constant 0.176776692 : f32
    %493 = vector.broadcast %cst_205 : f32 to vector<8x8xf32>
    %494 = arith.mulf %492, %493 : vector<8x8xf32>
    %495 = arith.addf %494, %18 : vector<8x8xf32>
    %cst_206 = arith.constant dense<0xFF800000> : vector<8xf32>
    %496 = vector.multi_reduction <maximumf>, %495, %cst_206 [1] : vector<8x8xf32> to vector<8xf32>
    %497 = vector.shape_cast %496 : vector<8xf32> to vector<8x1xf32>
    %498 = vector.broadcast %497 : vector<8x1xf32> to vector<8x8xf32>
    %499 = arith.subf %495, %498 : vector<8x8xf32>
    %500 = math.exp %499 : vector<8x8xf32>
    %cst_207 = arith.constant dense<0.000000e+00> : vector<8xf32>
    %501 = vector.multi_reduction <add>, %500, %cst_207 [1] : vector<8x8xf32> to vector<8xf32>
    %502 = vector.shape_cast %501 : vector<8xf32> to vector<8x1xf32>
    %503 = vector.broadcast %502 : vector<8x1xf32> to vector<8x8xf32>
    %504 = arith.divf %500, %503 : vector<8x8xf32>
    %cst_208 = arith.constant dense<0.000000e+00> : vector<8x8xf32>
    %505 = tpu.matmul %504, %491, %cst_208 {dimension_numbers = #tpu.dot_dimension_numbers<[1], [0], [0], [1], [0, 0, 1, 1], [], []>} : vector<8x8xf32>, vector<8x8xf32>, vector<8x8xf32> -> vector<8x8xf32>
    %506 = vector.extract_strided_slice %470 {offsets = [0, 16], sizes = [8, 8], strides = [1, 1]} : vector<8x32xf32> to vector<8x8xf32>
    %507 = vector.extract_strided_slice %471 {offsets = [0, 16], sizes = [8, 8], strides = [1, 1]} : vector<8x64xf32> to vector<8x8xf32>
    %508 = vector.extract_strided_slice %471 {offsets = [0, 48], sizes = [8, 8], strides = [1, 1]} : vector<8x64xf32> to vector<8x8xf32>
    %cst_209 = arith.constant dense<0.000000e+00> : vector<8x8xf32>
    %509 = tpu.matmul %506, %507, %cst_209 {dimension_numbers = #tpu.dot_dimension_numbers<[1], [1], [0], [0], [0, 0, 1, 0], [], []>} : vector<8x8xf32>, vector<8x8xf32>, vector<8x8xf32> -> vector<8x8xf32>
    %cst_210 = arith.constant 0.176776692 : f32
    %510 = vector.broadcast %cst_210 : f32 to vector<8x8xf32>
    %511 = arith.mulf %509, %510 : vector<8x8xf32>
    %512 = arith.addf %511, %18 : vector<8x8xf32>
    %cst_211 = arith.constant dense<0xFF800000> : vector<8xf32>
    %513 = vector.multi_reduction <maximumf>, %512, %cst_211 [1] : vector<8x8xf32> to vector<8xf32>
    %514 = vector.shape_cast %513 : vector<8xf32> to vector<8x1xf32>
    %515 = vector.broadcast %514 : vector<8x1xf32> to vector<8x8xf32>
    %516 = arith.subf %512, %515 : vector<8x8xf32>
    %517 = math.exp %516 : vector<8x8xf32>
    %cst_212 = arith.constant dense<0.000000e+00> : vector<8xf32>
    %518 = vector.multi_reduction <add>, %517, %cst_212 [1] : vector<8x8xf32> to vector<8xf32>
    %519 = vector.shape_cast %518 : vector<8xf32> to vector<8x1xf32>
    %520 = vector.broadcast %519 : vector<8x1xf32> to vector<8x8xf32>
    %521 = arith.divf %517, %520 : vector<8x8xf32>
    %cst_213 = arith.constant dense<0.000000e+00> : vector<8x8xf32>
    %522 = tpu.matmul %521, %508, %cst_213 {dimension_numbers = #tpu.dot_dimension_numbers<[1], [0], [0], [1], [0, 0, 1, 1], [], []>} : vector<8x8xf32>, vector<8x8xf32>, vector<8x8xf32> -> vector<8x8xf32>
    %523 = vector.extract_strided_slice %470 {offsets = [0, 24], sizes = [8, 8], strides = [1, 1]} : vector<8x32xf32> to vector<8x8xf32>
    %524 = vector.extract_strided_slice %471 {offsets = [0, 24], sizes = [8, 8], strides = [1, 1]} : vector<8x64xf32> to vector<8x8xf32>
    %525 = vector.extract_strided_slice %471 {offsets = [0, 56], sizes = [8, 8], strides = [1, 1]} : vector<8x64xf32> to vector<8x8xf32>
    %cst_214 = arith.constant dense<0.000000e+00> : vector<8x8xf32>
    %526 = tpu.matmul %523, %524, %cst_214 {dimension_numbers = #tpu.dot_dimension_numbers<[1], [1], [0], [0], [0, 0, 1, 0], [], []>} : vector<8x8xf32>, vector<8x8xf32>, vector<8x8xf32> -> vector<8x8xf32>
    %cst_215 = arith.constant 0.176776692 : f32
    %527 = vector.broadcast %cst_215 : f32 to vector<8x8xf32>
    %528 = arith.mulf %526, %527 : vector<8x8xf32>
    %529 = arith.addf %528, %18 : vector<8x8xf32>
    %cst_216 = arith.constant dense<0xFF800000> : vector<8xf32>
    %530 = vector.multi_reduction <maximumf>, %529, %cst_216 [1] : vector<8x8xf32> to vector<8xf32>
    %531 = vector.shape_cast %530 : vector<8xf32> to vector<8x1xf32>
    %532 = vector.broadcast %531 : vector<8x1xf32> to vector<8x8xf32>
    %533 = arith.subf %529, %532 : vector<8x8xf32>
    %534 = math.exp %533 : vector<8x8xf32>
    %cst_217 = arith.constant dense<0.000000e+00> : vector<8xf32>
    %535 = vector.multi_reduction <add>, %534, %cst_217 [1] : vector<8x8xf32> to vector<8xf32>
    %536 = vector.shape_cast %535 : vector<8xf32> to vector<8x1xf32>
    %537 = vector.broadcast %536 : vector<8x1xf32> to vector<8x8xf32>
    %538 = arith.divf %534, %537 : vector<8x8xf32>
    %cst_218 = arith.constant dense<0.000000e+00> : vector<8x8xf32>
    %539 = tpu.matmul %538, %525, %cst_218 {dimension_numbers = #tpu.dot_dimension_numbers<[1], [0], [0], [1], [0, 0, 1, 1], [], []>} : vector<8x8xf32>, vector<8x8xf32>, vector<8x8xf32> -> vector<8x8xf32>
    %540 = tpu.concatenate %488, %505, %522, %539 in 1 : vector<8x8xf32>, vector<8x8xf32>, vector<8x8xf32>, vector<8x8xf32> -> vector<8x32xf32>
    %541 = vector.extract_strided_slice %458 {offsets = [8, 0], sizes = [8, 32], strides = [1, 1]} : vector<16x32xf32> to vector<8x32xf32>
    %542 = vector.extract_strided_slice %469 {offsets = [8, 0], sizes = [8, 64], strides = [1, 1]} : vector<16x64xf32> to vector<8x64xf32>
    %543 = vector.extract_strided_slice %541 {offsets = [0, 0], sizes = [8, 8], strides = [1, 1]} : vector<8x32xf32> to vector<8x8xf32>
    %544 = vector.extract_strided_slice %542 {offsets = [0, 0], sizes = [8, 8], strides = [1, 1]} : vector<8x64xf32> to vector<8x8xf32>
    %545 = vector.extract_strided_slice %542 {offsets = [0, 32], sizes = [8, 8], strides = [1, 1]} : vector<8x64xf32> to vector<8x8xf32>
    %cst_219 = arith.constant dense<0.000000e+00> : vector<8x8xf32>
    %546 = tpu.matmul %543, %544, %cst_219 {dimension_numbers = #tpu.dot_dimension_numbers<[1], [1], [0], [0], [0, 0, 1, 0], [], []>} : vector<8x8xf32>, vector<8x8xf32>, vector<8x8xf32> -> vector<8x8xf32>
    %cst_220 = arith.constant 0.176776692 : f32
    %547 = vector.broadcast %cst_220 : f32 to vector<8x8xf32>
    %548 = arith.mulf %546, %547 : vector<8x8xf32>
    %549 = arith.addf %548, %25 : vector<8x8xf32>
    %cst_221 = arith.constant dense<0xFF800000> : vector<8xf32>
    %550 = vector.multi_reduction <maximumf>, %549, %cst_221 [1] : vector<8x8xf32> to vector<8xf32>
    %551 = vector.shape_cast %550 : vector<8xf32> to vector<8x1xf32>
    %552 = vector.broadcast %551 : vector<8x1xf32> to vector<8x8xf32>
    %553 = arith.subf %549, %552 : vector<8x8xf32>
    %554 = math.exp %553 : vector<8x8xf32>
    %cst_222 = arith.constant dense<0.000000e+00> : vector<8xf32>
    %555 = vector.multi_reduction <add>, %554, %cst_222 [1] : vector<8x8xf32> to vector<8xf32>
    %556 = vector.shape_cast %555 : vector<8xf32> to vector<8x1xf32>
    %557 = vector.broadcast %556 : vector<8x1xf32> to vector<8x8xf32>
    %558 = arith.divf %554, %557 : vector<8x8xf32>
    %cst_223 = arith.constant dense<0.000000e+00> : vector<8x8xf32>
    %559 = tpu.matmul %558, %545, %cst_223 {dimension_numbers = #tpu.dot_dimension_numbers<[1], [0], [0], [1], [0, 0, 1, 1], [], []>} : vector<8x8xf32>, vector<8x8xf32>, vector<8x8xf32> -> vector<8x8xf32>
    %560 = vector.extract_strided_slice %541 {offsets = [0, 8], sizes = [8, 8], strides = [1, 1]} : vector<8x32xf32> to vector<8x8xf32>
    %561 = vector.extract_strided_slice %542 {offsets = [0, 8], sizes = [8, 8], strides = [1, 1]} : vector<8x64xf32> to vector<8x8xf32>
    %562 = vector.extract_strided_slice %542 {offsets = [0, 40], sizes = [8, 8], strides = [1, 1]} : vector<8x64xf32> to vector<8x8xf32>
    %cst_224 = arith.constant dense<0.000000e+00> : vector<8x8xf32>
    %563 = tpu.matmul %560, %561, %cst_224 {dimension_numbers = #tpu.dot_dimension_numbers<[1], [1], [0], [0], [0, 0, 1, 0], [], []>} : vector<8x8xf32>, vector<8x8xf32>, vector<8x8xf32> -> vector<8x8xf32>
    %cst_225 = arith.constant 0.176776692 : f32
    %564 = vector.broadcast %cst_225 : f32 to vector<8x8xf32>
    %565 = arith.mulf %563, %564 : vector<8x8xf32>
    %566 = arith.addf %565, %25 : vector<8x8xf32>
    %cst_226 = arith.constant dense<0xFF800000> : vector<8xf32>
    %567 = vector.multi_reduction <maximumf>, %566, %cst_226 [1] : vector<8x8xf32> to vector<8xf32>
    %568 = vector.shape_cast %567 : vector<8xf32> to vector<8x1xf32>
    %569 = vector.broadcast %568 : vector<8x1xf32> to vector<8x8xf32>
    %570 = arith.subf %566, %569 : vector<8x8xf32>
    %571 = math.exp %570 : vector<8x8xf32>
    %cst_227 = arith.constant dense<0.000000e+00> : vector<8xf32>
    %572 = vector.multi_reduction <add>, %571, %cst_227 [1] : vector<8x8xf32> to vector<8xf32>
    %573 = vector.shape_cast %572 : vector<8xf32> to vector<8x1xf32>
    %574 = vector.broadcast %573 : vector<8x1xf32> to vector<8x8xf32>
    %575 = arith.divf %571, %574 : vector<8x8xf32>
    %cst_228 = arith.constant dense<0.000000e+00> : vector<8x8xf32>
    %576 = tpu.matmul %575, %562, %cst_228 {dimension_numbers = #tpu.dot_dimension_numbers<[1], [0], [0], [1], [0, 0, 1, 1], [], []>} : vector<8x8xf32>, vector<8x8xf32>, vector<8x8xf32> -> vector<8x8xf32>
    %577 = vector.extract_strided_slice %541 {offsets = [0, 16], sizes = [8, 8], strides = [1, 1]} : vector<8x32xf32> to vector<8x8xf32>
    %578 = vector.extract_strided_slice %542 {offsets = [0, 16], sizes = [8, 8], strides = [1, 1]} : vector<8x64xf32> to vector<8x8xf32>
    %579 = vector.extract_strided_slice %542 {offsets = [0, 48], sizes = [8, 8], strides = [1, 1]} : vector<8x64xf32> to vector<8x8xf32>
    %cst_229 = arith.constant dense<0.000000e+00> : vector<8x8xf32>
    %580 = tpu.matmul %577, %578, %cst_229 {dimension_numbers = #tpu.dot_dimension_numbers<[1], [1], [0], [0], [0, 0, 1, 0], [], []>} : vector<8x8xf32>, vector<8x8xf32>, vector<8x8xf32> -> vector<8x8xf32>
    %cst_230 = arith.constant 0.176776692 : f32
    %581 = vector.broadcast %cst_230 : f32 to vector<8x8xf32>
    %582 = arith.mulf %580, %581 : vector<8x8xf32>
    %583 = arith.addf %582, %25 : vector<8x8xf32>
    %cst_231 = arith.constant dense<0xFF800000> : vector<8xf32>
    %584 = vector.multi_reduction <maximumf>, %583, %cst_231 [1] : vector<8x8xf32> to vector<8xf32>
    %585 = vector.shape_cast %584 : vector<8xf32> to vector<8x1xf32>
    %586 = vector.broadcast %585 : vector<8x1xf32> to vector<8x8xf32>
    %587 = arith.subf %583, %586 : vector<8x8xf32>
    %588 = math.exp %587 : vector<8x8xf32>
    %cst_232 = arith.constant dense<0.000000e+00> : vector<8xf32>
    %589 = vector.multi_reduction <add>, %588, %cst_232 [1] : vector<8x8xf32> to vector<8xf32>
    %590 = vector.shape_cast %589 : vector<8xf32> to vector<8x1xf32>
    %591 = vector.broadcast %590 : vector<8x1xf32> to vector<8x8xf32>
    %592 = arith.divf %588, %591 : vector<8x8xf32>
    %cst_233 = arith.constant dense<0.000000e+00> : vector<8x8xf32>
    %593 = tpu.matmul %592, %579, %cst_233 {dimension_numbers = #tpu.dot_dimension_numbers<[1], [0], [0], [1], [0, 0, 1, 1], [], []>} : vector<8x8xf32>, vector<8x8xf32>, vector<8x8xf32> -> vector<8x8xf32>
    %594 = vector.extract_strided_slice %541 {offsets = [0, 24], sizes = [8, 8], strides = [1, 1]} : vector<8x32xf32> to vector<8x8xf32>
    %595 = vector.extract_strided_slice %542 {offsets = [0, 24], sizes = [8, 8], strides = [1, 1]} : vector<8x64xf32> to vector<8x8xf32>
    %596 = vector.extract_strided_slice %542 {offsets = [0, 56], sizes = [8, 8], strides = [1, 1]} : vector<8x64xf32> to vector<8x8xf32>
    %cst_234 = arith.constant dense<0.000000e+00> : vector<8x8xf32>
    %597 = tpu.matmul %594, %595, %cst_234 {dimension_numbers = #tpu.dot_dimension_numbers<[1], [1], [0], [0], [0, 0, 1, 0], [], []>} : vector<8x8xf32>, vector<8x8xf32>, vector<8x8xf32> -> vector<8x8xf32>
    %cst_235 = arith.constant 0.176776692 : f32
    %598 = vector.broadcast %cst_235 : f32 to vector<8x8xf32>
    %599 = arith.mulf %597, %598 : vector<8x8xf32>
    %600 = arith.addf %599, %25 : vector<8x8xf32>
    %cst_236 = arith.constant dense<0xFF800000> : vector<8xf32>
    %601 = vector.multi_reduction <maximumf>, %600, %cst_236 [1] : vector<8x8xf32> to vector<8xf32>
    %602 = vector.shape_cast %601 : vector<8xf32> to vector<8x1xf32>
    %603 = vector.broadcast %602 : vector<8x1xf32> to vector<8x8xf32>
    %604 = arith.subf %600, %603 : vector<8x8xf32>
    %605 = math.exp %604 : vector<8x8xf32>
    %cst_237 = arith.constant dense<0.000000e+00> : vector<8xf32>
    %606 = vector.multi_reduction <add>, %605, %cst_237 [1] : vector<8x8xf32> to vector<8xf32>
    %607 = vector.shape_cast %606 : vector<8xf32> to vector<8x1xf32>
    %608 = vector.broadcast %607 : vector<8x1xf32> to vector<8x8xf32>
    %609 = arith.divf %605, %608 : vector<8x8xf32>
    %cst_238 = arith.constant dense<0.000000e+00> : vector<8x8xf32>
    %610 = tpu.matmul %609, %596, %cst_238 {dimension_numbers = #tpu.dot_dimension_numbers<[1], [0], [0], [1], [0, 0, 1, 1], [], []>} : vector<8x8xf32>, vector<8x8xf32>, vector<8x8xf32> -> vector<8x8xf32>
    %611 = tpu.concatenate %559, %576, %593, %610 in 1 : vector<8x8xf32>, vector<8x8xf32>, vector<8x8xf32>, vector<8x8xf32> -> vector<8x32xf32>
    %612 = tpu.concatenate %540, %611 in 0 : vector<8x32xf32>, vector<8x32xf32> -> vector<16x32xf32>
    %cst_239 = arith.constant dense<0.000000e+00> : vector<16x32xf32>
    %613 = tpu.matmul %612, %464, %cst_239 {dimension_numbers = #tpu.dot_dimension_numbers<[1], [0], [0], [1], [0, 0, 1, 1], [], []>} : vector<16x32xf32>, vector<32x32xf32>, vector<16x32xf32> -> vector<16x32xf32>
    %614 = vector.broadcast %466 : vector<1x32xf32> to vector<16x32xf32>
    %615 = arith.addf %613, %614 : vector<16x32xf32>
    %616 = arith.addf %615, %458 : vector<16x32xf32>
    %c1_240 = arith.constant 1 : index
    %c0_241 = arith.constant 0 : index
    %c0_242 = arith.constant 0 : index
    %617 = vector.load %arg11[%c1_240, %c0_241, %c0_242] : memref<2x1x32xf32, #tpu.memory_space<vmem>>, vector<1x1x32xf32>
    %618 = vector.shape_cast %617 : vector<1x1x32xf32> to vector<1x32xf32>
    %c1_243 = arith.constant 1 : index
    %c0_244 = arith.constant 0 : index
    %c0_245 = arith.constant 0 : index
    %619 = vector.load %arg12[%c1_243, %c0_244, %c0_245] : memref<2x1x32xf32, #tpu.memory_space<vmem>>, vector<1x1x32xf32>
    %620 = vector.shape_cast %619 : vector<1x1x32xf32> to vector<1x32xf32>
    %cst_246 = arith.constant dense<0.000000e+00> : vector<16xf32>
    %621 = vector.multi_reduction <add>, %616, %cst_246 [1] : vector<16x32xf32> to vector<16xf32>
    %622 = vector.shape_cast %621 : vector<16xf32> to vector<16x1xf32>
    %cst_247 = arith.constant 3.200000e+01 : f32
    %623 = vector.broadcast %cst_247 : f32 to vector<16x1xf32>
    %624 = arith.divf %622, %623 : vector<16x1xf32>
    %625 = vector.broadcast %624 : vector<16x1xf32> to vector<16x32xf32>
    %626 = arith.subf %616, %625 : vector<16x32xf32>
    %627 = arith.mulf %626, %626 : vector<16x32xf32>
    %cst_248 = arith.constant dense<0.000000e+00> : vector<16xf32>
    %628 = vector.multi_reduction <add>, %627, %cst_248 [1] : vector<16x32xf32> to vector<16xf32>
    %629 = vector.shape_cast %628 : vector<16xf32> to vector<16x1xf32>
    %cst_249 = arith.constant 3.200000e+01 : f32
    %630 = vector.broadcast %cst_249 : f32 to vector<16x1xf32>
    %631 = arith.divf %629, %630 : vector<16x1xf32>
    %632 = vector.broadcast %624 : vector<16x1xf32> to vector<16x32xf32>
    %633 = arith.subf %616, %632 : vector<16x32xf32>
    %cst_250 = arith.constant 9.99999974E-6 : f32
    %634 = vector.broadcast %cst_250 : f32 to vector<16x1xf32>
    %635 = arith.addf %631, %634 : vector<16x1xf32>
    %636 = math.rsqrt %635 : vector<16x1xf32>
    %637 = vector.broadcast %636 : vector<16x1xf32> to vector<16x32xf32>
    %638 = arith.mulf %633, %637 : vector<16x32xf32>
    %639 = vector.broadcast %618 : vector<1x32xf32> to vector<16x32xf32>
    %640 = arith.mulf %638, %639 : vector<16x32xf32>
    %641 = vector.broadcast %620 : vector<1x32xf32> to vector<16x32xf32>
    %642 = arith.addf %640, %641 : vector<16x32xf32>
    %c1_251 = arith.constant 1 : index
    %c0_252 = arith.constant 0 : index
    %c0_253 = arith.constant 0 : index
    %643 = vector.load %arg13[%c1_251, %c0_252, %c0_253] : memref<2x32x64xf32, #tpu.memory_space<vmem>>, vector<1x32x64xf32>
    %644 = vector.shape_cast %643 : vector<1x32x64xf32> to vector<32x64xf32>
    %c1_254 = arith.constant 1 : index
    %c0_255 = arith.constant 0 : index
    %c0_256 = arith.constant 0 : index
    %645 = vector.load %arg14[%c1_254, %c0_255, %c0_256] : memref<2x1x64xf32, #tpu.memory_space<vmem>>, vector<1x1x64xf32>
    %646 = vector.shape_cast %645 : vector<1x1x64xf32> to vector<1x64xf32>
    %c1_257 = arith.constant 1 : index
    %c0_258 = arith.constant 0 : index
    %c0_259 = arith.constant 0 : index
    %647 = vector.load %arg15[%c1_257, %c0_258, %c0_259] : memref<2x32x32xf32, #tpu.memory_space<vmem>>, vector<1x32x32xf32>
    %648 = vector.shape_cast %647 : vector<1x32x32xf32> to vector<32x32xf32>
    %c1_260 = arith.constant 1 : index
    %c0_261 = arith.constant 0 : index
    %c0_262 = arith.constant 0 : index
    %649 = vector.load %arg16[%c1_260, %c0_261, %c0_262] : memref<2x1x32xf32, #tpu.memory_space<vmem>>, vector<1x1x32xf32>
    %650 = vector.shape_cast %649 : vector<1x1x32xf32> to vector<1x32xf32>
    %cst_263 = arith.constant dense<0.000000e+00> : vector<16x64xf32>
    %651 = tpu.matmul %11, %644, %cst_263 {dimension_numbers = #tpu.dot_dimension_numbers<[1], [0], [0], [1], [0, 0, 1, 1], [], []>} : vector<16x32xf32>, vector<32x64xf32>, vector<16x64xf32> -> vector<16x64xf32>
    %652 = vector.broadcast %646 : vector<1x64xf32> to vector<16x64xf32>
    %653 = arith.addf %651, %652 : vector<16x64xf32>
    %654 = vector.extract_strided_slice %642 {offsets = [0, 0], sizes = [8, 32], strides = [1, 1]} : vector<16x32xf32> to vector<8x32xf32>
    %655 = vector.extract_strided_slice %653 {offsets = [0, 0], sizes = [8, 64], strides = [1, 1]} : vector<16x64xf32> to vector<8x64xf32>
    %656 = vector.extract_strided_slice %654 {offsets = [0, 0], sizes = [8, 8], strides = [1, 1]} : vector<8x32xf32> to vector<8x8xf32>
    %657 = vector.extract_strided_slice %655 {offsets = [0, 0], sizes = [8, 8], strides = [1, 1]} : vector<8x64xf32> to vector<8x8xf32>
    %658 = vector.extract_strided_slice %655 {offsets = [0, 32], sizes = [8, 8], strides = [1, 1]} : vector<8x64xf32> to vector<8x8xf32>
    %cst_264 = arith.constant dense<0.000000e+00> : vector<8x8xf32>
    %659 = tpu.matmul %656, %657, %cst_264 {dimension_numbers = #tpu.dot_dimension_numbers<[1], [1], [0], [0], [0, 0, 1, 0], [], []>} : vector<8x8xf32>, vector<8x8xf32>, vector<8x8xf32> -> vector<8x8xf32>
    %cst_265 = arith.constant 0.176776692 : f32
    %660 = vector.broadcast %cst_265 : f32 to vector<8x8xf32>
    %661 = arith.mulf %659, %660 : vector<8x8xf32>
    %662 = vector.broadcast %32 : vector<1x8xf32> to vector<8x8xf32>
    %663 = arith.addf %661, %662 : vector<8x8xf32>
    %cst_266 = arith.constant dense<0xFF800000> : vector<8xf32>
    %664 = vector.multi_reduction <maximumf>, %663, %cst_266 [1] : vector<8x8xf32> to vector<8xf32>
    %665 = vector.shape_cast %664 : vector<8xf32> to vector<8x1xf32>
    %666 = vector.broadcast %665 : vector<8x1xf32> to vector<8x8xf32>
    %667 = arith.subf %663, %666 : vector<8x8xf32>
    %668 = math.exp %667 : vector<8x8xf32>
    %cst_267 = arith.constant dense<0.000000e+00> : vector<8xf32>
    %669 = vector.multi_reduction <add>, %668, %cst_267 [1] : vector<8x8xf32> to vector<8xf32>
    %670 = vector.shape_cast %669 : vector<8xf32> to vector<8x1xf32>
    %671 = vector.broadcast %670 : vector<8x1xf32> to vector<8x8xf32>
    %672 = arith.divf %668, %671 : vector<8x8xf32>
    %cst_268 = arith.constant dense<0.000000e+00> : vector<8x8xf32>
    %673 = tpu.matmul %672, %658, %cst_268 {dimension_numbers = #tpu.dot_dimension_numbers<[1], [0], [0], [1], [0, 0, 1, 1], [], []>} : vector<8x8xf32>, vector<8x8xf32>, vector<8x8xf32> -> vector<8x8xf32>
    %674 = vector.extract_strided_slice %654 {offsets = [0, 8], sizes = [8, 8], strides = [1, 1]} : vector<8x32xf32> to vector<8x8xf32>
    %675 = vector.extract_strided_slice %655 {offsets = [0, 8], sizes = [8, 8], strides = [1, 1]} : vector<8x64xf32> to vector<8x8xf32>
    %676 = vector.extract_strided_slice %655 {offsets = [0, 40], sizes = [8, 8], strides = [1, 1]} : vector<8x64xf32> to vector<8x8xf32>
    %cst_269 = arith.constant dense<0.000000e+00> : vector<8x8xf32>
    %677 = tpu.matmul %674, %675, %cst_269 {dimension_numbers = #tpu.dot_dimension_numbers<[1], [1], [0], [0], [0, 0, 1, 0], [], []>} : vector<8x8xf32>, vector<8x8xf32>, vector<8x8xf32> -> vector<8x8xf32>
    %cst_270 = arith.constant 0.176776692 : f32
    %678 = vector.broadcast %cst_270 : f32 to vector<8x8xf32>
    %679 = arith.mulf %677, %678 : vector<8x8xf32>
    %680 = vector.broadcast %32 : vector<1x8xf32> to vector<8x8xf32>
    %681 = arith.addf %679, %680 : vector<8x8xf32>
    %cst_271 = arith.constant dense<0xFF800000> : vector<8xf32>
    %682 = vector.multi_reduction <maximumf>, %681, %cst_271 [1] : vector<8x8xf32> to vector<8xf32>
    %683 = vector.shape_cast %682 : vector<8xf32> to vector<8x1xf32>
    %684 = vector.broadcast %683 : vector<8x1xf32> to vector<8x8xf32>
    %685 = arith.subf %681, %684 : vector<8x8xf32>
    %686 = math.exp %685 : vector<8x8xf32>
    %cst_272 = arith.constant dense<0.000000e+00> : vector<8xf32>
    %687 = vector.multi_reduction <add>, %686, %cst_272 [1] : vector<8x8xf32> to vector<8xf32>
    %688 = vector.shape_cast %687 : vector<8xf32> to vector<8x1xf32>
    %689 = vector.broadcast %688 : vector<8x1xf32> to vector<8x8xf32>
    %690 = arith.divf %686, %689 : vector<8x8xf32>
    %cst_273 = arith.constant dense<0.000000e+00> : vector<8x8xf32>
    %691 = tpu.matmul %690, %676, %cst_273 {dimension_numbers = #tpu.dot_dimension_numbers<[1], [0], [0], [1], [0, 0, 1, 1], [], []>} : vector<8x8xf32>, vector<8x8xf32>, vector<8x8xf32> -> vector<8x8xf32>
    %692 = vector.extract_strided_slice %654 {offsets = [0, 16], sizes = [8, 8], strides = [1, 1]} : vector<8x32xf32> to vector<8x8xf32>
    %693 = vector.extract_strided_slice %655 {offsets = [0, 16], sizes = [8, 8], strides = [1, 1]} : vector<8x64xf32> to vector<8x8xf32>
    %694 = vector.extract_strided_slice %655 {offsets = [0, 48], sizes = [8, 8], strides = [1, 1]} : vector<8x64xf32> to vector<8x8xf32>
    %cst_274 = arith.constant dense<0.000000e+00> : vector<8x8xf32>
    %695 = tpu.matmul %692, %693, %cst_274 {dimension_numbers = #tpu.dot_dimension_numbers<[1], [1], [0], [0], [0, 0, 1, 0], [], []>} : vector<8x8xf32>, vector<8x8xf32>, vector<8x8xf32> -> vector<8x8xf32>
    %cst_275 = arith.constant 0.176776692 : f32
    %696 = vector.broadcast %cst_275 : f32 to vector<8x8xf32>
    %697 = arith.mulf %695, %696 : vector<8x8xf32>
    %698 = vector.broadcast %32 : vector<1x8xf32> to vector<8x8xf32>
    %699 = arith.addf %697, %698 : vector<8x8xf32>
    %cst_276 = arith.constant dense<0xFF800000> : vector<8xf32>
    %700 = vector.multi_reduction <maximumf>, %699, %cst_276 [1] : vector<8x8xf32> to vector<8xf32>
    %701 = vector.shape_cast %700 : vector<8xf32> to vector<8x1xf32>
    %702 = vector.broadcast %701 : vector<8x1xf32> to vector<8x8xf32>
    %703 = arith.subf %699, %702 : vector<8x8xf32>
    %704 = math.exp %703 : vector<8x8xf32>
    %cst_277 = arith.constant dense<0.000000e+00> : vector<8xf32>
    %705 = vector.multi_reduction <add>, %704, %cst_277 [1] : vector<8x8xf32> to vector<8xf32>
    %706 = vector.shape_cast %705 : vector<8xf32> to vector<8x1xf32>
    %707 = vector.broadcast %706 : vector<8x1xf32> to vector<8x8xf32>
    %708 = arith.divf %704, %707 : vector<8x8xf32>
    %cst_278 = arith.constant dense<0.000000e+00> : vector<8x8xf32>
    %709 = tpu.matmul %708, %694, %cst_278 {dimension_numbers = #tpu.dot_dimension_numbers<[1], [0], [0], [1], [0, 0, 1, 1], [], []>} : vector<8x8xf32>, vector<8x8xf32>, vector<8x8xf32> -> vector<8x8xf32>
    %710 = vector.extract_strided_slice %654 {offsets = [0, 24], sizes = [8, 8], strides = [1, 1]} : vector<8x32xf32> to vector<8x8xf32>
    %711 = vector.extract_strided_slice %655 {offsets = [0, 24], sizes = [8, 8], strides = [1, 1]} : vector<8x64xf32> to vector<8x8xf32>
    %712 = vector.extract_strided_slice %655 {offsets = [0, 56], sizes = [8, 8], strides = [1, 1]} : vector<8x64xf32> to vector<8x8xf32>
    %cst_279 = arith.constant dense<0.000000e+00> : vector<8x8xf32>
    %713 = tpu.matmul %710, %711, %cst_279 {dimension_numbers = #tpu.dot_dimension_numbers<[1], [1], [0], [0], [0, 0, 1, 0], [], []>} : vector<8x8xf32>, vector<8x8xf32>, vector<8x8xf32> -> vector<8x8xf32>
    %cst_280 = arith.constant 0.176776692 : f32
    %714 = vector.broadcast %cst_280 : f32 to vector<8x8xf32>
    %715 = arith.mulf %713, %714 : vector<8x8xf32>
    %716 = vector.broadcast %32 : vector<1x8xf32> to vector<8x8xf32>
    %717 = arith.addf %715, %716 : vector<8x8xf32>
    %cst_281 = arith.constant dense<0xFF800000> : vector<8xf32>
    %718 = vector.multi_reduction <maximumf>, %717, %cst_281 [1] : vector<8x8xf32> to vector<8xf32>
    %719 = vector.shape_cast %718 : vector<8xf32> to vector<8x1xf32>
    %720 = vector.broadcast %719 : vector<8x1xf32> to vector<8x8xf32>
    %721 = arith.subf %717, %720 : vector<8x8xf32>
    %722 = math.exp %721 : vector<8x8xf32>
    %cst_282 = arith.constant dense<0.000000e+00> : vector<8xf32>
    %723 = vector.multi_reduction <add>, %722, %cst_282 [1] : vector<8x8xf32> to vector<8xf32>
    %724 = vector.shape_cast %723 : vector<8xf32> to vector<8x1xf32>
    %725 = vector.broadcast %724 : vector<8x1xf32> to vector<8x8xf32>
    %726 = arith.divf %722, %725 : vector<8x8xf32>
    %cst_283 = arith.constant dense<0.000000e+00> : vector<8x8xf32>
    %727 = tpu.matmul %726, %712, %cst_283 {dimension_numbers = #tpu.dot_dimension_numbers<[1], [0], [0], [1], [0, 0, 1, 1], [], []>} : vector<8x8xf32>, vector<8x8xf32>, vector<8x8xf32> -> vector<8x8xf32>
    %728 = tpu.concatenate %673, %691, %709, %727 in 1 : vector<8x8xf32>, vector<8x8xf32>, vector<8x8xf32>, vector<8x8xf32> -> vector<8x32xf32>
    %729 = vector.extract_strided_slice %642 {offsets = [8, 0], sizes = [8, 32], strides = [1, 1]} : vector<16x32xf32> to vector<8x32xf32>
    %730 = vector.extract_strided_slice %653 {offsets = [8, 0], sizes = [8, 64], strides = [1, 1]} : vector<16x64xf32> to vector<8x64xf32>
    %731 = vector.extract_strided_slice %729 {offsets = [0, 0], sizes = [8, 8], strides = [1, 1]} : vector<8x32xf32> to vector<8x8xf32>
    %732 = vector.extract_strided_slice %730 {offsets = [0, 0], sizes = [8, 8], strides = [1, 1]} : vector<8x64xf32> to vector<8x8xf32>
    %733 = vector.extract_strided_slice %730 {offsets = [0, 32], sizes = [8, 8], strides = [1, 1]} : vector<8x64xf32> to vector<8x8xf32>
    %cst_284 = arith.constant dense<0.000000e+00> : vector<8x8xf32>
    %734 = tpu.matmul %731, %732, %cst_284 {dimension_numbers = #tpu.dot_dimension_numbers<[1], [1], [0], [0], [0, 0, 1, 0], [], []>} : vector<8x8xf32>, vector<8x8xf32>, vector<8x8xf32> -> vector<8x8xf32>
    %cst_285 = arith.constant 0.176776692 : f32
    %735 = vector.broadcast %cst_285 : f32 to vector<8x8xf32>
    %736 = arith.mulf %734, %735 : vector<8x8xf32>
    %737 = vector.broadcast %39 : vector<1x8xf32> to vector<8x8xf32>
    %738 = arith.addf %736, %737 : vector<8x8xf32>
    %cst_286 = arith.constant dense<0xFF800000> : vector<8xf32>
    %739 = vector.multi_reduction <maximumf>, %738, %cst_286 [1] : vector<8x8xf32> to vector<8xf32>
    %740 = vector.shape_cast %739 : vector<8xf32> to vector<8x1xf32>
    %741 = vector.broadcast %740 : vector<8x1xf32> to vector<8x8xf32>
    %742 = arith.subf %738, %741 : vector<8x8xf32>
    %743 = math.exp %742 : vector<8x8xf32>
    %cst_287 = arith.constant dense<0.000000e+00> : vector<8xf32>
    %744 = vector.multi_reduction <add>, %743, %cst_287 [1] : vector<8x8xf32> to vector<8xf32>
    %745 = vector.shape_cast %744 : vector<8xf32> to vector<8x1xf32>
    %746 = vector.broadcast %745 : vector<8x1xf32> to vector<8x8xf32>
    %747 = arith.divf %743, %746 : vector<8x8xf32>
    %cst_288 = arith.constant dense<0.000000e+00> : vector<8x8xf32>
    %748 = tpu.matmul %747, %733, %cst_288 {dimension_numbers = #tpu.dot_dimension_numbers<[1], [0], [0], [1], [0, 0, 1, 1], [], []>} : vector<8x8xf32>, vector<8x8xf32>, vector<8x8xf32> -> vector<8x8xf32>
    %749 = vector.extract_strided_slice %729 {offsets = [0, 8], sizes = [8, 8], strides = [1, 1]} : vector<8x32xf32> to vector<8x8xf32>
    %750 = vector.extract_strided_slice %730 {offsets = [0, 8], sizes = [8, 8], strides = [1, 1]} : vector<8x64xf32> to vector<8x8xf32>
    %751 = vector.extract_strided_slice %730 {offsets = [0, 40], sizes = [8, 8], strides = [1, 1]} : vector<8x64xf32> to vector<8x8xf32>
    %cst_289 = arith.constant dense<0.000000e+00> : vector<8x8xf32>
    %752 = tpu.matmul %749, %750, %cst_289 {dimension_numbers = #tpu.dot_dimension_numbers<[1], [1], [0], [0], [0, 0, 1, 0], [], []>} : vector<8x8xf32>, vector<8x8xf32>, vector<8x8xf32> -> vector<8x8xf32>
    %cst_290 = arith.constant 0.176776692 : f32
    %753 = vector.broadcast %cst_290 : f32 to vector<8x8xf32>
    %754 = arith.mulf %752, %753 : vector<8x8xf32>
    %755 = vector.broadcast %39 : vector<1x8xf32> to vector<8x8xf32>
    %756 = arith.addf %754, %755 : vector<8x8xf32>
    %cst_291 = arith.constant dense<0xFF800000> : vector<8xf32>
    %757 = vector.multi_reduction <maximumf>, %756, %cst_291 [1] : vector<8x8xf32> to vector<8xf32>
    %758 = vector.shape_cast %757 : vector<8xf32> to vector<8x1xf32>
    %759 = vector.broadcast %758 : vector<8x1xf32> to vector<8x8xf32>
    %760 = arith.subf %756, %759 : vector<8x8xf32>
    %761 = math.exp %760 : vector<8x8xf32>
    %cst_292 = arith.constant dense<0.000000e+00> : vector<8xf32>
    %762 = vector.multi_reduction <add>, %761, %cst_292 [1] : vector<8x8xf32> to vector<8xf32>
    %763 = vector.shape_cast %762 : vector<8xf32> to vector<8x1xf32>
    %764 = vector.broadcast %763 : vector<8x1xf32> to vector<8x8xf32>
    %765 = arith.divf %761, %764 : vector<8x8xf32>
    %cst_293 = arith.constant dense<0.000000e+00> : vector<8x8xf32>
    %766 = tpu.matmul %765, %751, %cst_293 {dimension_numbers = #tpu.dot_dimension_numbers<[1], [0], [0], [1], [0, 0, 1, 1], [], []>} : vector<8x8xf32>, vector<8x8xf32>, vector<8x8xf32> -> vector<8x8xf32>
    %767 = vector.extract_strided_slice %729 {offsets = [0, 16], sizes = [8, 8], strides = [1, 1]} : vector<8x32xf32> to vector<8x8xf32>
    %768 = vector.extract_strided_slice %730 {offsets = [0, 16], sizes = [8, 8], strides = [1, 1]} : vector<8x64xf32> to vector<8x8xf32>
    %769 = vector.extract_strided_slice %730 {offsets = [0, 48], sizes = [8, 8], strides = [1, 1]} : vector<8x64xf32> to vector<8x8xf32>
    %cst_294 = arith.constant dense<0.000000e+00> : vector<8x8xf32>
    %770 = tpu.matmul %767, %768, %cst_294 {dimension_numbers = #tpu.dot_dimension_numbers<[1], [1], [0], [0], [0, 0, 1, 0], [], []>} : vector<8x8xf32>, vector<8x8xf32>, vector<8x8xf32> -> vector<8x8xf32>
    %cst_295 = arith.constant 0.176776692 : f32
    %771 = vector.broadcast %cst_295 : f32 to vector<8x8xf32>
    %772 = arith.mulf %770, %771 : vector<8x8xf32>
    %773 = vector.broadcast %39 : vector<1x8xf32> to vector<8x8xf32>
    %774 = arith.addf %772, %773 : vector<8x8xf32>
    %cst_296 = arith.constant dense<0xFF800000> : vector<8xf32>
    %775 = vector.multi_reduction <maximumf>, %774, %cst_296 [1] : vector<8x8xf32> to vector<8xf32>
    %776 = vector.shape_cast %775 : vector<8xf32> to vector<8x1xf32>
    %777 = vector.broadcast %776 : vector<8x1xf32> to vector<8x8xf32>
    %778 = arith.subf %774, %777 : vector<8x8xf32>
    %779 = math.exp %778 : vector<8x8xf32>
    %cst_297 = arith.constant dense<0.000000e+00> : vector<8xf32>
    %780 = vector.multi_reduction <add>, %779, %cst_297 [1] : vector<8x8xf32> to vector<8xf32>
    %781 = vector.shape_cast %780 : vector<8xf32> to vector<8x1xf32>
    %782 = vector.broadcast %781 : vector<8x1xf32> to vector<8x8xf32>
    %783 = arith.divf %779, %782 : vector<8x8xf32>
    %cst_298 = arith.constant dense<0.000000e+00> : vector<8x8xf32>
    %784 = tpu.matmul %783, %769, %cst_298 {dimension_numbers = #tpu.dot_dimension_numbers<[1], [0], [0], [1], [0, 0, 1, 1], [], []>} : vector<8x8xf32>, vector<8x8xf32>, vector<8x8xf32> -> vector<8x8xf32>
    %785 = vector.extract_strided_slice %729 {offsets = [0, 24], sizes = [8, 8], strides = [1, 1]} : vector<8x32xf32> to vector<8x8xf32>
    %786 = vector.extract_strided_slice %730 {offsets = [0, 24], sizes = [8, 8], strides = [1, 1]} : vector<8x64xf32> to vector<8x8xf32>
    %787 = vector.extract_strided_slice %730 {offsets = [0, 56], sizes = [8, 8], strides = [1, 1]} : vector<8x64xf32> to vector<8x8xf32>
    %cst_299 = arith.constant dense<0.000000e+00> : vector<8x8xf32>
    %788 = tpu.matmul %785, %786, %cst_299 {dimension_numbers = #tpu.dot_dimension_numbers<[1], [1], [0], [0], [0, 0, 1, 0], [], []>} : vector<8x8xf32>, vector<8x8xf32>, vector<8x8xf32> -> vector<8x8xf32>
    %cst_300 = arith.constant 0.176776692 : f32
    %789 = vector.broadcast %cst_300 : f32 to vector<8x8xf32>
    %790 = arith.mulf %788, %789 : vector<8x8xf32>
    %791 = vector.broadcast %39 : vector<1x8xf32> to vector<8x8xf32>
    %792 = arith.addf %790, %791 : vector<8x8xf32>
    %cst_301 = arith.constant dense<0xFF800000> : vector<8xf32>
    %793 = vector.multi_reduction <maximumf>, %792, %cst_301 [1] : vector<8x8xf32> to vector<8xf32>
    %794 = vector.shape_cast %793 : vector<8xf32> to vector<8x1xf32>
    %795 = vector.broadcast %794 : vector<8x1xf32> to vector<8x8xf32>
    %796 = arith.subf %792, %795 : vector<8x8xf32>
    %797 = math.exp %796 : vector<8x8xf32>
    %cst_302 = arith.constant dense<0.000000e+00> : vector<8xf32>
    %798 = vector.multi_reduction <add>, %797, %cst_302 [1] : vector<8x8xf32> to vector<8xf32>
    %799 = vector.shape_cast %798 : vector<8xf32> to vector<8x1xf32>
    %800 = vector.broadcast %799 : vector<8x1xf32> to vector<8x8xf32>
    %801 = arith.divf %797, %800 : vector<8x8xf32>
    %cst_303 = arith.constant dense<0.000000e+00> : vector<8x8xf32>
    %802 = tpu.matmul %801, %787, %cst_303 {dimension_numbers = #tpu.dot_dimension_numbers<[1], [0], [0], [1], [0, 0, 1, 1], [], []>} : vector<8x8xf32>, vector<8x8xf32>, vector<8x8xf32> -> vector<8x8xf32>
    %803 = tpu.concatenate %748, %766, %784, %802 in 1 : vector<8x8xf32>, vector<8x8xf32>, vector<8x8xf32>, vector<8x8xf32> -> vector<8x32xf32>
    %804 = tpu.concatenate %728, %803 in 0 : vector<8x32xf32>, vector<8x32xf32> -> vector<16x32xf32>
    %cst_304 = arith.constant dense<0.000000e+00> : vector<16x32xf32>
    %805 = tpu.matmul %804, %648, %cst_304 {dimension_numbers = #tpu.dot_dimension_numbers<[1], [0], [0], [1], [0, 0, 1, 1], [], []>} : vector<16x32xf32>, vector<32x32xf32>, vector<16x32xf32> -> vector<16x32xf32>
    %806 = vector.broadcast %650 : vector<1x32xf32> to vector<16x32xf32>
    %807 = arith.addf %805, %806 : vector<16x32xf32>
    %808 = arith.addf %807, %642 : vector<16x32xf32>
    %c1_305 = arith.constant 1 : index
    %c0_306 = arith.constant 0 : index
    %c0_307 = arith.constant 0 : index
    %809 = vector.load %arg17[%c1_305, %c0_306, %c0_307] : memref<2x1x32xf32, #tpu.memory_space<vmem>>, vector<1x1x32xf32>
    %810 = vector.shape_cast %809 : vector<1x1x32xf32> to vector<1x32xf32>
    %c1_308 = arith.constant 1 : index
    %c0_309 = arith.constant 0 : index
    %c0_310 = arith.constant 0 : index
    %811 = vector.load %arg18[%c1_308, %c0_309, %c0_310] : memref<2x1x32xf32, #tpu.memory_space<vmem>>, vector<1x1x32xf32>
    %812 = vector.shape_cast %811 : vector<1x1x32xf32> to vector<1x32xf32>
    %cst_311 = arith.constant dense<0.000000e+00> : vector<16xf32>
    %813 = vector.multi_reduction <add>, %808, %cst_311 [1] : vector<16x32xf32> to vector<16xf32>
    %814 = vector.shape_cast %813 : vector<16xf32> to vector<16x1xf32>
    %cst_312 = arith.constant 3.200000e+01 : f32
    %815 = vector.broadcast %cst_312 : f32 to vector<16x1xf32>
    %816 = arith.divf %814, %815 : vector<16x1xf32>
    %817 = vector.broadcast %816 : vector<16x1xf32> to vector<16x32xf32>
    %818 = arith.subf %808, %817 : vector<16x32xf32>
    %819 = arith.mulf %818, %818 : vector<16x32xf32>
    %cst_313 = arith.constant dense<0.000000e+00> : vector<16xf32>
    %820 = vector.multi_reduction <add>, %819, %cst_313 [1] : vector<16x32xf32> to vector<16xf32>
    %821 = vector.shape_cast %820 : vector<16xf32> to vector<16x1xf32>
    %cst_314 = arith.constant 3.200000e+01 : f32
    %822 = vector.broadcast %cst_314 : f32 to vector<16x1xf32>
    %823 = arith.divf %821, %822 : vector<16x1xf32>
    %824 = vector.broadcast %816 : vector<16x1xf32> to vector<16x32xf32>
    %825 = arith.subf %808, %824 : vector<16x32xf32>
    %cst_315 = arith.constant 9.99999974E-6 : f32
    %826 = vector.broadcast %cst_315 : f32 to vector<16x1xf32>
    %827 = arith.addf %823, %826 : vector<16x1xf32>
    %828 = math.rsqrt %827 : vector<16x1xf32>
    %829 = vector.broadcast %828 : vector<16x1xf32> to vector<16x32xf32>
    %830 = arith.mulf %825, %829 : vector<16x32xf32>
    %831 = vector.broadcast %810 : vector<1x32xf32> to vector<16x32xf32>
    %832 = arith.mulf %830, %831 : vector<16x32xf32>
    %833 = vector.broadcast %812 : vector<1x32xf32> to vector<16x32xf32>
    %834 = arith.addf %832, %833 : vector<16x32xf32>
    %c1_316 = arith.constant 1 : index
    %c0_317 = arith.constant 0 : index
    %c0_318 = arith.constant 0 : index
    %835 = vector.load %arg21[%c1_316, %c0_317, %c0_318] : memref<2x32x128xf32, #tpu.memory_space<vmem>>, vector<1x32x128xf32>
    %836 = vector.shape_cast %835 : vector<1x32x128xf32> to vector<32x128xf32>
    %cst_319 = arith.constant dense<0.000000e+00> : vector<16x128xf32>
    %837 = tpu.matmul %834, %836, %cst_319 {dimension_numbers = #tpu.dot_dimension_numbers<[1], [0], [0], [1], [0, 0, 1, 1], [], []>} : vector<16x32xf32>, vector<32x128xf32>, vector<16x128xf32> -> vector<16x128xf32>
    %c1_320 = arith.constant 1 : index
    %c0_321 = arith.constant 0 : index
    %c0_322 = arith.constant 0 : index
    %838 = vector.load %arg22[%c1_320, %c0_321, %c0_322] : memref<2x1x128xf32, #tpu.memory_space<vmem>>, vector<1x1x128xf32>
    %839 = vector.shape_cast %838 : vector<1x1x128xf32> to vector<1x128xf32>
    %840 = vector.broadcast %839 : vector<1x128xf32> to vector<16x128xf32>
    %841 = arith.addf %837, %840 : vector<16x128xf32>
    %cst_323 = arith.constant 0.000000e+00 : f32
    %842 = vector.broadcast %cst_323 : f32 to vector<16x128xf32>
    %843 = arith.maximumf %841, %842 : vector<16x128xf32>
    %c1_324 = arith.constant 1 : index
    %c0_325 = arith.constant 0 : index
    %c0_326 = arith.constant 0 : index
    %844 = vector.load %arg23[%c1_324, %c0_325, %c0_326] : memref<2x128x32xf32, #tpu.memory_space<vmem>>, vector<1x128x32xf32>
    %845 = vector.shape_cast %844 : vector<1x128x32xf32> to vector<128x32xf32>
    %cst_327 = arith.constant dense<0.000000e+00> : vector<16x32xf32>
    %846 = tpu.matmul %843, %845, %cst_327 {dimension_numbers = #tpu.dot_dimension_numbers<[1], [0], [0], [1], [0, 0, 1, 1], [], []>} : vector<16x128xf32>, vector<128x32xf32>, vector<16x32xf32> -> vector<16x32xf32>
    %c1_328 = arith.constant 1 : index
    %c0_329 = arith.constant 0 : index
    %c0_330 = arith.constant 0 : index
    %847 = vector.load %arg24[%c1_328, %c0_329, %c0_330] : memref<2x1x32xf32, #tpu.memory_space<vmem>>, vector<1x1x32xf32>
    %848 = vector.shape_cast %847 : vector<1x1x32xf32> to vector<1x32xf32>
    %849 = vector.broadcast %848 : vector<1x32xf32> to vector<16x32xf32>
    %850 = arith.addf %846, %849 : vector<16x32xf32>
    %851 = arith.addf %850, %834 : vector<16x32xf32>
    %c1_331 = arith.constant 1 : index
    %c0_332 = arith.constant 0 : index
    %c0_333 = arith.constant 0 : index
    %852 = vector.load %arg19[%c1_331, %c0_332, %c0_333] : memref<2x1x32xf32, #tpu.memory_space<vmem>>, vector<1x1x32xf32>
    %853 = vector.shape_cast %852 : vector<1x1x32xf32> to vector<1x32xf32>
    %c1_334 = arith.constant 1 : index
    %c0_335 = arith.constant 0 : index
    %c0_336 = arith.constant 0 : index
    %854 = vector.load %arg20[%c1_334, %c0_335, %c0_336] : memref<2x1x32xf32, #tpu.memory_space<vmem>>, vector<1x1x32xf32>
    %855 = vector.shape_cast %854 : vector<1x1x32xf32> to vector<1x32xf32>
    %cst_337 = arith.constant dense<0.000000e+00> : vector<16xf32>
    %856 = vector.multi_reduction <add>, %851, %cst_337 [1] : vector<16x32xf32> to vector<16xf32>
    %857 = vector.shape_cast %856 : vector<16xf32> to vector<16x1xf32>
    %cst_338 = arith.constant 3.200000e+01 : f32
    %858 = vector.broadcast %cst_338 : f32 to vector<16x1xf32>
    %859 = arith.divf %857, %858 : vector<16x1xf32>
    %860 = vector.broadcast %859 : vector<16x1xf32> to vector<16x32xf32>
    %861 = arith.subf %851, %860 : vector<16x32xf32>
    %862 = arith.mulf %861, %861 : vector<16x32xf32>
    %cst_339 = arith.constant dense<0.000000e+00> : vector<16xf32>
    %863 = vector.multi_reduction <add>, %862, %cst_339 [1] : vector<16x32xf32> to vector<16xf32>
    %864 = vector.shape_cast %863 : vector<16xf32> to vector<16x1xf32>
    %cst_340 = arith.constant 3.200000e+01 : f32
    %865 = vector.broadcast %cst_340 : f32 to vector<16x1xf32>
    %866 = arith.divf %864, %865 : vector<16x1xf32>
    %867 = vector.broadcast %859 : vector<16x1xf32> to vector<16x32xf32>
    %868 = arith.subf %851, %867 : vector<16x32xf32>
    %cst_341 = arith.constant 9.99999974E-6 : f32
    %869 = vector.broadcast %cst_341 : f32 to vector<16x1xf32>
    %870 = arith.addf %866, %869 : vector<16x1xf32>
    %871 = math.rsqrt %870 : vector<16x1xf32>
    %872 = vector.broadcast %871 : vector<16x1xf32> to vector<16x32xf32>
    %873 = arith.mulf %868, %872 : vector<16x32xf32>
    %874 = vector.broadcast %853 : vector<1x32xf32> to vector<16x32xf32>
    %875 = arith.mulf %873, %874 : vector<16x32xf32>
    %876 = vector.broadcast %855 : vector<1x32xf32> to vector<16x32xf32>
    %877 = arith.addf %875, %876 : vector<16x32xf32>
    %c0_342 = arith.constant 0 : index
    %c0_343 = arith.constant 0 : index
    %878 = vector.load %arg25[%c0_342, %c0_343] : memref<32x128xf32, #tpu.memory_space<vmem>>, vector<32x128xf32>
    %cst_344 = arith.constant dense<0.000000e+00> : vector<16x128xf32>
    %879 = tpu.matmul %877, %878, %cst_344 {dimension_numbers = #tpu.dot_dimension_numbers<[1], [0], [0], [1], [0, 0, 1, 1], [], []>} : vector<16x32xf32>, vector<32x128xf32>, vector<16x128xf32> -> vector<16x128xf32>
    %c0_345 = arith.constant 0 : index
    %c0_346 = arith.constant 0 : index
    %880 = vector.load %arg26[%c0_345, %c0_346] : memref<1x128xf32, #tpu.memory_space<vmem>>, vector<1x128xf32>
    %881 = vector.broadcast %880 : vector<1x128xf32> to vector<16x128xf32>
    %882 = arith.addf %879, %881 : vector<16x128xf32>
    %c0_347 = arith.constant 0 : index
    %c0_348 = arith.constant 0 : index
    %883 = vector.load %arg27[%c0_347, %c0_348] : memref<16x128xf32, #tpu.memory_space<vmem>>, vector<16x128xf32>
    tpu.vector_store %arg27[%c0_347, %c0_348], %882 {strides = array<i32>} : memref<16x128xf32, #tpu.memory_space<vmem>>, vector<16x128xf32>,
    return
  }
  func.func @transform_0(%arg0: i32) -> (i32, i32) {
    %c0_i32 = arith.constant 0 : i32
    %c0_i32_0 = arith.constant 0 : i32
    %c0_i32_1 = arith.constant 0 : i32
    return %c0_i32, %c0_i32_0 : i32, i32
  }
  func.func @transform_1(%arg0: i32) -> (i32, i32) {
    %c0_i32 = arith.constant 0 : i32
    %c0_i32_0 = arith.constant 0 : i32
    %c0_i32_1 = arith.constant 0 : i32
    return %c0_i32, %c0_i32_0 : i32, i32
  }
  func.func @transform_2(%arg0: i32) -> (i32, i32, i32) {
    %c0_i32 = arith.constant 0 : i32
    %c0_i32_0 = arith.constant 0 : i32
    %c0_i32_1 = arith.constant 0 : i32
    %c0_i32_2 = arith.constant 0 : i32
    return %c0_i32, %c0_i32_0, %c0_i32_1 : i32, i32, i32
  }
  func.func @transform_3(%arg0: i32) -> (i32, i32, i32) {
    %c0_i32 = arith.constant 0 : i32
    %c0_i32_0 = arith.constant 0 : i32
    %c0_i32_1 = arith.constant 0 : i32
    %c0_i32_2 = arith.constant 0 : i32
    return %c0_i32, %c0_i32_0, %c0_i32_1 : i32, i32, i32
  }
  func.func @transform_4(%arg0: i32) -> (i32, i32) {
    %c0_i32 = arith.constant 0 : i32
    %c0_i32_0 = arith.constant 0 : i32
    %c0_i32_1 = arith.constant 0 : i32
    return %c0_i32, %c0_i32_0 : i32, i32
  }
  func.func @transform_5(%arg0: i32) -> (i32, i32) {
    %c0_i32 = arith.constant 0 : i32
    %c0_i32_0 = arith.constant 0 : i32
    %c0_i32_1 = arith.constant 0 : i32
    return %c0_i32, %c0_i32_0 : i32, i32
  }
  func.func @transform_6(%arg0: i32) -> (i32, i32, i32) {
    %c0_i32 = arith.constant 0 : i32
    %c0_i32_0 = arith.constant 0 : i32
    %c0_i32_1 = arith.constant 0 : i32
    %c0_i32_2 = arith.constant 0 : i32
    return %c0_i32, %c0_i32_0, %c0_i32_1 : i32, i32, i32
  }
  func.func @transform_7(%arg0: i32) -> (i32, i32, i32) {
    %c0_i32 = arith.constant 0 : i32
    %c0_i32_0 = arith.constant 0 : i32
    %c0_i32_1 = arith.constant 0 : i32
    %c0_i32_2 = arith.constant 0 : i32
    return %c0_i32, %c0_i32_0, %c0_i32_1 : i32, i32, i32
  }
  func.func @transform_8(%arg0: i32) -> (i32, i32, i32) {
    %c0_i32 = arith.constant 0 : i32
    %c0_i32_0 = arith.constant 0 : i32
    %c0_i32_1 = arith.constant 0 : i32
    %c0_i32_2 = arith.constant 0 : i32
    return %c0_i32, %c0_i32_0, %c0_i32_1 : i32, i32, i32
  }
  func.func @transform_9(%arg0: i32) -> (i32, i32, i32) {
    %c0_i32 = arith.constant 0 : i32
    %c0_i32_0 = arith.constant 0 : i32
    %c0_i32_1 = arith.constant 0 : i32
    %c0_i32_2 = arith.constant 0 : i32
    return %c0_i32, %c0_i32_0, %c0_i32_1 : i32, i32, i32
  }
  func.func @transform_10(%arg0: i32) -> (i32, i32, i32) {
    %c0_i32 = arith.constant 0 : i32
    %c0_i32_0 = arith.constant 0 : i32
    %c0_i32_1 = arith.constant 0 : i32
    %c0_i32_2 = arith.constant 0 : i32
    return %c0_i32, %c0_i32_0, %c0_i32_1 : i32, i32, i32
  }
  func.func @transform_11(%arg0: i32) -> (i32, i32, i32) {
    %c0_i32 = arith.constant 0 : i32
    %c0_i32_0 = arith.constant 0 : i32
    %c0_i32_1 = arith.constant 0 : i32
    %c0_i32_2 = arith.constant 0 : i32
    return %c0_i32, %c0_i32_0, %c0_i32_1 : i32, i32, i32
  }
  func.func @transform_12(%arg0: i32) -> (i32, i32, i32) {
    %c0_i32 = arith.constant 0 : i32
    %c0_i32_0 = arith.constant 0 : i32
    %c0_i32_1 = arith.constant 0 : i32
    %c0_i32_2 = arith.constant 0 : i32
    return %c0_i32, %c0_i32_0, %c0_i32_1 : i32, i32, i32
  }
  func.func @transform_13(%arg0: i32) -> (i32, i32, i32) {
    %c0_i32 = arith.constant 0 : i32
    %c0_i32_0 = arith.constant 0 : i32
    %c0_i32_1 = arith.constant 0 : i32
    %c0_i32_2 = arith.constant 0 : i32
    return %c0_i32, %c0_i32_0, %c0_i32_1 : i32, i32, i32
  }
  func.func @transform_14(%arg0: i32) -> (i32, i32, i32) {
    %c0_i32 = arith.constant 0 : i32
    %c0_i32_0 = arith.constant 0 : i32
    %c0_i32_1 = arith.constant 0 : i32
    %c0_i32_2 = arith.constant 0 : i32
    return %c0_i32, %c0_i32_0, %c0_i32_1 : i32, i32, i32
  }
  func.func @transform_15(%arg0: i32) -> (i32, i32, i32) {
    %c0_i32 = arith.constant 0 : i32
    %c0_i32_0 = arith.constant 0 : i32
    %c0_i32_1 = arith.constant 0 : i32
    %c0_i32_2 = arith.constant 0 : i32
    return %c0_i32, %c0_i32_0, %c0_i32_1 : i32, i32, i32
  }
  func.func @transform_16(%arg0: i32) -> (i32, i32, i32) {
    %c0_i32 = arith.constant 0 : i32
    %c0_i32_0 = arith.constant 0 : i32
    %c0_i32_1 = arith.constant 0 : i32
    %c0_i32_2 = arith.constant 0 : i32
    return %c0_i32, %c0_i32_0, %c0_i32_1 : i32, i32, i32
  }
  func.func @transform_17(%arg0: i32) -> (i32, i32, i32) {
    %c0_i32 = arith.constant 0 : i32
    %c0_i32_0 = arith.constant 0 : i32
    %c0_i32_1 = arith.constant 0 : i32
    %c0_i32_2 = arith.constant 0 : i32
    return %c0_i32, %c0_i32_0, %c0_i32_1 : i32, i32, i32
  }
  func.func @transform_18(%arg0: i32) -> (i32, i32, i32) {
    %c0_i32 = arith.constant 0 : i32
    %c0_i32_0 = arith.constant 0 : i32
    %c0_i32_1 = arith.constant 0 : i32
    %c0_i32_2 = arith.constant 0 : i32
    return %c0_i32, %c0_i32_0, %c0_i32_1 : i32, i32, i32
  }
  func.func @transform_19(%arg0: i32) -> (i32, i32, i32) {
    %c0_i32 = arith.constant 0 : i32
    %c0_i32_0 = arith.constant 0 : i32
    %c0_i32_1 = arith.constant 0 : i32
    %c0_i32_2 = arith.constant 0 : i32
    return %c0_i32, %c0_i32_0, %c0_i32_1 : i32, i32, i32
  }
  func.func @transform_20(%arg0: i32) -> (i32, i32, i32) {
    %c0_i32 = arith.constant 0 : i32
    %c0_i32_0 = arith.constant 0 : i32
    %c0_i32_1 = arith.constant 0 : i32
    %c0_i32_2 = arith.constant 0 : i32
    return %c0_i32, %c0_i32_0, %c0_i32_1 : i32, i32, i32
  }
  func.func @transform_21(%arg0: i32) -> (i32, i32, i32) {
    %c0_i32 = arith.constant 0 : i32
    %c0_i32_0 = arith.constant 0 : i32
    %c0_i32_1 = arith.constant 0 : i32
    %c0_i32_2 = arith.constant 0 : i32
    return %c0_i32, %c0_i32_0, %c0_i32_1 : i32, i32, i32
  }
  func.func @transform_22(%arg0: i32) -> (i32, i32, i32) {
    %c0_i32 = arith.constant 0 : i32
    %c0_i32_0 = arith.constant 0 : i32
    %c0_i32_1 = arith.constant 0 : i32
    %c0_i32_2 = arith.constant 0 : i32
    return %c0_i32, %c0_i32_0, %c0_i32_1 : i32, i32, i32
  }
  func.func @transform_23(%arg0: i32) -> (i32, i32, i32) {
    %c0_i32 = arith.constant 0 : i32
    %c0_i32_0 = arith.constant 0 : i32
    %c0_i32_1 = arith.constant 0 : i32
    %c0_i32_2 = arith.constant 0 : i32
    return %c0_i32, %c0_i32_0, %c0_i32_1 : i32, i32, i32
  }
  func.func @transform_24(%arg0: i32) -> (i32, i32) {
    %c0_i32 = arith.constant 0 : i32
    %c0_i32_0 = arith.constant 0 : i32
    %c0_i32_1 = arith.constant 0 : i32
    return %c0_i32, %c0_i32_0 : i32, i32
  }
  func.func @transform_25(%arg0: i32) -> (i32, i32) {
    %c0_i32 = arith.constant 0 : i32
    %c0_i32_0 = arith.constant 0 : i32
    %c0_i32_1 = arith.constant 0 : i32
    return %c0_i32, %c0_i32_0 : i32, i32
  }
  func.func @transform_26(%arg0: i32) -> (i32, i32) {
    %c0_i32 = arith.constant 0 : i32
    %c0_i32_0 = arith.constant 0 : i32
    %c0_i32_1 = arith.constant 0 : i32
    return %c0_i32, %c0_i32_0 : i32, i32
  }
}

</mosaic_0001>

<llo_original>
// kernel: decoder_fwd.1
$region0: #{decoder_fwd.1}
  #allocation0 [shape = 'u32[]', space=smem, size = 0x4, offset = 0x4, fixed_abs, tag = 'smem constant byte address 0x4 - core index']
  #allocation1 [shape = 'u32[144,128]{1,0:T(1,128)}', space=vmem, size = 0x12000, scoped, tag = 'internal scratch']
  %s0 = inlined_call_operand.vmem [shape: s32[16,1], index: 0, kind: input, shape index: {}]
  %s1 = inlined_call_operand.vmem [shape: f32[16,32], index: 1, kind: input, shape index: {}]
  %s2 = inlined_call_operand.vmem [shape: f32[2,8,8], index: 2, kind: input, shape index: {}]
  %s3 = inlined_call_operand.vmem [shape: f32[2,1,8], index: 3, kind: input, shape index: {}]
  %s4 = inlined_call_operand.vmem [shape: f32[128,32], index: 4, kind: input, shape index: {}]
  %s5 = inlined_call_operand.vmem [shape: f32[16,32], index: 5, kind: input, shape index: {}]
  %s6 = inlined_call_operand.vmem [shape: f32[2,32,64], index: 6, kind: input, shape index: {}]
  %s7 = inlined_call_operand.vmem [shape: f32[2,1,64], index: 7, kind: input, shape index: {}]
  %s8 = inlined_call_operand.vmem [shape: f32[2,32,32], index: 8, kind: input, shape index: {}]
  %s9 = inlined_call_operand.vmem [shape: f32[2,1,32], index: 9, kind: input, shape index: {}]
  %s10 = inlined_call_operand.vmem [shape: f32[2,1,32], index: 10, kind: input, shape index: {}]
  %s11 = inlined_call_operand.vmem [shape: f32[2,1,32], index: 11, kind: input, shape index: {}]
  %s12 = inlined_call_operand.vmem [shape: f32[2,32,64], index: 12, kind: input, shape index: {}]
  %s13 = inlined_call_operand.vmem [shape: f32[2,1,64], index: 13, kind: input, shape index: {}]
  %s14 = inlined_call_operand.vmem [shape: f32[2,32,32], index: 14, kind: input, shape index: {}]
  %s15 = inlined_call_operand.vmem [shape: f32[2,1,32], index: 15, kind: input, shape index: {}]
  %s16 = inlined_call_operand.vmem [shape: f32[2,1,32], index: 16, kind: input, shape index: {}]
  %s17 = inlined_call_operand.vmem [shape: f32[2,1,32], index: 17, kind: input, shape index: {}]
  %s18 = inlined_call_operand.vmem [shape: f32[2,1,32], index: 18, kind: input, shape index: {}]
  %s19 = inlined_call_operand.vmem [shape: f32[2,1,32], index: 19, kind: input, shape index: {}]
  %s20 = inlined_call_operand.vmem [shape: f32[2,32,128], index: 20, kind: input, shape index: {}]
  %s21 = inlined_call_operand.vmem [shape: f32[2,1,128], index: 21, kind: input, shape index: {}]
  %s22 = inlined_call_operand.vmem [shape: f32[2,128,32], index: 22, kind: input, shape index: {}]
  %s23 = inlined_call_operand.vmem [shape: f32[2,1,32], index: 23, kind: input, shape index: {}]
  %s24 = inlined_call_operand.vmem [shape: f32[32,128], index: 24, kind: input, shape index: {}]
  %s25 = inlined_call_operand.vmem [shape: f32[1,128], index: 25, kind: input, shape index: {}]
  %s26 = inlined_call_operand.hbm [shape: f32[16,128], index: 26, kind: output, shape index: {}]
  %s27 = sld [smem:[#allocation0]]
  $region114: #{decoder_fwd.1} parent=0
    _
  %s29 = ssub.s32 1, %s27
  %s30 = scalar_select 0, %s29, %s27
  $region1: #{decoder_fwd.1} parent=0
    #allocation2 [shape = 'u8[8192]{0}', space=vmem, size = 0x2000, scoped, tag = 'output window, operand 0, single buffered']
    #allocation3 [shape = 's32[1]{0}', space=sflag, size = 0x4, scoped, tag = 'scoped memory for decoder_fwd.1']
    %31 = vsyncpa [#allocation3], 0
    // Predicated region
    $region2: #{decoder_fwd.1} parent=1 // pred_check
      _
    $region3: #{decoder_fwd.1} parent=1 // pred_check_branch
      %33 = sbr.rel (0) target = $region5
    $region4: #{decoder_fwd.1} parent=1 // pred_region
      _
    $region5: #{decoder_fwd.1} parent=1 // pred_fallthru
      _
    // Predicated region
    $region6: #{decoder_fwd.1} parent=1 // pred_check
      _
    $region7: #{decoder_fwd.1} parent=1 // pred_check_branch
      %35 = sbr.rel (0) target = $region9
    $region8: #{decoder_fwd.1} parent=1 // pred_region
      _
    $region9: #{decoder_fwd.1} parent=1 // pred_fallthru
      _
    // Predicated region
    $region10: #{decoder_fwd.1} parent=1 // pred_check
      _
    $region11: #{decoder_fwd.1} parent=1 // pred_check_branch
      %37 = sbr.rel (0) target = $region13
    $region12: #{decoder_fwd.1} parent=1 // pred_region
      _
    $region13: #{decoder_fwd.1} parent=1 // pred_fallthru
      _
    // Predicated region
    $region14: #{decoder_fwd.1} parent=1 // pred_check
      _
    $region15: #{decoder_fwd.1} parent=1 // pred_check_branch
      %39 = sbr.rel (0) target = $region17
    $region16: #{decoder_fwd.1} parent=1 // pred_region
      _
    $region17: #{decoder_fwd.1} parent=1 // pred_fallthru
      _
    // Predicated region
    $region18: #{decoder_fwd.1} parent=1 // pred_check
      _
    $region19: #{decoder_fwd.1} parent=1 // pred_check_branch
      %41 = sbr.rel (0) target = $region21
    $region20: #{decoder_fwd.1} parent=1 // pred_region
      _
    $region21: #{decoder_fwd.1} parent=1 // pred_fallthru
      _
    // Predicated region
    $region22: #{decoder_fwd.1} parent=1 // pred_check
      _
    $region23: #{decoder_fwd.1} parent=1 // pred_check_branch
      %43 = sbr.rel (0) target = $region25
    $region24: #{decoder_fwd.1} parent=1 // pred_region
      _
    $region25: #{decoder_fwd.1} parent=1 // pred_fallthru
      _
    // Predicated region
    $region26: #{decoder_fwd.1} parent=1 // pred_check
      _
    $region27: #{decoder_fwd.1} parent=1 // pred_check_branch
      %45 = sbr.rel (0) target = $region29
    $region28: #{decoder_fwd.1} parent=1 // pred_region
      _
    $region29: #{decoder_fwd.1} parent=1 // pred_fallthru
      _
    // Predicated region
    $region30: #{decoder_fwd.1} parent=1 // pred_check
      _
    $region31: #{decoder_fwd.1} parent=1 // pred_check_branch
      %47 = sbr.rel (0) target = $region33
    $region32: #{decoder_fwd.1} parent=1 // pred_region
      _
    $region33: #{decoder_fwd.1} parent=1 // pred_fallthru
      _
    // Predicated region
    $region34: #{decoder_fwd.1} parent=1 // pred_check
      _
    $region35: #{decoder_fwd.1} parent=1 // pred_check_branch
      %49 = sbr.rel (0) target = $region37
    $region36: #{decoder_fwd.1} parent=1 // pred_region
      _
    $region37: #{decoder_fwd.1} parent=1 // pred_fallthru
      _
    // Predicated region
    $region38: #{decoder_fwd.1} parent=1 // pred_check
      _
    $region39: #{decoder_fwd.1} parent=1 // pred_check_branch
      %51 = sbr.rel (0) target = $region41
    $region40: #{decoder_fwd.1} parent=1 // pred_region
      _
    $region41: #{decoder_fwd.1} parent=1 // pred_fallthru
      _
    // Predicated region
    $region42: #{decoder_fwd.1} parent=1 // pred_check
      _
    $region43: #{decoder_fwd.1} parent=1 // pred_check_branch
      %53 = sbr.rel (0) target = $region45
    $region44: #{decoder_fwd.1} parent=1 // pred_region
      _
    $region45: #{decoder_fwd.1} parent=1 // pred_fallthru
      _
    // Predicated region
    $region46: #{decoder_fwd.1} parent=1 // pred_check
      _
    $region47: #{decoder_fwd.1} parent=1 // pred_check_branch
      %55 = sbr.rel (0) target = $region49
    $region48: #{decoder_fwd.1} parent=1 // pred_region
      _
    $region49: #{decoder_fwd.1} parent=1 // pred_fallthru
      _
    // Predicated region
    $region50: #{decoder_fwd.1} parent=1 // pred_check
      _
    $region51: #{decoder_fwd.1} parent=1 // pred_check_branch
      %57 = sbr.rel (0) target = $region53
    $region52: #{decoder_fwd.1} parent=1 // pred_region
      _
    $region53: #{decoder_fwd.1} parent=1 // pred_fallthru
      _
    // Predicated region
    $region54: #{decoder_fwd.1} parent=1 // pred_check
      _
    $region55: #{decoder_fwd.1} parent=1 // pred_check_branch
      %59 = sbr.rel (0) target = $region57
    $region56: #{decoder_fwd.1} parent=1 // pred_region
      _
    $region57: #{decoder_fwd.1} parent=1 // pred_fallthru
      _
    // Predicated region
    $region58: #{decoder_fwd.1} parent=1 // pred_check
      _
    $region59: #{decoder_fwd.1} parent=1 // pred_check_branch
      %61 = sbr.rel (0) target = $region61
    $region60: #{decoder_fwd.1} parent=1 // pred_region
      _
    $region61: #{decoder_fwd.1} parent=1 // pred_fallthru
      _
    // Predicated region
    $region62: #{decoder_fwd.1} parent=1 // pred_check
      _
    $region63: #{decoder_fwd.1} parent=1 // pred_check_branch
      %63 = sbr.rel (0) target = $region65
    $region64: #{decoder_fwd.1} parent=1 // pred_region
      _
    $region65: #{decoder_fwd.1} parent=1 // pred_fallthru
      _
    // Predicated region
    $region66: #{decoder_fwd.1} parent=1 // pred_check
      _
    $region67: #{decoder_fwd.1} parent=1 // pred_check_branch
      %65 = sbr.rel (0) target = $region69
    $region68: #{decoder_fwd.1} parent=1 // pred_region
      _
    $region69: #{decoder_fwd.1} parent=1 // pred_fallthru
      _
    // Predicated region
    $region70: #{decoder_fwd.1} parent=1 // pred_check
      _
    $region71: #{decoder_fwd.1} parent=1 // pred_check_branch
      %67 = sbr.rel (0) target = $region73
    $region72: #{decoder_fwd.1} parent=1 // pred_region
      _
    $region73: #{decoder_fwd.1} parent=1 // pred_fallthru
      _
    // Predicated region
    $region74: #{decoder_fwd.1} parent=1 // pred_check
      _
    $region75: #{decoder_fwd.1} parent=1 // pred_check_branch
      %69 = sbr.rel (0) target = $region77
    $region76: #{decoder_fwd.1} parent=1 // pred_region
      _
    $region77: #{decoder_fwd.1} parent=1 // pred_fallthru
      _
    // Predicated region
    $region78: #{decoder_fwd.1} parent=1 // pred_check
      _
    $region79: #{decoder_fwd.1} parent=1 // pred_check_branch
      %71 = sbr.rel (0) target = $region81
    $region80: #{decoder_fwd.1} parent=1 // pred_region
      _
    $region81: #{decoder_fwd.1} parent=1 // pred_fallthru
      _
    // Predicated region
    $region82: #{decoder_fwd.1} parent=1 // pred_check
      _
    $region83: #{decoder_fwd.1} parent=1 // pred_check_branch
      %73 = sbr.rel (0) target = $region85
    $region84: #{decoder_fwd.1} parent=1 // pred_region
      _
    $region85: #{decoder_fwd.1} parent=1 // pred_fallthru
      _
    // Predicated region
    $region86: #{decoder_fwd.1} parent=1 // pred_check
      _
    $region87: #{decoder_fwd.1} parent=1 // pred_check_branch
      %75 = sbr.rel (0) target = $region89
    $region88: #{decoder_fwd.1} parent=1 // pred_region
      _
    $region89: #{decoder_fwd.1} parent=1 // pred_fallthru
      _
    // Predicated region
    $region90: #{decoder_fwd.1} parent=1 // pred_check
      _
    $region91: #{decoder_fwd.1} parent=1 // pred_check_branch
      %77 = sbr.rel (0) target = $region93
    $region92: #{decoder_fwd.1} parent=1 // pred_region
      _
    $region93: #{decoder_fwd.1} parent=1 // pred_fallthru
      _
    // Predicated region
    $region94: #{decoder_fwd.1} parent=1 // pred_check
      _
    $region95: #{decoder_fwd.1} parent=1 // pred_check_branch
      %79 = sbr.rel (0) target = $region97
    $region96: #{decoder_fwd.1} parent=1 // pred_region
      _
    $region97: #{decoder_fwd.1} parent=1 // pred_fallthru
      _
    // Predicated region
    $region98: #{decoder_fwd.1} parent=1 // pred_check
      _
    $region99: #{decoder_fwd.1} parent=1 // pred_check_branch
      %81 = sbr.rel (0) target = $region101
    $region100: #{decoder_fwd.1} parent=1 // pred_region
      _
    $region101: #{decoder_fwd.1} parent=1 // pred_fallthru
      _
    // Predicated region
    $region102: #{decoder_fwd.1} parent=1 // pred_check
      _
    $region103: #{decoder_fwd.1} parent=1 // pred_check_branch
      %83 = sbr.rel (0) target = $region105
    $region104: #{decoder_fwd.1} parent=1 // pred_region
      _
    $region105: #{decoder_fwd.1} parent=1 // pred_fallthru
      _
    %v84 = vld [vmem:[%s0] sm:$0xff]
    %v85 = vld [vmem:[%s0 + $0x8] sm:$0xff]
    %v86 = vlaneseq
    %v87 = vand.u32 %v86, 127
    %88 = vset.pattern.permute.xlu0 0
    %89 = vperm.xlu0 %88, %v84
    %v90 = vpop.permute.xlu0 %89
    %91 = vset.pattern.permute.xlu0 0
    %92 = vperm.xlu0 %91, %v85
    %v93 = vpop.permute.xlu0 %92
    %vm94 = vcmp.eq.s32.totalorder %v87, %v90
    %vm95 = vcmp.eq.s32.totalorder %v87, %v93
    %v96 = vsel %vm94, 1, 0
    %v97 = vsel %vm95, 1, 0
    %v98 = vcvt.s32.f32 %v96
    %v99 = vcvt.s32.f32 %v97
    %v100 = vld [vmem:[%s4] sm:$0xff]
    %v101 = vld [vmem:[%s4 + $0x8] sm:$0xff]
    %v102 = vld [vmem:[%s4 + $0x10] sm:$0xff]
    %v103 = vld [vmem:[%s4 + $0x18] sm:$0xff]
    %v104 = vld [vmem:[%s4 + $0x20] sm:$0xff]
    %v105 = vld [vmem:[%s4 + $0x28] sm:$0xff]
    %v106 = vld [vmem:[%s4 + $0x30] sm:$0xff]
    %v107 = vld [vmem:[%s4 + $0x38] sm:$0xff]
    %v108 = vld [vmem:[%s4 + $0x40] sm:$0xff]
    %v109 = vld [vmem:[%s4 + $0x48] sm:$0xff]
    %v110 = vld [vmem:[%s4 + $0x50] sm:$0xff]
    %v111 = vld [vmem:[%s4 + $0x58] sm:$0xff]
    %v112 = vld [vmem:[%s4 + $0x60] sm:$0xff]
    %v113 = vld [vmem:[%s4 + $0x68] sm:$0xff]
    %v114 = vld [vmem:[%s4 + $0x70] sm:$0xff]
    %v115 = vld [vmem:[%s4 + $0x78] sm:$0xff]
    %v116 = vld [vmem:[%s5] sm:$0xff]
    %117 = vmatprep.subr.mxu0 0.0
    %118 = vmatpush1.msra.mxu0 %v100
    %119 = vmatprep.subr.mxu0 0.0
    %120 = vmatpush1.msra.mxu0 %v101
    %121 = vmatprep.subr.mxu0 0.0
    %122 = vmatpush1.msra.mxu0 %v102
    %123 = vmatprep.subr.mxu0 0.0
    %124 = vmatpush1.msra.mxu0 %v103
    %125 = vmatprep.subr.mxu0 0.0
    %126 = vmatpush1.msra.mxu0 %v104
    %127 = vmatprep.subr.mxu0 0.0
    %128 = vmatpush1.msra.mxu0 %v105
    %129 = vmatprep.subr.mxu0 0.0
    %130 = vmatpush1.msra.mxu0 %v106
    %131 = vmatprep.subr.mxu0 0.0
    %132 = vmatpush1.msra.mxu0 %v107
    %133 = vmatprep.subr.mxu0 0.0
    %134 = vmatpush1.msra.mxu0 %v108
    %135 = vmatprep.subr.mxu0 0.0
    %136 = vmatpush1.msra.mxu0 %v109
    %137 = vmatprep.subr.mxu0 0.0
    %138 = vmatpush1.msra.mxu0 %v110
    %139 = vmatprep.subr.mxu0 0.0
    %140 = vmatpush1.msra.mxu0 %v111
    %141 = vmatprep.subr.mxu0 0.0
    %142 = vmatpush1.msra.mxu0 %v112
    %143 = vmatprep.subr.mxu0 0.0
    %144 = vmatpush1.msra.mxu0 %v113
    %145 = vmatprep.subr.mxu0 0.0
    %146 = vmatpush1.msra.mxu0 %v114
    %147 = vmatprep.subr.mxu0 0.0
    %148 = vmatpush1.msra.mxu0 %v115
    %149 = vmatprep.subr.mxu0 0.0
    %150 = vmatpush1.msra.mxu0 0.0
    %151 = vmatprep.subr.mxu0 0.0
    %152 = vmatpush1.msra.mxu0 0.0
    %153 = vmatprep.subr.mxu0 0.0
    %154 = vmatpush1.msra.mxu0 0.0
    %155 = vmatprep.subr.mxu0 0.0
    %156 = vmatpush1.msra.mxu0 0.0
    %157 = vmatprep.subr.mxu0 0.0
    %158 = vmatpush1.msra.mxu0 0.0
    %159 = vmatprep.subr.mxu0 0.0
    %160 = vmatpush1.msra.mxu0 0.0
    %161 = vmatprep.subr.mxu0 0.0
    %162 = vmatpush1.msra.mxu0 0.0
    %163 = vmatprep.subr.mxu0 0.0
    %164 = vmatpush1.msra.mxu0 0.0
    %165 = vmatprep.subr.mxu0 0.0
    %166 = vmatpush1.msra.mxu0 0.0
    %167 = vmatprep.subr.mxu0 0.0
    %168 = vmatpush1.msra.mxu0 0.0
    %169 = vmatprep.subr.mxu0 0.0
    %170 = vmatpush1.msra.mxu0 0.0
    %171 = vmatprep.subr.mxu0 0.0
    %172 = vmatpush1.msra.mxu0 0.0
    %173 = vmatprep.subr.mxu0 0.0
    %174 = vmatpush1.msra.mxu0 0.0
    %175 = vmatprep.subr.mxu0 0.0
    %176 = vmatpush1.msra.mxu0 0.0
    %177 = vmatprep.subr.mxu0 0.0
    %178 = vmatpush1.msra.mxu0 0.0
    %179 = vmatprep.subr.mxu0 0.0
    %180 = vmatpush1.msra.mxu0 0.0
    %181 = vmatprep.mubr.f32.mxu0 0.0
    %182 = vmatmul.mubr.f32.gmra.mrb[0].mxu0 %v98
    %v183 = vpop.f32.mrb[0].mxu0
    %v184 = vadd.f32 %v116, %v183
    %v185 = vpop.f32.mrb[0].mxu0
    %186 = vmatprep.mubr.f32.mxu0 0.0
    %187 = vmatmul.mubr.f32.gmra.mrb[0].mxu0 %v99
    %v188 = vpop.f32.mrb[0].mxu0
    %v189 = vadd.f32 %v116, %v188
    %v190 = vpop.f32.mrb[0].mxu0
    %191 = vdwg.mxu0
    %v192 = vld [vmem:[%s1] sm:$0xff]
    %v193 = vld [vmem:[%s1 + $0x8] sm:$0xff]
    %v194 = vld [vmem:[%s2] sm:$0xff]
    %vm195 = vcmp.eq.f32.partialorder %v194, 0.0
    %v196 = vsel %vm195, -1.767767e+19, 0.0
    %s197 = scalar_lea.vmem %s2, 8
    %v198 = vld [vmem:[%s197] sm:$0xff]
    %vm199 = vcmp.eq.f32.partialorder %v198, 0.0
    %v200 = vsel %vm199, -1.767767e+19, 0.0
    %v201 = vld [vmem:[%s3] sm:$0x1]
    %vm202 = vcmp.eq.f32.partialorder %v201, 0.0
    %v203 = vsel %vm202, -1.767767e+19, 0.0
    %s204 = scalar_lea.vmem %s3, 1
    %v205 = vld [vmem:[%s204] sm:$0x1]
    %vm206 = vcmp.eq.f32.partialorder %v205, 0.0
    %v207 = vsel %vm206, -1.767767e+19, 0.0
    %v208 = vld [vmem:[%s6] sm:$0xff]
    %v209 = vld [vmem:[%s6 + $0x8] sm:$0xff]
    %v210 = vld [vmem:[%s6 + $0x10] sm:$0xff]
    %v211 = vld [vmem:[%s6 + $0x18] sm:$0xff]
    %v212 = vld [vmem:[%s7] sm:$0x1]
    %v213 = vld [vmem:[%s8] sm:$0xff]
    %v214 = vld [vmem:[%s8 + $0x8] sm:$0xff]
    %v215 = vld [vmem:[%s8 + $0x10] sm:$0xff]
    %v216 = vld [vmem:[%s8 + $0x18] sm:$0xff]
    %v217 = vld [vmem:[%s9] sm:$0x1]
    %v219 = vlaneseq
    %v220 = vshrl.u32 %v219, 7
    %v221 = vsub.s32 0, %v220
    %v222 = vrot.slane %v212, %v221
    %vm224 = vcmask 261120
    %v226 = vsel %vm224, %v184, 0
    %v229 = vsel %vm224, %v189, 0
    %231 = vmatprep.subr.mxu0 0.0
    %232 = vmatpush1.msra.mxu0 %v208
    %233 = vmatprep.subr.mxu0 0.0
    %234 = vmatpush1.msra.mxu0 %v209
    %235 = vmatprep.subr.mxu0 0.0
    %236 = vmatpush1.msra.mxu0 %v210
    %237 = vmatprep.subr.mxu0 0.0
    %238 = vmatpush1.msra.mxu0 %v211
    %239 = vmatprep.subr.mxu0 0.0
    %240 = vmatpush1.msra.mxu0 0.0
    %241 = vmatprep.subr.mxu0 0.0
    %242 = vmatpush1.msra.mxu0 0.0
    %243 = vmatprep.subr.mxu0 0.0
    %244 = vmatpush1.msra.mxu0 0.0
    %245 = vmatprep.subr.mxu0 0.0
    %246 = vmatpush1.msra.mxu0 0.0
    %247 = vmatprep.subr.mxu0 0.0
    %248 = vmatpush1.msra.mxu0 0.0
    %249 = vmatprep.subr.mxu0 0.0
    %250 = vmatpush1.msra.mxu0 0.0
    %251 = vmatprep.subr.mxu0 0.0
    %252 = vmatpush1.msra.mxu0 0.0
    %253 = vmatprep.subr.mxu0 0.0
    %254 = vmatpush1.msra.mxu0 0.0
    %255 = vmatprep.subr.mxu0 0.0
    %256 = vmatpush1.msra.mxu0 0.0
    %257 = vmatprep.subr.mxu0 0.0
    %258 = vmatpush1.msra.mxu0 0.0
    %259 = vmatprep.subr.mxu0 0.0
    %260 = vmatpush1.msra.mxu0 0.0
    %261 = vmatprep.subr.mxu0 0.0
    %262 = vmatpush1.msra.mxu0 0.0
    %263 = vmatprep.subr.mxu0 0.0
    %264 = vmatpush1.msra.mxu0 0.0
    %265 = vmatprep.subr.mxu0 0.0
    %266 = vmatpush1.msra.mxu0 0.0
    %267 = vmatprep.subr.mxu0 0.0
    %268 = vmatpush1.msra.mxu0 0.0
    %269 = vmatprep.subr.mxu0 0.0
    %270 = vmatpush1.msra.mxu0 0.0
    %271 = vmatprep.subr.mxu0 0.0
    %272 = vmatpush1.msra.mxu0 0.0
    %273 = vmatprep.subr.mxu0 0.0
    %274 = vmatpush1.msra.mxu0 0.0
    %275 = vmatprep.subr.mxu0 0.0
    %276 = vmatpush1.msra.mxu0 0.0
    %277 = vmatprep.subr.mxu0 0.0
    %278 = vmatpush1.msra.mxu0 0.0
    %279 = vmatprep.subr.mxu0 0.0
    %280 = vmatpush1.msra.mxu0 0.0
    %281 = vmatprep.subr.mxu0 0.0
    %282 = vmatpush1.msra.mxu0 0.0
    %283 = vmatprep.subr.mxu0 0.0
    %284 = vmatpush1.msra.mxu0 0.0
    %285 = vmatprep.subr.mxu0 0.0
    %286 = vmatpush1.msra.mxu0 0.0
    %287 = vmatprep.subr.mxu0 0.0
    %288 = vmatpush1.msra.mxu0 0.0
    %289 = vmatprep.subr.mxu0 0.0
    %290 = vmatpush1.msra.mxu0 0.0
    %291 = vmatprep.subr.mxu0 0.0
    %292 = vmatpush1.msra.mxu0 0.0
    %293 = vmatprep.subr.mxu0 0.0
    %294 = vmatpush1.msra.mxu0 0.0
    %295 = vmatprep.mubr.f32.mxu0 0.0
    %296 = vmatmul.mubr.f32.gmra.mrb[0].mxu0 %v226
    %v297 = vpop.f32.mrb[0].mxu0
    %v298 = vadd.f32 %v222, %v297
    %v299 = vpop.f32.mrb[0].mxu0
    %300 = vmatprep.mubr.f32.mxu0 0.0
    %301 = vmatmul.mubr.f32.gmra.mrb[0].mxu0 %v229
    %v302 = vpop.f32.mrb[0].mxu0
    %v303 = vadd.f32 %v222, %v302
    %v304 = vpop.f32.mrb[0].mxu0
    %305 = vdwg.mxu0
    %vm306 = vcmask 64512
    %v307 = vsel %vm306, %v184, 0
    %v310 = vsel %vm306, %v298, 0
    %312 = vmatprep.subr.mxu0 0.0
    %313 = vmatpush1.xpose.msra.mxu0 %v310
    %314 = vmatprep.subr.mxu0 0.0
    %315 = vmatpush1.xpose.msra.mxu0 0.0
    %316 = vmatprep.subr.mxu0 0.0
    %317 = vmatpush1.xpose.msra.mxu0 0.0
    %318 = vmatprep.subr.mxu0 0.0
    %319 = vmatpush1.xpose.msra.mxu0 0.0
    %320 = vmatprep.subr.mxu0 0.0
    %321 = vmatpush1.xpose.msra.mxu0 0.0
    %322 = vmatprep.subr.mxu0 0.0
    %323 = vmatpush1.xpose.msra.mxu0 0.0
    %324 = vmatprep.subr.mxu0 0.0
    %325 = vmatpush1.xpose.msra.mxu0 0.0
    %326 = vmatprep.subr.mxu0 0.0
    %327 = vmatpush1.xpose.msra.mxu0 0.0
    %328 = vmatprep.subr.mxu0 0.0
    %329 = vmatpush1.xpose.msra.mxu0 0.0
    %330 = vmatprep.subr.mxu0 0.0
    %331 = vmatpush1.xpose.msra.mxu0 0.0
    %332 = vmatprep.subr.mxu0 0.0
    %333 = vmatpush1.xpose.msra.mxu0 0.0
    %334 = vmatprep.subr.mxu0 0.0
    %335 = vmatpush1.xpose.msra.mxu0 0.0
    %336 = vmatprep.subr.mxu0 0.0
    %337 = vmatpush1.xpose.msra.mxu0 0.0
    %338 = vmatprep.subr.mxu0 0.0
    %339 = vmatpush1.xpose.msra.mxu0 0.0
    %340 = vmatprep.subr.mxu0 0.0
    %341 = vmatpush1.xpose.msra.mxu0 0.0
    %342 = vmatprep.subr.mxu0 0.0
    %343 = vmatpush1.xpose.msra.mxu0 0.0
    %344 = vmatprep.subr.mxu0 0.0
    %345 = vmatpush1.xpose.msra.mxu0 0.0
    %346 = vmatprep.subr.mxu0 0.0
    %347 = vmatpush1.xpose.msra.mxu0 0.0
    %348 = vmatprep.subr.mxu0 0.0
    %349 = vmatpush1.xpose.msra.mxu0 0.0
    %350 = vmatprep.subr.mxu0 0.0
    %351 = vmatpush1.xpose.msra.mxu0 0.0
    %352 = vmatprep.subr.mxu0 0.0
    %353 = vmatpush1.xpose.msra.mxu0 0.0
    %354 = vmatprep.subr.mxu0 0.0
    %355 = vmatpush1.xpose.msra.mxu0 0.0
    %356 = vmatprep.subr.mxu0 0.0
    %357 = vmatpush1.xpose.msra.mxu0 0.0
    %358 = vmatprep.subr.mxu0 0.0
    %359 = vmatpush1.xpose.msra.mxu0 0.0
    %360 = vmatprep.subr.mxu0 0.0
    %361 = vmatpush1.xpose.msra.mxu0 0.0
    %362 = vmatprep.subr.mxu0 0.0
    %363 = vmatpush1.xpose.msra.mxu0 0.0
    %364 = vmatprep.subr.mxu0 0.0
    %365 = vmatpush1.xpose.msra.mxu0 0.0
    %366 = vmatprep.subr.mxu0 0.0
    %367 = vmatpush1.xpose.msra.mxu0 0.0
    %368 = vmatprep.subr.mxu0 0.0
    %369 = vmatpush1.xpose.msra.mxu0 0.0
    %370 = vmatprep.subr.mxu0 0.0
    %371 = vmatpush1.xpose.msra.mxu0 0.0
    %372 = vmatprep.subr.mxu0 0.0
    %373 = vmatpush1.xpose.msra.mxu0 0.0
    %374 = vmatprep.subr.mxu0 0.0
    %375 = vmatpush1.xpose.msra.mxu0 0.0
    %376 = vmatprep.mubr.f32.mxu0 0.0
    %377 = vmatmul.mubr.f32.gmra.mrb[0].mxu0 %v307
    %v378 = vpop.f32.mrb[0].mxu0
    %v379 = vadd.f32 0.0, %v378
    %v380 = vpop.f32.mrb[0].mxu0
    %381 = vdwg.mxu0
    %v382 = vmul.f32 %v379, 0.17677669
    %v383 = vadd.f32 %v382, %v196
    %v384 = vsel %vm306, %v383, -inf
    %385 = vmax.xlane.f32.xlu0 %v384
    %v386 = vpop.xlane.xlu0 %385
    %v387 = vsub.f32 %v383, %v386
    %v388 = vmul.f32 %v387, 1.442695
    %v389 = vpow.pop %v388
    %v390 = vsel %vm306, %v389, 0.0
    %391 = vadd.xlane.f32.xlu0 %v390
    %v392 = vpop.xlane.xlu0 %391
    %v393 = vrcp.pop %v392
    %v394 = vmul.f32 %v389, %v393
    %395 = vrot.lane.b32.xlu0 %v298, 96
    %v396 = vpop.permute.xlu0 %395
    %v399 = vsel %vm306, %v394, 0
    %401 = vmatprep.subr.mxu0 0.0
    %402 = vmatpush1.msra.mxu0 %v396
    %403 = vmatprep.subr.mxu0 0.0
    %404 = vmatpush1.msra.mxu0 0.0
    %405 = vmatprep.subr.mxu0 0.0
    %406 = vmatpush1.msra.mxu0 0.0
    %407 = vmatprep.subr.mxu0 0.0
    %408 = vmatpush1.msra.mxu0 0.0
    %409 = vmatprep.subr.mxu0 0.0
    %410 = vmatpush1.msra.mxu0 0.0
    %411 = vmatprep.subr.mxu0 0.0
    %412 = vmatpush1.msra.mxu0 0.0
    %413 = vmatprep.subr.mxu0 0.0
    %414 = vmatpush1.msra.mxu0 0.0
    %415 = vmatprep.subr.mxu0 0.0
    %416 = vmatpush1.msra.mxu0 0.0
    %417 = vmatprep.subr.mxu0 0.0
    %418 = vmatpush1.msra.mxu0 0.0
    %419 = vmatprep.subr.mxu0 0.0
    %420 = vmatpush1.msra.mxu0 0.0
    %421 = vmatprep.subr.mxu0 0.0
    %422 = vmatpush1.msra.mxu0 0.0
    %423 = vmatprep.subr.mxu0 0.0
    %424 = vmatpush1.msra.mxu0 0.0
    %425 = vmatprep.subr.mxu0 0.0
    %426 = vmatpush1.msra.mxu0 0.0
    %427 = vmatprep.subr.mxu0 0.0
    %428 = vmatpush1.msra.mxu0 0.0
    %429 = vmatprep.subr.mxu0 0.0
    %430 = vmatpush1.msra.mxu0 0.0
    %431 = vmatprep.subr.mxu0 0.0
    %432 = vmatpush1.msra.mxu0 0.0
    %433 = vmatprep.subr.mxu0 0.0
    %434 = vmatpush1.msra.mxu0 0.0
    %435 = vmatprep.subr.mxu0 0.0
    %436 = vmatpush1.msra.mxu0 0.0
    %437 = vmatprep.subr.mxu0 0.0
    %438 = vmatpush1.msra.mxu0 0.0
    %439 = vmatprep.subr.mxu0 0.0
    %440 = vmatpush1.msra.mxu0 0.0
    %441 = vmatprep.subr.mxu0 0.0
    %442 = vmatpush1.msra.mxu0 0.0
    %443 = vmatprep.subr.mxu0 0.0
    %444 = vmatpush1.msra.mxu0 0.0
    %445 = vmatprep.subr.mxu0 0.0
    %446 = vmatpush1.msra.mxu0 0.0
    %447 = vmatprep.subr.mxu0 0.0
    %448 = vmatpush1.msra.mxu0 0.0
    %449 = vmatprep.subr.mxu0 0.0
    %450 = vmatpush1.msra.mxu0 0.0
    %451 = vmatprep.subr.mxu0 0.0
    %452 = vmatpush1.msra.mxu0 0.0
    %453 = vmatprep.subr.mxu0 0.0
    %454 = vmatpush1.msra.mxu0 0.0
    %455 = vmatprep.subr.mxu0 0.0
    %456 = vmatpush1.msra.mxu0 0.0
    %457 = vmatprep.subr.mxu0 0.0
    %458 = vmatpush1.msra.mxu0 0.0
    %459 = vmatprep.subr.mxu0 0.0
    %460 = vmatpush1.msra.mxu0 0.0
    %461 = vmatprep.subr.mxu0 0.0
    %462 = vmatpush1.msra.mxu0 0.0
    %463 = vmatprep.subr.mxu0 0.0
    %464 = vmatpush1.msra.mxu0 0.0
    %465 = vmatprep.mubr.f32.mxu0 0.0
    %466 = vmatmul.mubr.f32.gmra.mrb[0].mxu0 %v399
    %v467 = vpop.f32.mrb[0].mxu0
    %v468 = vadd.f32 0.0, %v467
    %v469 = vpop.f32.mrb[0].mxu0
    %470 = vdwg.mxu0
    %471 = vrot.lane.b32.xlu0 %v184, 120
    %v472 = vpop.permute.xlu0 %471
    %473 = vrot.lane.b32.xlu0 %v298, 120
    %v474 = vpop.permute.xlu0 %473
    %v475 = vsel %vm306, %v472, 0
    %v477 = vsel %vm306, %v474, 0
    %479 = vmatprep.subr.mxu0 0.0
    %480 = vmatpush1.xpose.msra.mxu0 %v477
    %481 = vmatprep.subr.mxu0 0.0
    %482 = vmatpush1.xpose.msra.mxu0 0.0
    %483 = vmatprep.subr.mxu0 0.0
    %484 = vmatpush1.xpose.msra.mxu0 0.0
    %485 = vmatprep.subr.mxu0 0.0
    %486 = vmatpush1.xpose.msra.mxu0 0.0
    %487 = vmatprep.subr.mxu0 0.0
    %488 = vmatpush1.xpose.msra.mxu0 0.0
    %489 = vmatprep.subr.mxu0 0.0
    %490 = vmatpush1.xpose.msra.mxu0 0.0
    %491 = vmatprep.subr.mxu0 0.0
    %492 = vmatpush1.xpose.msra.mxu0 0.0
    %493 = vmatprep.subr.mxu0 0.0
    %494 = vmatpush1.xpose.msra.mxu0 0.0
    %495 = vmatprep.subr.mxu0 0.0
    %496 = vmatpush1.xpose.msra.mxu0 0.0
    %497 = vmatprep.subr.mxu0 0.0
    %498 = vmatpush1.xpose.msra.mxu0 0.0
    %499 = vmatprep.subr.mxu0 0.0
    %500 = vmatpush1.xpose.msra.mxu0 0.0
    %501 = vmatprep.subr.mxu0 0.0
    %502 = vmatpush1.xpose.msra.mxu0 0.0
    %503 = vmatprep.subr.mxu0 0.0
    %504 = vmatpush1.xpose.msra.mxu0 0.0
    %505 = vmatprep.subr.mxu0 0.0
    %506 = vmatpush1.xpose.msra.mxu0 0.0
    %507 = vmatprep.subr.mxu0 0.0
    %508 = vmatpush1.xpose.msra.mxu0 0.0
    %509 = vmatprep.subr.mxu0 0.0
    %510 = vmatpush1.xpose.msra.mxu0 0.0
    %511 = vmatprep.subr.mxu0 0.0
    %512 = vmatpush1.xpose.msra.mxu0 0.0
    %513 = vmatprep.subr.mxu0 0.0
    %514 = vmatpush1.xpose.msra.mxu0 0.0
    %515 = vmatprep.subr.mxu0 0.0
    %516 = vmatpush1.xpose.msra.mxu0 0.0
    %517 = vmatprep.subr.mxu0 0.0
    %518 = vmatpush1.xpose.msra.mxu0 0.0
    %519 = vmatprep.subr.mxu0 0.0
    %520 = vmatpush1.xpose.msra.mxu0 0.0
    %521 = vmatprep.subr.mxu0 0.0
    %522 = vmatpush1.xpose.msra.mxu0 0.0
    %523 = vmatprep.subr.mxu0 0.0
    %524 = vmatpush1.xpose.msra.mxu0 0.0
    %525 = vmatprep.subr.mxu0 0.0
    %526 = vmatpush1.xpose.msra.mxu0 0.0
    %527 = vmatprep.subr.mxu0 0.0
    %528 = vmatpush1.xpose.msra.mxu0 0.0
    %529 = vmatprep.subr.mxu0 0.0
    %530 = vmatpush1.xpose.msra.mxu0 0.0
    %531 = vmatprep.subr.mxu0 0.0
    %532 = vmatpush1.xpose.msra.mxu0 0.0
    %533 = vmatprep.subr.mxu0 0.0
    %534 = vmatpush1.xpose.msra.mxu0 0.0
    %535 = vmatprep.subr.mxu0 0.0
    %536 = vmatpush1.xpose.msra.mxu0 0.0
    %537 = vmatprep.subr.mxu0 0.0
    %538 = vmatpush1.xpose.msra.mxu0 0.0
    %539 = vmatprep.subr.mxu0 0.0
    %540 = vmatpush1.xpose.msra.mxu0 0.0
    %541 = vmatprep.subr.mxu0 0.0
    %542 = vmatpush1.xpose.msra.mxu0 0.0
    %543 = vmatprep.mubr.f32.mxu0 0.0
    %544 = vmatmul.mubr.f32.gmra.mrb[0].mxu0 %v475
    %v545 = vpop.f32.mrb[0].mxu0
    %v546 = vadd.f32 0.0, %v545
    %v547 = vpop.f32.mrb[0].mxu0
    %548 = vdwg.mxu0
    %v549 = vmul.f32 %v546, 0.17677669
    %v550 = vadd.f32 %v549, %v196
    %v551 = vsel %vm306, %v550, -inf
    %552 = vmax.xlane.f32.xlu0 %v551
    %v553 = vpop.xlane.xlu0 %552
    %v554 = vsub.f32 %v550, %v553
    %v555 = vmul.f32 %v554, 1.442695
    %v556 = vpow.pop %v555
    %v557 = vsel %vm306, %v556, 0.0
    %558 = vadd.xlane.f32.xlu0 %v557
    %v559 = vpop.xlane.xlu0 %558
    %v560 = vrcp.pop %v559
    %v561 = vmul.f32 %v556, %v560
    %562 = vrot.lane.b32.xlu0 %v298, 88
    %v563 = vpop.permute.xlu0 %562
    %v566 = vsel %vm306, %v561, 0
    %568 = vmatprep.subr.mxu0 0.0
    %569 = vmatpush1.msra.mxu0 %v563
    %570 = vmatprep.subr.mxu0 0.0
    %571 = vmatpush1.msra.mxu0 0.0
    %572 = vmatprep.subr.mxu0 0.0
    %573 = vmatpush1.msra.mxu0 0.0
    %574 = vmatprep.subr.mxu0 0.0
    %575 = vmatpush1.msra.mxu0 0.0
    %576 = vmatprep.subr.mxu0 0.0
    %577 = vmatpush1.msra.mxu0 0.0
    %578 = vmatprep.subr.mxu0 0.0
    %579 = vmatpush1.msra.mxu0 0.0
    %580 = vmatprep.subr.mxu0 0.0
    %581 = vmatpush1.msra.mxu0 0.0
    %582 = vmatprep.subr.mxu0 0.0
    %583 = vmatpush1.msra.mxu0 0.0
    %584 = vmatprep.subr.mxu0 0.0
    %585 = vmatpush1.msra.mxu0 0.0
    %586 = vmatprep.subr.mxu0 0.0
    %587 = vmatpush1.msra.mxu0 0.0
    %588 = vmatprep.subr.mxu0 0.0
    %589 = vmatpush1.msra.mxu0 0.0
    %590 = vmatprep.subr.mxu0 0.0
    %591 = vmatpush1.msra.mxu0 0.0
    %592 = vmatprep.subr.mxu0 0.0
    %593 = vmatpush1.msra.mxu0 0.0
    %594 = vmatprep.subr.mxu0 0.0
    %595 = vmatpush1.msra.mxu0 0.0
    %596 = vmatprep.subr.mxu0 0.0
    %597 = vmatpush1.msra.mxu0 0.0
    %598 = vmatprep.subr.mxu0 0.0
    %599 = vmatpush1.msra.mxu0 0.0
    %600 = vmatprep.subr.mxu0 0.0
    %601 = vmatpush1.msra.mxu0 0.0
    %602 = vmatprep.subr.mxu0 0.0
    %603 = vmatpush1.msra.mxu0 0.0
    %604 = vmatprep.subr.mxu0 0.0
    %605 = vmatpush1.msra.mxu0 0.0
    %606 = vmatprep.subr.mxu0 0.0
    %607 = vmatpush1.msra.mxu0 0.0
    %608 = vmatprep.subr.mxu0 0.0
    %609 = vmatpush1.msra.mxu0 0.0
    %610 = vmatprep.subr.mxu0 0.0
    %611 = vmatpush1.msra.mxu0 0.0
    %612 = vmatprep.subr.mxu0 0.0
    %613 = vmatpush1.msra.mxu0 0.0
    %614 = vmatprep.subr.mxu0 0.0
    %615 = vmatpush1.msra.mxu0 0.0
    %616 = vmatprep.subr.mxu0 0.0
    %617 = vmatpush1.msra.mxu0 0.0
    %618 = vmatprep.subr.mxu0 0.0
    %619 = vmatpush1.msra.mxu0 0.0
    %620 = vmatprep.subr.mxu0 0.0
    %621 = vmatpush1.msra.mxu0 0.0
    %622 = vmatprep.subr.mxu0 0.0
    %623 = vmatpush1.msra.mxu0 0.0
    %624 = vmatprep.subr.mxu0 0.0
    %625 = vmatpush1.msra.mxu0 0.0
    %626 = vmatprep.subr.mxu0 0.0
    %627 = vmatpush1.msra.mxu0 0.0
    %628 = vmatprep.subr.mxu0 0.0
    %629 = vmatpush1.msra.mxu0 0.0
    %630 = vmatprep.subr.mxu0 0.0
    %631 = vmatpush1.msra.mxu0 0.0
    %632 = vmatprep.mubr.f32.mxu0 0.0
    %633 = vmatmul.mubr.f32.gmra.mrb[0].mxu0 %v566
    %v634 = vpop.f32.mrb[0].mxu0
    %v635 = vadd.f32 0.0, %v634
    %v636 = vpop.f32.mrb[0].mxu0
    %637 = vdwg.mxu0
    %638 = vrot.lane.b32.xlu0 %v184, 112
    %v639 = vpop.permute.xlu0 %638
    %640 = vrot.lane.b32.xlu0 %v298, 112
    %v641 = vpop.permute.xlu0 %640
    %v642 = vsel %vm306, %v639, 0
    %v644 = vsel %vm306, %v641, 0
    %646 = vmatprep.subr.mxu0 0.0
    %647 = vmatpush1.xpose.msra.mxu0 %v644
    %648 = vmatprep.subr.mxu0 0.0
    %649 = vmatpush1.xpose.msra.mxu0 0.0
    %650 = vmatprep.subr.mxu0 0.0
    %651 = vmatpush1.xpose.msra.mxu0 0.0
    %652 = vmatprep.subr.mxu0 0.0
    %653 = vmatpush1.xpose.msra.mxu0 0.0
    %654 = vmatprep.subr.mxu0 0.0
    %655 = vmatpush1.xpose.msra.mxu0 0.0
    %656 = vmatprep.subr.mxu0 0.0
    %657 = vmatpush1.xpose.msra.mxu0 0.0
    %658 = vmatprep.subr.mxu0 0.0
    %659 = vmatpush1.xpose.msra.mxu0 0.0
    %660 = vmatprep.subr.mxu0 0.0
    %661 = vmatpush1.xpose.msra.mxu0 0.0
    %662 = vmatprep.subr.mxu0 0.0
    %663 = vmatpush1.xpose.msra.mxu0 0.0
    %664 = vmatprep.subr.mxu0 0.0
    %665 = vmatpush1.xpose.msra.mxu0 0.0
    %666 = vmatprep.subr.mxu0 0.0
    %667 = vmatpush1.xpose.msra.mxu0 0.0
    %668 = vmatprep.subr.mxu0 0.0
    %669 = vmatpush1.xpose.msra.mxu0 0.0
    %670 = vmatprep.subr.mxu0 0.0
    %671 = vmatpush1.xpose.msra.mxu0 0.0
    %672 = vmatprep.subr.mxu0 0.0
    %673 = vmatpush1.xpose.msra.mxu0 0.0
    %674 = vmatprep.subr.mxu0 0.0
    %675 = vmatpush1.xpose.msra.mxu0 0.0
    %676 = vmatprep.subr.mxu0 0.0
    %677 = vmatpush1.xpose.msra.mxu0 0.0
    %678 = vmatprep.subr.mxu0 0.0
    %679 = vmatpush1.xpose.msra.mxu0 0.0
    %680 = vmatprep.subr.mxu0 0.0
    %681 = vmatpush1.xpose.msra.mxu0 0.0
    %682 = vmatprep.subr.mxu0 0.0
    %683 = vmatpush1.xpose.msra.mxu0 0.0
    %684 = vmatprep.subr.mxu0 0.0
    %685 = vmatpush1.xpose.msra.mxu0 0.0
    %686 = vmatprep.subr.mxu0 0.0
    %687 = vmatpush1.xpose.msra.mxu0 0.0
    %688 = vmatprep.subr.mxu0 0.0
    %689 = vmatpush1.xpose.msra.mxu0 0.0
    %690 = vmatprep.subr.mxu0 0.0
    %691 = vmatpush1.xpose.msra.mxu0 0.0
    %692 = vmatprep.subr.mxu0 0.0
    %693 = vmatpush1.xpose.msra.mxu0 0.0
    %694 = vmatprep.subr.mxu0 0.0
    %695 = vmatpush1.xpose.msra.mxu0 0.0
    %696 = vmatprep.subr.mxu0 0.0
    %697 = vmatpush1.xpose.msra.mxu0 0.0
    %698 = vmatprep.subr.mxu0 0.0
    %699 = vmatpush1.xpose.msra.mxu0 0.0
    %700 = vmatprep.subr.mxu0 0.0
    %701 = vmatpush1.xpose.msra.mxu0 0.0
    %702 = vmatprep.subr.mxu0 0.0
    %703 = vmatpush1.xpose.msra.mxu0 0.0
    %704 = vmatprep.subr.mxu0 0.0
    %705 = vmatpush1.xpose.msra.mxu0 0.0
    %706 = vmatprep.subr.mxu0 0.0
    %707 = vmatpush1.xpose.msra.mxu0 0.0
    %708 = vmatprep.subr.mxu0 0.0
    %709 = vmatpush1.xpose.msra.mxu0 0.0
    %710 = vmatprep.mubr.f32.mxu0 0.0
    %711 = vmatmul.mubr.f32.gmra.mrb[0].mxu0 %v642
    %v712 = vpop.f32.mrb[0].mxu0
    %v713 = vadd.f32 0.0, %v712
    %v714 = vpop.f32.mrb[0].mxu0
    %715 = vdwg.mxu0
    %v716 = vmul.f32 %v713, 0.17677669
    %v717 = vadd.f32 %v716, %v196
    %v718 = vsel %vm306, %v717, -inf
    %719 = vmax.xlane.f32.xlu0 %v718
    %v720 = vpop.xlane.xlu0 %719
    %v721 = vsub.f32 %v717, %v720
    %v722 = vmul.f32 %v721, 1.442695
    %v723 = vpow.pop %v722
    %v724 = vsel %vm306, %v723, 0.0
    %725 = vadd.xlane.f32.xlu0 %v724
    %v726 = vpop.xlane.xlu0 %725
    %v727 = vrcp.pop %v726
    %v728 = vmul.f32 %v723, %v727
    %729 = vrot.lane.b32.xlu0 %v298, 80
    %v730 = vpop.permute.xlu0 %729
    %v733 = vsel %vm306, %v728, 0
    %735 = vmatprep.subr.mxu0 0.0
    %736 = vmatpush1.msra.mxu0 %v730
    %737 = vmatprep.subr.mxu0 0.0
    %738 = vmatpush1.msra.mxu0 0.0
    %739 = vmatprep.subr.mxu0 0.0
    %740 = vmatpush1.msra.mxu0 0.0
    %741 = vmatprep.subr.mxu0 0.0
    %742 = vmatpush1.msra.mxu0 0.0
    %743 = vmatprep.subr.mxu0 0.0
    %744 = vmatpush1.msra.mxu0 0.0
    %745 = vmatprep.subr.mxu0 0.0
    %746 = vmatpush1.msra.mxu0 0.0
    %747 = vmatprep.subr.mxu0 0.0
    %748 = vmatpush1.msra.mxu0 0.0
    %749 = vmatprep.subr.mxu0 0.0
    %750 = vmatpush1.msra.mxu0 0.0
    %751 = vmatprep.subr.mxu0 0.0
    %752 = vmatpush1.msra.mxu0 0.0
    %753 = vmatprep.subr.mxu0 0.0
    %754 = vmatpush1.msra.mxu0 0.0
    %755 = vmatprep.subr.mxu0 0.0
    %756 = vmatpush1.msra.mxu0 0.0
    %757 = vmatprep.subr.mxu0 0.0
    %758 = vmatpush1.msra.mxu0 0.0
    %759 = vmatprep.subr.mxu0 0.0
    %760 = vmatpush1.msra.mxu0 0.0
    %761 = vmatprep.subr.mxu0 0.0
    %762 = vmatpush1.msra.mxu0 0.0
    %763 = vmatprep.subr.mxu0 0.0
    %764 = vmatpush1.msra.mxu0 0.0
    %765 = vmatprep.subr.mxu0 0.0
    %766 = vmatpush1.msra.mxu0 0.0
    %767 = vmatprep.subr.mxu0 0.0
    %768 = vmatpush1.msra.mxu0 0.0
    %769 = vmatprep.subr.mxu0 0.0
    %770 = vmatpush1.msra.mxu0 0.0
    %771 = vmatprep.subr.mxu0 0.0
    %772 = vmatpush1.msra.mxu0 0.0
    %773 = vmatprep.subr.mxu0 0.0
    %774 = vmatpush1.msra.mxu0 0.0
    %775 = vmatprep.subr.mxu0 0.0
    %776 = vmatpush1.msra.mxu0 0.0
    %777 = vmatprep.subr.mxu0 0.0
    %778 = vmatpush1.msra.mxu0 0.0
    %779 = vmatprep.subr.mxu0 0.0
    %780 = vmatpush1.msra.mxu0 0.0
    %781 = vmatprep.subr.mxu0 0.0
    %782 = vmatpush1.msra.mxu0 0.0
    %783 = vmatprep.subr.mxu0 0.0
    %784 = vmatpush1.msra.mxu0 0.0
    %785 = vmatprep.subr.mxu0 0.0
    %786 = vmatpush1.msra.mxu0 0.0
    %787 = vmatprep.subr.mxu0 0.0
    %788 = vmatpush1.msra.mxu0 0.0
    %789 = vmatprep.subr.mxu0 0.0
    %790 = vmatpush1.msra.mxu0 0.0
    %791 = vmatprep.subr.mxu0 0.0
    %792 = vmatpush1.msra.mxu0 0.0
    %793 = vmatprep.subr.mxu0 0.0
    %794 = vmatpush1.msra.mxu0 0.0
    %795 = vmatprep.subr.mxu0 0.0
    %796 = vmatpush1.msra.mxu0 0.0
    %797 = vmatprep.subr.mxu0 0.0
    %798 = vmatpush1.msra.mxu0 0.0
    %799 = vmatprep.mubr.f32.mxu0 0.0
    %800 = vmatmul.mubr.f32.gmra.mrb[0].mxu0 %v733
    %v801 = vpop.f32.mrb[0].mxu0
    %v802 = vadd.f32 0.0, %v801
    %v803 = vpop.f32.mrb[0].mxu0
    %804 = vdwg.mxu0
    %805 = vrot.lane.b32.xlu0 %v184, 104
    %v806 = vpop.permute.xlu0 %805
    %807 = vrot.lane.b32.xlu0 %v298, 104
    %v808 = vpop.permute.xlu0 %807
    %v809 = vsel %vm306, %v806, 0
    %v811 = vsel %vm306, %v808, 0
    %813 = vmatprep.subr.mxu0 0.0
    %814 = vmatpush1.xpose.msra.mxu0 %v811
    %815 = vmatprep.subr.mxu0 0.0
    %816 = vmatpush1.xpose.msra.mxu0 0.0
    %817 = vmatprep.subr.mxu0 0.0
    %818 = vmatpush1.xpose.msra.mxu0 0.0
    %819 = vmatprep.subr.mxu0 0.0
    %820 = vmatpush1.xpose.msra.mxu0 0.0
    %821 = vmatprep.subr.mxu0 0.0
    %822 = vmatpush1.xpose.msra.mxu0 0.0
    %823 = vmatprep.subr.mxu0 0.0
    %824 = vmatpush1.xpose.msra.mxu0 0.0
    %825 = vmatprep.subr.mxu0 0.0
    %826 = vmatpush1.xpose.msra.mxu0 0.0
    %827 = vmatprep.subr.mxu0 0.0
    %828 = vmatpush1.xpose.msra.mxu0 0.0
    %829 = vmatprep.subr.mxu0 0.0
    %830 = vmatpush1.xpose.msra.mxu0 0.0
    %831 = vmatprep.subr.mxu0 0.0
    %832 = vmatpush1.xpose.msra.mxu0 0.0
    %833 = vmatprep.subr.mxu0 0.0
    %834 = vmatpush1.xpose.msra.mxu0 0.0
    %835 = vmatprep.subr.mxu0 0.0
    %836 = vmatpush1.xpose.msra.mxu0 0.0
    %837 = vmatprep.subr.mxu0 0.0
    %838 = vmatpush1.xpose.msra.mxu0 0.0
    %839 = vmatprep.subr.mxu0 0.0
    %840 = vmatpush1.xpose.msra.mxu0 0.0
    %841 = vmatprep.subr.mxu0 0.0
    %842 = vmatpush1.xpose.msra.mxu0 0.0
    %843 = vmatprep.subr.mxu0 0.0
    %844 = vmatpush1.xpose.msra.mxu0 0.0
    %845 = vmatprep.subr.mxu0 0.0
    %846 = vmatpush1.xpose.msra.mxu0 0.0
    %847 = vmatprep.subr.mxu0 0.0
    %848 = vmatpush1.xpose.msra.mxu0 0.0
    %849 = vmatprep.subr.mxu0 0.0
    %850 = vmatpush1.xpose.msra.mxu0 0.0
    %851 = vmatprep.subr.mxu0 0.0
    %852 = vmatpush1.xpose.msra.mxu0 0.0
    %853 = vmatprep.subr.mxu0 0.0
    %854 = vmatpush1.xpose.msra.mxu0 0.0
    %855 = vmatprep.subr.mxu0 0.0
    %856 = vmatpush1.xpose.msra.mxu0 0.0
    %857 = vmatprep.subr.mxu0 0.0
    %858 = vmatpush1.xpose.msra.mxu0 0.0
    %859 = vmatprep.subr.mxu0 0.0
    %860 = vmatpush1.xpose.msra.mxu0 0.0
    %861 = vmatprep.subr.mxu0 0.0
    %862 = vmatpush1.xpose.msra.mxu0 0.0
    %863 = vmatprep.subr.mxu0 0.0
    %864 = vmatpush1.xpose.msra.mxu0 0.0
    %865 = vmatprep.subr.mxu0 0.0
    %866 = vmatpush1.xpose.msra.mxu0 0.0
    %867 = vmatprep.subr.mxu0 0.0
    %868 = vmatpush1.xpose.msra.mxu0 0.0
    %869 = vmatprep.subr.mxu0 0.0
    %870 = vmatpush1.xpose.msra.mxu0 0.0
    %871 = vmatprep.subr.mxu0 0.0
    %872 = vmatpush1.xpose.msra.mxu0 0.0
    %873 = vmatprep.subr.mxu0 0.0
    %874 = vmatpush1.xpose.msra.mxu0 0.0
    %875 = vmatprep.subr.mxu0 0.0
    %876 = vmatpush1.xpose.msra.mxu0 0.0
    %877 = vmatprep.mubr.f32.mxu0 0.0
    %878 = vmatmul.mubr.f32.gmra.mrb[0].mxu0 %v809
    %v879 = vpop.f32.mrb[0].mxu0
    %v880 = vadd.f32 0.0, %v879
    %v881 = vpop.f32.mrb[0].mxu0
    %882 = vdwg.mxu0
    %v883 = vmul.f32 %v880, 0.17677669
    %v884 = vadd.f32 %v883, %v196
    %v885 = vsel %vm306, %v884, -inf
    %886 = vmax.xlane.f32.xlu0 %v885
    %v887 = vpop.xlane.xlu0 %886
    %v888 = vsub.f32 %v884, %v887
    %v889 = vmul.f32 %v888, 1.442695
    %v890 = vpow.pop %v889
    %v891 = vsel %vm306, %v890, 0.0
    %892 = vadd.xlane.f32.xlu0 %v891
    %v893 = vpop.xlane.xlu0 %892
    %v894 = vrcp.pop %v893
    %v895 = vmul.f32 %v890, %v894
    %896 = vrot.lane.b32.xlu0 %v298, 72
    %v897 = vpop.permute.xlu0 %896
    %v900 = vsel %vm306, %v895, 0
    %902 = vmatprep.subr.mxu0 0.0
    %903 = vmatpush1.msra.mxu0 %v897
    %904 = vmatprep.subr.mxu0 0.0
    %905 = vmatpush1.msra.mxu0 0.0
    %906 = vmatprep.subr.mxu0 0.0
    %907 = vmatpush1.msra.mxu0 0.0
    %908 = vmatprep.subr.mxu0 0.0
    %909 = vmatpush1.msra.mxu0 0.0
    %910 = vmatprep.subr.mxu0 0.0
    %911 = vmatpush1.msra.mxu0 0.0
    %912 = vmatprep.subr.mxu0 0.0
    %913 = vmatpush1.msra.mxu0 0.0
    %914 = vmatprep.subr.mxu0 0.0
    %915 = vmatpush1.msra.mxu0 0.0
    %916 = vmatprep.subr.mxu0 0.0
    %917 = vmatpush1.msra.mxu0 0.0
    %918 = vmatprep.subr.mxu0 0.0
    %919 = vmatpush1.msra.mxu0 0.0
    %920 = vmatprep.subr.mxu0 0.0
    %921 = vmatpush1.msra.mxu0 0.0
    %922 = vmatprep.subr.mxu0 0.0
    %923 = vmatpush1.msra.mxu0 0.0
    %924 = vmatprep.subr.mxu0 0.0
    %925 = vmatpush1.msra.mxu0 0.0
    %926 = vmatprep.subr.mxu0 0.0
    %927 = vmatpush1.msra.mxu0 0.0
    %928 = vmatprep.subr.mxu0 0.0
    %929 = vmatpush1.msra.mxu0 0.0
    %930 = vmatprep.subr.mxu0 0.0
    %931 = vmatpush1.msra.mxu0 0.0
    %932 = vmatprep.subr.mxu0 0.0
    %933 = vmatpush1.msra.mxu0 0.0
    %934 = vmatprep.subr.mxu0 0.0
    %935 = vmatpush1.msra.mxu0 0.0
    %936 = vmatprep.subr.mxu0 0.0
    %937 = vmatpush1.msra.mxu0 0.0
    %938 = vmatprep.subr.mxu0 0.0
    %939 = vmatpush1.msra.mxu0 0.0
    %940 = vmatprep.subr.mxu0 0.0
    %941 = vmatpush1.msra.mxu0 0.0
    %942 = vmatprep.subr.mxu0 0.0
    %943 = vmatpush1.msra.mxu0 0.0
    %944 = vmatprep.subr.mxu0 0.0
    %945 = vmatpush1.msra.mxu0 0.0
    %946 = vmatprep.subr.mxu0 0.0
    %947 = vmatpush1.msra.mxu0 0.0
    %948 = vmatprep.subr.mxu0 0.0
    %949 = vmatpush1.msra.mxu0 0.0
    %950 = vmatprep.subr.mxu0 0.0
    %951 = vmatpush1.msra.mxu0 0.0
    %952 = vmatprep.subr.mxu0 0.0
    %953 = vmatpush1.msra.mxu0 0.0
    %954 = vmatprep.subr.mxu0 0.0
    %955 = vmatpush1.msra.mxu0 0.0
    %956 = vmatprep.subr.mxu0 0.0
    %957 = vmatpush1.msra.mxu0 0.0
    %958 = vmatprep.subr.mxu0 0.0
    %959 = vmatpush1.msra.mxu0 0.0
    %960 = vmatprep.subr.mxu0 0.0
    %961 = vmatpush1.msra.mxu0 0.0
    %962 = vmatprep.subr.mxu0 0.0
    %963 = vmatpush1.msra.mxu0 0.0
    %964 = vmatprep.subr.mxu0 0.0
    %965 = vmatpush1.msra.mxu0 0.0
    %966 = vmatprep.mubr.f32.mxu0 0.0
    %967 = vmatmul.mubr.f32.gmra.mrb[0].mxu0 %v900
    %v968 = vpop.f32.mrb[0].mxu0
    %v969 = vadd.f32 0.0, %v968
    %v970 = vpop.f32.mrb[0].mxu0
    %971 = vdwg.mxu0
    %973 = vrot.lane.b32.xlu0 %v635, 8
    %v974 = vpop.permute.xlu0 %973
    %977 = vrot.lane.b32.xlu0 %v802, 16
    %v978 = vpop.permute.xlu0 %977
    %981 = vrot.lane.b32.xlu0 %v969, 24
    %v982 = vpop.permute.xlu0 %981
    %v984 = vsel %vm306, %v468, %v974
    %vm985 = vcmask 130048
    %v986 = vsel %vm985, %v984, %v978
    %vm987 = vcmask 195584
    %v988 = vsel %vm987, %v986, %v982
    %v989 = vsel %vm306, %v189, 0
    %v992 = vsel %vm306, %v303, 0
    %994 = vmatprep.subr.mxu0 0.0
    %995 = vmatpush1.xpose.msra.mxu0 %v992
    %996 = vmatprep.subr.mxu0 0.0
    %997 = vmatpush1.xpose.msra.mxu0 0.0
    %998 = vmatprep.subr.mxu0 0.0
    %999 = vmatpush1.xpose.msra.mxu0 0.0
    %1000 = vmatprep.subr.mxu0 0.0
    %1001 = vmatpush1.xpose.msra.mxu0 0.0
    %1002 = vmatprep.subr.mxu0 0.0
    %1003 = vmatpush1.xpose.msra.mxu0 0.0
    %1004 = vmatprep.subr.mxu0 0.0
    %1005 = vmatpush1.xpose.msra.mxu0 0.0
    %1006 = vmatprep.subr.mxu0 0.0
    %1007 = vmatpush1.xpose.msra.mxu0 0.0
    %1008 = vmatprep.subr.mxu0 0.0
    %1009 = vmatpush1.xpose.msra.mxu0 0.0
    %1010 = vmatprep.subr.mxu0 0.0
    %1011 = vmatpush1.xpose.msra.mxu0 0.0
    %1012 = vmatprep.subr.mxu0 0.0
    %1013 = vmatpush1.xpose.msra.mxu0 0.0
    %1014 = vmatprep.subr.mxu0 0.0
    %1015 = vmatpush1.xpose.msra.mxu0 0.0
    %1016 = vmatprep.subr.mxu0 0.0
    %1017 = vmatpush1.xpose.msra.mxu0 0.0
    %1018 = vmatprep.subr.mxu0 0.0
    %1019 = vmatpush1.xpose.msra.mxu0 0.0
    %1020 = vmatprep.subr.mxu0 0.0
    %1021 = vmatpush1.xpose.msra.mxu0 0.0
    %1022 = vmatprep.subr.mxu0 0.0
    %1023 = vmatpush1.xpose.msra.mxu0 0.0
    %1024 = vmatprep.subr.mxu0 0.0
    %1025 = vmatpush1.xpose.msra.mxu0 0.0
    %1026 = vmatprep.subr.mxu0 0.0
    %1027 = vmatpush1.xpose.msra.mxu0 0.0
    %1028 = vmatprep.subr.mxu0 0.0
    %1029 = vmatpush1.xpose.msra.mxu0 0.0
    %1030 = vmatprep.subr.mxu0 0.0
    %1031 = vmatpush1.xpose.msra.mxu0 0.0
    %1032 = vmatprep.subr.mxu0 0.0
    %1033 = vmatpush1.xpose.msra.mxu0 0.0
    %1034 = vmatprep.subr.mxu0 0.0
    %1035 = vmatpush1.xpose.msra.mxu0 0.0
    %1036 = vmatprep.subr.mxu0 0.0
    %1037 = vmatpush1.xpose.msra.mxu0 0.0
    %1038 = vmatprep.subr.mxu0 0.0
    %1039 = vmatpush1.xpose.msra.mxu0 0.0
    %1040 = vmatprep.subr.mxu0 0.0
    %1041 = vmatpush1.xpose.msra.mxu0 0.0
    %1042 = vmatprep.subr.mxu0 0.0
    %1043 = vmatpush1.xpose.msra.mxu0 0.0
    %1044 = vmatprep.subr.mxu0 0.0
    %1045 = vmatpush1.xpose.msra.mxu0 0.0
    %1046 = vmatprep.subr.mxu0 0.0
    %1047 = vmatpush1.xpose.msra.mxu0 0.0
    %1048 = vmatprep.subr.mxu0 0.0
    %1049 = vmatpush1.xpose.msra.mxu0 0.0
    %1050 = vmatprep.subr.mxu0 0.0
    %1051 = vmatpush1.xpose.msra.mxu0 0.0
    %1052 = vmatprep.subr.mxu0 0.0
    %1053 = vmatpush1.xpose.msra.mxu0 0.0
    %1054 = vmatprep.subr.mxu0 0.0
    %1055 = vmatpush1.xpose.msra.mxu0 0.0
    %1056 = vmatprep.subr.mxu0 0.0
    %1057 = vmatpush1.xpose.msra.mxu0 0.0
    %1058 = vmatprep.mubr.f32.mxu0 0.0
    %1059 = vmatmul.mubr.f32.gmra.mrb[0].mxu0 %v989
    %v1060 = vpop.f32.mrb[0].mxu0
    %v1061 = vadd.f32 0.0, %v1060
    %v1062 = vpop.f32.mrb[0].mxu0
    %1063 = vdwg.mxu0
    %v1064 = vmul.f32 %v1061, 0.17677669
    %v1065 = vadd.f32 %v1064, %v200
    %v1066 = vsel %vm306, %v1065, -inf
    %1067 = vmax.xlane.f32.xlu0 %v1066
    %v1068 = vpop.xlane.xlu0 %1067
    %v1069 = vsub.f32 %v1065, %v1068
    %v1070 = vmul.f32 %v1069, 1.442695
    %v1071 = vpow.pop %v1070
    %v1072 = vsel %vm306, %v1071, 0.0
    %1073 = vadd.xlane.f32.xlu0 %v1072
    %v1074 = vpop.xlane.xlu0 %1073
    %v1075 = vrcp.pop %v1074
    %v1076 = vmul.f32 %v1071, %v1075
    %1077 = vrot.lane.b32.xlu0 %v303, 96
    %v1078 = vpop.permute.xlu0 %1077
    %v1081 = vsel %vm306, %v1076, 0
    %1083 = vmatprep.subr.mxu0 0.0
    %1084 = vmatpush1.msra.mxu0 %v1078
    %1085 = vmatprep.subr.mxu0 0.0
    %1086 = vmatpush1.msra.mxu0 0.0
    %1087 = vmatprep.subr.mxu0 0.0
    %1088 = vmatpush1.msra.mxu0 0.0
    %1089 = vmatprep.subr.mxu0 0.0
    %1090 = vmatpush1.msra.mxu0 0.0
    %1091 = vmatprep.subr.mxu0 0.0
    %1092 = vmatpush1.msra.mxu0 0.0
    %1093 = vmatprep.subr.mxu0 0.0
    %1094 = vmatpush1.msra.mxu0 0.0
    %1095 = vmatprep.subr.mxu0 0.0
    %1096 = vmatpush1.msra.mxu0 0.0
    %1097 = vmatprep.subr.mxu0 0.0
    %1098 = vmatpush1.msra.mxu0 0.0
    %1099 = vmatprep.subr.mxu0 0.0
    %1100 = vmatpush1.msra.mxu0 0.0
    %1101 = vmatprep.subr.mxu0 0.0
    %1102 = vmatpush1.msra.mxu0 0.0
    %1103 = vmatprep.subr.mxu0 0.0
    %1104 = vmatpush1.msra.mxu0 0.0
    %1105 = vmatprep.subr.mxu0 0.0
    %1106 = vmatpush1.msra.mxu0 0.0
    %1107 = vmatprep.subr.mxu0 0.0
    %1108 = vmatpush1.msra.mxu0 0.0
    %1109 = vmatprep.subr.mxu0 0.0
    %1110 = vmatpush1.msra.mxu0 0.0
    %1111 = vmatprep.subr.mxu0 0.0
    %1112 = vmatpush1.msra.mxu0 0.0
    %1113 = vmatprep.subr.mxu0 0.0
    %1114 = vmatpush1.msra.mxu0 0.0
    %1115 = vmatprep.subr.mxu0 0.0
    %1116 = vmatpush1.msra.mxu0 0.0
    %1117 = vmatprep.subr.mxu0 0.0
    %1118 = vmatpush1.msra.mxu0 0.0
    %1119 = vmatprep.subr.mxu0 0.0
    %1120 = vmatpush1.msra.mxu0 0.0
    %1121 = vmatprep.subr.mxu0 0.0
    %1122 = vmatpush1.msra.mxu0 0.0
    %1123 = vmatprep.subr.mxu0 0.0
    %1124 = vmatpush1.msra.mxu0 0.0
    %1125 = vmatprep.subr.mxu0 0.0
    %1126 = vmatpush1.msra.mxu0 0.0
    %1127 = vmatprep.subr.mxu0 0.0
    %1128 = vmatpush1.msra.mxu0 0.0
    %1129 = vmatprep.subr.mxu0 0.0
    %1130 = vmatpush1.msra.mxu0 0.0
    %1131 = vmatprep.subr.mxu0 0.0
    %1132 = vmatpush1.msra.mxu0 0.0
    %1133 = vmatprep.subr.mxu0 0.0
    %1134 = vmatpush1.msra.mxu0 0.0
    %1135 = vmatprep.subr.mxu0 0.0
    %1136 = vmatpush1.msra.mxu0 0.0
    %1137 = vmatprep.subr.mxu0 0.0
    %1138 = vmatpush1.msra.mxu0 0.0
    %1139 = vmatprep.subr.mxu0 0.0
    %1140 = vmatpush1.msra.mxu0 0.0
    %1141 = vmatprep.subr.mxu0 0.0
    %1142 = vmatpush1.msra.mxu0 0.0
    %1143 = vmatprep.subr.mxu0 0.0
    %1144 = vmatpush1.msra.mxu0 0.0
    %1145 = vmatprep.subr.mxu0 0.0
    %1146 = vmatpush1.msra.mxu0 0.0
    %1147 = vmatprep.mubr.f32.mxu0 0.0
    %1148 = vmatmul.mubr.f32.gmra.mrb[0].mxu0 %v1081
    %v1149 = vpop.f32.mrb[0].mxu0
    %v1150 = vadd.f32 0.0, %v1149
    %v1151 = vpop.f32.mrb[0].mxu0
    %1152 = vdwg.mxu0
    %1153 = vrot.lane.b32.xlu0 %v189, 120
    %v1154 = vpop.permute.xlu0 %1153
    %1155 = vrot.lane.b32.xlu0 %v303, 120
    %v1156 = vpop.permute.xlu0 %1155
    %v1157 = vsel %vm306, %v1154, 0
    %v1159 = vsel %vm306, %v1156, 0
    %1161 = vmatprep.subr.mxu0 0.0
    %1162 = vmatpush1.xpose.msra.mxu0 %v1159
    %1163 = vmatprep.subr.mxu0 0.0
    %1164 = vmatpush1.xpose.msra.mxu0 0.0
    %1165 = vmatprep.subr.mxu0 0.0
    %1166 = vmatpush1.xpose.msra.mxu0 0.0
    %1167 = vmatprep.subr.mxu0 0.0
    %1168 = vmatpush1.xpose.msra.mxu0 0.0
    %1169 = vmatprep.subr.mxu0 0.0
    %1170 = vmatpush1.xpose.msra.mxu0 0.0
    %1171 = vmatprep.subr.mxu0 0.0
    %1172 = vmatpush1.xpose.msra.mxu0 0.0
    %1173 = vmatprep.subr.mxu0 0.0
    %1174 = vmatpush1.xpose.msra.mxu0 0.0
    %1175 = vmatprep.subr.mxu0 0.0
    %1176 = vmatpush1.xpose.msra.mxu0 0.0
    %1177 = vmatprep.subr.mxu0 0.0
    %1178 = vmatpush1.xpose.msra.mxu0 0.0
    %1179 = vmatprep.subr.mxu0 0.0
    %1180 = vmatpush1.xpose.msra.mxu0 0.0
    %1181 = vmatprep.subr.mxu0 0.0
    %1182 = vmatpush1.xpose.msra.mxu0 0.0
    %1183 = vmatprep.subr.mxu0 0.0
    %1184 = vmatpush1.xpose.msra.mxu0 0.0
    %1185 = vmatprep.subr.mxu0 0.0
    %1186 = vmatpush1.xpose.msra.mxu0 0.0
    %1187 = vmatprep.subr.mxu0 0.0
    %1188 = vmatpush1.xpose.msra.mxu0 0.0
    %1189 = vmatprep.subr.mxu0 0.0
    %1190 = vmatpush1.xpose.msra.mxu0 0.0
    %1191 = vmatprep.subr.mxu0 0.0
    %1192 = vmatpush1.xpose.msra.mxu0 0.0
    %1193 = vmatprep.subr.mxu0 0.0
    %1194 = vmatpush1.xpose.msra.mxu0 0.0
    %1195 = vmatprep.subr.mxu0 0.0
    %1196 = vmatpush1.xpose.msra.mxu0 0.0
    %1197 = vmatprep.subr.mxu0 0.0
    %1198 = vmatpush1.xpose.msra.mxu0 0.0
    %1199 = vmatprep.subr.mxu0 0.0
    %1200 = vmatpush1.xpose.msra.mxu0 0.0
    %1201 = vmatprep.subr.mxu0 0.0
    %1202 = vmatpush1.xpose.msra.mxu0 0.0
    %1203 = vmatprep.subr.mxu0 0.0
    %1204 = vmatpush1.xpose.msra.mxu0 0.0
    %1205 = vmatprep.subr.mxu0 0.0
    %1206 = vmatpush1.xpose.msra.mxu0 0.0
    %1207 = vmatprep.subr.mxu0 0.0
    %1208 = vmatpush1.xpose.msra.mxu0 0.0
    %1209 = vmatprep.subr.mxu0 0.0
    %1210 = vmatpush1.xpose.msra.mxu0 0.0
    %1211 = vmatprep.subr.mxu0 0.0
    %1212 = vmatpush1.xpose.msra.mxu0 0.0
    %1213 = vmatprep.subr.mxu0 0.0
    %1214 = vmatpush1.xpose.msra.mxu0 0.0
    %1215 = vmatprep.subr.mxu0 0.0
    %1216 = vmatpush1.xpose.msra.mxu0 0.0
    %1217 = vmatprep.subr.mxu0 0.0
    %1218 = vmatpush1.xpose.msra.mxu0 0.0
    %1219 = vmatprep.subr.mxu0 0.0
    %1220 = vmatpush1.xpose.msra.mxu0 0.0
    %1221 = vmatprep.subr.mxu0 0.0
    %1222 = vmatpush1.xpose.msra.mxu0 0.0
    %1223 = vmatprep.subr.mxu0 0.0
    %1224 = vmatpush1.xpose.msra.mxu0 0.0
    %1225 = vmatprep.mubr.f32.mxu0 0.0
    %1226 = vmatmul.mubr.f32.gmra.mrb[0].mxu0 %v1157
    %v1227 = vpop.f32.mrb[0].mxu0
    %v1228 = vadd.f32 0.0, %v1227
    %v1229 = vpop.f32.mrb[0].mxu0
    %1230 = vdwg.mxu0
    %v1231 = vmul.f32 %v1228, 0.17677669
    %v1232 = vadd.f32 %v1231, %v200
    %v1233 = vsel %vm306, %v1232, -inf
    %1234 = vmax.xlane.f32.xlu0 %v1233
    %v1235 = vpop.xlane.xlu0 %1234
    %v1236 = vsub.f32 %v1232, %v1235
    %v1237 = vmul.f32 %v1236, 1.442695
    %v1238 = vpow.pop %v1237
    %v1239 = vsel %vm306, %v1238, 0.0
    %1240 = vadd.xlane.f32.xlu0 %v1239
    %v1241 = vpop.xlane.xlu0 %1240
    %v1242 = vrcp.pop %v1241
    %v1243 = vmul.f32 %v1238, %v1242
    %1244 = vrot.lane.b32.xlu0 %v303, 88
    %v1245 = vpop.permute.xlu0 %1244
    %v1248 = vsel %vm306, %v1243, 0
    %1250 = vmatprep.subr.mxu0 0.0
    %1251 = vmatpush1.msra.mxu0 %v1245
    %1252 = vmatprep.subr.mxu0 0.0
    %1253 = vmatpush1.msra.mxu0 0.0
    %1254 = vmatprep.subr.mxu0 0.0
    %1255 = vmatpush1.msra.mxu0 0.0
    %1256 = vmatprep.subr.mxu0 0.0
    %1257 = vmatpush1.msra.mxu0 0.0
    %1258 = vmatprep.subr.mxu0 0.0
    %1259 = vmatpush1.msra.mxu0 0.0
    %1260 = vmatprep.subr.mxu0 0.0
    %1261 = vmatpush1.msra.mxu0 0.0
    %1262 = vmatprep.subr.mxu0 0.0
    %1263 = vmatpush1.msra.mxu0 0.0
    %1264 = vmatprep.subr.mxu0 0.0
    %1265 = vmatpush1.msra.mxu0 0.0
    %1266 = vmatprep.subr.mxu0 0.0
    %1267 = vmatpush1.msra.mxu0 0.0
    %1268 = vmatprep.subr.mxu0 0.0
    %1269 = vmatpush1.msra.mxu0 0.0
    %1270 = vmatprep.subr.mxu0 0.0
    %1271 = vmatpush1.msra.mxu0 0.0
    %1272 = vmatprep.subr.mxu0 0.0
    %1273 = vmatpush1.msra.mxu0 0.0
    %1274 = vmatprep.subr.mxu0 0.0
    %1275 = vmatpush1.msra.mxu0 0.0
    %1276 = vmatprep.subr.mxu0 0.0
    %1277 = vmatpush1.msra.mxu0 0.0
    %1278 = vmatprep.subr.mxu0 0.0
    %1279 = vmatpush1.msra.mxu0 0.0
    %1280 = vmatprep.subr.mxu0 0.0
    %1281 = vmatpush1.msra.mxu0 0.0
    %1282 = vmatprep.subr.mxu0 0.0
    %1283 = vmatpush1.msra.mxu0 0.0
    %1284 = vmatprep.subr.mxu0 0.0
    %1285 = vmatpush1.msra.mxu0 0.0
    %1286 = vmatprep.subr.mxu0 0.0
    %1287 = vmatpush1.msra.mxu0 0.0
    %1288 = vmatprep.subr.mxu0 0.0
    %1289 = vmatpush1.msra.mxu0 0.0
    %1290 = vmatprep.subr.mxu0 0.0
    %1291 = vmatpush1.msra.mxu0 0.0
    %1292 = vmatprep.subr.mxu0 0.0
    %1293 = vmatpush1.msra.mxu0 0.0
    %1294 = vmatprep.subr.mxu0 0.0
    %1295 = vmatpush1.msra.mxu0 0.0
    %1296 = vmatprep.subr.mxu0 0.0
    %1297 = vmatpush1.msra.mxu0 0.0
    %1298 = vmatprep.subr.mxu0 0.0
    %1299 = vmatpush1.msra.mxu0 0.0
    %1300 = vmatprep.subr.mxu0 0.0
    %1301 = vmatpush1.msra.mxu0 0.0
    %1302 = vmatprep.subr.mxu0 0.0
    %1303 = vmatpush1.msra.mxu0 0.0
    %1304 = vmatprep.subr.mxu0 0.0
    %1305 = vmatpush1.msra.mxu0 0.0
    %1306 = vmatprep.subr.mxu0 0.0
    %1307 = vmatpush1.msra.mxu0 0.0
    %1308 = vmatprep.subr.mxu0 0.0
    %1309 = vmatpush1.msra.mxu0 0.0
    %1310 = vmatprep.subr.mxu0 0.0
    %1311 = vmatpush1.msra.mxu0 0.0
    %1312 = vmatprep.subr.mxu0 0.0
    %1313 = vmatpush1.msra.mxu0 0.0
    %1314 = vmatprep.mubr.f32.mxu0 0.0
    %1315 = vmatmul.mubr.f32.gmra.mrb[0].mxu0 %v1248
    %v1316 = vpop.f32.mrb[0].mxu0
    %v1317 = vadd.f32 0.0, %v1316
    %v1318 = vpop.f32.mrb[0].mxu0
    %1319 = vdwg.mxu0
    %1320 = vrot.lane.b32.xlu0 %v189, 112
    %v1321 = vpop.permute.xlu0 %1320
    %1322 = vrot.lane.b32.xlu0 %v303, 112
    %v1323 = vpop.permute.xlu0 %1322
    %v1324 = vsel %vm306, %v1321, 0
    %v1326 = vsel %vm306, %v1323, 0
    %1328 = vmatprep.subr.mxu0 0.0
    %1329 = vmatpush1.xpose.msra.mxu0 %v1326
    %1330 = vmatprep.subr.mxu0 0.0
    %1331 = vmatpush1.xpose.msra.mxu0 0.0
    %1332 = vmatprep.subr.mxu0 0.0
    %1333 = vmatpush1.xpose.msra.mxu0 0.0
    %1334 = vmatprep.subr.mxu0 0.0
    %1335 = vmatpush1.xpose.msra.mxu0 0.0
    %1336 = vmatprep.subr.mxu0 0.0
    %1337 = vmatpush1.xpose.msra.mxu0 0.0
    %1338 = vmatprep.subr.mxu0 0.0
    %1339 = vmatpush1.xpose.msra.mxu0 0.0
    %1340 = vmatprep.subr.mxu0 0.0
    %1341 = vmatpush1.xpose.msra.mxu0 0.0
    %1342 = vmatprep.subr.mxu0 0.0
    %1343 = vmatpush1.xpose.msra.mxu0 0.0
    %1344 = vmatprep.subr.mxu0 0.0
    %1345 = vmatpush1.xpose.msra.mxu0 0.0
    %1346 = vmatprep.subr.mxu0 0.0
    %1347 = vmatpush1.xpose.msra.mxu0 0.0
    %1348 = vmatprep.subr.mxu0 0.0
    %1349 = vmatpush1.xpose.msra.mxu0 0.0
    %1350 = vmatprep.subr.mxu0 0.0
    %1351 = vmatpush1.xpose.msra.mxu0 0.0
    %1352 = vmatprep.subr.mxu0 0.0
    %1353 = vmatpush1.xpose.msra.mxu0 0.0
    %1354 = vmatprep.subr.mxu0 0.0
    %1355 = vmatpush1.xpose.msra.mxu0 0.0
    %1356 = vmatprep.subr.mxu0 0.0
    %1357 = vmatpush1.xpose.msra.mxu0 0.0
    %1358 = vmatprep.subr.mxu0 0.0
    %1359 = vmatpush1.xpose.msra.mxu0 0.0
    %1360 = vmatprep.subr.mxu0 0.0
    %1361 = vmatpush1.xpose.msra.mxu0 0.0
    %1362 = vmatprep.subr.mxu0 0.0
    %1363 = vmatpush1.xpose.msra.mxu0 0.0
    %1364 = vmatprep.subr.mxu0 0.0
    %1365 = vmatpush1.xpose.msra.mxu0 0.0
    %1366 = vmatprep.subr.mxu0 0.0
    %1367 = vmatpush1.xpose.msra.mxu0 0.0
    %1368 = vmatprep.subr.mxu0 0.0
    %1369 = vmatpush1.xpose.msra.mxu0 0.0
    %1370 = vmatprep.subr.mxu0 0.0
    %1371 = vmatpush1.xpose.msra.mxu0 0.0
    %1372 = vmatprep.subr.mxu0 0.0
    %1373 = vmatpush1.xpose.msra.mxu0 0.0
    %1374 = vmatprep.subr.mxu0 0.0
    %1375 = vmatpush1.xpose.msra.mxu0 0.0
    %1376 = vmatprep.subr.mxu0 0.0
    %1377 = vmatpush1.xpose.msra.mxu0 0.0
    %1378 = vmatprep.subr.mxu0 0.0
    %1379 = vmatpush1.xpose.msra.mxu0 0.0
    %1380 = vmatprep.subr.mxu0 0.0
    %1381 = vmatpush1.xpose.msra.mxu0 0.0
    %1382 = vmatprep.subr.mxu0 0.0
    %1383 = vmatpush1.xpose.msra.mxu0 0.0
    %1384 = vmatprep.subr.mxu0 0.0
    %1385 = vmatpush1.xpose.msra.mxu0 0.0
    %1386 = vmatprep.subr.mxu0 0.0
    %1387 = vmatpush1.xpose.msra.mxu0 0.0
    %1388 = vmatprep.subr.mxu0 0.0
    %1389 = vmatpush1.xpose.msra.mxu0 0.0
    %1390 = vmatprep.subr.mxu0 0.0
    %1391 = vmatpush1.xpose.msra.mxu0 0.0
    %1392 = vmatprep.mubr.f32.mxu0 0.0
    %1393 = vmatmul.mubr.f32.gmra.mrb[0].mxu0 %v1324
    %v1394 = vpop.f32.mrb[0].mxu0
    %v1395 = vadd.f32 0.0, %v1394
    %v1396 = vpop.f32.mrb[0].mxu0
    %1397 = vdwg.mxu0
    %v1398 = vmul.f32 %v1395, 0.17677669
    %v1399 = vadd.f32 %v1398, %v200
    %v1400 = vsel %vm306, %v1399, -inf
    %1401 = vmax.xlane.f32.xlu0 %v1400
    %v1402 = vpop.xlane.xlu0 %1401
    %v1403 = vsub.f32 %v1399, %v1402
    %v1404 = vmul.f32 %v1403, 1.442695
    %v1405 = vpow.pop %v1404
    %v1406 = vsel %vm306, %v1405, 0.0
    %1407 = vadd.xlane.f32.xlu0 %v1406
    %v1408 = vpop.xlane.xlu0 %1407
    %v1409 = vrcp.pop %v1408
    %v1410 = vmul.f32 %v1405, %v1409
    %1411 = vrot.lane.b32.xlu0 %v303, 80
    %v1412 = vpop.permute.xlu0 %1411
    %v1415 = vsel %vm306, %v1410, 0
    %1417 = vmatprep.subr.mxu0 0.0
    %1418 = vmatpush1.msra.mxu0 %v1412
    %1419 = vmatprep.subr.mxu0 0.0
    %1420 = vmatpush1.msra.mxu0 0.0
    %1421 = vmatprep.subr.mxu0 0.0
    %1422 = vmatpush1.msra.mxu0 0.0
    %1423 = vmatprep.subr.mxu0 0.0
    %1424 = vmatpush1.msra.mxu0 0.0
    %1425 = vmatprep.subr.mxu0 0.0
    %1426 = vmatpush1.msra.mxu0 0.0
    %1427 = vmatprep.subr.mxu0 0.0
    %1428 = vmatpush1.msra.mxu0 0.0
    %1429 = vmatprep.subr.mxu0 0.0
    %1430 = vmatpush1.msra.mxu0 0.0
    %1431 = vmatprep.subr.mxu0 0.0
    %1432 = vmatpush1.msra.mxu0 0.0
    %1433 = vmatprep.subr.mxu0 0.0
    %1434 = vmatpush1.msra.mxu0 0.0
    %1435 = vmatprep.subr.mxu0 0.0
    %1436 = vmatpush1.msra.mxu0 0.0
    %1437 = vmatprep.subr.mxu0 0.0
    %1438 = vmatpush1.msra.mxu0 0.0
    %1439 = vmatprep.subr.mxu0 0.0
    %1440 = vmatpush1.msra.mxu0 0.0
    %1441 = vmatprep.subr.mxu0 0.0
    %1442 = vmatpush1.msra.mxu0 0.0
    %1443 = vmatprep.subr.mxu0 0.0
    %1444 = vmatpush1.msra.mxu0 0.0
    %1445 = vmatprep.subr.mxu0 0.0
    %1446 = vmatpush1.msra.mxu0 0.0
    %1447 = vmatprep.subr.mxu0 0.0
    %1448 = vmatpush1.msra.mxu0 0.0
    %1449 = vmatprep.subr.mxu0 0.0
    %1450 = vmatpush1.msra.mxu0 0.0
    %1451 = vmatprep.subr.mxu0 0.0
    %1452 = vmatpush1.msra.mxu0 0.0
    %1453 = vmatprep.subr.mxu0 0.0
    %1454 = vmatpush1.msra.mxu0 0.0
    %1455 = vmatprep.subr.mxu0 0.0
    %1456 = vmatpush1.msra.mxu0 0.0
    %1457 = vmatprep.subr.mxu0 0.0
    %1458 = vmatpush1.msra.mxu0 0.0
    %1459 = vmatprep.subr.mxu0 0.0
    %1460 = vmatpush1.msra.mxu0 0.0
    %1461 = vmatprep.subr.mxu0 0.0
    %1462 = vmatpush1.msra.mxu0 0.0
    %1463 = vmatprep.subr.mxu0 0.0
    %1464 = vmatpush1.msra.mxu0 0.0
    %1465 = vmatprep.subr.mxu0 0.0
    %1466 = vmatpush1.msra.mxu0 0.0
    %1467 = vmatprep.subr.mxu0 0.0
    %1468 = vmatpush1.msra.mxu0 0.0
    %1469 = vmatprep.subr.mxu0 0.0
    %1470 = vmatpush1.msra.mxu0 0.0
    %1471 = vmatprep.subr.mxu0 0.0
    %1472 = vmatpush1.msra.mxu0 0.0
    %1473 = vmatprep.subr.mxu0 0.0
    %1474 = vmatpush1.msra.mxu0 0.0
    %1475 = vmatprep.subr.mxu0 0.0
    %1476 = vmatpush1.msra.mxu0 0.0
    %1477 = vmatprep.subr.mxu0 0.0
    %1478 = vmatpush1.msra.mxu0 0.0
    %1479 = vmatprep.subr.mxu0 0.0
    %1480 = vmatpush1.msra.mxu0 0.0
    %1481 = vmatprep.mubr.f32.mxu0 0.0
    %1482 = vmatmul.mubr.f32.gmra.mrb[0].mxu0 %v1415
    %v1483 = vpop.f32.mrb[0].mxu0
    %v1484 = vadd.f32 0.0, %v1483
    %v1485 = vpop.f32.mrb[0].mxu0
    %1486 = vdwg.mxu0
    %1487 = vrot.lane.b32.xlu0 %v189, 104
    %v1488 = vpop.permute.xlu0 %1487
    %1489 = vrot.lane.b32.xlu0 %v303, 104
    %v1490 = vpop.permute.xlu0 %1489
    %v1491 = vsel %vm306, %v1488, 0
    %v1493 = vsel %vm306, %v1490, 0
    %1495 = vmatprep.subr.mxu0 0.0
    %1496 = vmatpush1.xpose.msra.mxu0 %v1493
    %1497 = vmatprep.subr.mxu0 0.0
    %1498 = vmatpush1.xpose.msra.mxu0 0.0
    %1499 = vmatprep.subr.mxu0 0.0
    %1500 = vmatpush1.xpose.msra.mxu0 0.0
    %1501 = vmatprep.subr.mxu0 0.0
    %1502 = vmatpush1.xpose.msra.mxu0 0.0
    %1503 = vmatprep.subr.mxu0 0.0
    %1504 = vmatpush1.xpose.msra.mxu0 0.0
    %1505 = vmatprep.subr.mxu0 0.0
    %1506 = vmatpush1.xpose.msra.mxu0 0.0
    %1507 = vmatprep.subr.mxu0 0.0
    %1508 = vmatpush1.xpose.msra.mxu0 0.0
    %1509 = vmatprep.subr.mxu0 0.0
    %1510 = vmatpush1.xpose.msra.mxu0 0.0
    %1511 = vmatprep.subr.mxu0 0.0
    %1512 = vmatpush1.xpose.msra.mxu0 0.0
    %1513 = vmatprep.subr.mxu0 0.0
    %1514 = vmatpush1.xpose.msra.mxu0 0.0
    %1515 = vmatprep.subr.mxu0 0.0
    %1516 = vmatpush1.xpose.msra.mxu0 0.0
    %1517 = vmatprep.subr.mxu0 0.0
    %1518 = vmatpush1.xpose.msra.mxu0 0.0
    %1519 = vmatprep.subr.mxu0 0.0
    %1520 = vmatpush1.xpose.msra.mxu0 0.0
    %1521 = vmatprep.subr.mxu0 0.0
    %1522 = vmatpush1.xpose.msra.mxu0 0.0
    %1523 = vmatprep.subr.mxu0 0.0
    %1524 = vmatpush1.xpose.msra.mxu0 0.0
    %1525 = vmatprep.subr.mxu0 0.0
    %1526 = vmatpush1.xpose.msra.mxu0 0.0
    %1527 = vmatprep.subr.mxu0 0.0
    %1528 = vmatpush1.xpose.msra.mxu0 0.0
    %1529 = vmatprep.subr.mxu0 0.0
    %1530 = vmatpush1.xpose.msra.mxu0 0.0
    %1531 = vmatprep.subr.mxu0 0.0
    %1532 = vmatpush1.xpose.msra.mxu0 0.0
    %1533 = vmatprep.subr.mxu0 0.0
    %1534 = vmatpush1.xpose.msra.mxu0 0.0
    %1535 = vmatprep.subr.mxu0 0.0
    %1536 = vmatpush1.xpose.msra.mxu0 0.0
    %1537 = vmatprep.subr.mxu0 0.0
    %1538 = vmatpush1.xpose.msra.mxu0 0.0
    %1539 = vmatprep.subr.mxu0 0.0
    %1540 = vmatpush1.xpose.msra.mxu0 0.0
    %1541 = vmatprep.subr.mxu0 0.0
    %1542 = vmatpush1.xpose.msra.mxu0 0.0
    %1543 = vmatprep.subr.mxu0 0.0
    %1544 = vmatpush1.xpose.msra.mxu0 0.0
    %1545 = vmatprep.subr.mxu0 0.0
    %1546 = vmatpush1.xpose.msra.mxu0 0.0
    %1547 = vmatprep.subr.mxu0 0.0
    %1548 = vmatpush1.xpose.msra.mxu0 0.0
    %1549 = vmatprep.subr.mxu0 0.0
    %1550 = vmatpush1.xpose.msra.mxu0 0.0
    %1551 = vmatprep.subr.mxu0 0.0
    %1552 = vmatpush1.xpose.msra.mxu0 0.0
    %1553 = vmatprep.subr.mxu0 0.0
    %1554 = vmatpush1.xpose.msra.mxu0 0.0
    %1555 = vmatprep.subr.mxu0 0.0
    %1556 = vmatpush1.xpose.msra.mxu0 0.0
    %1557 = vmatprep.subr.mxu0 0.0
    %1558 = vmatpush1.xpose.msra.mxu0 0.0
    %1559 = vmatprep.mubr.f32.mxu0 0.0
    %1560 = vmatmul.mubr.f32.gmra.mrb[0].mxu0 %v1491
    %v1561 = vpop.f32.mrb[0].mxu0
    %v1562 = vadd.f32 0.0, %v1561
    %v1563 = vpop.f32.mrb[0].mxu0
    %1564 = vdwg.mxu0
    %v1565 = vmul.f32 %v1562, 0.17677669
    %v1566 = vadd.f32 %v1565, %v200
    %v1567 = vsel %vm306, %v1566, -inf
    %1568 = vmax.xlane.f32.xlu0 %v1567
    %v1569 = vpop.xlane.xlu0 %1568
    %v1570 = vsub.f32 %v1566, %v1569
    %v1571 = vmul.f32 %v1570, 1.442695
    %v1572 = vpow.pop %v1571
    %v1573 = vsel %vm306, %v1572, 0.0
    %1574 = vadd.xlane.f32.xlu0 %v1573
    %v1575 = vpop.xlane.xlu0 %1574
    %v1576 = vrcp.pop %v1575
    %v1577 = vmul.f32 %v1572, %v1576
    %1578 = vrot.lane.b32.xlu0 %v303, 72
    %v1579 = vpop.permute.xlu0 %1578
    %v1582 = vsel %vm306, %v1577, 0
    %1584 = vmatprep.subr.mxu0 0.0
    %1585 = vmatpush1.msra.mxu0 %v1579
    %1586 = vmatprep.subr.mxu0 0.0
    %1587 = vmatpush1.msra.mxu0 0.0
    %1588 = vmatprep.subr.mxu0 0.0
    %1589 = vmatpush1.msra.mxu0 0.0
    %1590 = vmatprep.subr.mxu0 0.0
    %1591 = vmatpush1.msra.mxu0 0.0
    %1592 = vmatprep.subr.mxu0 0.0
    %1593 = vmatpush1.msra.mxu0 0.0
    %1594 = vmatprep.subr.mxu0 0.0
    %1595 = vmatpush1.msra.mxu0 0.0
    %1596 = vmatprep.subr.mxu0 0.0
    %1597 = vmatpush1.msra.mxu0 0.0
    %1598 = vmatprep.subr.mxu0 0.0
    %1599 = vmatpush1.msra.mxu0 0.0
    %1600 = vmatprep.subr.mxu0 0.0
    %1601 = vmatpush1.msra.mxu0 0.0
    %1602 = vmatprep.subr.mxu0 0.0
    %1603 = vmatpush1.msra.mxu0 0.0
    %1604 = vmatprep.subr.mxu0 0.0
    %1605 = vmatpush1.msra.mxu0 0.0
    %1606 = vmatprep.subr.mxu0 0.0
    %1607 = vmatpush1.msra.mxu0 0.0
    %1608 = vmatprep.subr.mxu0 0.0
    %1609 = vmatpush1.msra.mxu0 0.0
    %1610 = vmatprep.subr.mxu0 0.0
    %1611 = vmatpush1.msra.mxu0 0.0
    %1612 = vmatprep.subr.mxu0 0.0
    %1613 = vmatpush1.msra.mxu0 0.0
    %1614 = vmatprep.subr.mxu0 0.0
    %1615 = vmatpush1.msra.mxu0 0.0
    %1616 = vmatprep.subr.mxu0 0.0
    %1617 = vmatpush1.msra.mxu0 0.0
    %1618 = vmatprep.subr.mxu0 0.0
    %1619 = vmatpush1.msra.mxu0 0.0
    %1620 = vmatprep.subr.mxu0 0.0
    %1621 = vmatpush1.msra.mxu0 0.0
    %1622 = vmatprep.subr.mxu0 0.0
    %1623 = vmatpush1.msra.mxu0 0.0
    %1624 = vmatprep.subr.mxu0 0.0
    %1625 = vmatpush1.msra.mxu0 0.0
    %1626 = vmatprep.subr.mxu0 0.0
    %1627 = vmatpush1.msra.mxu0 0.0
    %1628 = vmatprep.subr.mxu0 0.0
    %1629 = vmatpush1.msra.mxu0 0.0
    %1630 = vmatprep.subr.mxu0 0.0
    %1631 = vmatpush1.msra.mxu0 0.0
    %1632 = vmatprep.subr.mxu0 0.0
    %1633 = vmatpush1.msra.mxu0 0.0
    %1634 = vmatprep.subr.mxu0 0.0
    %1635 = vmatpush1.msra.mxu0 0.0
    %1636 = vmatprep.subr.mxu0 0.0
    %1637 = vmatpush1.msra.mxu0 0.0
    %1638 = vmatprep.subr.mxu0 0.0
    %1639 = vmatpush1.msra.mxu0 0.0
    %1640 = vmatprep.subr.mxu0 0.0
    %1641 = vmatpush1.msra.mxu0 0.0
    %1642 = vmatprep.subr.mxu0 0.0
    %1643 = vmatpush1.msra.mxu0 0.0
    %1644 = vmatprep.subr.mxu0 0.0
    %1645 = vmatpush1.msra.mxu0 0.0
    %1646 = vmatprep.subr.mxu0 0.0
    %1647 = vmatpush1.msra.mxu0 0.0
    %1648 = vmatprep.mubr.f32.mxu0 0.0
    %1649 = vmatmul.mubr.f32.gmra.mrb[0].mxu0 %v1582
    %v1650 = vpop.f32.mrb[0].mxu0
    %v1651 = vadd.f32 0.0, %v1650
    %v1652 = vpop.f32.mrb[0].mxu0
    %1653 = vdwg.mxu0
    %1655 = vrot.lane.b32.xlu0 %v1317, 8
    %v1656 = vpop.permute.xlu0 %1655
    %1659 = vrot.lane.b32.xlu0 %v1484, 16
    %v1660 = vpop.permute.xlu0 %1659
    %1663 = vrot.lane.b32.xlu0 %v1651, 24
    %v1664 = vpop.permute.xlu0 %1663
    %v1666 = vsel %vm306, %v1150, %v1656
    %v1667 = vsel %vm985, %v1666, %v1660
    %v1668 = vsel %vm987, %v1667, %v1664
    %v1670 = vlaneseq
    %v1671 = vshrl.u32 %v1670, 7
    %v1672 = vsub.s32 0, %v1671
    %v1673 = vrot.slane %v217, %v1672
    %v1676 = vsel %vm224, %v988, 0
    %v1679 = vsel %vm224, %v1668, 0
    %1681 = vmatprep.subr.mxu0 0.0
    %1682 = vmatpush1.msra.mxu0 %v213
    %1683 = vmatprep.subr.mxu0 0.0
    %1684 = vmatpush1.msra.mxu0 %v214
    %1685 = vmatprep.subr.mxu0 0.0
    %1686 = vmatpush1.msra.mxu0 %v215
    %1687 = vmatprep.subr.mxu0 0.0
    %1688 = vmatpush1.msra.mxu0 %v216
    %1689 = vmatprep.subr.mxu0 0.0
    %1690 = vmatpush1.msra.mxu0 0.0
    %1691 = vmatprep.subr.mxu0 0.0
    %1692 = vmatpush1.msra.mxu0 0.0
    %1693 = vmatprep.subr.mxu0 0.0
    %1694 = vmatpush1.msra.mxu0 0.0
    %1695 = vmatprep.subr.mxu0 0.0
    %1696 = vmatpush1.msra.mxu0 0.0
    %1697 = vmatprep.subr.mxu0 0.0
    %1698 = vmatpush1.msra.mxu0 0.0
    %1699 = vmatprep.subr.mxu0 0.0
    %1700 = vmatpush1.msra.mxu0 0.0
    %1701 = vmatprep.subr.mxu0 0.0
    %1702 = vmatpush1.msra.mxu0 0.0
    %1703 = vmatprep.subr.mxu0 0.0
    %1704 = vmatpush1.msra.mxu0 0.0
    %1705 = vmatprep.subr.mxu0 0.0
    %1706 = vmatpush1.msra.mxu0 0.0
    %1707 = vmatprep.subr.mxu0 0.0
    %1708 = vmatpush1.msra.mxu0 0.0
    %1709 = vmatprep.subr.mxu0 0.0
    %1710 = vmatpush1.msra.mxu0 0.0
    %1711 = vmatprep.subr.mxu0 0.0
    %1712 = vmatpush1.msra.mxu0 0.0
    %1713 = vmatprep.subr.mxu0 0.0
    %1714 = vmatpush1.msra.mxu0 0.0
    %1715 = vmatprep.subr.mxu0 0.0
    %1716 = vmatpush1.msra.mxu0 0.0
    %1717 = vmatprep.subr.mxu0 0.0
    %1718 = vmatpush1.msra.mxu0 0.0
    %1719 = vmatprep.subr.mxu0 0.0
    %1720 = vmatpush1.msra.mxu0 0.0
    %1721 = vmatprep.subr.mxu0 0.0
    %1722 = vmatpush1.msra.mxu0 0.0
    %1723 = vmatprep.subr.mxu0 0.0
    %1724 = vmatpush1.msra.mxu0 0.0
    %1725 = vmatprep.subr.mxu0 0.0
    %1726 = vmatpush1.msra.mxu0 0.0
    %1727 = vmatprep.subr.mxu0 0.0
    %1728 = vmatpush1.msra.mxu0 0.0
    %1729 = vmatprep.subr.mxu0 0.0
    %1730 = vmatpush1.msra.mxu0 0.0
    %1731 = vmatprep.subr.mxu0 0.0
    %1732 = vmatpush1.msra.mxu0 0.0
    %1733 = vmatprep.subr.mxu0 0.0
    %1734 = vmatpush1.msra.mxu0 0.0
    %1735 = vmatprep.subr.mxu0 0.0
    %1736 = vmatpush1.msra.mxu0 0.0
    %1737 = vmatprep.subr.mxu0 0.0
    %1738 = vmatpush1.msra.mxu0 0.0
    %1739 = vmatprep.subr.mxu0 0.0
    %1740 = vmatpush1.msra.mxu0 0.0
    %1741 = vmatprep.subr.mxu0 0.0
    %1742 = vmatpush1.msra.mxu0 0.0
    %1743 = vmatprep.subr.mxu0 0.0
    %1744 = vmatpush1.msra.mxu0 0.0
    %1745 = vmatprep.mubr.f32.mxu0 0.0
    %1746 = vmatmul.mubr.f32.gmra.mrb[0].mxu0 %v1676
    %v1747 = vpop.f32.mrb[0].mxu0
    %v1748 = vadd.f32 %v1673, %v1747
    %v1749 = vpop.f32.mrb[0].mxu0
    %1750 = vmatprep.mubr.f32.mxu0 0.0
    %1751 = vmatmul.mubr.f32.gmra.mrb[0].mxu0 %v1679
    %v1752 = vpop.f32.mrb[0].mxu0
    %v1753 = vadd.f32 %v1673, %v1752
    %v1754 = vpop.f32.mrb[0].mxu0
    %1755 = vdwg.mxu0
    %v1756 = vadd.f32 %v1748, %v184
    %v1757 = vadd.f32 %v1753, %v189
    %v1758 = vld [vmem:[%s10] sm:$0x1]
    %v1759 = vld [vmem:[%s11] sm:$0x1]
    %v1760 = vsel %vm224, %v1756, 0.0
    %1761 = vadd.xlane.f32.xlu0 %v1760
    %v1762 = vpop.xlane.xlu0 %1761
    %v1763 = vsel %vm224, %v1757, 0.0
    %1764 = vadd.xlane.f32.xlu0 %v1763
    %v1765 = vpop.xlane.xlu0 %1764
    %v1766 = vrcp.pop 32.0
    %v1767 = vmul.f32 %v1762, %v1766
    %v1768 = vmul.f32 %v1765, %v1766
    %v1769 = vsub.f32 %v1756, %v1767
    %v1770 = vsub.f32 %v1757, %v1768
    %v1771 = vmul.f32 %v1769, %v1769
    %v1772 = vmul.f32 %v1770, %v1770
    %v1773 = vsel %vm224, %v1771, 0.0
    %1774 = vadd.xlane.f32.xlu0 %v1773
    %v1775 = vpop.xlane.xlu0 %1774
    %v1776 = vsel %vm224, %v1772, 0.0
    %1777 = vadd.xlane.f32.xlu0 %v1776
    %v1778 = vpop.xlane.xlu0 %1777
    %v1779 = vmul.f32 %v1775, %v1766
    %v1780 = vmul.f32 %v1778, %v1766
    %v1781 = vadd.f32 %v1779, 1e-05
    %v1782 = vadd.f32 %v1780, 1e-05
    %v1783 = vrsqrt.pop %v1781
    %v1784 = vrsqrt.pop %v1782
    %v1785 = vmul.f32 %v1769, %v1783
    %v1786 = vmul.f32 %v1770, %v1784
    %v1788 = vlaneseq
    %v1789 = vshrl.u32 %v1788, 7
    %v1790 = vsub.s32 0, %v1789
    %v1791 = vrot.slane %v1758, %v1790
    %v1793 = vmul.f32 %v1785, %v1791
    %v1794 = vmul.f32 %v1786, %v1791
    %v1796 = vlaneseq
    %v1797 = vshrl.u32 %v1796, 7
    %v1798 = vsub.s32 0, %v1797
    %v1799 = vrot.slane %v1759, %v1798
    %v1801 = vadd.f32 %v1793, %v1799
    %v1802 = vadd.f32 %v1794, %v1799
    %v1803 = vld [vmem:[%s12] sm:$0xff]
    %v1804 = vld [vmem:[%s12 + $0x8] sm:$0xff]
    %v1805 = vld [vmem:[%s12 + $0x10] sm:$0xff]
    %v1806 = vld [vmem:[%s12 + $0x18] sm:$0xff]
    %v1807 = vld [vmem:[%s13] sm:$0x1]
    %v1808 = vld [vmem:[%s14] sm:$0xff]
    %v1809 = vld [vmem:[%s14 + $0x8] sm:$0xff]
    %v1810 = vld [vmem:[%s14 + $0x10] sm:$0xff]
    %v1811 = vld [vmem:[%s14 + $0x18] sm:$0xff]
    %v1812 = vld [vmem:[%s15] sm:$0x1]
    %v1814 = vlaneseq
    %v1815 = vshrl.u32 %v1814, 7
    %v1816 = vsub.s32 0, %v1815
    %v1817 = vrot.slane %v1807, %v1816
    %v1820 = vsel %vm224, %v192, 0
    %v1823 = vsel %vm224, %v193, 0
    %1825 = vmatprep.subr.mxu0 0.0
    %1826 = vmatpush1.msra.mxu0 %v1803
    %1827 = vmatprep.subr.mxu0 0.0
    %1828 = vmatpush1.msra.mxu0 %v1804
    %1829 = vmatprep.subr.mxu0 0.0
    %1830 = vmatpush1.msra.mxu0 %v1805
    %1831 = vmatprep.subr.mxu0 0.0
    %1832 = vmatpush1.msra.mxu0 %v1806
    %1833 = vmatprep.subr.mxu0 0.0
    %1834 = vmatpush1.msra.mxu0 0.0
    %1835 = vmatprep.subr.mxu0 0.0
    %1836 = vmatpush1.msra.mxu0 0.0
    %1837 = vmatprep.subr.mxu0 0.0
    %1838 = vmatpush1.msra.mxu0 0.0
    %1839 = vmatprep.subr.mxu0 0.0
    %1840 = vmatpush1.msra.mxu0 0.0
    %1841 = vmatprep.subr.mxu0 0.0
    %1842 = vmatpush1.msra.mxu0 0.0
    %1843 = vmatprep.subr.mxu0 0.0
    %1844 = vmatpush1.msra.mxu0 0.0
    %1845 = vmatprep.subr.mxu0 0.0
    %1846 = vmatpush1.msra.mxu0 0.0
    %1847 = vmatprep.subr.mxu0 0.0
    %1848 = vmatpush1.msra.mxu0 0.0
    %1849 = vmatprep.subr.mxu0 0.0
    %1850 = vmatpush1.msra.mxu0 0.0
    %1851 = vmatprep.subr.mxu0 0.0
    %1852 = vmatpush1.msra.mxu0 0.0
    %1853 = vmatprep.subr.mxu0 0.0
    %1854 = vmatpush1.msra.mxu0 0.0
    %1855 = vmatprep.subr.mxu0 0.0
    %1856 = vmatpush1.msra.mxu0 0.0
    %1857 = vmatprep.subr.mxu0 0.0
    %1858 = vmatpush1.msra.mxu0 0.0
    %1859 = vmatprep.subr.mxu0 0.0
    %1860 = vmatpush1.msra.mxu0 0.0
    %1861 = vmatprep.subr.mxu0 0.0
    %1862 = vmatpush1.msra.mxu0 0.0
    %1863 = vmatprep.subr.mxu0 0.0
    %1864 = vmatpush1.msra.mxu0 0.0
    %1865 = vmatprep.subr.mxu0 0.0
    %1866 = vmatpush1.msra.mxu0 0.0
    %1867 = vmatprep.subr.mxu0 0.0
    %1868 = vmatpush1.msra.mxu0 0.0
    %1869 = vmatprep.subr.mxu0 0.0
    %1870 = vmatpush1.msra.mxu0 0.0
    %1871 = vmatprep.subr.mxu0 0.0
    %1872 = vmatpush1.msra.mxu0 0.0
    %1873 = vmatprep.subr.mxu0 0.0
    %1874 = vmatpush1.msra.mxu0 0.0
    %1875 = vmatprep.subr.mxu0 0.0
    %1876 = vmatpush1.msra.mxu0 0.0
    %1877 = vmatprep.subr.mxu0 0.0
    %1878 = vmatpush1.msra.mxu0 0.0
    %1879 = vmatprep.subr.mxu0 0.0
    %1880 = vmatpush1.msra.mxu0 0.0
    %1881 = vmatprep.subr.mxu0 0.0
    %1882 = vmatpush1.msra.mxu0 0.0
    %1883 = vmatprep.subr.mxu0 0.0
    %1884 = vmatpush1.msra.mxu0 0.0
    %1885 = vmatprep.subr.mxu0 0.0
    %1886 = vmatpush1.msra.mxu0 0.0
    %1887 = vmatprep.subr.mxu0 0.0
    %1888 = vmatpush1.msra.mxu0 0.0
    %1889 = vmatprep.mubr.f32.mxu0 0.0
    %1890 = vmatmul.mubr.f32.gmra.mrb[0].mxu0 %v1820
    %v1891 = vpop.f32.mrb[0].mxu0
    %v1892 = vadd.f32 %v1817, %v1891
    %v1893 = vpop.f32.mrb[0].mxu0
    %1894 = vmatprep.mubr.f32.mxu0 0.0
    %1895 = vmatmul.mubr.f32.gmra.mrb[0].mxu0 %v1823
    %v1896 = vpop.f32.mrb[0].mxu0
    %v1897 = vadd.f32 %v1817, %v1896
    %v1898 = vpop.f32.mrb[0].mxu0
    %1899 = vdwg.mxu0
    %v1901 = vsel %vm306, %v1801, 0
    %v1904 = vsel %vm306, %v1892, 0
    %1906 = vmatprep.subr.mxu0 0.0
    %1907 = vmatpush1.xpose.msra.mxu0 %v1904
    %1908 = vmatprep.subr.mxu0 0.0
    %1909 = vmatpush1.xpose.msra.mxu0 0.0
    %1910 = vmatprep.subr.mxu0 0.0
    %1911 = vmatpush1.xpose.msra.mxu0 0.0
    %1912 = vmatprep.subr.mxu0 0.0
    %1913 = vmatpush1.xpose.msra.mxu0 0.0
    %1914 = vmatprep.subr.mxu0 0.0
    %1915 = vmatpush1.xpose.msra.mxu0 0.0
    %1916 = vmatprep.subr.mxu0 0.0
    %1917 = vmatpush1.xpose.msra.mxu0 0.0
    %1918 = vmatprep.subr.mxu0 0.0
    %1919 = vmatpush1.xpose.msra.mxu0 0.0
    %1920 = vmatprep.subr.mxu0 0.0
    %1921 = vmatpush1.xpose.msra.mxu0 0.0
    %1922 = vmatprep.subr.mxu0 0.0
    %1923 = vmatpush1.xpose.msra.mxu0 0.0
    %1924 = vmatprep.subr.mxu0 0.0
    %1925 = vmatpush1.xpose.msra.mxu0 0.0
    %1926 = vmatprep.subr.mxu0 0.0
    %1927 = vmatpush1.xpose.msra.mxu0 0.0
    %1928 = vmatprep.subr.mxu0 0.0
    %1929 = vmatpush1.xpose.msra.mxu0 0.0
    %1930 = vmatprep.subr.mxu0 0.0
    %1931 = vmatpush1.xpose.msra.mxu0 0.0
    %1932 = vmatprep.subr.mxu0 0.0
    %1933 = vmatpush1.xpose.msra.mxu0 0.0
    %1934 = vmatprep.subr.mxu0 0.0
    %1935 = vmatpush1.xpose.msra.mxu0 0.0
    %1936 = vmatprep.subr.mxu0 0.0
    %1937 = vmatpush1.xpose.msra.mxu0 0.0
    %1938 = vmatprep.subr.mxu0 0.0
    %1939 = vmatpush1.xpose.msra.mxu0 0.0
    %1940 = vmatprep.subr.mxu0 0.0
    %1941 = vmatpush1.xpose.msra.mxu0 0.0
    %1942 = vmatprep.subr.mxu0 0.0
    %1943 = vmatpush1.xpose.msra.mxu0 0.0
    %1944 = vmatprep.subr.mxu0 0.0
    %1945 = vmatpush1.xpose.msra.mxu0 0.0
    %1946 = vmatprep.subr.mxu0 0.0
    %1947 = vmatpush1.xpose.msra.mxu0 0.0
    %1948 = vmatprep.subr.mxu0 0.0
    %1949 = vmatpush1.xpose.msra.mxu0 0.0
    %1950 = vmatprep.subr.mxu0 0.0
    %1951 = vmatpush1.xpose.msra.mxu0 0.0
    %1952 = vmatprep.subr.mxu0 0.0
    %1953 = vmatpush1.xpose.msra.mxu0 0.0
    %1954 = vmatprep.subr.mxu0 0.0
    %1955 = vmatpush1.xpose.msra.mxu0 0.0
    %1956 = vmatprep.subr.mxu0 0.0
    %1957 = vmatpush1.xpose.msra.mxu0 0.0
    %1958 = vmatprep.subr.mxu0 0.0
    %1959 = vmatpush1.xpose.msra.mxu0 0.0
    %1960 = vmatprep.subr.mxu0 0.0
    %1961 = vmatpush1.xpose.msra.mxu0 0.0
    %1962 = vmatprep.subr.mxu0 0.0
    %1963 = vmatpush1.xpose.msra.mxu0 0.0
    %1964 = vmatprep.subr.mxu0 0.0
    %1965 = vmatpush1.xpose.msra.mxu0 0.0
    %1966 = vmatprep.subr.mxu0 0.0
    %1967 = vmatpush1.xpose.msra.mxu0 0.0
    %1968 = vmatprep.subr.mxu0 0.0
    %1969 = vmatpush1.xpose.msra.mxu0 0.0
    %1970 = vmatprep.mubr.f32.mxu0 0.0
    %1971 = vmatmul.mubr.f32.gmra.mrb[0].mxu0 %v1901
    %v1972 = vpop.f32.mrb[0].mxu0
    %v1973 = vadd.f32 0.0, %v1972
    %v1974 = vpop.f32.mrb[0].mxu0
    %1975 = vdwg.mxu0
    %v1976 = vmul.f32 %v1973, 0.17677669
    %v1978 = vlaneseq
    %v1979 = vshrl.u32 %v1978, 7
    %v1980 = vsub.s32 0, %v1979
    %v1981 = vrot.slane %v203, %v1980
    %v1983 = vadd.f32 %v1976, %v1981
    %v1984 = vsel %vm306, %v1983, -inf
    %1985 = vmax.xlane.f32.xlu0 %v1984
    %v1986 = vpop.xlane.xlu0 %1985
    %v1987 = vsub.f32 %v1983, %v1986
    %v1988 = vmul.f32 %v1987, 1.442695
    %v1989 = vpow.pop %v1988
    %v1990 = vsel %vm306, %v1989, 0.0
    %1991 = vadd.xlane.f32.xlu0 %v1990
    %v1992 = vpop.xlane.xlu0 %1991
    %v1993 = vrcp.pop %v1992
    %v1994 = vmul.f32 %v1989, %v1993
    %1995 = vrot.lane.b32.xlu0 %v1892, 96
    %v1996 = vpop.permute.xlu0 %1995
    %v1999 = vsel %vm306, %v1994, 0
    %2001 = vmatprep.subr.mxu0 0.0
    %2002 = vmatpush1.msra.mxu0 %v1996
    %2003 = vmatprep.subr.mxu0 0.0
    %2004 = vmatpush1.msra.mxu0 0.0
    %2005 = vmatprep.subr.mxu0 0.0
    %2006 = vmatpush1.msra.mxu0 0.0
    %2007 = vmatprep.subr.mxu0 0.0
    %2008 = vmatpush1.msra.mxu0 0.0
    %2009 = vmatprep.subr.mxu0 0.0
    %2010 = vmatpush1.msra.mxu0 0.0
    %2011 = vmatprep.subr.mxu0 0.0
    %2012 = vmatpush1.msra.mxu0 0.0
    %2013 = vmatprep.subr.mxu0 0.0
    %2014 = vmatpush1.msra.mxu0 0.0
    %2015 = vmatprep.subr.mxu0 0.0
    %2016 = vmatpush1.msra.mxu0 0.0
    %2017 = vmatprep.subr.mxu0 0.0
    %2018 = vmatpush1.msra.mxu0 0.0
    %2019 = vmatprep.subr.mxu0 0.0
    %2020 = vmatpush1.msra.mxu0 0.0
    %2021 = vmatprep.subr.mxu0 0.0
    %2022 = vmatpush1.msra.mxu0 0.0
    %2023 = vmatprep.subr.mxu0 0.0
    %2024 = vmatpush1.msra.mxu0 0.0
    %2025 = vmatprep.subr.mxu0 0.0
    %2026 = vmatpush1.msra.mxu0 0.0
    %2027 = vmatprep.subr.mxu0 0.0
    %2028 = vmatpush1.msra.mxu0 0.0
    %2029 = vmatprep.subr.mxu0 0.0
    %2030 = vmatpush1.msra.mxu0 0.0
    %2031 = vmatprep.subr.mxu0 0.0
    %2032 = vmatpush1.msra.mxu0 0.0
    %2033 = vmatprep.subr.mxu0 0.0
    %2034 = vmatpush1.msra.mxu0 0.0
    %2035 = vmatprep.subr.mxu0 0.0
    %2036 = vmatpush1.msra.mxu0 0.0
    %2037 = vmatprep.subr.mxu0 0.0
    %2038 = vmatpush1.msra.mxu0 0.0
    %2039 = vmatprep.subr.mxu0 0.0
    %2040 = vmatpush1.msra.mxu0 0.0
    %2041 = vmatprep.subr.mxu0 0.0
    %2042 = vmatpush1.msra.mxu0 0.0
    %2043 = vmatprep.subr.mxu0 0.0
    %2044 = vmatpush1.msra.mxu0 0.0
    %2045 = vmatprep.subr.mxu0 0.0
    %2046 = vmatpush1.msra.mxu0 0.0
    %2047 = vmatprep.subr.mxu0 0.0
    %2048 = vmatpush1.msra.mxu0 0.0
    %2049 = vmatprep.subr.mxu0 0.0
    %2050 = vmatpush1.msra.mxu0 0.0
    %2051 = vmatprep.subr.mxu0 0.0
    %2052 = vmatpush1.msra.mxu0 0.0
    %2053 = vmatprep.subr.mxu0 0.0
    %2054 = vmatpush1.msra.mxu0 0.0
    %2055 = vmatprep.subr.mxu0 0.0
    %2056 = vmatpush1.msra.mxu0 0.0
    %2057 = vmatprep.subr.mxu0 0.0
    %2058 = vmatpush1.msra.mxu0 0.0
    %2059 = vmatprep.subr.mxu0 0.0
    %2060 = vmatpush1.msra.mxu0 0.0
    %2061 = vmatprep.subr.mxu0 0.0
    %2062 = vmatpush1.msra.mxu0 0.0
    %2063 = vmatprep.subr.mxu0 0.0
    %2064 = vmatpush1.msra.mxu0 0.0
    %2065 = vmatprep.mubr.f32.mxu0 0.0
    %2066 = vmatmul.mubr.f32.gmra.mrb[0].mxu0 %v1999
    %v2067 = vpop.f32.mrb[0].mxu0
    %v2068 = vadd.f32 0.0, %v2067
    %v2069 = vpop.f32.mrb[0].mxu0
    %2070 = vdwg.mxu0
    %2071 = vrot.lane.b32.xlu0 %v1801, 120
    %v2072 = vpop.permute.xlu0 %2071
    %2073 = vrot.lane.b32.xlu0 %v1892, 120
    %v2074 = vpop.permute.xlu0 %2073
    %v2075 = vsel %vm306, %v2072, 0
    %v2077 = vsel %vm306, %v2074, 0
    %2079 = vmatprep.subr.mxu0 0.0
    %2080 = vmatpush1.xpose.msra.mxu0 %v2077
    %2081 = vmatprep.subr.mxu0 0.0
    %2082 = vmatpush1.xpose.msra.mxu0 0.0
    %2083 = vmatprep.subr.mxu0 0.0
    %2084 = vmatpush1.xpose.msra.mxu0 0.0
    %2085 = vmatprep.subr.mxu0 0.0
    %2086 = vmatpush1.xpose.msra.mxu0 0.0
    %2087 = vmatprep.subr.mxu0 0.0
    %2088 = vmatpush1.xpose.msra.mxu0 0.0
    %2089 = vmatprep.subr.mxu0 0.0
    %2090 = vmatpush1.xpose.msra.mxu0 0.0
    %2091 = vmatprep.subr.mxu0 0.0
    %2092 = vmatpush1.xpose.msra.mxu0 0.0
    %2093 = vmatprep.subr.mxu0 0.0
    %2094 = vmatpush1.xpose.msra.mxu0 0.0
    %2095 = vmatprep.subr.mxu0 0.0
    %2096 = vmatpush1.xpose.msra.mxu0 0.0
    %2097 = vmatprep.subr.mxu0 0.0
    %2098 = vmatpush1.xpose.msra.mxu0 0.0
    %2099 = vmatprep.subr.mxu0 0.0
    %2100 = vmatpush1.xpose.msra.mxu0 0.0
    %2101 = vmatprep.subr.mxu0 0.0
    %2102 = vmatpush1.xpose.msra.mxu0 0.0
    %2103 = vmatprep.subr.mxu0 0.0
    %2104 = vmatpush1.xpose.msra.mxu0 0.0
    %2105 = vmatprep.subr.mxu0 0.0
    %2106 = vmatpush1.xpose.msra.mxu0 0.0
    %2107 = vmatprep.subr.mxu0 0.0
    %2108 = vmatpush1.xpose.msra.mxu0 0.0
    %2109 = vmatprep.subr.mxu0 0.0
    %2110 = vmatpush1.xpose.msra.mxu0 0.0
    %2111 = vmatprep.subr.mxu0 0.0
    %2112 = vmatpush1.xpose.msra.mxu0 0.0
    %2113 = vmatprep.subr.mxu0 0.0
    %2114 = vmatpush1.xpose.msra.mxu0 0.0
    %2115 = vmatprep.subr.mxu0 0.0
    %2116 = vmatpush1.xpose.msra.mxu0 0.0
    %2117 = vmatprep.subr.mxu0 0.0
    %2118 = vmatpush1.xpose.msra.mxu0 0.0
    %2119 = vmatprep.subr.mxu0 0.0
    %2120 = vmatpush1.xpose.msra.mxu0 0.0
    %2121 = vmatprep.subr.mxu0 0.0
    %2122 = vmatpush1.xpose.msra.mxu0 0.0
    %2123 = vmatprep.subr.mxu0 0.0
    %2124 = vmatpush1.xpose.msra.mxu0 0.0
    %2125 = vmatprep.subr.mxu0 0.0
    %2126 = vmatpush1.xpose.msra.mxu0 0.0
    %2127 = vmatprep.subr.mxu0 0.0
    %2128 = vmatpush1.xpose.msra.mxu0 0.0
    %2129 = vmatprep.subr.mxu0 0.0
    %2130 = vmatpush1.xpose.msra.mxu0 0.0
    %2131 = vmatprep.subr.mxu0 0.0
    %2132 = vmatpush1.xpose.msra.mxu0 0.0
    %2133 = vmatprep.subr.mxu0 0.0
    %2134 = vmatpush1.xpose.msra.mxu0 0.0
    %2135 = vmatprep.subr.mxu0 0.0
    %2136 = vmatpush1.xpose.msra.mxu0 0.0
    %2137 = vmatprep.subr.mxu0 0.0
    %2138 = vmatpush1.xpose.msra.mxu0 0.0
    %2139 = vmatprep.subr.mxu0 0.0
    %2140 = vmatpush1.xpose.msra.mxu0 0.0
    %2141 = vmatprep.subr.mxu0 0.0
    %2142 = vmatpush1.xpose.msra.mxu0 0.0
    %2143 = vmatprep.mubr.f32.mxu0 0.0
    %2144 = vmatmul.mubr.f32.gmra.mrb[0].mxu0 %v2075
    %v2145 = vpop.f32.mrb[0].mxu0
    %v2146 = vadd.f32 0.0, %v2145
    %v2147 = vpop.f32.mrb[0].mxu0
    %2148 = vdwg.mxu0
    %v2149 = vmul.f32 %v2146, 0.17677669
    %v2150 = vadd.f32 %v2149, %v1981
    %v2151 = vsel %vm306, %v2150, -inf
    %2152 = vmax.xlane.f32.xlu0 %v2151
    %v2153 = vpop.xlane.xlu0 %2152
    %v2154 = vsub.f32 %v2150, %v2153
    %v2155 = vmul.f32 %v2154, 1.442695
    %v2156 = vpow.pop %v2155
    %v2157 = vsel %vm306, %v2156, 0.0
    %2158 = vadd.xlane.f32.xlu0 %v2157
    %v2159 = vpop.xlane.xlu0 %2158
    %v2160 = vrcp.pop %v2159
    %v2161 = vmul.f32 %v2156, %v2160
    %2162 = vrot.lane.b32.xlu0 %v1892, 88
    %v2163 = vpop.permute.xlu0 %2162
    %v2166 = vsel %vm306, %v2161, 0
    %2168 = vmatprep.subr.mxu0 0.0
    %2169 = vmatpush1.msra.mxu0 %v2163
    %2170 = vmatprep.subr.mxu0 0.0
    %2171 = vmatpush1.msra.mxu0 0.0
    %2172 = vmatprep.subr.mxu0 0.0
    %2173 = vmatpush1.msra.mxu0 0.0
    %2174 = vmatprep.subr.mxu0 0.0
    %2175 = vmatpush1.msra.mxu0 0.0
    %2176 = vmatprep.subr.mxu0 0.0
    %2177 = vmatpush1.msra.mxu0 0.0
    %2178 = vmatprep.subr.mxu0 0.0
    %2179 = vmatpush1.msra.mxu0 0.0
    %2180 = vmatprep.subr.mxu0 0.0
    %2181 = vmatpush1.msra.mxu0 0.0
    %2182 = vmatprep.subr.mxu0 0.0
    %2183 = vmatpush1.msra.mxu0 0.0
    %2184 = vmatprep.subr.mxu0 0.0
    %2185 = vmatpush1.msra.mxu0 0.0
    %2186 = vmatprep.subr.mxu0 0.0
    %2187 = vmatpush1.msra.mxu0 0.0
    %2188 = vmatprep.subr.mxu0 0.0
    %2189 = vmatpush1.msra.mxu0 0.0
    %2190 = vmatprep.subr.mxu0 0.0
    %2191 = vmatpush1.msra.mxu0 0.0
    %2192 = vmatprep.subr.mxu0 0.0
    %2193 = vmatpush1.msra.mxu0 0.0
    %2194 = vmatprep.subr.mxu0 0.0
    %2195 = vmatpush1.msra.mxu0 0.0
    %2196 = vmatprep.subr.mxu0 0.0
    %2197 = vmatpush1.msra.mxu0 0.0
    %2198 = vmatprep.subr.mxu0 0.0
    %2199 = vmatpush1.msra.mxu0 0.0
    %2200 = vmatprep.subr.mxu0 0.0
    %2201 = vmatpush1.msra.mxu0 0.0
    %2202 = vmatprep.subr.mxu0 0.0
    %2203 = vmatpush1.msra.mxu0 0.0
    %2204 = vmatprep.subr.mxu0 0.0
    %2205 = vmatpush1.msra.mxu0 0.0
    %2206 = vmatprep.subr.mxu0 0.0
    %2207 = vmatpush1.msra.mxu0 0.0
    %2208 = vmatprep.subr.mxu0 0.0
    %2209 = vmatpush1.msra.mxu0 0.0
    %2210 = vmatprep.subr.mxu0 0.0
    %2211 = vmatpush1.msra.mxu0 0.0
    %2212 = vmatprep.subr.mxu0 0.0
    %2213 = vmatpush1.msra.mxu0 0.0
    %2214 = vmatprep.subr.mxu0 0.0
    %2215 = vmatpush1.msra.mxu0 0.0
    %2216 = vmatprep.subr.mxu0 0.0
    %2217 = vmatpush1.msra.mxu0 0.0
    %2218 = vmatprep.subr.mxu0 0.0
    %2219 = vmatpush1.msra.mxu0 0.0
    %2220 = vmatprep.subr.mxu0 0.0
    %2221 = vmatpush1.msra.mxu0 0.0
    %2222 = vmatprep.subr.mxu0 0.0
    %2223 = vmatpush1.msra.mxu0 0.0
    %2224 = vmatprep.subr.mxu0 0.0
    %2225 = vmatpush1.msra.mxu0 0.0
    %2226 = vmatprep.subr.mxu0 0.0
    %2227 = vmatpush1.msra.mxu0 0.0
    %2228 = vmatprep.subr.mxu0 0.0
    %2229 = vmatpush1.msra.mxu0 0.0
    %2230 = vmatprep.subr.mxu0 0.0
    %2231 = vmatpush1.msra.mxu0 0.0
    %2232 = vmatprep.mubr.f32.mxu0 0.0
    %2233 = vmatmul.mubr.f32.gmra.mrb[0].mxu0 %v2166
    %v2234 = vpop.f32.mrb[0].mxu0
    %v2235 = vadd.f32 0.0, %v2234
    %v2236 = vpop.f32.mrb[0].mxu0
    %2237 = vdwg.mxu0
    %2238 = vrot.lane.b32.xlu0 %v1801, 112
    %v2239 = vpop.permute.xlu0 %2238
    %2240 = vrot.lane.b32.xlu0 %v1892, 112
    %v2241 = vpop.permute.xlu0 %2240
    %v2242 = vsel %vm306, %v2239, 0
    %v2244 = vsel %vm306, %v2241, 0
    %2246 = vmatprep.subr.mxu0 0.0
    %2247 = vmatpush1.xpose.msra.mxu0 %v2244
    %2248 = vmatprep.subr.mxu0 0.0
    %2249 = vmatpush1.xpose.msra.mxu0 0.0
    %2250 = vmatprep.subr.mxu0 0.0
    %2251 = vmatpush1.xpose.msra.mxu0 0.0
    %2252 = vmatprep.subr.mxu0 0.0
    %2253 = vmatpush1.xpose.msra.mxu0 0.0
    %2254 = vmatprep.subr.mxu0 0.0
    %2255 = vmatpush1.xpose.msra.mxu0 0.0
    %2256 = vmatprep.subr.mxu0 0.0
    %2257 = vmatpush1.xpose.msra.mxu0 0.0
    %2258 = vmatprep.subr.mxu0 0.0
    %2259 = vmatpush1.xpose.msra.mxu0 0.0
    %2260 = vmatprep.subr.mxu0 0.0
    %2261 = vmatpush1.xpose.msra.mxu0 0.0
    %2262 = vmatprep.subr.mxu0 0.0
    %2263 = vmatpush1.xpose.msra.mxu0 0.0
    %2264 = vmatprep.subr.mxu0 0.0
    %2265 = vmatpush1.xpose.msra.mxu0 0.0
    %2266 = vmatprep.subr.mxu0 0.0
    %2267 = vmatpush1.xpose.msra.mxu0 0.0
    %2268 = vmatprep.subr.mxu0 0.0
    %2269 = vmatpush1.xpose.msra.mxu0 0.0
    %2270 = vmatprep.subr.mxu0 0.0
    %2271 = vmatpush1.xpose.msra.mxu0 0.0
    %2272 = vmatprep.subr.mxu0 0.0
    %2273 = vmatpush1.xpose.msra.mxu0 0.0
    %2274 = vmatprep.subr.mxu0 0.0
    %2275 = vmatpush1.xpose.msra.mxu0 0.0
    %2276 = vmatprep.subr.mxu0 0.0
    %2277 = vmatpush1.xpose.msra.mxu0 0.0
    %2278 = vmatprep.subr.mxu0 0.0
    %2279 = vmatpush1.xpose.msra.mxu0 0.0
    %2280 = vmatprep.subr.mxu0 0.0
    %2281 = vmatpush1.xpose.msra.mxu0 0.0
    %2282 = vmatprep.subr.mxu0 0.0
    %2283 = vmatpush1.xpose.msra.mxu0 0.0
    %2284 = vmatprep.subr.mxu0 0.0
    %2285 = vmatpush1.xpose.msra.mxu0 0.0
    %2286 = vmatprep.subr.mxu0 0.0
    %2287 = vmatpush1.xpose.msra.mxu0 0.0
    %2288 = vmatprep.subr.mxu0 0.0
    %2289 = vmatpush1.xpose.msra.mxu0 0.0
    %2290 = vmatprep.subr.mxu0 0.0
    %2291 = vmatpush1.xpose.msra.mxu0 0.0
    %2292 = vmatprep.subr.mxu0 0.0
    %2293 = vmatpush1.xpose.msra.mxu0 0.0
    %2294 = vmatprep.subr.mxu0 0.0
    %2295 = vmatpush1.xpose.msra.mxu0 0.0
    %2296 = vmatprep.subr.mxu0 0.0
    %2297 = vmatpush1.xpose.msra.mxu0 0.0
    %2298 = vmatprep.subr.mxu0 0.0
    %2299 = vmatpush1.xpose.msra.mxu0 0.0
    %2300 = vmatprep.subr.mxu0 0.0
    %2301 = vmatpush1.xpose.msra.mxu0 0.0
    %2302 = vmatprep.subr.mxu0 0.0
    %2303 = vmatpush1.xpose.msra.mxu0 0.0
    %2304 = vmatprep.subr.mxu0 0.0
    %2305 = vmatpush1.xpose.msra.mxu0 0.0
    %2306 = vmatprep.subr.mxu0 0.0
    %2307 = vmatpush1.xpose.msra.mxu0 0.0
    %2308 = vmatprep.subr.mxu0 0.0
    %2309 = vmatpush1.xpose.msra.mxu0 0.0
    %2310 = vmatprep.mubr.f32.mxu0 0.0
    %2311 = vmatmul.mubr.f32.gmra.mrb[0].mxu0 %v2242
    %v2312 = vpop.f32.mrb[0].mxu0
    %v2313 = vadd.f32 0.0, %v2312
    %v2314 = vpop.f32.mrb[0].mxu0
    %2315 = vdwg.mxu0
    %v2316 = vmul.f32 %v2313, 0.17677669
    %v2317 = vadd.f32 %v2316, %v1981
    %v2318 = vsel %vm306, %v2317, -inf
    %2319 = vmax.xlane.f32.xlu0 %v2318
    %v2320 = vpop.xlane.xlu0 %2319
    %v2321 = vsub.f32 %v2317, %v2320
    %v2322 = vmul.f32 %v2321, 1.442695
    %v2323 = vpow.pop %v2322
    %v2324 = vsel %vm306, %v2323, 0.0
    %2325 = vadd.xlane.f32.xlu0 %v2324
    %v2326 = vpop.xlane.xlu0 %2325
    %v2327 = vrcp.pop %v2326
    %v2328 = vmul.f32 %v2323, %v2327
    %2329 = vrot.lane.b32.xlu0 %v1892, 80
    %v2330 = vpop.permute.xlu0 %2329
    %v2333 = vsel %vm306, %v2328, 0
    %2335 = vmatprep.subr.mxu0 0.0
    %2336 = vmatpush1.msra.mxu0 %v2330
    %2337 = vmatprep.subr.mxu0 0.0
    %2338 = vmatpush1.msra.mxu0 0.0
    %2339 = vmatprep.subr.mxu0 0.0
    %2340 = vmatpush1.msra.mxu0 0.0
    %2341 = vmatprep.subr.mxu0 0.0
    %2342 = vmatpush1.msra.mxu0 0.0
    %2343 = vmatprep.subr.mxu0 0.0
    %2344 = vmatpush1.msra.mxu0 0.0
    %2345 = vmatprep.subr.mxu0 0.0
    %2346 = vmatpush1.msra.mxu0 0.0
    %2347 = vmatprep.subr.mxu0 0.0
    %2348 = vmatpush1.msra.mxu0 0.0
    %2349 = vmatprep.subr.mxu0 0.0
    %2350 = vmatpush1.msra.mxu0 0.0
    %2351 = vmatprep.subr.mxu0 0.0
    %2352 = vmatpush1.msra.mxu0 0.0
    %2353 = vmatprep.subr.mxu0 0.0
    %2354 = vmatpush1.msra.mxu0 0.0
    %2355 = vmatprep.subr.mxu0 0.0
    %2356 = vmatpush1.msra.mxu0 0.0
    %2357 = vmatprep.subr.mxu0 0.0
    %2358 = vmatpush1.msra.mxu0 0.0
    %2359 = vmatprep.subr.mxu0 0.0
    %2360 = vmatpush1.msra.mxu0 0.0
    %2361 = vmatprep.subr.mxu0 0.0
    %2362 = vmatpush1.msra.mxu0 0.0
    %2363 = vmatprep.subr.mxu0 0.0
    %2364 = vmatpush1.msra.mxu0 0.0
    %2365 = vmatprep.subr.mxu0 0.0
    %2366 = vmatpush1.msra.mxu0 0.0
    %2367 = vmatprep.subr.mxu0 0.0
    %2368 = vmatpush1.msra.mxu0 0.0
    %2369 = vmatprep.subr.mxu0 0.0
    %2370 = vmatpush1.msra.mxu0 0.0
    %2371 = vmatprep.subr.mxu0 0.0
    %2372 = vmatpush1.msra.mxu0 0.0
    %2373 = vmatprep.subr.mxu0 0.0
    %2374 = vmatpush1.msra.mxu0 0.0
    %2375 = vmatprep.subr.mxu0 0.0
    %2376 = vmatpush1.msra.mxu0 0.0
    %2377 = vmatprep.subr.mxu0 0.0
    %2378 = vmatpush1.msra.mxu0 0.0
    %2379 = vmatprep.subr.mxu0 0.0
    %2380 = vmatpush1.msra.mxu0 0.0
    %2381 = vmatprep.subr.mxu0 0.0
    %2382 = vmatpush1.msra.mxu0 0.0
    %2383 = vmatprep.subr.mxu0 0.0
    %2384 = vmatpush1.msra.mxu0 0.0
    %2385 = vmatprep.subr.mxu0 0.0
    %2386 = vmatpush1.msra.mxu0 0.0
    %2387 = vmatprep.subr.mxu0 0.0
    %2388 = vmatpush1.msra.mxu0 0.0
    %2389 = vmatprep.subr.mxu0 0.0
    %2390 = vmatpush1.msra.mxu0 0.0
    %2391 = vmatprep.subr.mxu0 0.0
    %2392 = vmatpush1.msra.mxu0 0.0
    %2393 = vmatprep.subr.mxu0 0.0
    %2394 = vmatpush1.msra.mxu0 0.0
    %2395 = vmatprep.subr.mxu0 0.0
    %2396 = vmatpush1.msra.mxu0 0.0
    %2397 = vmatprep.subr.mxu0 0.0
    %2398 = vmatpush1.msra.mxu0 0.0
    %2399 = vmatprep.mubr.f32.mxu0 0.0
    %2400 = vmatmul.mubr.f32.gmra.mrb[0].mxu0 %v2333
    %v2401 = vpop.f32.mrb[0].mxu0
    %v2402 = vadd.f32 0.0, %v2401
    %v2403 = vpop.f32.mrb[0].mxu0
    %2404 = vdwg.mxu0
    %2405 = vrot.lane.b32.xlu0 %v1801, 104
    %v2406 = vpop.permute.xlu0 %2405
    %2407 = vrot.lane.b32.xlu0 %v1892, 104
    %v2408 = vpop.permute.xlu0 %2407
    %v2409 = vsel %vm306, %v2406, 0
    %v2411 = vsel %vm306, %v2408, 0
    %2413 = vmatprep.subr.mxu0 0.0
    %2414 = vmatpush1.xpose.msra.mxu0 %v2411
    %2415 = vmatprep.subr.mxu0 0.0
    %2416 = vmatpush1.xpose.msra.mxu0 0.0
    %2417 = vmatprep.subr.mxu0 0.0
    %2418 = vmatpush1.xpose.msra.mxu0 0.0
    %2419 = vmatprep.subr.mxu0 0.0
    %2420 = vmatpush1.xpose.msra.mxu0 0.0
    %2421 = vmatprep.subr.mxu0 0.0
    %2422 = vmatpush1.xpose.msra.mxu0 0.0
    %2423 = vmatprep.subr.mxu0 0.0
    %2424 = vmatpush1.xpose.msra.mxu0 0.0
    %2425 = vmatprep.subr.mxu0 0.0
    %2426 = vmatpush1.xpose.msra.mxu0 0.0
    %2427 = vmatprep.subr.mxu0 0.0
    %2428 = vmatpush1.xpose.msra.mxu0 0.0
    %2429 = vmatprep.subr.mxu0 0.0
    %2430 = vmatpush1.xpose.msra.mxu0 0.0
    %2431 = vmatprep.subr.mxu0 0.0
    %2432 = vmatpush1.xpose.msra.mxu0 0.0
    %2433 = vmatprep.subr.mxu0 0.0
    %2434 = vmatpush1.xpose.msra.mxu0 0.0
    %2435 = vmatprep.subr.mxu0 0.0
    %2436 = vmatpush1.xpose.msra.mxu0 0.0
    %2437 = vmatprep.subr.mxu0 0.0
    %2438 = vmatpush1.xpose.msra.mxu0 0.0
    %2439 = vmatprep.subr.mxu0 0.0
    %2440 = vmatpush1.xpose.msra.mxu0 0.0
    %2441 = vmatprep.subr.mxu0 0.0
    %2442 = vmatpush1.xpose.msra.mxu0 0.0
    %2443 = vmatprep.subr.mxu0 0.0
    %2444 = vmatpush1.xpose.msra.mxu0 0.0
    %2445 = vmatprep.subr.mxu0 0.0
    %2446 = vmatpush1.xpose.msra.mxu0 0.0
    %2447 = vmatprep.subr.mxu0 0.0
    %2448 = vmatpush1.xpose.msra.mxu0 0.0
    %2449 = vmatprep.subr.mxu0 0.0
    %2450 = vmatpush1.xpose.msra.mxu0 0.0
    %2451 = vmatprep.subr.mxu0 0.0
    %2452 = vmatpush1.xpose.msra.mxu0 0.0
    %2453 = vmatprep.subr.mxu0 0.0
    %2454 = vmatpush1.xpose.msra.mxu0 0.0
    %2455 = vmatprep.subr.mxu0 0.0
    %2456 = vmatpush1.xpose.msra.mxu0 0.0
    %2457 = vmatprep.subr.mxu0 0.0
    %2458 = vmatpush1.xpose.msra.mxu0 0.0
    %2459 = vmatprep.subr.mxu0 0.0
    %2460 = vmatpush1.xpose.msra.mxu0 0.0
    %2461 = vmatprep.subr.mxu0 0.0
    %2462 = vmatpush1.xpose.msra.mxu0 0.0
    %2463 = vmatprep.subr.mxu0 0.0
    %2464 = vmatpush1.xpose.msra.mxu0 0.0
    %2465 = vmatprep.subr.mxu0 0.0
    %2466 = vmatpush1.xpose.msra.mxu0 0.0
    %2467 = vmatprep.subr.mxu0 0.0
    %2468 = vmatpush1.xpose.msra.mxu0 0.0
    %2469 = vmatprep.subr.mxu0 0.0
    %2470 = vmatpush1.xpose.msra.mxu0 0.0
    %2471 = vmatprep.subr.mxu0 0.0
    %2472 = vmatpush1.xpose.msra.mxu0 0.0
    %2473 = vmatprep.subr.mxu0 0.0
    %2474 = vmatpush1.xpose.msra.mxu0 0.0
    %2475 = vmatprep.subr.mxu0 0.0
    %2476 = vmatpush1.xpose.msra.mxu0 0.0
    %2477 = vmatprep.mubr.f32.mxu0 0.0
    %2478 = vmatmul.mubr.f32.gmra.mrb[0].mxu0 %v2409
    %v2479 = vpop.f32.mrb[0].mxu0
    %v2480 = vadd.f32 0.0, %v2479
    %v2481 = vpop.f32.mrb[0].mxu0
    %2482 = vdwg.mxu0
    %v2483 = vmul.f32 %v2480, 0.17677669
    %v2484 = vadd.f32 %v2483, %v1981
    %v2485 = vsel %vm306, %v2484, -inf
    %2486 = vmax.xlane.f32.xlu0 %v2485
    %v2487 = vpop.xlane.xlu0 %2486
    %v2488 = vsub.f32 %v2484, %v2487
    %v2489 = vmul.f32 %v2488, 1.442695
    %v2490 = vpow.pop %v2489
    %v2491 = vsel %vm306, %v2490, 0.0
    %2492 = vadd.xlane.f32.xlu0 %v2491
    %v2493 = vpop.xlane.xlu0 %2492
    %v2494 = vrcp.pop %v2493
    %v2495 = vmul.f32 %v2490, %v2494
    %2496 = vrot.lane.b32.xlu0 %v1892, 72
    %v2497 = vpop.permute.xlu0 %2496
    %v2500 = vsel %vm306, %v2495, 0
    %2502 = vmatprep.subr.mxu0 0.0
    %2503 = vmatpush1.msra.mxu0 %v2497
    %2504 = vmatprep.subr.mxu0 0.0
    %2505 = vmatpush1.msra.mxu0 0.0
    %2506 = vmatprep.subr.mxu0 0.0
    %2507 = vmatpush1.msra.mxu0 0.0
    %2508 = vmatprep.subr.mxu0 0.0
    %2509 = vmatpush1.msra.mxu0 0.0
    %2510 = vmatprep.subr.mxu0 0.0
    %2511 = vmatpush1.msra.mxu0 0.0
    %2512 = vmatprep.subr.mxu0 0.0
    %2513 = vmatpush1.msra.mxu0 0.0
    %2514 = vmatprep.subr.mxu0 0.0
    %2515 = vmatpush1.msra.mxu0 0.0
    %2516 = vmatprep.subr.mxu0 0.0
    %2517 = vmatpush1.msra.mxu0 0.0
    %2518 = vmatprep.subr.mxu0 0.0
    %2519 = vmatpush1.msra.mxu0 0.0
    %2520 = vmatprep.subr.mxu0 0.0
    %2521 = vmatpush1.msra.mxu0 0.0
    %2522 = vmatprep.subr.mxu0 0.0
    %2523 = vmatpush1.msra.mxu0 0.0
    %2524 = vmatprep.subr.mxu0 0.0
    %2525 = vmatpush1.msra.mxu0 0.0
    %2526 = vmatprep.subr.mxu0 0.0
    %2527 = vmatpush1.msra.mxu0 0.0
    %2528 = vmatprep.subr.mxu0 0.0
    %2529 = vmatpush1.msra.mxu0 0.0
    %2530 = vmatprep.subr.mxu0 0.0
    %2531 = vmatpush1.msra.mxu0 0.0
    %2532 = vmatprep.subr.mxu0 0.0
    %2533 = vmatpush1.msra.mxu0 0.0
    %2534 = vmatprep.subr.mxu0 0.0
    %2535 = vmatpush1.msra.mxu0 0.0
    %2536 = vmatprep.subr.mxu0 0.0
    %2537 = vmatpush1.msra.mxu0 0.0
    %2538 = vmatprep.subr.mxu0 0.0
    %2539 = vmatpush1.msra.mxu0 0.0
    %2540 = vmatprep.subr.mxu0 0.0
    %2541 = vmatpush1.msra.mxu0 0.0
    %2542 = vmatprep.subr.mxu0 0.0
    %2543 = vmatpush1.msra.mxu0 0.0
    %2544 = vmatprep.subr.mxu0 0.0
    %2545 = vmatpush1.msra.mxu0 0.0
    %2546 = vmatprep.subr.mxu0 0.0
    %2547 = vmatpush1.msra.mxu0 0.0
    %2548 = vmatprep.subr.mxu0 0.0
    %2549 = vmatpush1.msra.mxu0 0.0
    %2550 = vmatprep.subr.mxu0 0.0
    %2551 = vmatpush1.msra.mxu0 0.0
    %2552 = vmatprep.subr.mxu0 0.0
    %2553 = vmatpush1.msra.mxu0 0.0
    %2554 = vmatprep.subr.mxu0 0.0
    %2555 = vmatpush1.msra.mxu0 0.0
    %2556 = vmatprep.subr.mxu0 0.0
    %2557 = vmatpush1.msra.mxu0 0.0
    %2558 = vmatprep.subr.mxu0 0.0
    %2559 = vmatpush1.msra.mxu0 0.0
    %2560 = vmatprep.subr.mxu0 0.0
    %2561 = vmatpush1.msra.mxu0 0.0
    %2562 = vmatprep.subr.mxu0 0.0
    %2563 = vmatpush1.msra.mxu0 0.0
    %2564 = vmatprep.subr.mxu0 0.0
    %2565 = vmatpush1.msra.mxu0 0.0
    %2566 = vmatprep.mubr.f32.mxu0 0.0
    %2567 = vmatmul.mubr.f32.gmra.mrb[0].mxu0 %v2500
    %v2568 = vpop.f32.mrb[0].mxu0
    %v2569 = vadd.f32 0.0, %v2568
    %v2570 = vpop.f32.mrb[0].mxu0
    %2571 = vdwg.mxu0
    %2573 = vrot.lane.b32.xlu0 %v2235, 8
    %v2574 = vpop.permute.xlu0 %2573
    %2577 = vrot.lane.b32.xlu0 %v2402, 16
    %v2578 = vpop.permute.xlu0 %2577
    %2581 = vrot.lane.b32.xlu0 %v2569, 24
    %v2582 = vpop.permute.xlu0 %2581
    %v2584 = vsel %vm306, %v2068, %v2574
    %v2585 = vsel %vm985, %v2584, %v2578
    %v2586 = vsel %vm987, %v2585, %v2582
    %v2588 = vsel %vm306, %v1802, 0
    %v2591 = vsel %vm306, %v1897, 0
    %2593 = vmatprep.subr.mxu0 0.0
    %2594 = vmatpush1.xpose.msra.mxu0 %v2591
    %2595 = vmatprep.subr.mxu0 0.0
    %2596 = vmatpush1.xpose.msra.mxu0 0.0
    %2597 = vmatprep.subr.mxu0 0.0
    %2598 = vmatpush1.xpose.msra.mxu0 0.0
    %2599 = vmatprep.subr.mxu0 0.0
    %2600 = vmatpush1.xpose.msra.mxu0 0.0
    %2601 = vmatprep.subr.mxu0 0.0
    %2602 = vmatpush1.xpose.msra.mxu0 0.0
    %2603 = vmatprep.subr.mxu0 0.0
    %2604 = vmatpush1.xpose.msra.mxu0 0.0
    %2605 = vmatprep.subr.mxu0 0.0
    %2606 = vmatpush1.xpose.msra.mxu0 0.0
    %2607 = vmatprep.subr.mxu0 0.0
    %2608 = vmatpush1.xpose.msra.mxu0 0.0
    %2609 = vmatprep.subr.mxu0 0.0
    %2610 = vmatpush1.xpose.msra.mxu0 0.0
    %2611 = vmatprep.subr.mxu0 0.0
    %2612 = vmatpush1.xpose.msra.mxu0 0.0
    %2613 = vmatprep.subr.mxu0 0.0
    %2614 = vmatpush1.xpose.msra.mxu0 0.0
    %2615 = vmatprep.subr.mxu0 0.0
    %2616 = vmatpush1.xpose.msra.mxu0 0.0
    %2617 = vmatprep.subr.mxu0 0.0
    %2618 = vmatpush1.xpose.msra.mxu0 0.0
    %2619 = vmatprep.subr.mxu0 0.0
    %2620 = vmatpush1.xpose.msra.mxu0 0.0
    %2621 = vmatprep.subr.mxu0 0.0
    %2622 = vmatpush1.xpose.msra.mxu0 0.0
    %2623 = vmatprep.subr.mxu0 0.0
    %2624 = vmatpush1.xpose.msra.mxu0 0.0
    %2625 = vmatprep.subr.mxu0 0.0
    %2626 = vmatpush1.xpose.msra.mxu0 0.0
    %2627 = vmatprep.subr.mxu0 0.0
    %2628 = vmatpush1.xpose.msra.mxu0 0.0
    %2629 = vmatprep.subr.mxu0 0.0
    %2630 = vmatpush1.xpose.msra.mxu0 0.0
    %2631 = vmatprep.subr.mxu0 0.0
    %2632 = vmatpush1.xpose.msra.mxu0 0.0
    %2633 = vmatprep.subr.mxu0 0.0
    %2634 = vmatpush1.xpose.msra.mxu0 0.0
    %2635 = vmatprep.subr.mxu0 0.0
    %2636 = vmatpush1.xpose.msra.mxu0 0.0
    %2637 = vmatprep.subr.mxu0 0.0
    %2638 = vmatpush1.xpose.msra.mxu0 0.0
    %2639 = vmatprep.subr.mxu0 0.0
    %2640 = vmatpush1.xpose.msra.mxu0 0.0
    %2641 = vmatprep.subr.mxu0 0.0
    %2642 = vmatpush1.xpose.msra.mxu0 0.0
    %2643 = vmatprep.subr.mxu0 0.0
    %2644 = vmatpush1.xpose.msra.mxu0 0.0
    %2645 = vmatprep.subr.mxu0 0.0
    %2646 = vmatpush1.xpose.msra.mxu0 0.0
    %2647 = vmatprep.subr.mxu0 0.0
    %2648 = vmatpush1.xpose.msra.mxu0 0.0
    %2649 = vmatprep.subr.mxu0 0.0
    %2650 = vmatpush1.xpose.msra.mxu0 0.0
    %2651 = vmatprep.subr.mxu0 0.0
    %2652 = vmatpush1.xpose.msra.mxu0 0.0
    %2653 = vmatprep.subr.mxu0 0.0
    %2654 = vmatpush1.xpose.msra.mxu0 0.0
    %2655 = vmatprep.subr.mxu0 0.0
    %2656 = vmatpush1.xpose.msra.mxu0 0.0
    %2657 = vmatprep.mubr.f32.mxu0 0.0
    %2658 = vmatmul.mubr.f32.gmra.mrb[0].mxu0 %v2588
    %v2659 = vpop.f32.mrb[0].mxu0
    %v2660 = vadd.f32 0.0, %v2659
    %v2661 = vpop.f32.mrb[0].mxu0
    %2662 = vdwg.mxu0
    %v2663 = vmul.f32 %v2660, 0.17677669
    %v2665 = vlaneseq
    %v2666 = vshrl.u32 %v2665, 7
    %v2667 = vsub.s32 0, %v2666
    %v2668 = vrot.slane %v207, %v2667
    %v2670 = vadd.f32 %v2663, %v2668
    %v2671 = vsel %vm306, %v2670, -inf
    %2672 = vmax.xlane.f32.xlu0 %v2671
    %v2673 = vpop.xlane.xlu0 %2672
    %v2674 = vsub.f32 %v2670, %v2673
    %v2675 = vmul.f32 %v2674, 1.442695
    %v2676 = vpow.pop %v2675
    %v2677 = vsel %vm306, %v2676, 0.0
    %2678 = vadd.xlane.f32.xlu0 %v2677
    %v2679 = vpop.xlane.xlu0 %2678
    %v2680 = vrcp.pop %v2679
    %v2681 = vmul.f32 %v2676, %v2680
    %2682 = vrot.lane.b32.xlu0 %v1897, 96
    %v2683 = vpop.permute.xlu0 %2682
    %v2686 = vsel %vm306, %v2681, 0
    %2688 = vmatprep.subr.mxu0 0.0
    %2689 = vmatpush1.msra.mxu0 %v2683
    %2690 = vmatprep.subr.mxu0 0.0
    %2691 = vmatpush1.msra.mxu0 0.0
    %2692 = vmatprep.subr.mxu0 0.0
    %2693 = vmatpush1.msra.mxu0 0.0
    %2694 = vmatprep.subr.mxu0 0.0
    %2695 = vmatpush1.msra.mxu0 0.0
    %2696 = vmatprep.subr.mxu0 0.0
    %2697 = vmatpush1.msra.mxu0 0.0
    %2698 = vmatprep.subr.mxu0 0.0
    %2699 = vmatpush1.msra.mxu0 0.0
    %2700 = vmatprep.subr.mxu0 0.0
    %2701 = vmatpush1.msra.mxu0 0.0
    %2702 = vmatprep.subr.mxu0 0.0
    %2703 = vmatpush1.msra.mxu0 0.0
    %2704 = vmatprep.subr.mxu0 0.0
    %2705 = vmatpush1.msra.mxu0 0.0
    %2706 = vmatprep.subr.mxu0 0.0
    %2707 = vmatpush1.msra.mxu0 0.0
    %2708 = vmatprep.subr.mxu0 0.0
    %2709 = vmatpush1.msra.mxu0 0.0
    %2710 = vmatprep.subr.mxu0 0.0
    %2711 = vmatpush1.msra.mxu0 0.0
    %2712 = vmatprep.subr.mxu0 0.0
    %2713 = vmatpush1.msra.mxu0 0.0
    %2714 = vmatprep.subr.mxu0 0.0
    %2715 = vmatpush1.msra.mxu0 0.0
    %2716 = vmatprep.subr.mxu0 0.0
    %2717 = vmatpush1.msra.mxu0 0.0
    %2718 = vmatprep.subr.mxu0 0.0
    %2719 = vmatpush1.msra.mxu0 0.0
    %2720 = vmatprep.subr.mxu0 0.0
    %2721 = vmatpush1.msra.mxu0 0.0
    %2722 = vmatprep.subr.mxu0 0.0
    %2723 = vmatpush1.msra.mxu0 0.0
    %2724 = vmatprep.subr.mxu0 0.0
    %2725 = vmatpush1.msra.mxu0 0.0
    %2726 = vmatprep.subr.mxu0 0.0
    %2727 = vmatpush1.msra.mxu0 0.0
    %2728 = vmatprep.subr.mxu0 0.0
    %2729 = vmatpush1.msra.mxu0 0.0
    %2730 = vmatprep.subr.mxu0 0.0
    %2731 = vmatpush1.msra.mxu0 0.0
    %2732 = vmatprep.subr.mxu0 0.0
    %2733 = vmatpush1.msra.mxu0 0.0
    %2734 = vmatprep.subr.mxu0 0.0
    %2735 = vmatpush1.msra.mxu0 0.0
    %2736 = vmatprep.subr.mxu0 0.0
    %2737 = vmatpush1.msra.mxu0 0.0
    %2738 = vmatprep.subr.mxu0 0.0
    %2739 = vmatpush1.msra.mxu0 0.0
    %2740 = vmatprep.subr.mxu0 0.0
    %2741 = vmatpush1.msra.mxu0 0.0
    %2742 = vmatprep.subr.mxu0 0.0
    %2743 = vmatpush1.msra.mxu0 0.0
    %2744 = vmatprep.subr.mxu0 0.0
    %2745 = vmatpush1.msra.mxu0 0.0
    %2746 = vmatprep.subr.mxu0 0.0
    %2747 = vmatpush1.msra.mxu0 0.0
    %2748 = vmatprep.subr.mxu0 0.0
    %2749 = vmatpush1.msra.mxu0 0.0
    %2750 = vmatprep.subr.mxu0 0.0
    %2751 = vmatpush1.msra.mxu0 0.0
    %2752 = vmatprep.mubr.f32.mxu0 0.0
    %2753 = vmatmul.mubr.f32.gmra.mrb[0].mxu0 %v2686
    %v2754 = vpop.f32.mrb[0].mxu0
    %v2755 = vadd.f32 0.0, %v2754
    %v2756 = vpop.f32.mrb[0].mxu0
    %2757 = vdwg.mxu0
    %2758 = vrot.lane.b32.xlu0 %v1802, 120
    %v2759 = vpop.permute.xlu0 %2758
    %2760 = vrot.lane.b32.xlu0 %v1897, 120
    %v2761 = vpop.permute.xlu0 %2760
    %v2762 = vsel %vm306, %v2759, 0
    %v2764 = vsel %vm306, %v2761, 0
    %2766 = vmatprep.subr.mxu0 0.0
    %2767 = vmatpush1.xpose.msra.mxu0 %v2764
    %2768 = vmatprep.subr.mxu0 0.0
    %2769 = vmatpush1.xpose.msra.mxu0 0.0
    %2770 = vmatprep.subr.mxu0 0.0
    %2771 = vmatpush1.xpose.msra.mxu0 0.0
    %2772 = vmatprep.subr.mxu0 0.0
    %2773 = vmatpush1.xpose.msra.mxu0 0.0
    %2774 = vmatprep.subr.mxu0 0.0
    %2775 = vmatpush1.xpose.msra.mxu0 0.0
    %2776 = vmatprep.subr.mxu0 0.0
    %2777 = vmatpush1.xpose.msra.mxu0 0.0
    %2778 = vmatprep.subr.mxu0 0.0
    %2779 = vmatpush1.xpose.msra.mxu0 0.0
    %2780 = vmatprep.subr.mxu0 0.0
    %2781 = vmatpush1.xpose.msra.mxu0 0.0
    %2782 = vmatprep.subr.mxu0 0.0
    %2783 = vmatpush1.xpose.msra.mxu0 0.0
    %2784 = vmatprep.subr.mxu0 0.0
    %2785 = vmatpush1.xpose.msra.mxu0 0.0
    %2786 = vmatprep.subr.mxu0 0.0
    %2787 = vmatpush1.xpose.msra.mxu0 0.0
    %2788 = vmatprep.subr.mxu0 0.0
    %2789 = vmatpush1.xpose.msra.mxu0 0.0
    %2790 = vmatprep.subr.mxu0 0.0
    %2791 = vmatpush1.xpose.msra.mxu0 0.0
    %2792 = vmatprep.subr.mxu0 0.0
    %2793 = vmatpush1.xpose.msra.mxu0 0.0
    %2794 = vmatprep.subr.mxu0 0.0
    %2795 = vmatpush1.xpose.msra.mxu0 0.0
    %2796 = vmatprep.subr.mxu0 0.0
    %2797 = vmatpush1.xpose.msra.mxu0 0.0
    %2798 = vmatprep.subr.mxu0 0.0
    %2799 = vmatpush1.xpose.msra.mxu0 0.0
    %2800 = vmatprep.subr.mxu0 0.0
    %2801 = vmatpush1.xpose.msra.mxu0 0.0
    %2802 = vmatprep.subr.mxu0 0.0
    %2803 = vmatpush1.xpose.msra.mxu0 0.0
    %2804 = vmatprep.subr.mxu0 0.0
    %2805 = vmatpush1.xpose.msra.mxu0 0.0
    %2806 = vmatprep.subr.mxu0 0.0
    %2807 = vmatpush1.xpose.msra.mxu0 0.0
    %2808 = vmatprep.subr.mxu0 0.0
    %2809 = vmatpush1.xpose.msra.mxu0 0.0
    %2810 = vmatprep.subr.mxu0 0.0
    %2811 = vmatpush1.xpose.msra.mxu0 0.0
    %2812 = vmatprep.subr.mxu0 0.0
    %2813 = vmatpush1.xpose.msra.mxu0 0.0
    %2814 = vmatprep.subr.mxu0 0.0
    %2815 = vmatpush1.xpose.msra.mxu0 0.0
    %2816 = vmatprep.subr.mxu0 0.0
    %2817 = vmatpush1.xpose.msra.mxu0 0.0
    %2818 = vmatprep.subr.mxu0 0.0
    %2819 = vmatpush1.xpose.msra.mxu0 0.0
    %2820 = vmatprep.subr.mxu0 0.0
    %2821 = vmatpush1.xpose.msra.mxu0 0.0
    %2822 = vmatprep.subr.mxu0 0.0
    %2823 = vmatpush1.xpose.msra.mxu0 0.0
    %2824 = vmatprep.subr.mxu0 0.0
    %2825 = vmatpush1.xpose.msra.mxu0 0.0
    %2826 = vmatprep.subr.mxu0 0.0
    %2827 = vmatpush1.xpose.msra.mxu0 0.0
    %2828 = vmatprep.subr.mxu0 0.0
    %2829 = vmatpush1.xpose.msra.mxu0 0.0
    %2830 = vmatprep.mubr.f32.mxu0 0.0
    %2831 = vmatmul.mubr.f32.gmra.mrb[0].mxu0 %v2762
    %v2832 = vpop.f32.mrb[0].mxu0
    %v2833 = vadd.f32 0.0, %v2832
    %v2834 = vpop.f32.mrb[0].mxu0
    %2835 = vdwg.mxu0
    %v2836 = vmul.f32 %v2833, 0.17677669
    %v2837 = vadd.f32 %v2836, %v2668
    %v2838 = vsel %vm306, %v2837, -inf
    %2839 = vmax.xlane.f32.xlu0 %v2838
    %v2840 = vpop.xlane.xlu0 %2839
    %v2841 = vsub.f32 %v2837, %v2840
    %v2842 = vmul.f32 %v2841, 1.442695
    %v2843 = vpow.pop %v2842
    %v2844 = vsel %vm306, %v2843, 0.0
    %2845 = vadd.xlane.f32.xlu0 %v2844
    %v2846 = vpop.xlane.xlu0 %2845
    %v2847 = vrcp.pop %v2846
    %v2848 = vmul.f32 %v2843, %v2847
    %2849 = vrot.lane.b32.xlu0 %v1897, 88
    %v2850 = vpop.permute.xlu0 %2849
    %v2853 = vsel %vm306, %v2848, 0
    %2855 = vmatprep.subr.mxu0 0.0
    %2856 = vmatpush1.msra.mxu0 %v2850
    %2857 = vmatprep.subr.mxu0 0.0
    %2858 = vmatpush1.msra.mxu0 0.0
    %2859 = vmatprep.subr.mxu0 0.0
    %2860 = vmatpush1.msra.mxu0 0.0
    %2861 = vmatprep.subr.mxu0 0.0
    %2862 = vmatpush1.msra.mxu0 0.0
    %2863 = vmatprep.subr.mxu0 0.0
    %2864 = vmatpush1.msra.mxu0 0.0
    %2865 = vmatprep.subr.mxu0 0.0
    %2866 = vmatpush1.msra.mxu0 0.0
    %2867 = vmatprep.subr.mxu0 0.0
    %2868 = vmatpush1.msra.mxu0 0.0
    %2869 = vmatprep.subr.mxu0 0.0
    %2870 = vmatpush1.msra.mxu0 0.0
    %2871 = vmatprep.subr.mxu0 0.0
    %2872 = vmatpush1.msra.mxu0 0.0
    %2873 = vmatprep.subr.mxu0 0.0
    %2874 = vmatpush1.msra.mxu0 0.0
    %2875 = vmatprep.subr.mxu0 0.0
    %2876 = vmatpush1.msra.mxu0 0.0
    %2877 = vmatprep.subr.mxu0 0.0
    %2878 = vmatpush1.msra.mxu0 0.0
    %2879 = vmatprep.subr.mxu0 0.0
    %2880 = vmatpush1.msra.mxu0 0.0
    %2881 = vmatprep.subr.mxu0 0.0
    %2882 = vmatpush1.msra.mxu0 0.0
    %2883 = vmatprep.subr.mxu0 0.0
    %2884 = vmatpush1.msra.mxu0 0.0
    %2885 = vmatprep.subr.mxu0 0.0
    %2886 = vmatpush1.msra.mxu0 0.0
    %2887 = vmatprep.subr.mxu0 0.0
    %2888 = vmatpush1.msra.mxu0 0.0
    %2889 = vmatprep.subr.mxu0 0.0
    %2890 = vmatpush1.msra.mxu0 0.0
    %2891 = vmatprep.subr.mxu0 0.0
    %2892 = vmatpush1.msra.mxu0 0.0
    %2893 = vmatprep.subr.mxu0 0.0
    %2894 = vmatpush1.msra.mxu0 0.0
    %2895 = vmatprep.subr.mxu0 0.0
    %2896 = vmatpush1.msra.mxu0 0.0
    %2897 = vmatprep.subr.mxu0 0.0
    %2898 = vmatpush1.msra.mxu0 0.0
    %2899 = vmatprep.subr.mxu0 0.0
    %2900 = vmatpush1.msra.mxu0 0.0
    %2901 = vmatprep.subr.mxu0 0.0
    %2902 = vmatpush1.msra.mxu0 0.0
    %2903 = vmatprep.subr.mxu0 0.0
    %2904 = vmatpush1.msra.mxu0 0.0
    %2905 = vmatprep.subr.mxu0 0.0
    %2906 = vmatpush1.msra.mxu0 0.0
    %2907 = vmatprep.subr.mxu0 0.0
    %2908 = vmatpush1.msra.mxu0 0.0
    %2909 = vmatprep.subr.mxu0 0.0
    %2910 = vmatpush1.msra.mxu0 0.0
    %2911 = vmatprep.subr.mxu0 0.0
    %2912 = vmatpush1.msra.mxu0 0.0
    %2913 = vmatprep.subr.mxu0 0.0
    %2914 = vmatpush1.msra.mxu0 0.0
    %2915 = vmatprep.subr.mxu0 0.0
    %2916 = vmatpush1.msra.mxu0 0.0
    %2917 = vmatprep.subr.mxu0 0.0
    %2918 = vmatpush1.msra.mxu0 0.0
    %2919 = vmatprep.mubr.f32.mxu0 0.0
    %2920 = vmatmul.mubr.f32.gmra.mrb[0].mxu0 %v2853
    %v2921 = vpop.f32.mrb[0].mxu0
    %v2922 = vadd.f32 0.0, %v2921
    %v2923 = vpop.f32.mrb[0].mxu0
    %2924 = vdwg.mxu0
    %2925 = vrot.lane.b32.xlu0 %v1802, 112
    %v2926 = vpop.permute.xlu0 %2925
    %2927 = vrot.lane.b32.xlu0 %v1897, 112
    %v2928 = vpop.permute.xlu0 %2927
    %v2929 = vsel %vm306, %v2926, 0
    %v2931 = vsel %vm306, %v2928, 0
    %2933 = vmatprep.subr.mxu0 0.0
    %2934 = vmatpush1.xpose.msra.mxu0 %v2931
    %2935 = vmatprep.subr.mxu0 0.0
    %2936 = vmatpush1.xpose.msra.mxu0 0.0
    %2937 = vmatprep.subr.mxu0 0.0
    %2938 = vmatpush1.xpose.msra.mxu0 0.0
    %2939 = vmatprep.subr.mxu0 0.0
    %2940 = vmatpush1.xpose.msra.mxu0 0.0
    %2941 = vmatprep.subr.mxu0 0.0
    %2942 = vmatpush1.xpose.msra.mxu0 0.0
    %2943 = vmatprep.subr.mxu0 0.0
    %2944 = vmatpush1.xpose.msra.mxu0 0.0
    %2945 = vmatprep.subr.mxu0 0.0
    %2946 = vmatpush1.xpose.msra.mxu0 0.0
    %2947 = vmatprep.subr.mxu0 0.0
    %2948 = vmatpush1.xpose.msra.mxu0 0.0
    %2949 = vmatprep.subr.mxu0 0.0
    %2950 = vmatpush1.xpose.msra.mxu0 0.0
    %2951 = vmatprep.subr.mxu0 0.0
    %2952 = vmatpush1.xpose.msra.mxu0 0.0
    %2953 = vmatprep.subr.mxu0 0.0
    %2954 = vmatpush1.xpose.msra.mxu0 0.0
    %2955 = vmatprep.subr.mxu0 0.0
    %2956 = vmatpush1.xpose.msra.mxu0 0.0
    %2957 = vmatprep.subr.mxu0 0.0
    %2958 = vmatpush1.xpose.msra.mxu0 0.0
    %2959 = vmatprep.subr.mxu0 0.0
    %2960 = vmatpush1.xpose.msra.mxu0 0.0
    %2961 = vmatprep.subr.mxu0 0.0
    %2962 = vmatpush1.xpose.msra.mxu0 0.0
    %2963 = vmatprep.subr.mxu0 0.0
    %2964 = vmatpush1.xpose.msra.mxu0 0.0
    %2965 = vmatprep.subr.mxu0 0.0
    %2966 = vmatpush1.xpose.msra.mxu0 0.0
    %2967 = vmatprep.subr.mxu0 0.0
    %2968 = vmatpush1.xpose.msra.mxu0 0.0
    %2969 = vmatprep.subr.mxu0 0.0
    %2970 = vmatpush1.xpose.msra.mxu0 0.0
    %2971 = vmatprep.subr.mxu0 0.0
    %2972 = vmatpush1.xpose.msra.mxu0 0.0
    %2973 = vmatprep.subr.mxu0 0.0
    %2974 = vmatpush1.xpose.msra.mxu0 0.0
    %2975 = vmatprep.subr.mxu0 0.0
    %2976 = vmatpush1.xpose.msra.mxu0 0.0
    %2977 = vmatprep.subr.mxu0 0.0
    %2978 = vmatpush1.xpose.msra.mxu0 0.0
    %2979 = vmatprep.subr.mxu0 0.0
    %2980 = vmatpush1.xpose.msra.mxu0 0.0
    %2981 = vmatprep.subr.mxu0 0.0
    %2982 = vmatpush1.xpose.msra.mxu0 0.0
    %2983 = vmatprep.subr.mxu0 0.0
    %2984 = vmatpush1.xpose.msra.mxu0 0.0
    %2985 = vmatprep.subr.mxu0 0.0
    %2986 = vmatpush1.xpose.msra.mxu0 0.0
    %2987 = vmatprep.subr.mxu0 0.0
    %2988 = vmatpush1.xpose.msra.mxu0 0.0
    %2989 = vmatprep.subr.mxu0 0.0
    %2990 = vmatpush1.xpose.msra.mxu0 0.0
    %2991 = vmatprep.subr.mxu0 0.0
    %2992 = vmatpush1.xpose.msra.mxu0 0.0
    %2993 = vmatprep.subr.mxu0 0.0
    %2994 = vmatpush1.xpose.msra.mxu0 0.0
    %2995 = vmatprep.subr.mxu0 0.0
    %2996 = vmatpush1.xpose.msra.mxu0 0.0
    %2997 = vmatprep.mubr.f32.mxu0 0.0
    %2998 = vmatmul.mubr.f32.gmra.mrb[0].mxu0 %v2929
    %v2999 = vpop.f32.mrb[0].mxu0
    %v3000 = vadd.f32 0.0, %v2999
    %v3001 = vpop.f32.mrb[0].mxu0
    %3002 = vdwg.mxu0
    %v3003 = vmul.f32 %v3000, 0.17677669
    %v3004 = vadd.f32 %v3003, %v2668
    %v3005 = vsel %vm306, %v3004, -inf
    %3006 = vmax.xlane.f32.xlu0 %v3005
    %v3007 = vpop.xlane.xlu0 %3006
    %v3008 = vsub.f32 %v3004, %v3007
    %v3009 = vmul.f32 %v3008, 1.442695
    %v3010 = vpow.pop %v3009
    %v3011 = vsel %vm306, %v3010, 0.0
    %3012 = vadd.xlane.f32.xlu0 %v3011
    %v3013 = vpop.xlane.xlu0 %3012
    %v3014 = vrcp.pop %v3013
    %v3015 = vmul.f32 %v3010, %v3014
    %3016 = vrot.lane.b32.xlu0 %v1897, 80
    %v3017 = vpop.permute.xlu0 %3016
    %v3020 = vsel %vm306, %v3015, 0
    %3022 = vmatprep.subr.mxu0 0.0
    %3023 = vmatpush1.msra.mxu0 %v3017
    %3024 = vmatprep.subr.mxu0 0.0
    %3025 = vmatpush1.msra.mxu0 0.0
    %3026 = vmatprep.subr.mxu0 0.0
    %3027 = vmatpush1.msra.mxu0 0.0
    %3028 = vmatprep.subr.mxu0 0.0
    %3029 = vmatpush1.msra.mxu0 0.0
    %3030 = vmatprep.subr.mxu0 0.0
    %3031 = vmatpush1.msra.mxu0 0.0
    %3032 = vmatprep.subr.mxu0 0.0
    %3033 = vmatpush1.msra.mxu0 0.0
    %3034 = vmatprep.subr.mxu0 0.0
    %3035 = vmatpush1.msra.mxu0 0.0
    %3036 = vmatprep.subr.mxu0 0.0
    %3037 = vmatpush1.msra.mxu0 0.0
    %3038 = vmatprep.subr.mxu0 0.0
    %3039 = vmatpush1.msra.mxu0 0.0
    %3040 = vmatprep.subr.mxu0 0.0
    %3041 = vmatpush1.msra.mxu0 0.0
    %3042 = vmatprep.subr.mxu0 0.0
    %3043 = vmatpush1.msra.mxu0 0.0
    %3044 = vmatprep.subr.mxu0 0.0
    %3045 = vmatpush1.msra.mxu0 0.0
    %3046 = vmatprep.subr.mxu0 0.0
    %3047 = vmatpush1.msra.mxu0 0.0
    %3048 = vmatprep.subr.mxu0 0.0
    %3049 = vmatpush1.msra.mxu0 0.0
    %3050 = vmatprep.subr.mxu0 0.0
    %3051 = vmatpush1.msra.mxu0 0.0
    %3052 = vmatprep.subr.mxu0 0.0
    %3053 = vmatpush1.msra.mxu0 0.0
    %3054 = vmatprep.subr.mxu0 0.0
    %3055 = vmatpush1.msra.mxu0 0.0
    %3056 = vmatprep.subr.mxu0 0.0
    %3057 = vmatpush1.msra.mxu0 0.0
    %3058 = vmatprep.subr.mxu0 0.0
    %3059 = vmatpush1.msra.mxu0 0.0
    %3060 = vmatprep.subr.mxu0 0.0
    %3061 = vmatpush1.msra.mxu0 0.0
    %3062 = vmatprep.subr.mxu0 0.0
    %3063 = vmatpush1.msra.mxu0 0.0
    %3064 = vmatprep.subr.mxu0 0.0
    %3065 = vmatpush1.msra.mxu0 0.0
    %3066 = vmatprep.subr.mxu0 0.0
    %3067 = vmatpush1.msra.mxu0 0.0
    %3068 = vmatprep.subr.mxu0 0.0
    %3069 = vmatpush1.msra.mxu0 0.0
    %3070 = vmatprep.subr.mxu0 0.0
    %3071 = vmatpush1.msra.mxu0 0.0
    %3072 = vmatprep.subr.mxu0 0.0
    %3073 = vmatpush1.msra.mxu0 0.0
    %3074 = vmatprep.subr.mxu0 0.0
    %3075 = vmatpush1.msra.mxu0 0.0
    %3076 = vmatprep.subr.mxu0 0.0
    %3077 = vmatpush1.msra.mxu0 0.0
    %3078 = vmatprep.subr.mxu0 0.0
    %3079 = vmatpush1.msra.mxu0 0.0
    %3080 = vmatprep.subr.mxu0 0.0
    %3081 = vmatpush1.msra.mxu0 0.0
    %3082 = vmatprep.subr.mxu0 0.0
    %3083 = vmatpush1.msra.mxu0 0.0
    %3084 = vmatprep.subr.mxu0 0.0
    %3085 = vmatpush1.msra.mxu0 0.0
    %3086 = vmatprep.mubr.f32.mxu0 0.0
    %3087 = vmatmul.mubr.f32.gmra.mrb[0].mxu0 %v3020
    %v3088 = vpop.f32.mrb[0].mxu0
    %v3089 = vadd.f32 0.0, %v3088
    %v3090 = vpop.f32.mrb[0].mxu0
    %3091 = vdwg.mxu0
    %3092 = vrot.lane.b32.xlu0 %v1802, 104
    %v3093 = vpop.permute.xlu0 %3092
    %3094 = vrot.lane.b32.xlu0 %v1897, 104
    %v3095 = vpop.permute.xlu0 %3094
    %v3096 = vsel %vm306, %v3093, 0
    %v3098 = vsel %vm306, %v3095, 0
    %3100 = vmatprep.subr.mxu0 0.0
    %3101 = vmatpush1.xpose.msra.mxu0 %v3098
    %3102 = vmatprep.subr.mxu0 0.0
    %3103 = vmatpush1.xpose.msra.mxu0 0.0
    %3104 = vmatprep.subr.mxu0 0.0
    %3105 = vmatpush1.xpose.msra.mxu0 0.0
    %3106 = vmatprep.subr.mxu0 0.0
    %3107 = vmatpush1.xpose.msra.mxu0 0.0
    %3108 = vmatprep.subr.mxu0 0.0
    %3109 = vmatpush1.xpose.msra.mxu0 0.0
    %3110 = vmatprep.subr.mxu0 0.0
    %3111 = vmatpush1.xpose.msra.mxu0 0.0
    %3112 = vmatprep.subr.mxu0 0.0
    %3113 = vmatpush1.xpose.msra.mxu0 0.0
    %3114 = vmatprep.subr.mxu0 0.0
    %3115 = vmatpush1.xpose.msra.mxu0 0.0
    %3116 = vmatprep.subr.mxu0 0.0
    %3117 = vmatpush1.xpose.msra.mxu0 0.0
    %3118 = vmatprep.subr.mxu0 0.0
    %3119 = vmatpush1.xpose.msra.mxu0 0.0
    %3120 = vmatprep.subr.mxu0 0.0
    %3121 = vmatpush1.xpose.msra.mxu0 0.0
    %3122 = vmatprep.subr.mxu0 0.0
    %3123 = vmatpush1.xpose.msra.mxu0 0.0
    %3124 = vmatprep.subr.mxu0 0.0
    %3125 = vmatpush1.xpose.msra.mxu0 0.0
    %3126 = vmatprep.subr.mxu0 0.0
    %3127 = vmatpush1.xpose.msra.mxu0 0.0
    %3128 = vmatprep.subr.mxu0 0.0
    %3129 = vmatpush1.xpose.msra.mxu0 0.0
    %3130 = vmatprep.subr.mxu0 0.0
    %3131 = vmatpush1.xpose.msra.mxu0 0.0
    %3132 = vmatprep.subr.mxu0 0.0
    %3133 = vmatpush1.xpose.msra.mxu0 0.0
    %3134 = vmatprep.subr.mxu0 0.0
    %3135 = vmatpush1.xpose.msra.mxu0 0.0
    %3136 = vmatprep.subr.mxu0 0.0
    %3137 = vmatpush1.xpose.msra.mxu0 0.0
    %3138 = vmatprep.subr.mxu0 0.0
    %3139 = vmatpush1.xpose.msra.mxu0 0.0
    %3140 = vmatprep.subr.mxu0 0.0
    %3141 = vmatpush1.xpose.msra.mxu0 0.0
    %3142 = vmatprep.subr.mxu0 0.0
    %3143 = vmatpush1.xpose.msra.mxu0 0.0
    %3144 = vmatprep.subr.mxu0 0.0
    %3145 = vmatpush1.xpose.msra.mxu0 0.0
    %3146 = vmatprep.subr.mxu0 0.0
    %3147 = vmatpush1.xpose.msra.mxu0 0.0
    %3148 = vmatprep.subr.mxu0 0.0
    %3149 = vmatpush1.xpose.msra.mxu0 0.0
    %3150 = vmatprep.subr.mxu0 0.0
    %3151 = vmatpush1.xpose.msra.mxu0 0.0
    %3152 = vmatprep.subr.mxu0 0.0
    %3153 = vmatpush1.xpose.msra.mxu0 0.0
    %3154 = vmatprep.subr.mxu0 0.0
    %3155 = vmatpush1.xpose.msra.mxu0 0.0
    %3156 = vmatprep.subr.mxu0 0.0
    %3157 = vmatpush1.xpose.msra.mxu0 0.0
    %3158 = vmatprep.subr.mxu0 0.0
    %3159 = vmatpush1.xpose.msra.mxu0 0.0
    %3160 = vmatprep.subr.mxu0 0.0
    %3161 = vmatpush1.xpose.msra.mxu0 0.0
    %3162 = vmatprep.subr.mxu0 0.0
    %3163 = vmatpush1.xpose.msra.mxu0 0.0
    %3164 = vmatprep.mubr.f32.mxu0 0.0
    %3165 = vmatmul.mubr.f32.gmra.mrb[0].mxu0 %v3096
    %v3166 = vpop.f32.mrb[0].mxu0
    %v3167 = vadd.f32 0.0, %v3166
    %v3168 = vpop.f32.mrb[0].mxu0
    %3169 = vdwg.mxu0
    %v3170 = vmul.f32 %v3167, 0.17677669
    %v3171 = vadd.f32 %v3170, %v2668
    %v3172 = vsel %vm306, %v3171, -inf
    %3173 = vmax.xlane.f32.xlu0 %v3172
    %v3174 = vpop.xlane.xlu0 %3173
    %v3175 = vsub.f32 %v3171, %v3174
    %v3176 = vmul.f32 %v3175, 1.442695
    %v3177 = vpow.pop %v3176
    %v3178 = vsel %vm306, %v3177, 0.0
    %3179 = vadd.xlane.f32.xlu0 %v3178
    %v3180 = vpop.xlane.xlu0 %3179
    %v3181 = vrcp.pop %v3180
    %v3182 = vmul.f32 %v3177, %v3181
    %3183 = vrot.lane.b32.xlu0 %v1897, 72
    %v3184 = vpop.permute.xlu0 %3183
    %v3187 = vsel %vm306, %v3182, 0
    %3189 = vmatprep.subr.mxu0 0.0
    %3190 = vmatpush1.msra.mxu0 %v3184
    %3191 = vmatprep.subr.mxu0 0.0
    %3192 = vmatpush1.msra.mxu0 0.0
    %3193 = vmatprep.subr.mxu0 0.0
    %3194 = vmatpush1.msra.mxu0 0.0
    %3195 = vmatprep.subr.mxu0 0.0
    %3196 = vmatpush1.msra.mxu0 0.0
    %3197 = vmatprep.subr.mxu0 0.0
    %3198 = vmatpush1.msra.mxu0 0.0
    %3199 = vmatprep.subr.mxu0 0.0
    %3200 = vmatpush1.msra.mxu0 0.0
    %3201 = vmatprep.subr.mxu0 0.0
    %3202 = vmatpush1.msra.mxu0 0.0
    %3203 = vmatprep.subr.mxu0 0.0
    %3204 = vmatpush1.msra.mxu0 0.0
    %3205 = vmatprep.subr.mxu0 0.0
    %3206 = vmatpush1.msra.mxu0 0.0
    %3207 = vmatprep.subr.mxu0 0.0
    %3208 = vmatpush1.msra.mxu0 0.0
    %3209 = vmatprep.subr.mxu0 0.0
    %3210 = vmatpush1.msra.mxu0 0.0
    %3211 = vmatprep.subr.mxu0 0.0
    %3212 = vmatpush1.msra.mxu0 0.0
    %3213 = vmatprep.subr.mxu0 0.0
    %3214 = vmatpush1.msra.mxu0 0.0
    %3215 = vmatprep.subr.mxu0 0.0
    %3216 = vmatpush1.msra.mxu0 0.0
    %3217 = vmatprep.subr.mxu0 0.0
    %3218 = vmatpush1.msra.mxu0 0.0
    %3219 = vmatprep.subr.mxu0 0.0
    %3220 = vmatpush1.msra.mxu0 0.0
    %3221 = vmatprep.subr.mxu0 0.0
    %3222 = vmatpush1.msra.mxu0 0.0
    %3223 = vmatprep.subr.mxu0 0.0
    %3224 = vmatpush1.msra.mxu0 0.0
    %3225 = vmatprep.subr.mxu0 0.0
    %3226 = vmatpush1.msra.mxu0 0.0
    %3227 = vmatprep.subr.mxu0 0.0
    %3228 = vmatpush1.msra.mxu0 0.0
    %3229 = vmatprep.subr.mxu0 0.0
    %3230 = vmatpush1.msra.mxu0 0.0
    %3231 = vmatprep.subr.mxu0 0.0
    %3232 = vmatpush1.msra.mxu0 0.0
    %3233 = vmatprep.subr.mxu0 0.0
    %3234 = vmatpush1.msra.mxu0 0.0
    %3235 = vmatprep.subr.mxu0 0.0
    %3236 = vmatpush1.msra.mxu0 0.0
    %3237 = vmatprep.subr.mxu0 0.0
    %3238 = vmatpush1.msra.mxu0 0.0
    %3239 = vmatprep.subr.mxu0 0.0
    %3240 = vmatpush1.msra.mxu0 0.0
    %3241 = vmatprep.subr.mxu0 0.0
    %3242 = vmatpush1.msra.mxu0 0.0
    %3243 = vmatprep.subr.mxu0 0.0
    %3244 = vmatpush1.msra.mxu0 0.0
    %3245 = vmatprep.subr.mxu0 0.0
    %3246 = vmatpush1.msra.mxu0 0.0
    %3247 = vmatprep.subr.mxu0 0.0
    %3248 = vmatpush1.msra.mxu0 0.0
    %3249 = vmatprep.subr.mxu0 0.0
    %3250 = vmatpush1.msra.mxu0 0.0
    %3251 = vmatprep.subr.mxu0 0.0
    %3252 = vmatpush1.msra.mxu0 0.0
    %3253 = vmatprep.mubr.f32.mxu0 0.0
    %3254 = vmatmul.mubr.f32.gmra.mrb[0].mxu0 %v3187
    %v3255 = vpop.f32.mrb[0].mxu0
    %v3256 = vadd.f32 0.0, %v3255
    %v3257 = vpop.f32.mrb[0].mxu0
    %3258 = vdwg.mxu0
    %3260 = vrot.lane.b32.xlu0 %v2922, 8
    %v3261 = vpop.permute.xlu0 %3260
    %3264 = vrot.lane.b32.xlu0 %v3089, 16
    %v3265 = vpop.permute.xlu0 %3264
    %3268 = vrot.lane.b32.xlu0 %v3256, 24
    %v3269 = vpop.permute.xlu0 %3268
    %v3271 = vsel %vm306, %v2755, %v3261
    %v3272 = vsel %vm985, %v3271, %v3265
    %v3273 = vsel %vm987, %v3272, %v3269
    %v3275 = vlaneseq
    %v3276 = vshrl.u32 %v3275, 7
    %v3277 = vsub.s32 0, %v3276
    %v3278 = vrot.slane %v1812, %v3277
    %v3281 = vsel %vm224, %v2586, 0
    %v3284 = vsel %vm224, %v3273, 0
    %3286 = vmatprep.subr.mxu0 0.0
    %3287 = vmatpush1.msra.mxu0 %v1808
    %3288 = vmatprep.subr.mxu0 0.0
    %3289 = vmatpush1.msra.mxu0 %v1809
    %3290 = vmatprep.subr.mxu0 0.0
    %3291 = vmatpush1.msra.mxu0 %v1810
    %3292 = vmatprep.subr.mxu0 0.0
    %3293 = vmatpush1.msra.mxu0 %v1811
    %3294 = vmatprep.subr.mxu0 0.0
    %3295 = vmatpush1.msra.mxu0 0.0
    %3296 = vmatprep.subr.mxu0 0.0
    %3297 = vmatpush1.msra.mxu0 0.0
    %3298 = vmatprep.subr.mxu0 0.0
    %3299 = vmatpush1.msra.mxu0 0.0
    %3300 = vmatprep.subr.mxu0 0.0
    %3301 = vmatpush1.msra.mxu0 0.0
    %3302 = vmatprep.subr.mxu0 0.0
    %3303 = vmatpush1.msra.mxu0 0.0
    %3304 = vmatprep.subr.mxu0 0.0
    %3305 = vmatpush1.msra.mxu0 0.0
    %3306 = vmatprep.subr.mxu0 0.0
    %3307 = vmatpush1.msra.mxu0 0.0
    %3308 = vmatprep.subr.mxu0 0.0
    %3309 = vmatpush1.msra.mxu0 0.0
    %3310 = vmatprep.subr.mxu0 0.0
    %3311 = vmatpush1.msra.mxu0 0.0
    %3312 = vmatprep.subr.mxu0 0.0
    %3313 = vmatpush1.msra.mxu0 0.0
    %3314 = vmatprep.subr.mxu0 0.0
    %3315 = vmatpush1.msra.mxu0 0.0
    %3316 = vmatprep.subr.mxu0 0.0
    %3317 = vmatpush1.msra.mxu0 0.0
    %3318 = vmatprep.subr.mxu0 0.0
    %3319 = vmatpush1.msra.mxu0 0.0
    %3320 = vmatprep.subr.mxu0 0.0
    %3321 = vmatpush1.msra.mxu0 0.0
    %3322 = vmatprep.subr.mxu0 0.0
    %3323 = vmatpush1.msra.mxu0 0.0
    %3324 = vmatprep.subr.mxu0 0.0
    %3325 = vmatpush1.msra.mxu0 0.0
    %3326 = vmatprep.subr.mxu0 0.0
    %3327 = vmatpush1.msra.mxu0 0.0
    %3328 = vmatprep.subr.mxu0 0.0
    %3329 = vmatpush1.msra.mxu0 0.0
    %3330 = vmatprep.subr.mxu0 0.0
    %3331 = vmatpush1.msra.mxu0 0.0
    %3332 = vmatprep.subr.mxu0 0.0
    %3333 = vmatpush1.msra.mxu0 0.0
    %3334 = vmatprep.subr.mxu0 0.0
    %3335 = vmatpush1.msra.mxu0 0.0
    %3336 = vmatprep.subr.mxu0 0.0
    %3337 = vmatpush1.msra.mxu0 0.0
    %3338 = vmatprep.subr.mxu0 0.0
    %3339 = vmatpush1.msra.mxu0 0.0
    %3340 = vmatprep.subr.mxu0 0.0
    %3341 = vmatpush1.msra.mxu0 0.0
    %3342 = vmatprep.subr.mxu0 0.0
    %3343 = vmatpush1.msra.mxu0 0.0
    %3344 = vmatprep.subr.mxu0 0.0
    %3345 = vmatpush1.msra.mxu0 0.0
    %3346 = vmatprep.subr.mxu0 0.0
    %3347 = vmatpush1.msra.mxu0 0.0
    %3348 = vmatprep.subr.mxu0 0.0
    %3349 = vmatpush1.msra.mxu0 0.0
    %3350 = vmatprep.mubr.f32.mxu0 0.0
    %3351 = vmatmul.mubr.f32.gmra.mrb[0].mxu0 %v3281
    %v3352 = vpop.f32.mrb[0].mxu0
    %v3353 = vadd.f32 %v3278, %v3352
    %v3354 = vpop.f32.mrb[0].mxu0
    %3355 = vmatprep.mubr.f32.mxu0 0.0
    %3356 = vmatmul.mubr.f32.gmra.mrb[0].mxu0 %v3284
    %v3357 = vpop.f32.mrb[0].mxu0
    %v3358 = vadd.f32 %v3278, %v3357
    %v3359 = vpop.f32.mrb[0].mxu0
    %3360 = vdwg.mxu0
    %v3361 = vadd.f32 %v3353, %v1801
    %v3362 = vadd.f32 %v3358, %v1802
    %v3363 = vld [vmem:[%s16] sm:$0x1]
    %v3364 = vld [vmem:[%s17] sm:$0x1]
    %v3365 = vsel %vm224, %v3361, 0.0
    %3366 = vadd.xlane.f32.xlu0 %v3365
    %v3367 = vpop.xlane.xlu0 %3366
    %v3368 = vsel %vm224, %v3362, 0.0
    %3369 = vadd.xlane.f32.xlu0 %v3368
    %v3370 = vpop.xlane.xlu0 %3369
    %v3371 = vmul.f32 %v3367, %v1766
    %v3372 = vmul.f32 %v3370, %v1766
    %v3373 = vsub.f32 %v3361, %v3371
    %v3374 = vsub.f32 %v3362, %v3372
    %v3375 = vmul.f32 %v3373, %v3373
    %v3376 = vmul.f32 %v3374, %v3374
    %v3377 = vsel %vm224, %v3375, 0.0
    %3378 = vadd.xlane.f32.xlu0 %v3377
    %v3379 = vpop.xlane.xlu0 %3378
    %v3380 = vsel %vm224, %v3376, 0.0
    %3381 = vadd.xlane.f32.xlu0 %v3380
    %v3382 = vpop.xlane.xlu0 %3381
    %v3383 = vmul.f32 %v3379, %v1766
    %v3384 = vmul.f32 %v3382, %v1766
    %v3385 = vadd.f32 %v3383, 1e-05
    %v3386 = vadd.f32 %v3384, 1e-05
    %v3387 = vrsqrt.pop %v3385
    %v3388 = vrsqrt.pop %v3386
    %v3389 = vmul.f32 %v3373, %v3387
    %v3390 = vmul.f32 %v3374, %v3388
    %v3392 = vlaneseq
    %v3393 = vshrl.u32 %v3392, 7
    %v3394 = vsub.s32 0, %v3393
    %v3395 = vrot.slane %v3363, %v3394
    %v3397 = vmul.f32 %v3389, %v3395
    %v3398 = vmul.f32 %v3390, %v3395
    %v3400 = vlaneseq
    %v3401 = vshrl.u32 %v3400, 7
    %v3402 = vsub.s32 0, %v3401
    %v3403 = vrot.slane %v3364, %v3402
    %v3405 = vadd.f32 %v3397, %v3403
    %v3406 = vadd.f32 %v3398, %v3403
    %v3407 = vld [vmem:[%s20] sm:$0xff]
    %v3408 = vld [vmem:[%s20 + $0x8] sm:$0xff]
    %v3409 = vld [vmem:[%s20 + $0x10] sm:$0xff]
    %v3410 = vld [vmem:[%s20 + $0x18] sm:$0xff]
    %v3411 = vld [vmem:[%s21] sm:$0x1]
    %v3413 = vlaneseq
    %v3414 = vshrl.u32 %v3413, 7
    %v3415 = vsub.s32 0, %v3414
    %v3416 = vrot.slane %v3411, %v3415
    %v3419 = vsel %vm224, %v3405, 0
    %v3422 = vsel %vm224, %v3406, 0
    %3424 = vmatprep.subr.mxu0 0.0
    %3425 = vmatpush1.msra.mxu0 %v3407
    %3426 = vmatprep.subr.mxu0 0.0
    %3427 = vmatpush1.msra.mxu0 %v3408
    %3428 = vmatprep.subr.mxu0 0.0
    %3429 = vmatpush1.msra.mxu0 %v3409
    %3430 = vmatprep.subr.mxu0 0.0
    %3431 = vmatpush1.msra.mxu0 %v3410
    %3432 = vmatprep.subr.mxu0 0.0
    %3433 = vmatpush1.msra.mxu0 0.0
    %3434 = vmatprep.subr.mxu0 0.0
    %3435 = vmatpush1.msra.mxu0 0.0
    %3436 = vmatprep.subr.mxu0 0.0
    %3437 = vmatpush1.msra.mxu0 0.0
    %3438 = vmatprep.subr.mxu0 0.0
    %3439 = vmatpush1.msra.mxu0 0.0
    %3440 = vmatprep.subr.mxu0 0.0
    %3441 = vmatpush1.msra.mxu0 0.0
    %3442 = vmatprep.subr.mxu0 0.0
    %3443 = vmatpush1.msra.mxu0 0.0
    %3444 = vmatprep.subr.mxu0 0.0
    %3445 = vmatpush1.msra.mxu0 0.0
    %3446 = vmatprep.subr.mxu0 0.0
    %3447 = vmatpush1.msra.mxu0 0.0
    %3448 = vmatprep.subr.mxu0 0.0
    %3449 = vmatpush1.msra.mxu0 0.0
    %3450 = vmatprep.subr.mxu0 0.0
    %3451 = vmatpush1.msra.mxu0 0.0
    %3452 = vmatprep.subr.mxu0 0.0
    %3453 = vmatpush1.msra.mxu0 0.0
    %3454 = vmatprep.subr.mxu0 0.0
    %3455 = vmatpush1.msra.mxu0 0.0
    %3456 = vmatprep.subr.mxu0 0.0
    %3457 = vmatpush1.msra.mxu0 0.0
    %3458 = vmatprep.subr.mxu0 0.0
    %3459 = vmatpush1.msra.mxu0 0.0
    %3460 = vmatprep.subr.mxu0 0.0
    %3461 = vmatpush1.msra.mxu0 0.0
    %3462 = vmatprep.subr.mxu0 0.0
    %3463 = vmatpush1.msra.mxu0 0.0
    %3464 = vmatprep.subr.mxu0 0.0
    %3465 = vmatpush1.msra.mxu0 0.0
    %3466 = vmatprep.subr.mxu0 0.0
    %3467 = vmatpush1.msra.mxu0 0.0
    %3468 = vmatprep.subr.mxu0 0.0
    %3469 = vmatpush1.msra.mxu0 0.0
    %3470 = vmatprep.subr.mxu0 0.0
    %3471 = vmatpush1.msra.mxu0 0.0
    %3472 = vmatprep.subr.mxu0 0.0
    %3473 = vmatpush1.msra.mxu0 0.0
    %3474 = vmatprep.subr.mxu0 0.0
    %3475 = vmatpush1.msra.mxu0 0.0
    %3476 = vmatprep.subr.mxu0 0.0
    %3477 = vmatpush1.msra.mxu0 0.0
    %3478 = vmatprep.subr.mxu0 0.0
    %3479 = vmatpush1.msra.mxu0 0.0
    %3480 = vmatprep.subr.mxu0 0.0
    %3481 = vmatpush1.msra.mxu0 0.0
    %3482 = vmatprep.subr.mxu0 0.0
    %3483 = vmatpush1.msra.mxu0 0.0
    %3484 = vmatprep.subr.mxu0 0.0
    %3485 = vmatpush1.msra.mxu0 0.0
    %3486 = vmatprep.subr.mxu0 0.0
    %3487 = vmatpush1.msra.mxu0 0.0
    %3488 = vmatprep.mubr.f32.mxu0 0.0
    %3489 = vmatmul.mubr.f32.gmra.mrb[0].mxu0 %v3419
    %v3490 = vpop.f32.mrb[0].mxu0
    %v3491 = vadd.f32 %v3416, %v3490
    %v3492 = vpop.f32.mrb[0].mxu0
    %3493 = vmatprep.mubr.f32.mxu0 0.0
    %3494 = vmatmul.mubr.f32.gmra.mrb[0].mxu0 %v3422
    %v3495 = vpop.f32.mrb[0].mxu0
    %v3496 = vadd.f32 %v3416, %v3495
    %v3497 = vpop.f32.mrb[0].mxu0
    %3498 = vdwg.mxu0
    %v3499 = vmax.f32 %v3491, 0.0
    %v3500 = vmax.f32 %v3496, 0.0
    %v3501 = vld [vmem:[%s22] sm:$0xff]
    %v3502 = vld [vmem:[%s22 + $0x8] sm:$0xff]
    %v3503 = vld [vmem:[%s22 + $0x10] sm:$0xff]
    %v3504 = vld [vmem:[%s22 + $0x18] sm:$0xff]
    %v3505 = vld [vmem:[%s22 + $0x20] sm:$0xff]
    %v3506 = vld [vmem:[%s22 + $0x28] sm:$0xff]
    %v3507 = vld [vmem:[%s22 + $0x30] sm:$0xff]
    %v3508 = vld [vmem:[%s22 + $0x38] sm:$0xff]
    %v3509 = vld [vmem:[%s22 + $0x40] sm:$0xff]
    %v3510 = vld [vmem:[%s22 + $0x48] sm:$0xff]
    %v3511 = vld [vmem:[%s22 + $0x50] sm:$0xff]
    %v3512 = vld [vmem:[%s22 + $0x58] sm:$0xff]
    %v3513 = vld [vmem:[%s22 + $0x60] sm:$0xff]
    %v3514 = vld [vmem:[%s22 + $0x68] sm:$0xff]
    %v3515 = vld [vmem:[%s22 + $0x70] sm:$0xff]
    %v3516 = vld [vmem:[%s22 + $0x78] sm:$0xff]
    %v3517 = vld [vmem:[%s23] sm:$0x1]
    %v3519 = vlaneseq
    %v3520 = vshrl.u32 %v3519, 7
    %v3521 = vsub.s32 0, %v3520
    %v3522 = vrot.slane %v3517, %v3521
    %3524 = vmatprep.subr.mxu0 0.0
    %3525 = vmatpush1.msra.mxu0 %v3501
    %3526 = vmatprep.subr.mxu0 0.0
    %3527 = vmatpush1.msra.mxu0 %v3502
    %3528 = vmatprep.subr.mxu0 0.0
    %3529 = vmatpush1.msra.mxu0 %v3503
    %3530 = vmatprep.subr.mxu0 0.0
    %3531 = vmatpush1.msra.mxu0 %v3504
    %3532 = vmatprep.subr.mxu0 0.0
    %3533 = vmatpush1.msra.mxu0 %v3505
    %3534 = vmatprep.subr.mxu0 0.0
    %3535 = vmatpush1.msra.mxu0 %v3506
    %3536 = vmatprep.subr.mxu0 0.0
    %3537 = vmatpush1.msra.mxu0 %v3507
    %3538 = vmatprep.subr.mxu0 0.0
    %3539 = vmatpush1.msra.mxu0 %v3508
    %3540 = vmatprep.subr.mxu0 0.0
    %3541 = vmatpush1.msra.mxu0 %v3509
    %3542 = vmatprep.subr.mxu0 0.0
    %3543 = vmatpush1.msra.mxu0 %v3510
    %3544 = vmatprep.subr.mxu0 0.0
    %3545 = vmatpush1.msra.mxu0 %v3511
    %3546 = vmatprep.subr.mxu0 0.0
    %3547 = vmatpush1.msra.mxu0 %v3512
    %3548 = vmatprep.subr.mxu0 0.0
    %3549 = vmatpush1.msra.mxu0 %v3513
    %3550 = vmatprep.subr.mxu0 0.0
    %3551 = vmatpush1.msra.mxu0 %v3514
    %3552 = vmatprep.subr.mxu0 0.0
    %3553 = vmatpush1.msra.mxu0 %v3515
    %3554 = vmatprep.subr.mxu0 0.0
    %3555 = vmatpush1.msra.mxu0 %v3516
    %3556 = vmatprep.subr.mxu0 0.0
    %3557 = vmatpush1.msra.mxu0 0.0
    %3558 = vmatprep.subr.mxu0 0.0
    %3559 = vmatpush1.msra.mxu0 0.0
    %3560 = vmatprep.subr.mxu0 0.0
    %3561 = vmatpush1.msra.mxu0 0.0
    %3562 = vmatprep.subr.mxu0 0.0
    %3563 = vmatpush1.msra.mxu0 0.0
    %3564 = vmatprep.subr.mxu0 0.0
    %3565 = vmatpush1.msra.mxu0 0.0
    %3566 = vmatprep.subr.mxu0 0.0
    %3567 = vmatpush1.msra.mxu0 0.0
    %3568 = vmatprep.subr.mxu0 0.0
    %3569 = vmatpush1.msra.mxu0 0.0
    %3570 = vmatprep.subr.mxu0 0.0
    %3571 = vmatpush1.msra.mxu0 0.0
    %3572 = vmatprep.subr.mxu0 0.0
    %3573 = vmatpush1.msra.mxu0 0.0
    %3574 = vmatprep.subr.mxu0 0.0
    %3575 = vmatpush1.msra.mxu0 0.0
    %3576 = vmatprep.subr.mxu0 0.0
    %3577 = vmatpush1.msra.mxu0 0.0
    %3578 = vmatprep.subr.mxu0 0.0
    %3579 = vmatpush1.msra.mxu0 0.0
    %3580 = vmatprep.subr.mxu0 0.0
    %3581 = vmatpush1.msra.mxu0 0.0
    %3582 = vmatprep.subr.mxu0 0.0
    %3583 = vmatpush1.msra.mxu0 0.0
    %3584 = vmatprep.subr.mxu0 0.0
    %3585 = vmatpush1.msra.mxu0 0.0
    %3586 = vmatprep.subr.mxu0 0.0
    %3587 = vmatpush1.msra.mxu0 0.0
    %3588 = vmatprep.mubr.f32.mxu0 0.0
    %3589 = vmatmul.mubr.f32.gmra.mrb[0].mxu0 %v3499
    %v3590 = vpop.f32.mrb[0].mxu0
    %v3591 = vadd.f32 %v3522, %v3590
    %v3592 = vpop.f32.mrb[0].mxu0
    %3593 = vmatprep.mubr.f32.mxu0 0.0
    %3594 = vmatmul.mubr.f32.gmra.mrb[0].mxu0 %v3500
    %v3595 = vpop.f32.mrb[0].mxu0
    %v3596 = vadd.f32 %v3522, %v3595
    %v3597 = vpop.f32.mrb[0].mxu0
    %3598 = vdwg.mxu0
    %v3599 = vadd.f32 %v3591, %v3405
    %v3600 = vadd.f32 %v3596, %v3406
    %v3601 = vld [vmem:[%s18] sm:$0x1]
    %v3602 = vld [vmem:[%s19] sm:$0x1]
    %v3603 = vsel %vm224, %v3599, 0.0
    %3604 = vadd.xlane.f32.xlu0 %v3603
    %v3605 = vpop.xlane.xlu0 %3604
    %v3606 = vsel %vm224, %v3600, 0.0
    %3607 = vadd.xlane.f32.xlu0 %v3606
    %v3608 = vpop.xlane.xlu0 %3607
    %v3609 = vmul.f32 %v3605, %v1766
    %v3610 = vmul.f32 %v3608, %v1766
    %v3611 = vsub.f32 %v3599, %v3609
    %v3612 = vsub.f32 %v3600, %v3610
    %v3613 = vmul.f32 %v3611, %v3611
    %v3614 = vmul.f32 %v3612, %v3612
    %v3615 = vsel %vm224, %v3613, 0.0
    %3616 = vadd.xlane.f32.xlu0 %v3615
    %v3617 = vpop.xlane.xlu0 %3616
    %v3618 = vsel %vm224, %v3614, 0.0
    %3619 = vadd.xlane.f32.xlu0 %v3618
    %v3620 = vpop.xlane.xlu0 %3619
    %v3621 = vmul.f32 %v3617, %v1766
    %v3622 = vmul.f32 %v3620, %v1766
    %v3623 = vadd.f32 %v3621, 1e-05
    %v3624 = vadd.f32 %v3622, 1e-05
    %v3625 = vrsqrt.pop %v3623
    %v3626 = vrsqrt.pop %v3624
    %v3627 = vmul.f32 %v3611, %v3625
    %v3628 = vmul.f32 %v3612, %v3626
    %v3630 = vlaneseq
    %v3631 = vshrl.u32 %v3630, 7
    %v3632 = vsub.s32 0, %v3631
    %v3633 = vrot.slane %v3601, %v3632
    %v3635 = vmul.f32 %v3627, %v3633
    %v3636 = vmul.f32 %v3628, %v3633
    %v3638 = vlaneseq
    %v3639 = vshrl.u32 %v3638, 7
    %v3640 = vsub.s32 0, %v3639
    %v3641 = vrot.slane %v3602, %v3640
    %v3643 = vadd.f32 %v3635, %v3641
    %v3644 = vadd.f32 %v3636, %v3641
    %s3645 = scalar_lea.vmem %s6, 32
    %v3646 = vld [vmem:[%s3645] sm:$0xff]
    %v3647 = vld [vmem:[%s3645 + $0x8] sm:$0xff]
    %v3648 = vld [vmem:[%s3645 + $0x10] sm:$0xff]
    %v3649 = vld [vmem:[%s3645 + $0x18] sm:$0xff]
    %s3650 = scalar_lea.vmem %s7, 1
    %v3651 = vld [vmem:[%s3650] sm:$0x1]
    %s3652 = scalar_lea.vmem %s8, 32
    %v3653 = vld [vmem:[%s3652] sm:$0xff]
    %v3654 = vld [vmem:[%s3652 + $0x8] sm:$0xff]
    %v3655 = vld [vmem:[%s3652 + $0x10] sm:$0xff]
    %v3656 = vld [vmem:[%s3652 + $0x18] sm:$0xff]
    %s3657 = scalar_lea.vmem %s9, 1
    %v3658 = vld [vmem:[%s3657] sm:$0x1]
    %v3660 = vlaneseq
    %v3661 = vshrl.u32 %v3660, 7
    %v3662 = vsub.s32 0, %v3661
    %v3663 = vrot.slane %v3651, %v3662
    %v3666 = vsel %vm224, %v3643, 0
    %v3669 = vsel %vm224, %v3644, 0
    %3671 = vmatprep.subr.mxu0 0.0
    %3672 = vmatpush1.msra.mxu0 %v3646
    %3673 = vmatprep.subr.mxu0 0.0
    %3674 = vmatpush1.msra.mxu0 %v3647
    %3675 = vmatprep.subr.mxu0 0.0
    %3676 = vmatpush1.msra.mxu0 %v3648
    %3677 = vmatprep.subr.mxu0 0.0
    %3678 = vmatpush1.msra.mxu0 %v3649
    %3679 = vmatprep.subr.mxu0 0.0
    %3680 = vmatpush1.msra.mxu0 0.0
    %3681 = vmatprep.subr.mxu0 0.0
    %3682 = vmatpush1.msra.mxu0 0.0
    %3683 = vmatprep.subr.mxu0 0.0
    %3684 = vmatpush1.msra.mxu0 0.0
    %3685 = vmatprep.subr.mxu0 0.0
    %3686 = vmatpush1.msra.mxu0 0.0
    %3687 = vmatprep.subr.mxu0 0.0
    %3688 = vmatpush1.msra.mxu0 0.0
    %3689 = vmatprep.subr.mxu0 0.0
    %3690 = vmatpush1.msra.mxu0 0.0
    %3691 = vmatprep.subr.mxu0 0.0
    %3692 = vmatpush1.msra.mxu0 0.0
    %3693 = vmatprep.subr.mxu0 0.0
    %3694 = vmatpush1.msra.mxu0 0.0
    %3695 = vmatprep.subr.mxu0 0.0
    %3696 = vmatpush1.msra.mxu0 0.0
    %3697 = vmatprep.subr.mxu0 0.0
    %3698 = vmatpush1.msra.mxu0 0.0
    %3699 = vmatprep.subr.mxu0 0.0
    %3700 = vmatpush1.msra.mxu0 0.0
    %3701 = vmatprep.subr.mxu0 0.0
    %3702 = vmatpush1.msra.mxu0 0.0
    %3703 = vmatprep.subr.mxu0 0.0
    %3704 = vmatpush1.msra.mxu0 0.0
    %3705 = vmatprep.subr.mxu0 0.0
    %3706 = vmatpush1.msra.mxu0 0.0
    %3707 = vmatprep.subr.mxu0 0.0
    %3708 = vmatpush1.msra.mxu0 0.0
    %3709 = vmatprep.subr.mxu0 0.0
    %3710 = vmatpush1.msra.mxu0 0.0
    %3711 = vmatprep.subr.mxu0 0.0
    %3712 = vmatpush1.msra.mxu0 0.0
    %3713 = vmatprep.subr.mxu0 0.0
    %3714 = vmatpush1.msra.mxu0 0.0
    %3715 = vmatprep.subr.mxu0 0.0
    %3716 = vmatpush1.msra.mxu0 0.0
    %3717 = vmatprep.subr.mxu0 0.0
    %3718 = vmatpush1.msra.mxu0 0.0
    %3719 = vmatprep.subr.mxu0 0.0
    %3720 = vmatpush1.msra.mxu0 0.0
    %3721 = vmatprep.subr.mxu0 0.0
    %3722 = vmatpush1.msra.mxu0 0.0
    %3723 = vmatprep.subr.mxu0 0.0
    %3724 = vmatpush1.msra.mxu0 0.0
    %3725 = vmatprep.subr.mxu0 0.0
    %3726 = vmatpush1.msra.mxu0 0.0
    %3727 = vmatprep.subr.mxu0 0.0
    %3728 = vmatpush1.msra.mxu0 0.0
    %3729 = vmatprep.subr.mxu0 0.0
    %3730 = vmatpush1.msra.mxu0 0.0
    %3731 = vmatprep.subr.mxu0 0.0
    %3732 = vmatpush1.msra.mxu0 0.0
    %3733 = vmatprep.subr.mxu0 0.0
    %3734 = vmatpush1.msra.mxu0 0.0
    %3735 = vmatprep.mubr.f32.mxu0 0.0
    %3736 = vmatmul.mubr.f32.gmra.mrb[0].mxu0 %v3666
    %v3737 = vpop.f32.mrb[0].mxu0
    %v3738 = vadd.f32 %v3663, %v3737
    %v3739 = vpop.f32.mrb[0].mxu0
    %3740 = vmatprep.mubr.f32.mxu0 0.0
    %3741 = vmatmul.mubr.f32.gmra.mrb[0].mxu0 %v3669
    %v3742 = vpop.f32.mrb[0].mxu0
    %v3743 = vadd.f32 %v3663, %v3742
    %v3744 = vpop.f32.mrb[0].mxu0
    %3745 = vdwg.mxu0
    %v3746 = vsel %vm306, %v3643, 0
    %v3749 = vsel %vm306, %v3738, 0
    %3751 = vmatprep.subr.mxu0 0.0
    %3752 = vmatpush1.xpose.msra.mxu0 %v3749
    %3753 = vmatprep.subr.mxu0 0.0
    %3754 = vmatpush1.xpose.msra.mxu0 0.0
    %3755 = vmatprep.subr.mxu0 0.0
    %3756 = vmatpush1.xpose.msra.mxu0 0.0
    %3757 = vmatprep.subr.mxu0 0.0
    %3758 = vmatpush1.xpose.msra.mxu0 0.0
    %3759 = vmatprep.subr.mxu0 0.0
    %3760 = vmatpush1.xpose.msra.mxu0 0.0
    %3761 = vmatprep.subr.mxu0 0.0
    %3762 = vmatpush1.xpose.msra.mxu0 0.0
    %3763 = vmatprep.subr.mxu0 0.0
    %3764 = vmatpush1.xpose.msra.mxu0 0.0
    %3765 = vmatprep.subr.mxu0 0.0
    %3766 = vmatpush1.xpose.msra.mxu0 0.0
    %3767 = vmatprep.subr.mxu0 0.0
    %3768 = vmatpush1.xpose.msra.mxu0 0.0
    %3769 = vmatprep.subr.mxu0 0.0
    %3770 = vmatpush1.xpose.msra.mxu0 0.0
    %3771 = vmatprep.subr.mxu0 0.0
    %3772 = vmatpush1.xpose.msra.mxu0 0.0
    %3773 = vmatprep.subr.mxu0 0.0
    %3774 = vmatpush1.xpose.msra.mxu0 0.0
    %3775 = vmatprep.subr.mxu0 0.0
    %3776 = vmatpush1.xpose.msra.mxu0 0.0
    %3777 = vmatprep.subr.mxu0 0.0
    %3778 = vmatpush1.xpose.msra.mxu0 0.0
    %3779 = vmatprep.subr.mxu0 0.0
    %3780 = vmatpush1.xpose.msra.mxu0 0.0
    %3781 = vmatprep.subr.mxu0 0.0
    %3782 = vmatpush1.xpose.msra.mxu0 0.0
    %3783 = vmatprep.subr.mxu0 0.0
    %3784 = vmatpush1.xpose.msra.mxu0 0.0
    %3785 = vmatprep.subr.mxu0 0.0
    %3786 = vmatpush1.xpose.msra.mxu0 0.0
    %3787 = vmatprep.subr.mxu0 0.0
    %3788 = vmatpush1.xpose.msra.mxu0 0.0
    %3789 = vmatprep.subr.mxu0 0.0
    %3790 = vmatpush1.xpose.msra.mxu0 0.0
    %3791 = vmatprep.subr.mxu0 0.0
    %3792 = vmatpush1.xpose.msra.mxu0 0.0
    %3793 = vmatprep.subr.mxu0 0.0
    %3794 = vmatpush1.xpose.msra.mxu0 0.0
    %3795 = vmatprep.subr.mxu0 0.0
    %3796 = vmatpush1.xpose.msra.mxu0 0.0
    %3797 = vmatprep.subr.mxu0 0.0
    %3798 = vmatpush1.xpose.msra.mxu0 0.0
    %3799 = vmatprep.subr.mxu0 0.0
    %3800 = vmatpush1.xpose.msra.mxu0 0.0
    %3801 = vmatprep.subr.mxu0 0.0
    %3802 = vmatpush1.xpose.msra.mxu0 0.0
    %3803 = vmatprep.subr.mxu0 0.0
    %3804 = vmatpush1.xpose.msra.mxu0 0.0
    %3805 = vmatprep.subr.mxu0 0.0
    %3806 = vmatpush1.xpose.msra.mxu0 0.0
    %3807 = vmatprep.subr.mxu0 0.0
    %3808 = vmatpush1.xpose.msra.mxu0 0.0
    %3809 = vmatprep.subr.mxu0 0.0
    %3810 = vmatpush1.xpose.msra.mxu0 0.0
    %3811 = vmatprep.subr.mxu0 0.0
    %3812 = vmatpush1.xpose.msra.mxu0 0.0
    %3813 = vmatprep.subr.mxu0 0.0
    %3814 = vmatpush1.xpose.msra.mxu0 0.0
    %3815 = vmatprep.mubr.f32.mxu0 0.0
    %3816 = vmatmul.mubr.f32.gmra.mrb[0].mxu0 %v3746
    %v3817 = vpop.f32.mrb[0].mxu0
    %v3818 = vadd.f32 0.0, %v3817
    %v3819 = vpop.f32.mrb[0].mxu0
    %3820 = vdwg.mxu0
    %v3821 = vmul.f32 %v3818, 0.17677669
    %v3822 = vadd.f32 %v3821, %v196
    %v3823 = vsel %vm306, %v3822, -inf
    %3824 = vmax.xlane.f32.xlu0 %v3823
    %v3825 = vpop.xlane.xlu0 %3824
    %v3826 = vsub.f32 %v3822, %v3825
    %v3827 = vmul.f32 %v3826, 1.442695
    %v3828 = vpow.pop %v3827
    %v3829 = vsel %vm306, %v3828, 0.0
    %3830 = vadd.xlane.f32.xlu0 %v3829
    %v3831 = vpop.xlane.xlu0 %3830
    %v3832 = vrcp.pop %v3831
    %v3833 = vmul.f32 %v3828, %v3832
    %3834 = vrot.lane.b32.xlu0 %v3738, 96
    %v3835 = vpop.permute.xlu0 %3834
    %v3838 = vsel %vm306, %v3833, 0
    %3840 = vmatprep.subr.mxu0 0.0
    %3841 = vmatpush1.msra.mxu0 %v3835
    %3842 = vmatprep.subr.mxu0 0.0
    %3843 = vmatpush1.msra.mxu0 0.0
    %3844 = vmatprep.subr.mxu0 0.0
    %3845 = vmatpush1.msra.mxu0 0.0
    %3846 = vmatprep.subr.mxu0 0.0
    %3847 = vmatpush1.msra.mxu0 0.0
    %3848 = vmatprep.subr.mxu0 0.0
    %3849 = vmatpush1.msra.mxu0 0.0
    %3850 = vmatprep.subr.mxu0 0.0
    %3851 = vmatpush1.msra.mxu0 0.0
    %3852 = vmatprep.subr.mxu0 0.0
    %3853 = vmatpush1.msra.mxu0 0.0
    %3854 = vmatprep.subr.mxu0 0.0
    %3855 = vmatpush1.msra.mxu0 0.0
    %3856 = vmatprep.subr.mxu0 0.0
    %3857 = vmatpush1.msra.mxu0 0.0
    %3858 = vmatprep.subr.mxu0 0.0
    %3859 = vmatpush1.msra.mxu0 0.0
    %3860 = vmatprep.subr.mxu0 0.0
    %3861 = vmatpush1.msra.mxu0 0.0
    %3862 = vmatprep.subr.mxu0 0.0
    %3863 = vmatpush1.msra.mxu0 0.0
    %3864 = vmatprep.subr.mxu0 0.0
    %3865 = vmatpush1.msra.mxu0 0.0
    %3866 = vmatprep.subr.mxu0 0.0
    %3867 = vmatpush1.msra.mxu0 0.0
    %3868 = vmatprep.subr.mxu0 0.0
    %3869 = vmatpush1.msra.mxu0 0.0
    %3870 = vmatprep.subr.mxu0 0.0
    %3871 = vmatpush1.msra.mxu0 0.0
    %3872 = vmatprep.subr.mxu0 0.0
    %3873 = vmatpush1.msra.mxu0 0.0
    %3874 = vmatprep.subr.mxu0 0.0
    %3875 = vmatpush1.msra.mxu0 0.0
    %3876 = vmatprep.subr.mxu0 0.0
    %3877 = vmatpush1.msra.mxu0 0.0
    %3878 = vmatprep.subr.mxu0 0.0
    %3879 = vmatpush1.msra.mxu0 0.0
    %3880 = vmatprep.subr.mxu0 0.0
    %3881 = vmatpush1.msra.mxu0 0.0
    %3882 = vmatprep.subr.mxu0 0.0
    %3883 = vmatpush1.msra.mxu0 0.0
    %3884 = vmatprep.subr.mxu0 0.0
    %3885 = vmatpush1.msra.mxu0 0.0
    %3886 = vmatprep.subr.mxu0 0.0
    %3887 = vmatpush1.msra.mxu0 0.0
    %3888 = vmatprep.subr.mxu0 0.0
    %3889 = vmatpush1.msra.mxu0 0.0
    %3890 = vmatprep.subr.mxu0 0.0
    %3891 = vmatpush1.msra.mxu0 0.0
    %3892 = vmatprep.subr.mxu0 0.0
    %3893 = vmatpush1.msra.mxu0 0.0
    %3894 = vmatprep.subr.mxu0 0.0
    %3895 = vmatpush1.msra.mxu0 0.0
    %3896 = vmatprep.subr.mxu0 0.0
    %3897 = vmatpush1.msra.mxu0 0.0
    %3898 = vmatprep.subr.mxu0 0.0
    %3899 = vmatpush1.msra.mxu0 0.0
    %3900 = vmatprep.subr.mxu0 0.0
    %3901 = vmatpush1.msra.mxu0 0.0
    %3902 = vmatprep.subr.mxu0 0.0
    %3903 = vmatpush1.msra.mxu0 0.0
    %3904 = vmatprep.mubr.f32.mxu0 0.0
    %3905 = vmatmul.mubr.f32.gmra.mrb[0].mxu0 %v3838
    %v3906 = vpop.f32.mrb[0].mxu0
    %v3907 = vadd.f32 0.0, %v3906
    %v3908 = vpop.f32.mrb[0].mxu0
    %3909 = vdwg.mxu0
    %3910 = vrot.lane.b32.xlu0 %v3643, 120
    %v3911 = vpop.permute.xlu0 %3910
    %3912 = vrot.lane.b32.xlu0 %v3738, 120
    %v3913 = vpop.permute.xlu0 %3912
    %v3914 = vsel %vm306, %v3911, 0
    %v3916 = vsel %vm306, %v3913, 0
    %3918 = vmatprep.subr.mxu0 0.0
    %3919 = vmatpush1.xpose.msra.mxu0 %v3916
    %3920 = vmatprep.subr.mxu0 0.0
    %3921 = vmatpush1.xpose.msra.mxu0 0.0
    %3922 = vmatprep.subr.mxu0 0.0
    %3923 = vmatpush1.xpose.msra.mxu0 0.0
    %3924 = vmatprep.subr.mxu0 0.0
    %3925 = vmatpush1.xpose.msra.mxu0 0.0
    %3926 = vmatprep.subr.mxu0 0.0
    %3927 = vmatpush1.xpose.msra.mxu0 0.0
    %3928 = vmatprep.subr.mxu0 0.0
    %3929 = vmatpush1.xpose.msra.mxu0 0.0
    %3930 = vmatprep.subr.mxu0 0.0
    %3931 = vmatpush1.xpose.msra.mxu0 0.0
    %3932 = vmatprep.subr.mxu0 0.0
    %3933 = vmatpush1.xpose.msra.mxu0 0.0
    %3934 = vmatprep.subr.mxu0 0.0
    %3935 = vmatpush1.xpose.msra.mxu0 0.0
    %3936 = vmatprep.subr.mxu0 0.0
    %3937 = vmatpush1.xpose.msra.mxu0 0.0
    %3938 = vmatprep.subr.mxu0 0.0
    %3939 = vmatpush1.xpose.msra.mxu0 0.0
    %3940 = vmatprep.subr.mxu0 0.0
    %3941 = vmatpush1.xpose.msra.mxu0 0.0
    %3942 = vmatprep.subr.mxu0 0.0
    %3943 = vmatpush1.xpose.msra.mxu0 0.0
    %3944 = vmatprep.subr.mxu0 0.0
    %3945 = vmatpush1.xpose.msra.mxu0 0.0
    %3946 = vmatprep.subr.mxu0 0.0
    %3947 = vmatpush1.xpose.msra.mxu0 0.0
    %3948 = vmatprep.subr.mxu0 0.0
    %3949 = vmatpush1.xpose.msra.mxu0 0.0
    %3950 = vmatprep.subr.mxu0 0.0
    %3951 = vmatpush1.xpose.msra.mxu0 0.0
    %3952 = vmatprep.subr.mxu0 0.0
    %3953 = vmatpush1.xpose.msra.mxu0 0.0
    %3954 = vmatprep.subr.mxu0 0.0
    %3955 = vmatpush1.xpose.msra.mxu0 0.0
    %3956 = vmatprep.subr.mxu0 0.0
    %3957 = vmatpush1.xpose.msra.mxu0 0.0
    %3958 = vmatprep.subr.mxu0 0.0
    %3959 = vmatpush1.xpose.msra.mxu0 0.0
    %3960 = vmatprep.subr.mxu0 0.0
    %3961 = vmatpush1.xpose.msra.mxu0 0.0
    %3962 = vmatprep.subr.mxu0 0.0
    %3963 = vmatpush1.xpose.msra.mxu0 0.0
    %3964 = vmatprep.subr.mxu0 0.0
    %3965 = vmatpush1.xpose.msra.mxu0 0.0
    %3966 = vmatprep.subr.mxu0 0.0
    %3967 = vmatpush1.xpose.msra.mxu0 0.0
    %3968 = vmatprep.subr.mxu0 0.0
    %3969 = vmatpush1.xpose.msra.mxu0 0.0
    %3970 = vmatprep.subr.mxu0 0.0
    %3971 = vmatpush1.xpose.msra.mxu0 0.0
    %3972 = vmatprep.subr.mxu0 0.0
    %3973 = vmatpush1.xpose.msra.mxu0 0.0
    %3974 = vmatprep.subr.mxu0 0.0
    %3975 = vmatpush1.xpose.msra.mxu0 0.0
    %3976 = vmatprep.subr.mxu0 0.0
    %3977 = vmatpush1.xpose.msra.mxu0 0.0
    %3978 = vmatprep.subr.mxu0 0.0
    %3979 = vmatpush1.xpose.msra.mxu0 0.0
    %3980 = vmatprep.subr.mxu0 0.0
    %3981 = vmatpush1.xpose.msra.mxu0 0.0
    %3982 = vmatprep.mubr.f32.mxu0 0.0
    %3983 = vmatmul.mubr.f32.gmra.mrb[0].mxu0 %v3914
    %v3984 = vpop.f32.mrb[0].mxu0
    %v3985 = vadd.f32 0.0, %v3984
    %v3986 = vpop.f32.mrb[0].mxu0
    %3987 = vdwg.mxu0
    %v3988 = vmul.f32 %v3985, 0.17677669
    %v3989 = vadd.f32 %v3988, %v196
    %v3990 = vsel %vm306, %v3989, -inf
    %3991 = vmax.xlane.f32.xlu0 %v3990
    %v3992 = vpop.xlane.xlu0 %3991
    %v3993 = vsub.f32 %v3989, %v3992
    %v3994 = vmul.f32 %v3993, 1.442695
    %v3995 = vpow.pop %v3994
    %v3996 = vsel %vm306, %v3995, 0.0
    %3997 = vadd.xlane.f32.xlu0 %v3996
    %v3998 = vpop.xlane.xlu0 %3997
    %v3999 = vrcp.pop %v3998
    %v4000 = vmul.f32 %v3995, %v3999
    %4001 = vrot.lane.b32.xlu0 %v3738, 88
    %v4002 = vpop.permute.xlu0 %4001
    %v4005 = vsel %vm306, %v4000, 0
    %4007 = vmatprep.subr.mxu0 0.0
    %4008 = vmatpush1.msra.mxu0 %v4002
    %4009 = vmatprep.subr.mxu0 0.0
    %4010 = vmatpush1.msra.mxu0 0.0
    %4011 = vmatprep.subr.mxu0 0.0
    %4012 = vmatpush1.msra.mxu0 0.0
    %4013 = vmatprep.subr.mxu0 0.0
    %4014 = vmatpush1.msra.mxu0 0.0
    %4015 = vmatprep.subr.mxu0 0.0
    %4016 = vmatpush1.msra.mxu0 0.0
    %4017 = vmatprep.subr.mxu0 0.0
    %4018 = vmatpush1.msra.mxu0 0.0
    %4019 = vmatprep.subr.mxu0 0.0
    %4020 = vmatpush1.msra.mxu0 0.0
    %4021 = vmatprep.subr.mxu0 0.0
    %4022 = vmatpush1.msra.mxu0 0.0
    %4023 = vmatprep.subr.mxu0 0.0
    %4024 = vmatpush1.msra.mxu0 0.0
    %4025 = vmatprep.subr.mxu0 0.0
    %4026 = vmatpush1.msra.mxu0 0.0
    %4027 = vmatprep.subr.mxu0 0.0
    %4028 = vmatpush1.msra.mxu0 0.0
    %4029 = vmatprep.subr.mxu0 0.0
    %4030 = vmatpush1.msra.mxu0 0.0
    %4031 = vmatprep.subr.mxu0 0.0
    %4032 = vmatpush1.msra.mxu0 0.0
    %4033 = vmatprep.subr.mxu0 0.0
    %4034 = vmatpush1.msra.mxu0 0.0
    %4035 = vmatprep.subr.mxu0 0.0
    %4036 = vmatpush1.msra.mxu0 0.0
    %4037 = vmatprep.subr.mxu0 0.0
    %4038 = vmatpush1.msra.mxu0 0.0
    %4039 = vmatprep.subr.mxu0 0.0
    %4040 = vmatpush1.msra.mxu0 0.0
    %4041 = vmatprep.subr.mxu0 0.0
    %4042 = vmatpush1.msra.mxu0 0.0
    %4043 = vmatprep.subr.mxu0 0.0
    %4044 = vmatpush1.msra.mxu0 0.0
    %4045 = vmatprep.subr.mxu0 0.0
    %4046 = vmatpush1.msra.mxu0 0.0
    %4047 = vmatprep.subr.mxu0 0.0
    %4048 = vmatpush1.msra.mxu0 0.0
    %4049 = vmatprep.subr.mxu0 0.0
    %4050 = vmatpush1.msra.mxu0 0.0
    %4051 = vmatprep.subr.mxu0 0.0
    %4052 = vmatpush1.msra.mxu0 0.0
    %4053 = vmatprep.subr.mxu0 0.0
    %4054 = vmatpush1.msra.mxu0 0.0
    %4055 = vmatprep.subr.mxu0 0.0
    %4056 = vmatpush1.msra.mxu0 0.0
    %4057 = vmatprep.subr.mxu0 0.0
    %4058 = vmatpush1.msra.mxu0 0.0
    %4059 = vmatprep.subr.mxu0 0.0
    %4060 = vmatpush1.msra.mxu0 0.0
    %4061 = vmatprep.subr.mxu0 0.0
    %4062 = vmatpush1.msra.mxu0 0.0
    %4063 = vmatprep.subr.mxu0 0.0
    %4064 = vmatpush1.msra.mxu0 0.0
    %4065 = vmatprep.subr.mxu0 0.0
    %4066 = vmatpush1.msra.mxu0 0.0
    %4067 = vmatprep.subr.mxu0 0.0
    %4068 = vmatpush1.msra.mxu0 0.0
    %4069 = vmatprep.subr.mxu0 0.0
    %4070 = vmatpush1.msra.mxu0 0.0
    %4071 = vmatprep.mubr.f32.mxu0 0.0
    %4072 = vmatmul.mubr.f32.gmra.mrb[0].mxu0 %v4005
    %v4073 = vpop.f32.mrb[0].mxu0
    %v4074 = vadd.f32 0.0, %v4073
    %v4075 = vpop.f32.mrb[0].mxu0
    %4076 = vdwg.mxu0
    %4077 = vrot.lane.b32.xlu0 %v3643, 112
    %v4078 = vpop.permute.xlu0 %4077
    %4079 = vrot.lane.b32.xlu0 %v3738, 112
    %v4080 = vpop.permute.xlu0 %4079
    %v4081 = vsel %vm306, %v4078, 0
    %v4083 = vsel %vm306, %v4080, 0
    %4085 = vmatprep.subr.mxu0 0.0
    %4086 = vmatpush1.xpose.msra.mxu0 %v4083
    %4087 = vmatprep.subr.mxu0 0.0
    %4088 = vmatpush1.xpose.msra.mxu0 0.0
    %4089 = vmatprep.subr.mxu0 0.0
    %4090 = vmatpush1.xpose.msra.mxu0 0.0
    %4091 = vmatprep.subr.mxu0 0.0
    %4092 = vmatpush1.xpose.msra.mxu0 0.0
    %4093 = vmatprep.subr.mxu0 0.0
    %4094 = vmatpush1.xpose.msra.mxu0 0.0
    %4095 = vmatprep.subr.mxu0 0.0
    %4096 = vmatpush1.xpose.msra.mxu0 0.0
    %4097 = vmatprep.subr.mxu0 0.0
    %4098 = vmatpush1.xpose.msra.mxu0 0.0
    %4099 = vmatprep.subr.mxu0 0.0
    %4100 = vmatpush1.xpose.msra.mxu0 0.0
    %4101 = vmatprep.subr.mxu0 0.0
    %4102 = vmatpush1.xpose.msra.mxu0 0.0
    %4103 = vmatprep.subr.mxu0 0.0
    %4104 = vmatpush1.xpose.msra.mxu0 0.0
    %4105 = vmatprep.subr.mxu0 0.0
    %4106 = vmatpush1.xpose.msra.mxu0 0.0
    %4107 = vmatprep.subr.mxu0 0.0
    %4108 = vmatpush1.xpose.msra.mxu0 0.0
    %4109 = vmatprep.subr.mxu0 0.0
    %4110 = vmatpush1.xpose.msra.mxu0 0.0
    %4111 = vmatprep.subr.mxu0 0.0
    %4112 = vmatpush1.xpose.msra.mxu0 0.0
    %4113 = vmatprep.subr.mxu0 0.0
    %4114 = vmatpush1.xpose.msra.mxu0 0.0
    %4115 = vmatprep.subr.mxu0 0.0
    %4116 = vmatpush1.xpose.msra.mxu0 0.0
    %4117 = vmatprep.subr.mxu0 0.0
    %4118 = vmatpush1.xpose.msra.mxu0 0.0
    %4119 = vmatprep.subr.mxu0 0.0
    %4120 = vmatpush1.xpose.msra.mxu0 0.0
    %4121 = vmatprep.subr.mxu0 0.0
    %4122 = vmatpush1.xpose.msra.mxu0 0.0
    %4123 = vmatprep.subr.mxu0 0.0
    %4124 = vmatpush1.xpose.msra.mxu0 0.0
    %4125 = vmatprep.subr.mxu0 0.0
    %4126 = vmatpush1.xpose.msra.mxu0 0.0
    %4127 = vmatprep.subr.mxu0 0.0
    %4128 = vmatpush1.xpose.msra.mxu0 0.0
    %4129 = vmatprep.subr.mxu0 0.0
    %4130 = vmatpush1.xpose.msra.mxu0 0.0
    %4131 = vmatprep.subr.mxu0 0.0
    %4132 = vmatpush1.xpose.msra.mxu0 0.0
    %4133 = vmatprep.subr.mxu0 0.0
    %4134 = vmatpush1.xpose.msra.mxu0 0.0
    %4135 = vmatprep.subr.mxu0 0.0
    %4136 = vmatpush1.xpose.msra.mxu0 0.0
    %4137 = vmatprep.subr.mxu0 0.0
    %4138 = vmatpush1.xpose.msra.mxu0 0.0
    %4139 = vmatprep.subr.mxu0 0.0
    %4140 = vmatpush1.xpose.msra.mxu0 0.0
    %4141 = vmatprep.subr.mxu0 0.0
    %4142 = vmatpush1.xpose.msra.mxu0 0.0
    %4143 = vmatprep.subr.mxu0 0.0
    %4144 = vmatpush1.xpose.msra.mxu0 0.0
    %4145 = vmatprep.subr.mxu0 0.0
    %4146 = vmatpush1.xpose.msra.mxu0 0.0
    %4147 = vmatprep.subr.mxu0 0.0
    %4148 = vmatpush1.xpose.msra.mxu0 0.0
    %4149 = vmatprep.mubr.f32.mxu0 0.0
    %4150 = vmatmul.mubr.f32.gmra.mrb[0].mxu0 %v4081
    %v4151 = vpop.f32.mrb[0].mxu0
    %v4152 = vadd.f32 0.0, %v4151
    %v4153 = vpop.f32.mrb[0].mxu0
    %4154 = vdwg.mxu0
    %v4155 = vmul.f32 %v4152, 0.17677669
    %v4156 = vadd.f32 %v4155, %v196
    %v4157 = vsel %vm306, %v4156, -inf
    %4158 = vmax.xlane.f32.xlu0 %v4157
    %v4159 = vpop.xlane.xlu0 %4158
    %v4160 = vsub.f32 %v4156, %v4159
    %v4161 = vmul.f32 %v4160, 1.442695
    %v4162 = vpow.pop %v4161
    %v4163 = vsel %vm306, %v4162, 0.0
    %4164 = vadd.xlane.f32.xlu0 %v4163
    %v4165 = vpop.xlane.xlu0 %4164
    %v4166 = vrcp.pop %v4165
    %v4167 = vmul.f32 %v4162, %v4166
    %4168 = vrot.lane.b32.xlu0 %v3738, 80
    %v4169 = vpop.permute.xlu0 %4168
    %v4172 = vsel %vm306, %v4167, 0
    %4174 = vmatprep.subr.mxu0 0.0
    %4175 = vmatpush1.msra.mxu0 %v4169
    %4176 = vmatprep.subr.mxu0 0.0
    %4177 = vmatpush1.msra.mxu0 0.0
    %4178 = vmatprep.subr.mxu0 0.0
    %4179 = vmatpush1.msra.mxu0 0.0
    %4180 = vmatprep.subr.mxu0 0.0
    %4181 = vmatpush1.msra.mxu0 0.0
    %4182 = vmatprep.subr.mxu0 0.0
    %4183 = vmatpush1.msra.mxu0 0.0
    %4184 = vmatprep.subr.mxu0 0.0
    %4185 = vmatpush1.msra.mxu0 0.0
    %4186 = vmatprep.subr.mxu0 0.0
    %4187 = vmatpush1.msra.mxu0 0.0
    %4188 = vmatprep.subr.mxu0 0.0
    %4189 = vmatpush1.msra.mxu0 0.0
    %4190 = vmatprep.subr.mxu0 0.0
    %4191 = vmatpush1.msra.mxu0 0.0
    %4192 = vmatprep.subr.mxu0 0.0
    %4193 = vmatpush1.msra.mxu0 0.0
    %4194 = vmatprep.subr.mxu0 0.0
    %4195 = vmatpush1.msra.mxu0 0.0
    %4196 = vmatprep.subr.mxu0 0.0
    %4197 = vmatpush1.msra.mxu0 0.0
    %4198 = vmatprep.subr.mxu0 0.0
    %4199 = vmatpush1.msra.mxu0 0.0
    %4200 = vmatprep.subr.mxu0 0.0
    %4201 = vmatpush1.msra.mxu0 0.0
    %4202 = vmatprep.subr.mxu0 0.0
    %4203 = vmatpush1.msra.mxu0 0.0
    %4204 = vmatprep.subr.mxu0 0.0
    %4205 = vmatpush1.msra.mxu0 0.0
    %4206 = vmatprep.subr.mxu0 0.0
    %4207 = vmatpush1.msra.mxu0 0.0
    %4208 = vmatprep.subr.mxu0 0.0
    %4209 = vmatpush1.msra.mxu0 0.0
    %4210 = vmatprep.subr.mxu0 0.0
    %4211 = vmatpush1.msra.mxu0 0.0
    %4212 = vmatprep.subr.mxu0 0.0
    %4213 = vmatpush1.msra.mxu0 0.0
    %4214 = vmatprep.subr.mxu0 0.0
    %4215 = vmatpush1.msra.mxu0 0.0
    %4216 = vmatprep.subr.mxu0 0.0
    %4217 = vmatpush1.msra.mxu0 0.0
    %4218 = vmatprep.subr.mxu0 0.0
    %4219 = vmatpush1.msra.mxu0 0.0
    %4220 = vmatprep.subr.mxu0 0.0
    %4221 = vmatpush1.msra.mxu0 0.0
    %4222 = vmatprep.subr.mxu0 0.0
    %4223 = vmatpush1.msra.mxu0 0.0
    %4224 = vmatprep.subr.mxu0 0.0
    %4225 = vmatpush1.msra.mxu0 0.0
    %4226 = vmatprep.subr.mxu0 0.0
    %4227 = vmatpush1.msra.mxu0 0.0
    %4228 = vmatprep.subr.mxu0 0.0
    %4229 = vmatpush1.msra.mxu0 0.0
    %4230 = vmatprep.subr.mxu0 0.0
    %4231 = vmatpush1.msra.mxu0 0.0
    %4232 = vmatprep.subr.mxu0 0.0
    %4233 = vmatpush1.msra.mxu0 0.0
    %4234 = vmatprep.subr.mxu0 0.0
    %4235 = vmatpush1.msra.mxu0 0.0
    %4236 = vmatprep.subr.mxu0 0.0
    %4237 = vmatpush1.msra.mxu0 0.0
    %4238 = vmatprep.mubr.f32.mxu0 0.0
    %4239 = vmatmul.mubr.f32.gmra.mrb[0].mxu0 %v4172
    %v4240 = vpop.f32.mrb[0].mxu0
    %v4241 = vadd.f32 0.0, %v4240
    %v4242 = vpop.f32.mrb[0].mxu0
    %4243 = vdwg.mxu0
    %4244 = vrot.lane.b32.xlu0 %v3643, 104
    %v4245 = vpop.permute.xlu0 %4244
    %4246 = vrot.lane.b32.xlu0 %v3738, 104
    %v4247 = vpop.permute.xlu0 %4246
    %v4248 = vsel %vm306, %v4245, 0
    %v4250 = vsel %vm306, %v4247, 0
    %4252 = vmatprep.subr.mxu0 0.0
    %4253 = vmatpush1.xpose.msra.mxu0 %v4250
    %4254 = vmatprep.subr.mxu0 0.0
    %4255 = vmatpush1.xpose.msra.mxu0 0.0
    %4256 = vmatprep.subr.mxu0 0.0
    %4257 = vmatpush1.xpose.msra.mxu0 0.0
    %4258 = vmatprep.subr.mxu0 0.0
    %4259 = vmatpush1.xpose.msra.mxu0 0.0
    %4260 = vmatprep.subr.mxu0 0.0
    %4261 = vmatpush1.xpose.msra.mxu0 0.0
    %4262 = vmatprep.subr.mxu0 0.0
    %4263 = vmatpush1.xpose.msra.mxu0 0.0
    %4264 = vmatprep.subr.mxu0 0.0
    %4265 = vmatpush1.xpose.msra.mxu0 0.0
    %4266 = vmatprep.subr.mxu0 0.0
    %4267 = vmatpush1.xpose.msra.mxu0 0.0
    %4268 = vmatprep.subr.mxu0 0.0
    %4269 = vmatpush1.xpose.msra.mxu0 0.0
    %4270 = vmatprep.subr.mxu0 0.0
    %4271 = vmatpush1.xpose.msra.mxu0 0.0
    %4272 = vmatprep.subr.mxu0 0.0
    %4273 = vmatpush1.xpose.msra.mxu0 0.0
    %4274 = vmatprep.subr.mxu0 0.0
    %4275 = vmatpush1.xpose.msra.mxu0 0.0
    %4276 = vmatprep.subr.mxu0 0.0
    %4277 = vmatpush1.xpose.msra.mxu0 0.0
    %4278 = vmatprep.subr.mxu0 0.0
    %4279 = vmatpush1.xpose.msra.mxu0 0.0
    %4280 = vmatprep.subr.mxu0 0.0
    %4281 = vmatpush1.xpose.msra.mxu0 0.0
    %4282 = vmatprep.subr.mxu0 0.0
    %4283 = vmatpush1.xpose.msra.mxu0 0.0
    %4284 = vmatprep.subr.mxu0 0.0
    %4285 = vmatpush1.xpose.msra.mxu0 0.0
    %4286 = vmatprep.subr.mxu0 0.0
    %4287 = vmatpush1.xpose.msra.mxu0 0.0
    %4288 = vmatprep.subr.mxu0 0.0
    %4289 = vmatpush1.xpose.msra.mxu0 0.0
    %4290 = vmatprep.subr.mxu0 0.0
    %4291 = vmatpush1.xpose.msra.mxu0 0.0
    %4292 = vmatprep.subr.mxu0 0.0
    %4293 = vmatpush1.xpose.msra.mxu0 0.0
    %4294 = vmatprep.subr.mxu0 0.0
    %4295 = vmatpush1.xpose.msra.mxu0 0.0
    %4296 = vmatprep.subr.mxu0 0.0
    %4297 = vmatpush1.xpose.msra.mxu0 0.0
    %4298 = vmatprep.subr.mxu0 0.0
    %4299 = vmatpush1.xpose.msra.mxu0 0.0
    %4300 = vmatprep.subr.mxu0 0.0
    %4301 = vmatpush1.xpose.msra.mxu0 0.0
    %4302 = vmatprep.subr.mxu0 0.0
    %4303 = vmatpush1.xpose.msra.mxu0 0.0
    %4304 = vmatprep.subr.mxu0 0.0
    %4305 = vmatpush1.xpose.msra.mxu0 0.0
    %4306 = vmatprep.subr.mxu0 0.0
    %4307 = vmatpush1.xpose.msra.mxu0 0.0
    %4308 = vmatprep.subr.mxu0 0.0
    %4309 = vmatpush1.xpose.msra.mxu0 0.0
    %4310 = vmatprep.subr.mxu0 0.0
    %4311 = vmatpush1.xpose.msra.mxu0 0.0
    %4312 = vmatprep.subr.mxu0 0.0
    %4313 = vmatpush1.xpose.msra.mxu0 0.0
    %4314 = vmatprep.subr.mxu0 0.0
    %4315 = vmatpush1.xpose.msra.mxu0 0.0
    %4316 = vmatprep.mubr.f32.mxu0 0.0
    %4317 = vmatmul.mubr.f32.gmra.mrb[0].mxu0 %v4248
    %v4318 = vpop.f32.mrb[0].mxu0
    %v4319 = vadd.f32 0.0, %v4318
    %v4320 = vpop.f32.mrb[0].mxu0
    %4321 = vdwg.mxu0
    %v4322 = vmul.f32 %v4319, 0.17677669
    %v4323 = vadd.f32 %v4322, %v196
    %v4324 = vsel %vm306, %v4323, -inf
    %4325 = vmax.xlane.f32.xlu0 %v4324
    %v4326 = vpop.xlane.xlu0 %4325
    %v4327 = vsub.f32 %v4323, %v4326
    %v4328 = vmul.f32 %v4327, 1.442695
    %v4329 = vpow.pop %v4328
    %v4330 = vsel %vm306, %v4329, 0.0
    %4331 = vadd.xlane.f32.xlu0 %v4330
    %v4332 = vpop.xlane.xlu0 %4331
    %v4333 = vrcp.pop %v4332
    %v4334 = vmul.f32 %v4329, %v4333
    %4335 = vrot.lane.b32.xlu0 %v3738, 72
    %v4336 = vpop.permute.xlu0 %4335
    %v4339 = vsel %vm306, %v4334, 0
    %4341 = vmatprep.subr.mxu0 0.0
    %4342 = vmatpush1.msra.mxu0 %v4336
    %4343 = vmatprep.subr.mxu0 0.0
    %4344 = vmatpush1.msra.mxu0 0.0
    %4345 = vmatprep.subr.mxu0 0.0
    %4346 = vmatpush1.msra.mxu0 0.0
    %4347 = vmatprep.subr.mxu0 0.0
    %4348 = vmatpush1.msra.mxu0 0.0
    %4349 = vmatprep.subr.mxu0 0.0
    %4350 = vmatpush1.msra.mxu0 0.0
    %4351 = vmatprep.subr.mxu0 0.0
    %4352 = vmatpush1.msra.mxu0 0.0
    %4353 = vmatprep.subr.mxu0 0.0
    %4354 = vmatpush1.msra.mxu0 0.0
    %4355 = vmatprep.subr.mxu0 0.0
    %4356 = vmatpush1.msra.mxu0 0.0
    %4357 = vmatprep.subr.mxu0 0.0
    %4358 = vmatpush1.msra.mxu0 0.0
    %4359 = vmatprep.subr.mxu0 0.0
    %4360 = vmatpush1.msra.mxu0 0.0
    %4361 = vmatprep.subr.mxu0 0.0
    %4362 = vmatpush1.msra.mxu0 0.0
    %4363 = vmatprep.subr.mxu0 0.0
    %4364 = vmatpush1.msra.mxu0 0.0
    %4365 = vmatprep.subr.mxu0 0.0
    %4366 = vmatpush1.msra.mxu0 0.0
    %4367 = vmatprep.subr.mxu0 0.0
    %4368 = vmatpush1.msra.mxu0 0.0
    %4369 = vmatprep.subr.mxu0 0.0
    %4370 = vmatpush1.msra.mxu0 0.0
    %4371 = vmatprep.subr.mxu0 0.0
    %4372 = vmatpush1.msra.mxu0 0.0
    %4373 = vmatprep.subr.mxu0 0.0
    %4374 = vmatpush1.msra.mxu0 0.0
    %4375 = vmatprep.subr.mxu0 0.0
    %4376 = vmatpush1.msra.mxu0 0.0
    %4377 = vmatprep.subr.mxu0 0.0
    %4378 = vmatpush1.msra.mxu0 0.0
    %4379 = vmatprep.subr.mxu0 0.0
    %4380 = vmatpush1.msra.mxu0 0.0
    %4381 = vmatprep.subr.mxu0 0.0
    %4382 = vmatpush1.msra.mxu0 0.0
    %4383 = vmatprep.subr.mxu0 0.0
    %4384 = vmatpush1.msra.mxu0 0.0
    %4385 = vmatprep.subr.mxu0 0.0
    %4386 = vmatpush1.msra.mxu0 0.0
    %4387 = vmatprep.subr.mxu0 0.0
    %4388 = vmatpush1.msra.mxu0 0.0
    %4389 = vmatprep.subr.mxu0 0.0
    %4390 = vmatpush1.msra.mxu0 0.0
    %4391 = vmatprep.subr.mxu0 0.0
    %4392 = vmatpush1.msra.mxu0 0.0
    %4393 = vmatprep.subr.mxu0 0.0
    %4394 = vmatpush1.msra.mxu0 0.0
    %4395 = vmatprep.subr.mxu0 0.0
    %4396 = vmatpush1.msra.mxu0 0.0
    %4397 = vmatprep.subr.mxu0 0.0
    %4398 = vmatpush1.msra.mxu0 0.0
    %4399 = vmatprep.subr.mxu0 0.0
    %4400 = vmatpush1.msra.mxu0 0.0
    %4401 = vmatprep.subr.mxu0 0.0
    %4402 = vmatpush1.msra.mxu0 0.0
    %4403 = vmatprep.subr.mxu0 0.0
    %4404 = vmatpush1.msra.mxu0 0.0
    %4405 = vmatprep.mubr.f32.mxu0 0.0
    %4406 = vmatmul.mubr.f32.gmra.mrb[0].mxu0 %v4339
    %v4407 = vpop.f32.mrb[0].mxu0
    %v4408 = vadd.f32 0.0, %v4407
    %v4409 = vpop.f32.mrb[0].mxu0
    %4410 = vdwg.mxu0
    %4412 = vrot.lane.b32.xlu0 %v4074, 8
    %v4413 = vpop.permute.xlu0 %4412
    %4416 = vrot.lane.b32.xlu0 %v4241, 16
    %v4417 = vpop.permute.xlu0 %4416
    %4420 = vrot.lane.b32.xlu0 %v4408, 24
    %v4421 = vpop.permute.xlu0 %4420
    %v4423 = vsel %vm306, %v3907, %v4413
    %v4424 = vsel %vm985, %v4423, %v4417
    %v4425 = vsel %vm987, %v4424, %v4421
    %v4426 = vsel %vm306, %v3644, 0
    %v4429 = vsel %vm306, %v3743, 0
    %4431 = vmatprep.subr.mxu0 0.0
    %4432 = vmatpush1.xpose.msra.mxu0 %v4429
    %4433 = vmatprep.subr.mxu0 0.0
    %4434 = vmatpush1.xpose.msra.mxu0 0.0
    %4435 = vmatprep.subr.mxu0 0.0
    %4436 = vmatpush1.xpose.msra.mxu0 0.0
    %4437 = vmatprep.subr.mxu0 0.0
    %4438 = vmatpush1.xpose.msra.mxu0 0.0
    %4439 = vmatprep.subr.mxu0 0.0
    %4440 = vmatpush1.xpose.msra.mxu0 0.0
    %4441 = vmatprep.subr.mxu0 0.0
    %4442 = vmatpush1.xpose.msra.mxu0 0.0
    %4443 = vmatprep.subr.mxu0 0.0
    %4444 = vmatpush1.xpose.msra.mxu0 0.0
    %4445 = vmatprep.subr.mxu0 0.0
    %4446 = vmatpush1.xpose.msra.mxu0 0.0
    %4447 = vmatprep.subr.mxu0 0.0
    %4448 = vmatpush1.xpose.msra.mxu0 0.0
    %4449 = vmatprep.subr.mxu0 0.0
    %4450 = vmatpush1.xpose.msra.mxu0 0.0
    %4451 = vmatprep.subr.mxu0 0.0
    %4452 = vmatpush1.xpose.msra.mxu0 0.0
    %4453 = vmatprep.subr.mxu0 0.0
    %4454 = vmatpush1.xpose.msra.mxu0 0.0
    %4455 = vmatprep.subr.mxu0 0.0
    %4456 = vmatpush1.xpose.msra.mxu0 0.0
    %4457 = vmatprep.subr.mxu0 0.0
    %4458 = vmatpush1.xpose.msra.mxu0 0.0
    %4459 = vmatprep.subr.mxu0 0.0
    %4460 = vmatpush1.xpose.msra.mxu0 0.0
    %4461 = vmatprep.subr.mxu0 0.0
    %4462 = vmatpush1.xpose.msra.mxu0 0.0
    %4463 = vmatprep.subr.mxu0 0.0
    %4464 = vmatpush1.xpose.msra.mxu0 0.0
    %4465 = vmatprep.subr.mxu0 0.0
    %4466 = vmatpush1.xpose.msra.mxu0 0.0
    %4467 = vmatprep.subr.mxu0 0.0
    %4468 = vmatpush1.xpose.msra.mxu0 0.0
    %4469 = vmatprep.subr.mxu0 0.0
    %4470 = vmatpush1.xpose.msra.mxu0 0.0
    %4471 = vmatprep.subr.mxu0 0.0
    %4472 = vmatpush1.xpose.msra.mxu0 0.0
    %4473 = vmatprep.subr.mxu0 0.0
    %4474 = vmatpush1.xpose.msra.mxu0 0.0
    %4475 = vmatprep.subr.mxu0 0.0
    %4476 = vmatpush1.xpose.msra.mxu0 0.0
    %4477 = vmatprep.subr.mxu0 0.0
    %4478 = vmatpush1.xpose.msra.mxu0 0.0
    %4479 = vmatprep.subr.mxu0 0.0
    %4480 = vmatpush1.xpose.msra.mxu0 0.0
    %4481 = vmatprep.subr.mxu0 0.0
    %4482 = vmatpush1.xpose.msra.mxu0 0.0
    %4483 = vmatprep.subr.mxu0 0.0
    %4484 = vmatpush1.xpose.msra.mxu0 0.0
    %4485 = vmatprep.subr.mxu0 0.0
    %4486 = vmatpush1.xpose.msra.mxu0 0.0
    %4487 = vmatprep.subr.mxu0 0.0
    %4488 = vmatpush1.xpose.msra.mxu0 0.0
    %4489 = vmatprep.subr.mxu0 0.0
    %4490 = vmatpush1.xpose.msra.mxu0 0.0
    %4491 = vmatprep.subr.mxu0 0.0
    %4492 = vmatpush1.xpose.msra.mxu0 0.0
    %4493 = vmatprep.subr.mxu0 0.0
    %4494 = vmatpush1.xpose.msra.mxu0 0.0
    %4495 = vmatprep.mubr.f32.mxu0 0.0
    %4496 = vmatmul.mubr.f32.gmra.mrb[0].mxu0 %v4426
    %v4497 = vpop.f32.mrb[0].mxu0
    %v4498 = vadd.f32 0.0, %v4497
    %v4499 = vpop.f32.mrb[0].mxu0
    %4500 = vdwg.mxu0
    %v4501 = vmul.f32 %v4498, 0.17677669
    %v4502 = vadd.f32 %v4501, %v200
    %v4503 = vsel %vm306, %v4502, -inf
    %4504 = vmax.xlane.f32.xlu0 %v4503
    %v4505 = vpop.xlane.xlu0 %4504
    %v4506 = vsub.f32 %v4502, %v4505
    %v4507 = vmul.f32 %v4506, 1.442695
    %v4508 = vpow.pop %v4507
    %v4509 = vsel %vm306, %v4508, 0.0
    %4510 = vadd.xlane.f32.xlu0 %v4509
    %v4511 = vpop.xlane.xlu0 %4510
    %v4512 = vrcp.pop %v4511
    %v4513 = vmul.f32 %v4508, %v4512
    %4514 = vrot.lane.b32.xlu0 %v3743, 96
    %v4515 = vpop.permute.xlu0 %4514
    %v4518 = vsel %vm306, %v4513, 0
    %4520 = vmatprep.subr.mxu0 0.0
    %4521 = vmatpush1.msra.mxu0 %v4515
    %4522 = vmatprep.subr.mxu0 0.0
    %4523 = vmatpush1.msra.mxu0 0.0
    %4524 = vmatprep.subr.mxu0 0.0
    %4525 = vmatpush1.msra.mxu0 0.0
    %4526 = vmatprep.subr.mxu0 0.0
    %4527 = vmatpush1.msra.mxu0 0.0
    %4528 = vmatprep.subr.mxu0 0.0
    %4529 = vmatpush1.msra.mxu0 0.0
    %4530 = vmatprep.subr.mxu0 0.0
    %4531 = vmatpush1.msra.mxu0 0.0
    %4532 = vmatprep.subr.mxu0 0.0
    %4533 = vmatpush1.msra.mxu0 0.0
    %4534 = vmatprep.subr.mxu0 0.0
    %4535 = vmatpush1.msra.mxu0 0.0
    %4536 = vmatprep.subr.mxu0 0.0
    %4537 = vmatpush1.msra.mxu0 0.0
    %4538 = vmatprep.subr.mxu0 0.0
    %4539 = vmatpush1.msra.mxu0 0.0
    %4540 = vmatprep.subr.mxu0 0.0
    %4541 = vmatpush1.msra.mxu0 0.0
    %4542 = vmatprep.subr.mxu0 0.0
    %4543 = vmatpush1.msra.mxu0 0.0
    %4544 = vmatprep.subr.mxu0 0.0
    %4545 = vmatpush1.msra.mxu0 0.0
    %4546 = vmatprep.subr.mxu0 0.0
    %4547 = vmatpush1.msra.mxu0 0.0
    %4548 = vmatprep.subr.mxu0 0.0
    %4549 = vmatpush1.msra.mxu0 0.0
    %4550 = vmatprep.subr.mxu0 0.0
    %4551 = vmatpush1.msra.mxu0 0.0
    %4552 = vmatprep.subr.mxu0 0.0
    %4553 = vmatpush1.msra.mxu0 0.0
    %4554 = vmatprep.subr.mxu0 0.0
    %4555 = vmatpush1.msra.mxu0 0.0
    %4556 = vmatprep.subr.mxu0 0.0
    %4557 = vmatpush1.msra.mxu0 0.0
    %4558 = vmatprep.subr.mxu0 0.0
    %4559 = vmatpush1.msra.mxu0 0.0
    %4560 = vmatprep.subr.mxu0 0.0
    %4561 = vmatpush1.msra.mxu0 0.0
    %4562 = vmatprep.subr.mxu0 0.0
    %4563 = vmatpush1.msra.mxu0 0.0
    %4564 = vmatprep.subr.mxu0 0.0
    %4565 = vmatpush1.msra.mxu0 0.0
    %4566 = vmatprep.subr.mxu0 0.0
    %4567 = vmatpush1.msra.mxu0 0.0
    %4568 = vmatprep.subr.mxu0 0.0
    %4569 = vmatpush1.msra.mxu0 0.0
    %4570 = vmatprep.subr.mxu0 0.0
    %4571 = vmatpush1.msra.mxu0 0.0
    %4572 = vmatprep.subr.mxu0 0.0
    %4573 = vmatpush1.msra.mxu0 0.0
    %4574 = vmatprep.subr.mxu0 0.0
    %4575 = vmatpush1.msra.mxu0 0.0
    %4576 = vmatprep.subr.mxu0 0.0
    %4577 = vmatpush1.msra.mxu0 0.0
    %4578 = vmatprep.subr.mxu0 0.0
    %4579 = vmatpush1.msra.mxu0 0.0
    %4580 = vmatprep.subr.mxu0 0.0
    %4581 = vmatpush1.msra.mxu0 0.0
    %4582 = vmatprep.subr.mxu0 0.0
    %4583 = vmatpush1.msra.mxu0 0.0
    %4584 = vmatprep.mubr.f32.mxu0 0.0
    %4585 = vmatmul.mubr.f32.gmra.mrb[0].mxu0 %v4518
    %v4586 = vpop.f32.mrb[0].mxu0
    %v4587 = vadd.f32 0.0, %v4586
    %v4588 = vpop.f32.mrb[0].mxu0
    %4589 = vdwg.mxu0
    %4590 = vrot.lane.b32.xlu0 %v3644, 120
    %v4591 = vpop.permute.xlu0 %4590
    %4592 = vrot.lane.b32.xlu0 %v3743, 120
    %v4593 = vpop.permute.xlu0 %4592
    %v4594 = vsel %vm306, %v4591, 0
    %v4596 = vsel %vm306, %v4593, 0
    %4598 = vmatprep.subr.mxu0 0.0
    %4599 = vmatpush1.xpose.msra.mxu0 %v4596
    %4600 = vmatprep.subr.mxu0 0.0
    %4601 = vmatpush1.xpose.msra.mxu0 0.0
    %4602 = vmatprep.subr.mxu0 0.0
    %4603 = vmatpush1.xpose.msra.mxu0 0.0
    %4604 = vmatprep.subr.mxu0 0.0
    %4605 = vmatpush1.xpose.msra.mxu0 0.0
    %4606 = vmatprep.subr.mxu0 0.0
    %4607 = vmatpush1.xpose.msra.mxu0 0.0
    %4608 = vmatprep.subr.mxu0 0.0
    %4609 = vmatpush1.xpose.msra.mxu0 0.0
    %4610 = vmatprep.subr.mxu0 0.0
    %4611 = vmatpush1.xpose.msra.mxu0 0.0
    %4612 = vmatprep.subr.mxu0 0.0
    %4613 = vmatpush1.xpose.msra.mxu0 0.0
    %4614 = vmatprep.subr.mxu0 0.0
    %4615 = vmatpush1.xpose.msra.mxu0 0.0
    %4616 = vmatprep.subr.mxu0 0.0
    %4617 = vmatpush1.xpose.msra.mxu0 0.0
    %4618 = vmatprep.subr.mxu0 0.0
    %4619 = vmatpush1.xpose.msra.mxu0 0.0
    %4620 = vmatprep.subr.mxu0 0.0
    %4621 = vmatpush1.xpose.msra.mxu0 0.0
    %4622 = vmatprep.subr.mxu0 0.0
    %4623 = vmatpush1.xpose.msra.mxu0 0.0
    %4624 = vmatprep.subr.mxu0 0.0
    %4625 = vmatpush1.xpose.msra.mxu0 0.0
    %4626 = vmatprep.subr.mxu0 0.0
    %4627 = vmatpush1.xpose.msra.mxu0 0.0
    %4628 = vmatprep.subr.mxu0 0.0
    %4629 = vmatpush1.xpose.msra.mxu0 0.0
    %4630 = vmatprep.subr.mxu0 0.0
    %4631 = vmatpush1.xpose.msra.mxu0 0.0
    %4632 = vmatprep.subr.mxu0 0.0
    %4633 = vmatpush1.xpose.msra.mxu0 0.0
    %4634 = vmatprep.subr.mxu0 0.0
    %4635 = vmatpush1.xpose.msra.mxu0 0.0
    %4636 = vmatprep.subr.mxu0 0.0
    %4637 = vmatpush1.xpose.msra.mxu0 0.0
    %4638 = vmatprep.subr.mxu0 0.0
    %4639 = vmatpush1.xpose.msra.mxu0 0.0
    %4640 = vmatprep.subr.mxu0 0.0
    %4641 = vmatpush1.xpose.msra.mxu0 0.0
    %4642 = vmatprep.subr.mxu0 0.0
    %4643 = vmatpush1.xpose.msra.mxu0 0.0
    %4644 = vmatprep.subr.mxu0 0.0
    %4645 = vmatpush1.xpose.msra.mxu0 0.0
    %4646 = vmatprep.subr.mxu0 0.0
    %4647 = vmatpush1.xpose.msra.mxu0 0.0
    %4648 = vmatprep.subr.mxu0 0.0
    %4649 = vmatpush1.xpose.msra.mxu0 0.0
    %4650 = vmatprep.subr.mxu0 0.0
    %4651 = vmatpush1.xpose.msra.mxu0 0.0
    %4652 = vmatprep.subr.mxu0 0.0
    %4653 = vmatpush1.xpose.msra.mxu0 0.0
    %4654 = vmatprep.subr.mxu0 0.0
    %4655 = vmatpush1.xpose.msra.mxu0 0.0
    %4656 = vmatprep.subr.mxu0 0.0
    %4657 = vmatpush1.xpose.msra.mxu0 0.0
    %4658 = vmatprep.subr.mxu0 0.0
    %4659 = vmatpush1.xpose.msra.mxu0 0.0
    %4660 = vmatprep.subr.mxu0 0.0
    %4661 = vmatpush1.xpose.msra.mxu0 0.0
    %4662 = vmatprep.mubr.f32.mxu0 0.0
    %4663 = vmatmul.mubr.f32.gmra.mrb[0].mxu0 %v4594
    %v4664 = vpop.f32.mrb[0].mxu0
    %v4665 = vadd.f32 0.0, %v4664
    %v4666 = vpop.f32.mrb[0].mxu0
    %4667 = vdwg.mxu0
    %v4668 = vmul.f32 %v4665, 0.17677669
    %v4669 = vadd.f32 %v4668, %v200
    %v4670 = vsel %vm306, %v4669, -inf
    %4671 = vmax.xlane.f32.xlu0 %v4670
    %v4672 = vpop.xlane.xlu0 %4671
    %v4673 = vsub.f32 %v4669, %v4672
    %v4674 = vmul.f32 %v4673, 1.442695
    %v4675 = vpow.pop %v4674
    %v4676 = vsel %vm306, %v4675, 0.0
    %4677 = vadd.xlane.f32.xlu0 %v4676
    %v4678 = vpop.xlane.xlu0 %4677
    %v4679 = vrcp.pop %v4678
    %v4680 = vmul.f32 %v4675, %v4679
    %4681 = vrot.lane.b32.xlu0 %v3743, 88
    %v4682 = vpop.permute.xlu0 %4681
    %v4685 = vsel %vm306, %v4680, 0
    %4687 = vmatprep.subr.mxu0 0.0
    %4688 = vmatpush1.msra.mxu0 %v4682
    %4689 = vmatprep.subr.mxu0 0.0
    %4690 = vmatpush1.msra.mxu0 0.0
    %4691 = vmatprep.subr.mxu0 0.0
    %4692 = vmatpush1.msra.mxu0 0.0
    %4693 = vmatprep.subr.mxu0 0.0
    %4694 = vmatpush1.msra.mxu0 0.0
    %4695 = vmatprep.subr.mxu0 0.0
    %4696 = vmatpush1.msra.mxu0 0.0
    %4697 = vmatprep.subr.mxu0 0.0
    %4698 = vmatpush1.msra.mxu0 0.0
    %4699 = vmatprep.subr.mxu0 0.0
    %4700 = vmatpush1.msra.mxu0 0.0
    %4701 = vmatprep.subr.mxu0 0.0
    %4702 = vmatpush1.msra.mxu0 0.0
    %4703 = vmatprep.subr.mxu0 0.0
    %4704 = vmatpush1.msra.mxu0 0.0
    %4705 = vmatprep.subr.mxu0 0.0
    %4706 = vmatpush1.msra.mxu0 0.0
    %4707 = vmatprep.subr.mxu0 0.0
    %4708 = vmatpush1.msra.mxu0 0.0
    %4709 = vmatprep.subr.mxu0 0.0
    %4710 = vmatpush1.msra.mxu0 0.0
    %4711 = vmatprep.subr.mxu0 0.0
    %4712 = vmatpush1.msra.mxu0 0.0
    %4713 = vmatprep.subr.mxu0 0.0
    %4714 = vmatpush1.msra.mxu0 0.0
    %4715 = vmatprep.subr.mxu0 0.0
    %4716 = vmatpush1.msra.mxu0 0.0
    %4717 = vmatprep.subr.mxu0 0.0
    %4718 = vmatpush1.msra.mxu0 0.0
    %4719 = vmatprep.subr.mxu0 0.0
    %4720 = vmatpush1.msra.mxu0 0.0
    %4721 = vmatprep.subr.mxu0 0.0
    %4722 = vmatpush1.msra.mxu0 0.0
    %4723 = vmatprep.subr.mxu0 0.0
    %4724 = vmatpush1.msra.mxu0 0.0
    %4725 = vmatprep.subr.mxu0 0.0
    %4726 = vmatpush1.msra.mxu0 0.0
    %4727 = vmatprep.subr.mxu0 0.0
    %4728 = vmatpush1.msra.mxu0 0.0
    %4729 = vmatprep.subr.mxu0 0.0
    %4730 = vmatpush1.msra.mxu0 0.0
    %4731 = vmatprep.subr.mxu0 0.0
    %4732 = vmatpush1.msra.mxu0 0.0
    %4733 = vmatprep.subr.mxu0 0.0
    %4734 = vmatpush1.msra.mxu0 0.0
    %4735 = vmatprep.subr.mxu0 0.0
    %4736 = vmatpush1.msra.mxu0 0.0
    %4737 = vmatprep.subr.mxu0 0.0
    %4738 = vmatpush1.msra.mxu0 0.0
    %4739 = vmatprep.subr.mxu0 0.0
    %4740 = vmatpush1.msra.mxu0 0.0
    %4741 = vmatprep.subr.mxu0 0.0
    %4742 = vmatpush1.msra.mxu0 0.0
    %4743 = vmatprep.subr.mxu0 0.0
    %4744 = vmatpush1.msra.mxu0 0.0
    %4745 = vmatprep.subr.mxu0 0.0
    %4746 = vmatpush1.msra.mxu0 0.0
    %4747 = vmatprep.subr.mxu0 0.0
    %4748 = vmatpush1.msra.mxu0 0.0
    %4749 = vmatprep.subr.mxu0 0.0
    %4750 = vmatpush1.msra.mxu0 0.0
    %4751 = vmatprep.mubr.f32.mxu0 0.0
    %4752 = vmatmul.mubr.f32.gmra.mrb[0].mxu0 %v4685
    %v4753 = vpop.f32.mrb[0].mxu0
    %v4754 = vadd.f32 0.0, %v4753
    %v4755 = vpop.f32.mrb[0].mxu0
    %4756 = vdwg.mxu0
    %4757 = vrot.lane.b32.xlu0 %v3644, 112
    %v4758 = vpop.permute.xlu0 %4757
    %4759 = vrot.lane.b32.xlu0 %v3743, 112
    %v4760 = vpop.permute.xlu0 %4759
    %v4761 = vsel %vm306, %v4758, 0
    %v4763 = vsel %vm306, %v4760, 0
    %4765 = vmatprep.subr.mxu0 0.0
    %4766 = vmatpush1.xpose.msra.mxu0 %v4763
    %4767 = vmatprep.subr.mxu0 0.0
    %4768 = vmatpush1.xpose.msra.mxu0 0.0
    %4769 = vmatprep.subr.mxu0 0.0
    %4770 = vmatpush1.xpose.msra.mxu0 0.0
    %4771 = vmatprep.subr.mxu0 0.0
    %4772 = vmatpush1.xpose.msra.mxu0 0.0
    %4773 = vmatprep.subr.mxu0 0.0
    %4774 = vmatpush1.xpose.msra.mxu0 0.0
    %4775 = vmatprep.subr.mxu0 0.0
    %4776 = vmatpush1.xpose.msra.mxu0 0.0
    %4777 = vmatprep.subr.mxu0 0.0
    %4778 = vmatpush1.xpose.msra.mxu0 0.0
    %4779 = vmatprep.subr.mxu0 0.0
    %4780 = vmatpush1.xpose.msra.mxu0 0.0
    %4781 = vmatprep.subr.mxu0 0.0
    %4782 = vmatpush1.xpose.msra.mxu0 0.0
    %4783 = vmatprep.subr.mxu0 0.0
    %4784 = vmatpush1.xpose.msra.mxu0 0.0
    %4785 = vmatprep.subr.mxu0 0.0
    %4786 = vmatpush1.xpose.msra.mxu0 0.0
    %4787 = vmatprep.subr.mxu0 0.0
    %4788 = vmatpush1.xpose.msra.mxu0 0.0
    %4789 = vmatprep.subr.mxu0 0.0
    %4790 = vmatpush1.xpose.msra.mxu0 0.0
    %4791 = vmatprep.subr.mxu0 0.0
    %4792 = vmatpush1.xpose.msra.mxu0 0.0
    %4793 = vmatprep.subr.mxu0 0.0
    %4794 = vmatpush1.xpose.msra.mxu0 0.0
    %4795 = vmatprep.subr.mxu0 0.0
    %4796 = vmatpush1.xpose.msra.mxu0 0.0
    %4797 = vmatprep.subr.mxu0 0.0
    %4798 = vmatpush1.xpose.msra.mxu0 0.0
    %4799 = vmatprep.subr.mxu0 0.0
    %4800 = vmatpush1.xpose.msra.mxu0 0.0
    %4801 = vmatprep.subr.mxu0 0.0
    %4802 = vmatpush1.xpose.msra.mxu0 0.0
    %4803 = vmatprep.subr.mxu0 0.0
    %4804 = vmatpush1.xpose.msra.mxu0 0.0
    %4805 = vmatprep.subr.mxu0 0.0
    %4806 = vmatpush1.xpose.msra.mxu0 0.0
    %4807 = vmatprep.subr.mxu0 0.0
    %4808 = vmatpush1.xpose.msra.mxu0 0.0
    %4809 = vmatprep.subr.mxu0 0.0
    %4810 = vmatpush1.xpose.msra.mxu0 0.0
    %4811 = vmatprep.subr.mxu0 0.0
    %4812 = vmatpush1.xpose.msra.mxu0 0.0
    %4813 = vmatprep.subr.mxu0 0.0
    %4814 = vmatpush1.xpose.msra.mxu0 0.0
    %4815 = vmatprep.subr.mxu0 0.0
    %4816 = vmatpush1.xpose.msra.mxu0 0.0
    %4817 = vmatprep.subr.mxu0 0.0
    %4818 = vmatpush1.xpose.msra.mxu0 0.0
    %4819 = vmatprep.subr.mxu0 0.0
    %4820 = vmatpush1.xpose.msra.mxu0 0.0
    %4821 = vmatprep.subr.mxu0 0.0
    %4822 = vmatpush1.xpose.msra.mxu0 0.0
    %4823 = vmatprep.subr.mxu0 0.0
    %4824 = vmatpush1.xpose.msra.mxu0 0.0
    %4825 = vmatprep.subr.mxu0 0.0
    %4826 = vmatpush1.xpose.msra.mxu0 0.0
    %4827 = vmatprep.subr.mxu0 0.0
    %4828 = vmatpush1.xpose.msra.mxu0 0.0
    %4829 = vmatprep.mubr.f32.mxu0 0.0
    %4830 = vmatmul.mubr.f32.gmra.mrb[0].mxu0 %v4761
    %v4831 = vpop.f32.mrb[0].mxu0
    %v4832 = vadd.f32 0.0, %v4831
    %v4833 = vpop.f32.mrb[0].mxu0
    %4834 = vdwg.mxu0
    %v4835 = vmul.f32 %v4832, 0.17677669
    %v4836 = vadd.f32 %v4835, %v200
    %v4837 = vsel %vm306, %v4836, -inf
    %4838 = vmax.xlane.f32.xlu0 %v4837
    %v4839 = vpop.xlane.xlu0 %4838
    %v4840 = vsub.f32 %v4836, %v4839
    %v4841 = vmul.f32 %v4840, 1.442695
    %v4842 = vpow.pop %v4841
    %v4843 = vsel %vm306, %v4842, 0.0
    %4844 = vadd.xlane.f32.xlu0 %v4843
    %v4845 = vpop.xlane.xlu0 %4844
    %v4846 = vrcp.pop %v4845
    %v4847 = vmul.f32 %v4842, %v4846
    %4848 = vrot.lane.b32.xlu0 %v3743, 80
    %v4849 = vpop.permute.xlu0 %4848
    %v4852 = vsel %vm306, %v4847, 0
    %4854 = vmatprep.subr.mxu0 0.0
    %4855 = vmatpush1.msra.mxu0 %v4849
    %4856 = vmatprep.subr.mxu0 0.0
    %4857 = vmatpush1.msra.mxu0 0.0
    %4858 = vmatprep.subr.mxu0 0.0
    %4859 = vmatpush1.msra.mxu0 0.0
    %4860 = vmatprep.subr.mxu0 0.0
    %4861 = vmatpush1.msra.mxu0 0.0
    %4862 = vmatprep.subr.mxu0 0.0
    %4863 = vmatpush1.msra.mxu0 0.0
    %4864 = vmatprep.subr.mxu0 0.0
    %4865 = vmatpush1.msra.mxu0 0.0
    %4866 = vmatprep.subr.mxu0 0.0
    %4867 = vmatpush1.msra.mxu0 0.0
    %4868 = vmatprep.subr.mxu0 0.0
    %4869 = vmatpush1.msra.mxu0 0.0
    %4870 = vmatprep.subr.mxu0 0.0
    %4871 = vmatpush1.msra.mxu0 0.0
    %4872 = vmatprep.subr.mxu0 0.0
    %4873 = vmatpush1.msra.mxu0 0.0
    %4874 = vmatprep.subr.mxu0 0.0
    %4875 = vmatpush1.msra.mxu0 0.0
    %4876 = vmatprep.subr.mxu0 0.0
    %4877 = vmatpush1.msra.mxu0 0.0
    %4878 = vmatprep.subr.mxu0 0.0
    %4879 = vmatpush1.msra.mxu0 0.0
    %4880 = vmatprep.subr.mxu0 0.0
    %4881 = vmatpush1.msra.mxu0 0.0
    %4882 = vmatprep.subr.mxu0 0.0
    %4883 = vmatpush1.msra.mxu0 0.0
    %4884 = vmatprep.subr.mxu0 0.0
    %4885 = vmatpush1.msra.mxu0 0.0
    %4886 = vmatprep.subr.mxu0 0.0
    %4887 = vmatpush1.msra.mxu0 0.0
    %4888 = vmatprep.subr.mxu0 0.0
    %4889 = vmatpush1.msra.mxu0 0.0
    %4890 = vmatprep.subr.mxu0 0.0
    %4891 = vmatpush1.msra.mxu0 0.0
    %4892 = vmatprep.subr.mxu0 0.0
    %4893 = vmatpush1.msra.mxu0 0.0
    %4894 = vmatprep.subr.mxu0 0.0
    %4895 = vmatpush1.msra.mxu0 0.0
    %4896 = vmatprep.subr.mxu0 0.0
    %4897 = vmatpush1.msra.mxu0 0.0
    %4898 = vmatprep.subr.mxu0 0.0
    %4899 = vmatpush1.msra.mxu0 0.0
    %4900 = vmatprep.subr.mxu0 0.0
    %4901 = vmatpush1.msra.mxu0 0.0
    %4902 = vmatprep.subr.mxu0 0.0
    %4903 = vmatpush1.msra.mxu0 0.0
    %4904 = vmatprep.subr.mxu0 0.0
    %4905 = vmatpush1.msra.mxu0 0.0
    %4906 = vmatprep.subr.mxu0 0.0
    %4907 = vmatpush1.msra.mxu0 0.0
    %4908 = vmatprep.subr.mxu0 0.0
    %4909 = vmatpush1.msra.mxu0 0.0
    %4910 = vmatprep.subr.mxu0 0.0
    %4911 = vmatpush1.msra.mxu0 0.0
    %4912 = vmatprep.subr.mxu0 0.0
    %4913 = vmatpush1.msra.mxu0 0.0
    %4914 = vmatprep.subr.mxu0 0.0
    %4915 = vmatpush1.msra.mxu0 0.0
    %4916 = vmatprep.subr.mxu0 0.0
    %4917 = vmatpush1.msra.mxu0 0.0
    %4918 = vmatprep.mubr.f32.mxu0 0.0
    %4919 = vmatmul.mubr.f32.gmra.mrb[0].mxu0 %v4852
    %v4920 = vpop.f32.mrb[0].mxu0
    %v4921 = vadd.f32 0.0, %v4920
    %v4922 = vpop.f32.mrb[0].mxu0
    %4923 = vdwg.mxu0
    %4924 = vrot.lane.b32.xlu0 %v3644, 104
    %v4925 = vpop.permute.xlu0 %4924
    %4926 = vrot.lane.b32.xlu0 %v3743, 104
    %v4927 = vpop.permute.xlu0 %4926
    %v4928 = vsel %vm306, %v4925, 0
    %v4930 = vsel %vm306, %v4927, 0
    %4932 = vmatprep.subr.mxu0 0.0
    %4933 = vmatpush1.xpose.msra.mxu0 %v4930
    %4934 = vmatprep.subr.mxu0 0.0
    %4935 = vmatpush1.xpose.msra.mxu0 0.0
    %4936 = vmatprep.subr.mxu0 0.0
    %4937 = vmatpush1.xpose.msra.mxu0 0.0
    %4938 = vmatprep.subr.mxu0 0.0
    %4939 = vmatpush1.xpose.msra.mxu0 0.0
    %4940 = vmatprep.subr.mxu0 0.0
    %4941 = vmatpush1.xpose.msra.mxu0 0.0
    %4942 = vmatprep.subr.mxu0 0.0
    %4943 = vmatpush1.xpose.msra.mxu0 0.0
    %4944 = vmatprep.subr.mxu0 0.0
    %4945 = vmatpush1.xpose.msra.mxu0 0.0
    %4946 = vmatprep.subr.mxu0 0.0
    %4947 = vmatpush1.xpose.msra.mxu0 0.0
    %4948 = vmatprep.subr.mxu0 0.0
    %4949 = vmatpush1.xpose.msra.mxu0 0.0
    %4950 = vmatprep.subr.mxu0 0.0
    %4951 = vmatpush1.xpose.msra.mxu0 0.0
    %4952 = vmatprep.subr.mxu0 0.0
    %4953 = vmatpush1.xpose.msra.mxu0 0.0
    %4954 = vmatprep.subr.mxu0 0.0
    %4955 = vmatpush1.xpose.msra.mxu0 0.0
    %4956 = vmatprep.subr.mxu0 0.0
    %4957 = vmatpush1.xpose.msra.mxu0 0.0
    %4958 = vmatprep.subr.mxu0 0.0
    %4959 = vmatpush1.xpose.msra.mxu0 0.0
    %4960 = vmatprep.subr.mxu0 0.0
    %4961 = vmatpush1.xpose.msra.mxu0 0.0
    %4962 = vmatprep.subr.mxu0 0.0
    %4963 = vmatpush1.xpose.msra.mxu0 0.0
    %4964 = vmatprep.subr.mxu0 0.0
    %4965 = vmatpush1.xpose.msra.mxu0 0.0
    %4966 = vmatprep.subr.mxu0 0.0
    %4967 = vmatpush1.xpose.msra.mxu0 0.0
    %4968 = vmatprep.subr.mxu0 0.0
    %4969 = vmatpush1.xpose.msra.mxu0 0.0
    %4970 = vmatprep.subr.mxu0 0.0
    %4971 = vmatpush1.xpose.msra.mxu0 0.0
    %4972 = vmatprep.subr.mxu0 0.0
    %4973 = vmatpush1.xpose.msra.mxu0 0.0
    %4974 = vmatprep.subr.mxu0 0.0
    %4975 = vmatpush1.xpose.msra.mxu0 0.0
    %4976 = vmatprep.subr.mxu0 0.0
    %4977 = vmatpush1.xpose.msra.mxu0 0.0
    %4978 = vmatprep.subr.mxu0 0.0
    %4979 = vmatpush1.xpose.msra.mxu0 0.0
    %4980 = vmatprep.subr.mxu0 0.0
    %4981 = vmatpush1.xpose.msra.mxu0 0.0
    %4982 = vmatprep.subr.mxu0 0.0
    %4983 = vmatpush1.xpose.msra.mxu0 0.0
    %4984 = vmatprep.subr.mxu0 0.0
    %4985 = vmatpush1.xpose.msra.mxu0 0.0
    %4986 = vmatprep.subr.mxu0 0.0
    %4987 = vmatpush1.xpose.msra.mxu0 0.0
    %4988 = vmatprep.subr.mxu0 0.0
    %4989 = vmatpush1.xpose.msra.mxu0 0.0
    %4990 = vmatprep.subr.mxu0 0.0
    %4991 = vmatpush1.xpose.msra.mxu0 0.0
    %4992 = vmatprep.subr.mxu0 0.0
    %4993 = vmatpush1.xpose.msra.mxu0 0.0
    %4994 = vmatprep.subr.mxu0 0.0
    %4995 = vmatpush1.xpose.msra.mxu0 0.0
    %4996 = vmatprep.mubr.f32.mxu0 0.0
    %4997 = vmatmul.mubr.f32.gmra.mrb[0].mxu0 %v4928
    %v4998 = vpop.f32.mrb[0].mxu0
    %v4999 = vadd.f32 0.0, %v4998
    %v5000 = vpop.f32.mrb[0].mxu0
    %5001 = vdwg.mxu0
    %v5002 = vmul.f32 %v4999, 0.17677669
    %v5003 = vadd.f32 %v5002, %v200
    %v5004 = vsel %vm306, %v5003, -inf
    %5005 = vmax.xlane.f32.xlu0 %v5004
    %v5006 = vpop.xlane.xlu0 %5005
    %v5007 = vsub.f32 %v5003, %v5006
    %v5008 = vmul.f32 %v5007, 1.442695
    %v5009 = vpow.pop %v5008
    %v5010 = vsel %vm306, %v5009, 0.0
    %5011 = vadd.xlane.f32.xlu0 %v5010
    %v5012 = vpop.xlane.xlu0 %5011
    %v5013 = vrcp.pop %v5012
    %v5014 = vmul.f32 %v5009, %v5013
    %5015 = vrot.lane.b32.xlu0 %v3743, 72
    %v5016 = vpop.permute.xlu0 %5015
    %v5019 = vsel %vm306, %v5014, 0
    %5021 = vmatprep.subr.mxu0 0.0
    %5022 = vmatpush1.msra.mxu0 %v5016
    %5023 = vmatprep.subr.mxu0 0.0
    %5024 = vmatpush1.msra.mxu0 0.0
    %5025 = vmatprep.subr.mxu0 0.0
    %5026 = vmatpush1.msra.mxu0 0.0
    %5027 = vmatprep.subr.mxu0 0.0
    %5028 = vmatpush1.msra.mxu0 0.0
    %5029 = vmatprep.subr.mxu0 0.0
    %5030 = vmatpush1.msra.mxu0 0.0
    %5031 = vmatprep.subr.mxu0 0.0
    %5032 = vmatpush1.msra.mxu0 0.0
    %5033 = vmatprep.subr.mxu0 0.0
    %5034 = vmatpush1.msra.mxu0 0.0
    %5035 = vmatprep.subr.mxu0 0.0
    %5036 = vmatpush1.msra.mxu0 0.0
    %5037 = vmatprep.subr.mxu0 0.0
    %5038 = vmatpush1.msra.mxu0 0.0
    %5039 = vmatprep.subr.mxu0 0.0
    %5040 = vmatpush1.msra.mxu0 0.0
    %5041 = vmatprep.subr.mxu0 0.0
    %5042 = vmatpush1.msra.mxu0 0.0
    %5043 = vmatprep.subr.mxu0 0.0
    %5044 = vmatpush1.msra.mxu0 0.0
    %5045 = vmatprep.subr.mxu0 0.0
    %5046 = vmatpush1.msra.mxu0 0.0
    %5047 = vmatprep.subr.mxu0 0.0
    %5048 = vmatpush1.msra.mxu0 0.0
    %5049 = vmatprep.subr.mxu0 0.0
    %5050 = vmatpush1.msra.mxu0 0.0
    %5051 = vmatprep.subr.mxu0 0.0
    %5052 = vmatpush1.msra.mxu0 0.0
    %5053 = vmatprep.subr.mxu0 0.0
    %5054 = vmatpush1.msra.mxu0 0.0
    %5055 = vmatprep.subr.mxu0 0.0
    %5056 = vmatpush1.msra.mxu0 0.0
    %5057 = vmatprep.subr.mxu0 0.0
    %5058 = vmatpush1.msra.mxu0 0.0
    %5059 = vmatprep.subr.mxu0 0.0
    %5060 = vmatpush1.msra.mxu0 0.0
    %5061 = vmatprep.subr.mxu0 0.0
    %5062 = vmatpush1.msra.mxu0 0.0
    %5063 = vmatprep.subr.mxu0 0.0
    %5064 = vmatpush1.msra.mxu0 0.0
    %5065 = vmatprep.subr.mxu0 0.0
    %5066 = vmatpush1.msra.mxu0 0.0
    %5067 = vmatprep.subr.mxu0 0.0
    %5068 = vmatpush1.msra.mxu0 0.0
    %5069 = vmatprep.subr.mxu0 0.0
    %5070 = vmatpush1.msra.mxu0 0.0
    %5071 = vmatprep.subr.mxu0 0.0
    %5072 = vmatpush1.msra.mxu0 0.0
    %5073 = vmatprep.subr.mxu0 0.0
    %5074 = vmatpush1.msra.mxu0 0.0
    %5075 = vmatprep.subr.mxu0 0.0
    %5076 = vmatpush1.msra.mxu0 0.0
    %5077 = vmatprep.subr.mxu0 0.0
    %5078 = vmatpush1.msra.mxu0 0.0
    %5079 = vmatprep.subr.mxu0 0.0
    %5080 = vmatpush1.msra.mxu0 0.0
    %5081 = vmatprep.subr.mxu0 0.0
    %5082 = vmatpush1.msra.mxu0 0.0
    %5083 = vmatprep.subr.mxu0 0.0
    %5084 = vmatpush1.msra.mxu0 0.0
    %5085 = vmatprep.mubr.f32.mxu0 0.0
    %5086 = vmatmul.mubr.f32.gmra.mrb[0].mxu0 %v5019
    %v5087 = vpop.f32.mrb[0].mxu0
    %v5088 = vadd.f32 0.0, %v5087
    %v5089 = vpop.f32.mrb[0].mxu0
    %5090 = vdwg.mxu0
    %5092 = vrot.lane.b32.xlu0 %v4754, 8
    %v5093 = vpop.permute.xlu0 %5092
    %5096 = vrot.lane.b32.xlu0 %v4921, 16
    %v5097 = vpop.permute.xlu0 %5096
    %5100 = vrot.lane.b32.xlu0 %v5088, 24
    %v5101 = vpop.permute.xlu0 %5100
    %v5103 = vsel %vm306, %v4587, %v5093
    %v5104 = vsel %vm985, %v5103, %v5097
    %v5105 = vsel %vm987, %v5104, %v5101
    %v5107 = vlaneseq
    %v5108 = vshrl.u32 %v5107, 7
    %v5109 = vsub.s32 0, %v5108
    %v5110 = vrot.slane %v3658, %v5109
    %v5113 = vsel %vm224, %v4425, 0
    %v5116 = vsel %vm224, %v5105, 0
    %5118 = vmatprep.subr.mxu0 0.0
    %5119 = vmatpush1.msra.mxu0 %v3653
    %5120 = vmatprep.subr.mxu0 0.0
    %5121 = vmatpush1.msra.mxu0 %v3654
    %5122 = vmatprep.subr.mxu0 0.0
    %5123 = vmatpush1.msra.mxu0 %v3655
    %5124 = vmatprep.subr.mxu0 0.0
    %5125 = vmatpush1.msra.mxu0 %v3656
    %5126 = vmatprep.subr.mxu0 0.0
    %5127 = vmatpush1.msra.mxu0 0.0
    %5128 = vmatprep.subr.mxu0 0.0
    %5129 = vmatpush1.msra.mxu0 0.0
    %5130 = vmatprep.subr.mxu0 0.0
    %5131 = vmatpush1.msra.mxu0 0.0
    %5132 = vmatprep.subr.mxu0 0.0
    %5133 = vmatpush1.msra.mxu0 0.0
    %5134 = vmatprep.subr.mxu0 0.0
    %5135 = vmatpush1.msra.mxu0 0.0
    %5136 = vmatprep.subr.mxu0 0.0
    %5137 = vmatpush1.msra.mxu0 0.0
    %5138 = vmatprep.subr.mxu0 0.0
    %5139 = vmatpush1.msra.mxu0 0.0
    %5140 = vmatprep.subr.mxu0 0.0
    %5141 = vmatpush1.msra.mxu0 0.0
    %5142 = vmatprep.subr.mxu0 0.0
    %5143 = vmatpush1.msra.mxu0 0.0
    %5144 = vmatprep.subr.mxu0 0.0
    %5145 = vmatpush1.msra.mxu0 0.0
    %5146 = vmatprep.subr.mxu0 0.0
    %5147 = vmatpush1.msra.mxu0 0.0
    %5148 = vmatprep.subr.mxu0 0.0
    %5149 = vmatpush1.msra.mxu0 0.0
    %5150 = vmatprep.subr.mxu0 0.0
    %5151 = vmatpush1.msra.mxu0 0.0
    %5152 = vmatprep.subr.mxu0 0.0
    %5153 = vmatpush1.msra.mxu0 0.0
    %5154 = vmatprep.subr.mxu0 0.0
    %5155 = vmatpush1.msra.mxu0 0.0
    %5156 = vmatprep.subr.mxu0 0.0
    %5157 = vmatpush1.msra.mxu0 0.0
    %5158 = vmatprep.subr.mxu0 0.0
    %5159 = vmatpush1.msra.mxu0 0.0
    %5160 = vmatprep.subr.mxu0 0.0
    %5161 = vmatpush1.msra.mxu0 0.0
    %5162 = vmatprep.subr.mxu0 0.0
    %5163 = vmatpush1.msra.mxu0 0.0
    %5164 = vmatprep.subr.mxu0 0.0
    %5165 = vmatpush1.msra.mxu0 0.0
    %5166 = vmatprep.subr.mxu0 0.0
    %5167 = vmatpush1.msra.mxu0 0.0
    %5168 = vmatprep.subr.mxu0 0.0
    %5169 = vmatpush1.msra.mxu0 0.0
    %5170 = vmatprep.subr.mxu0 0.0
    %5171 = vmatpush1.msra.mxu0 0.0
    %5172 = vmatprep.subr.mxu0 0.0
    %5173 = vmatpush1.msra.mxu0 0.0
    %5174 = vmatprep.subr.mxu0 0.0
    %5175 = vmatpush1.msra.mxu0 0.0
    %5176 = vmatprep.subr.mxu0 0.0
    %5177 = vmatpush1.msra.mxu0 0.0
    %5178 = vmatprep.subr.mxu0 0.0
    %5179 = vmatpush1.msra.mxu0 0.0
    %5180 = vmatprep.subr.mxu0 0.0
    %5181 = vmatpush1.msra.mxu0 0.0
    %5182 = vmatprep.mubr.f32.mxu0 0.0
    %5183 = vmatmul.mubr.f32.gmra.mrb[0].mxu0 %v5113
    %v5184 = vpop.f32.mrb[0].mxu0
    %v5185 = vadd.f32 %v5110, %v5184
    %v5186 = vpop.f32.mrb[0].mxu0
    %5187 = vmatprep.mubr.f32.mxu0 0.0
    %5188 = vmatmul.mubr.f32.gmra.mrb[0].mxu0 %v5116
    %v5189 = vpop.f32.mrb[0].mxu0
    %v5190 = vadd.f32 %v5110, %v5189
    %v5191 = vpop.f32.mrb[0].mxu0
    %5192 = vdwg.mxu0
    %v5193 = vadd.f32 %v5185, %v3643
    %v5194 = vadd.f32 %v5190, %v3644
    %s5195 = scalar_lea.vmem %s10, 1
    %v5196 = vld [vmem:[%s5195] sm:$0x1]
    %s5197 = scalar_lea.vmem %s11, 1
    %v5198 = vld [vmem:[%s5197] sm:$0x1]
    %v5199 = vsel %vm224, %v5193, 0.0
    %5200 = vadd.xlane.f32.xlu0 %v5199
    %v5201 = vpop.xlane.xlu0 %5200
    %v5202 = vsel %vm224, %v5194, 0.0
    %5203 = vadd.xlane.f32.xlu0 %v5202
    %v5204 = vpop.xlane.xlu0 %5203
    %v5205 = vmul.f32 %v5201, %v1766
    %v5206 = vmul.f32 %v5204, %v1766
    %v5207 = vsub.f32 %v5193, %v5205
    %v5208 = vsub.f32 %v5194, %v5206
    %v5209 = vmul.f32 %v5207, %v5207
    %v5210 = vmul.f32 %v5208, %v5208
    %v5211 = vsel %vm224, %v5209, 0.0
    %5212 = vadd.xlane.f32.xlu0 %v5211
    %v5213 = vpop.xlane.xlu0 %5212
    %v5214 = vsel %vm224, %v5210, 0.0
    %5215 = vadd.xlane.f32.xlu0 %v5214
    %v5216 = vpop.xlane.xlu0 %5215
    %v5217 = vmul.f32 %v5213, %v1766
    %v5218 = vmul.f32 %v5216, %v1766
    %v5219 = vadd.f32 %v5217, 1e-05
    %v5220 = vadd.f32 %v5218, 1e-05
    %v5221 = vrsqrt.pop %v5219
    %v5222 = vrsqrt.pop %v5220
    %v5223 = vmul.f32 %v5207, %v5221
    %v5224 = vmul.f32 %v5208, %v5222
    %v5226 = vlaneseq
    %v5227 = vshrl.u32 %v5226, 7
    %v5228 = vsub.s32 0, %v5227
    %v5229 = vrot.slane %v5196, %v5228
    %v5231 = vmul.f32 %v5223, %v5229
    %v5232 = vmul.f32 %v5224, %v5229
    %v5234 = vlaneseq
    %v5235 = vshrl.u32 %v5234, 7
    %v5236 = vsub.s32 0, %v5235
    %v5237 = vrot.slane %v5198, %v5236
    %v5239 = vadd.f32 %v5231, %v5237
    %v5240 = vadd.f32 %v5232, %v5237
    %s5241 = scalar_lea.vmem %s12, 32
    %v5242 = vld [vmem:[%s5241] sm:$0xff]
    %v5243 = vld [vmem:[%s5241 + $0x8] sm:$0xff]
    %v5244 = vld [vmem:[%s5241 + $0x10] sm:$0xff]
    %v5245 = vld [vmem:[%s5241 + $0x18] sm:$0xff]
    %s5246 = scalar_lea.vmem %s13, 1
    %v5247 = vld [vmem:[%s5246] sm:$0x1]
    %s5248 = scalar_lea.vmem %s14, 32
    %v5249 = vld [vmem:[%s5248] sm:$0xff]
    %v5250 = vld [vmem:[%s5248 + $0x8] sm:$0xff]
    %v5251 = vld [vmem:[%s5248 + $0x10] sm:$0xff]
    %v5252 = vld [vmem:[%s5248 + $0x18] sm:$0xff]
    %s5253 = scalar_lea.vmem %s15, 1
    %v5254 = vld [vmem:[%s5253] sm:$0x1]
    %v5256 = vlaneseq
    %v5257 = vshrl.u32 %v5256, 7
    %v5258 = vsub.s32 0, %v5257
    %v5259 = vrot.slane %v5247, %v5258
    %5261 = vmatprep.subr.mxu0 0.0
    %5262 = vmatpush1.msra.mxu0 %v5242
    %5263 = vmatprep.subr.mxu0 0.0
    %5264 = vmatpush1.msra.mxu0 %v5243
    %5265 = vmatprep.subr.mxu0 0.0
    %5266 = vmatpush1.msra.mxu0 %v5244
    %5267 = vmatprep.subr.mxu0 0.0
    %5268 = vmatpush1.msra.mxu0 %v5245
    %5269 = vmatprep.subr.mxu0 0.0
    %5270 = vmatpush1.msra.mxu0 0.0
    %5271 = vmatprep.subr.mxu0 0.0
    %5272 = vmatpush1.msra.mxu0 0.0
    %5273 = vmatprep.subr.mxu0 0.0
    %5274 = vmatpush1.msra.mxu0 0.0
    %5275 = vmatprep.subr.mxu0 0.0
    %5276 = vmatpush1.msra.mxu0 0.0
    %5277 = vmatprep.subr.mxu0 0.0
    %5278 = vmatpush1.msra.mxu0 0.0
    %5279 = vmatprep.subr.mxu0 0.0
    %5280 = vmatpush1.msra.mxu0 0.0
    %5281 = vmatprep.subr.mxu0 0.0
    %5282 = vmatpush1.msra.mxu0 0.0
    %5283 = vmatprep.subr.mxu0 0.0
    %5284 = vmatpush1.msra.mxu0 0.0
    %5285 = vmatprep.subr.mxu0 0.0
    %5286 = vmatpush1.msra.mxu0 0.0
    %5287 = vmatprep.subr.mxu0 0.0
    %5288 = vmatpush1.msra.mxu0 0.0
    %5289 = vmatprep.subr.mxu0 0.0
    %5290 = vmatpush1.msra.mxu0 0.0
    %5291 = vmatprep.subr.mxu0 0.0
    %5292 = vmatpush1.msra.mxu0 0.0
    %5293 = vmatprep.subr.mxu0 0.0
    %5294 = vmatpush1.msra.mxu0 0.0
    %5295 = vmatprep.subr.mxu0 0.0
    %5296 = vmatpush1.msra.mxu0 0.0
    %5297 = vmatprep.subr.mxu0 0.0
    %5298 = vmatpush1.msra.mxu0 0.0
    %5299 = vmatprep.subr.mxu0 0.0
    %5300 = vmatpush1.msra.mxu0 0.0
    %5301 = vmatprep.subr.mxu0 0.0
    %5302 = vmatpush1.msra.mxu0 0.0
    %5303 = vmatprep.subr.mxu0 0.0
    %5304 = vmatpush1.msra.mxu0 0.0
    %5305 = vmatprep.subr.mxu0 0.0
    %5306 = vmatpush1.msra.mxu0 0.0
    %5307 = vmatprep.subr.mxu0 0.0
    %5308 = vmatpush1.msra.mxu0 0.0
    %5309 = vmatprep.subr.mxu0 0.0
    %5310 = vmatpush1.msra.mxu0 0.0
    %5311 = vmatprep.subr.mxu0 0.0
    %5312 = vmatpush1.msra.mxu0 0.0
    %5313 = vmatprep.subr.mxu0 0.0
    %5314 = vmatpush1.msra.mxu0 0.0
    %5315 = vmatprep.subr.mxu0 0.0
    %5316 = vmatpush1.msra.mxu0 0.0
    %5317 = vmatprep.subr.mxu0 0.0
    %5318 = vmatpush1.msra.mxu0 0.0
    %5319 = vmatprep.subr.mxu0 0.0
    %5320 = vmatpush1.msra.mxu0 0.0
    %5321 = vmatprep.subr.mxu0 0.0
    %5322 = vmatpush1.msra.mxu0 0.0
    %5323 = vmatprep.subr.mxu0 0.0
    %5324 = vmatpush1.msra.mxu0 0.0
    %5325 = vmatprep.mubr.f32.mxu0 0.0
    %5326 = vmatmul.mubr.f32.gmra.mrb[0].mxu0 %v1820
    %v5327 = vpop.f32.mrb[0].mxu0
    %v5328 = vadd.f32 %v5259, %v5327
    %v5329 = vpop.f32.mrb[0].mxu0
    %5330 = vmatprep.mubr.f32.mxu0 0.0
    %5331 = vmatmul.mubr.f32.gmra.mrb[0].mxu0 %v1823
    %v5332 = vpop.f32.mrb[0].mxu0
    %v5333 = vadd.f32 %v5259, %v5332
    %v5334 = vpop.f32.mrb[0].mxu0
    %5335 = vdwg.mxu0
    %v5337 = vsel %vm306, %v5239, 0
    %v5340 = vsel %vm306, %v5328, 0
    %5342 = vmatprep.subr.mxu0 0.0
    %5343 = vmatpush1.xpose.msra.mxu0 %v5340
    %5344 = vmatprep.subr.mxu0 0.0
    %5345 = vmatpush1.xpose.msra.mxu0 0.0
    %5346 = vmatprep.subr.mxu0 0.0
    %5347 = vmatpush1.xpose.msra.mxu0 0.0
    %5348 = vmatprep.subr.mxu0 0.0
    %5349 = vmatpush1.xpose.msra.mxu0 0.0
    %5350 = vmatprep.subr.mxu0 0.0
    %5351 = vmatpush1.xpose.msra.mxu0 0.0
    %5352 = vmatprep.subr.mxu0 0.0
    %5353 = vmatpush1.xpose.msra.mxu0 0.0
    %5354 = vmatprep.subr.mxu0 0.0
    %5355 = vmatpush1.xpose.msra.mxu0 0.0
    %5356 = vmatprep.subr.mxu0 0.0
    %5357 = vmatpush1.xpose.msra.mxu0 0.0
    %5358 = vmatprep.subr.mxu0 0.0
    %5359 = vmatpush1.xpose.msra.mxu0 0.0
    %5360 = vmatprep.subr.mxu0 0.0
    %5361 = vmatpush1.xpose.msra.mxu0 0.0
    %5362 = vmatprep.subr.mxu0 0.0
    %5363 = vmatpush1.xpose.msra.mxu0 0.0
    %5364 = vmatprep.subr.mxu0 0.0
    %5365 = vmatpush1.xpose.msra.mxu0 0.0
    %5366 = vmatprep.subr.mxu0 0.0
    %5367 = vmatpush1.xpose.msra.mxu0 0.0
    %5368 = vmatprep.subr.mxu0 0.0
    %5369 = vmatpush1.xpose.msra.mxu0 0.0
    %5370 = vmatprep.subr.mxu0 0.0
    %5371 = vmatpush1.xpose.msra.mxu0 0.0
    %5372 = vmatprep.subr.mxu0 0.0
    %5373 = vmatpush1.xpose.msra.mxu0 0.0
    %5374 = vmatprep.subr.mxu0 0.0
    %5375 = vmatpush1.xpose.msra.mxu0 0.0
    %5376 = vmatprep.subr.mxu0 0.0
    %5377 = vmatpush1.xpose.msra.mxu0 0.0
    %5378 = vmatprep.subr.mxu0 0.0
    %5379 = vmatpush1.xpose.msra.mxu0 0.0
    %5380 = vmatprep.subr.mxu0 0.0
    %5381 = vmatpush1.xpose.msra.mxu0 0.0
    %5382 = vmatprep.subr.mxu0 0.0
    %5383 = vmatpush1.xpose.msra.mxu0 0.0
    %5384 = vmatprep.subr.mxu0 0.0
    %5385 = vmatpush1.xpose.msra.mxu0 0.0
    %5386 = vmatprep.subr.mxu0 0.0
    %5387 = vmatpush1.xpose.msra.mxu0 0.0
    %5388 = vmatprep.subr.mxu0 0.0
    %5389 = vmatpush1.xpose.msra.mxu0 0.0
    %5390 = vmatprep.subr.mxu0 0.0
    %5391 = vmatpush1.xpose.msra.mxu0 0.0
    %5392 = vmatprep.subr.mxu0 0.0
    %5393 = vmatpush1.xpose.msra.mxu0 0.0
    %5394 = vmatprep.subr.mxu0 0.0
    %5395 = vmatpush1.xpose.msra.mxu0 0.0
    %5396 = vmatprep.subr.mxu0 0.0
    %5397 = vmatpush1.xpose.msra.mxu0 0.0
    %5398 = vmatprep.subr.mxu0 0.0
    %5399 = vmatpush1.xpose.msra.mxu0 0.0
    %5400 = vmatprep.subr.mxu0 0.0
    %5401 = vmatpush1.xpose.msra.mxu0 0.0
    %5402 = vmatprep.subr.mxu0 0.0
    %5403 = vmatpush1.xpose.msra.mxu0 0.0
    %5404 = vmatprep.subr.mxu0 0.0
    %5405 = vmatpush1.xpose.msra.mxu0 0.0
    %5406 = vmatprep.mubr.f32.mxu0 0.0
    %5407 = vmatmul.mubr.f32.gmra.mrb[0].mxu0 %v5337
    %v5408 = vpop.f32.mrb[0].mxu0
    %v5409 = vadd.f32 0.0, %v5408
    %v5410 = vpop.f32.mrb[0].mxu0
    %5411 = vdwg.mxu0
    %v5412 = vmul.f32 %v5409, 0.17677669
    %v5413 = vadd.f32 %v5412, %v1981
    %v5414 = vsel %vm306, %v5413, -inf
    %5415 = vmax.xlane.f32.xlu0 %v5414
    %v5416 = vpop.xlane.xlu0 %5415
    %v5417 = vsub.f32 %v5413, %v5416
    %v5418 = vmul.f32 %v5417, 1.442695
    %v5419 = vpow.pop %v5418
    %v5420 = vsel %vm306, %v5419, 0.0
    %5421 = vadd.xlane.f32.xlu0 %v5420
    %v5422 = vpop.xlane.xlu0 %5421
    %v5423 = vrcp.pop %v5422
    %v5424 = vmul.f32 %v5419, %v5423
    %5425 = vrot.lane.b32.xlu0 %v5328, 96
    %v5426 = vpop.permute.xlu0 %5425
    %v5429 = vsel %vm306, %v5424, 0
    %5431 = vmatprep.subr.mxu0 0.0
    %5432 = vmatpush1.msra.mxu0 %v5426
    %5433 = vmatprep.subr.mxu0 0.0
    %5434 = vmatpush1.msra.mxu0 0.0
    %5435 = vmatprep.subr.mxu0 0.0
    %5436 = vmatpush1.msra.mxu0 0.0
    %5437 = vmatprep.subr.mxu0 0.0
    %5438 = vmatpush1.msra.mxu0 0.0
    %5439 = vmatprep.subr.mxu0 0.0
    %5440 = vmatpush1.msra.mxu0 0.0
    %5441 = vmatprep.subr.mxu0 0.0
    %5442 = vmatpush1.msra.mxu0 0.0
    %5443 = vmatprep.subr.mxu0 0.0
    %5444 = vmatpush1.msra.mxu0 0.0
    %5445 = vmatprep.subr.mxu0 0.0
    %5446 = vmatpush1.msra.mxu0 0.0
    %5447 = vmatprep.subr.mxu0 0.0
    %5448 = vmatpush1.msra.mxu0 0.0
    %5449 = vmatprep.subr.mxu0 0.0
    %5450 = vmatpush1.msra.mxu0 0.0
    %5451 = vmatprep.subr.mxu0 0.0
    %5452 = vmatpush1.msra.mxu0 0.0
    %5453 = vmatprep.subr.mxu0 0.0
    %5454 = vmatpush1.msra.mxu0 0.0
    %5455 = vmatprep.subr.mxu0 0.0
    %5456 = vmatpush1.msra.mxu0 0.0
    %5457 = vmatprep.subr.mxu0 0.0
    %5458 = vmatpush1.msra.mxu0 0.0
    %5459 = vmatprep.subr.mxu0 0.0
    %5460 = vmatpush1.msra.mxu0 0.0
    %5461 = vmatprep.subr.mxu0 0.0
    %5462 = vmatpush1.msra.mxu0 0.0
    %5463 = vmatprep.subr.mxu0 0.0
    %5464 = vmatpush1.msra.mxu0 0.0
    %5465 = vmatprep.subr.mxu0 0.0
    %5466 = vmatpush1.msra.mxu0 0.0
    %5467 = vmatprep.subr.mxu0 0.0
    %5468 = vmatpush1.msra.mxu0 0.0
    %5469 = vmatprep.subr.mxu0 0.0
    %5470 = vmatpush1.msra.mxu0 0.0
    %5471 = vmatprep.subr.mxu0 0.0
    %5472 = vmatpush1.msra.mxu0 0.0
    %5473 = vmatprep.subr.mxu0 0.0
    %5474 = vmatpush1.msra.mxu0 0.0
    %5475 = vmatprep.subr.mxu0 0.0
    %5476 = vmatpush1.msra.mxu0 0.0
    %5477 = vmatprep.subr.mxu0 0.0
    %5478 = vmatpush1.msra.mxu0 0.0
    %5479 = vmatprep.subr.mxu0 0.0
    %5480 = vmatpush1.msra.mxu0 0.0
    %5481 = vmatprep.subr.mxu0 0.0
    %5482 = vmatpush1.msra.mxu0 0.0
    %5483 = vmatprep.subr.mxu0 0.0
    %5484 = vmatpush1.msra.mxu0 0.0
    %5485 = vmatprep.subr.mxu0 0.0
    %5486 = vmatpush1.msra.mxu0 0.0
    %5487 = vmatprep.subr.mxu0 0.0
    %5488 = vmatpush1.msra.mxu0 0.0
    %5489 = vmatprep.subr.mxu0 0.0
    %5490 = vmatpush1.msra.mxu0 0.0
    %5491 = vmatprep.subr.mxu0 0.0
    %5492 = vmatpush1.msra.mxu0 0.0
    %5493 = vmatprep.subr.mxu0 0.0
    %5494 = vmatpush1.msra.mxu0 0.0
    %5495 = vmatprep.mubr.f32.mxu0 0.0
    %5496 = vmatmul.mubr.f32.gmra.mrb[0].mxu0 %v5429
    %v5497 = vpop.f32.mrb[0].mxu0
    %v5498 = vadd.f32 0.0, %v5497
    %v5499 = vpop.f32.mrb[0].mxu0
    %5500 = vdwg.mxu0
    %5501 = vrot.lane.b32.xlu0 %v5239, 120
    %v5502 = vpop.permute.xlu0 %5501
    %5503 = vrot.lane.b32.xlu0 %v5328, 120
    %v5504 = vpop.permute.xlu0 %5503
    %v5505 = vsel %vm306, %v5502, 0
    %v5507 = vsel %vm306, %v5504, 0
    %5509 = vmatprep.subr.mxu0 0.0
    %5510 = vmatpush1.xpose.msra.mxu0 %v5507
    %5511 = vmatprep.subr.mxu0 0.0
    %5512 = vmatpush1.xpose.msra.mxu0 0.0
    %5513 = vmatprep.subr.mxu0 0.0
    %5514 = vmatpush1.xpose.msra.mxu0 0.0
    %5515 = vmatprep.subr.mxu0 0.0
    %5516 = vmatpush1.xpose.msra.mxu0 0.0
    %5517 = vmatprep.subr.mxu0 0.0
    %5518 = vmatpush1.xpose.msra.mxu0 0.0
    %5519 = vmatprep.subr.mxu0 0.0
    %5520 = vmatpush1.xpose.msra.mxu0 0.0
    %5521 = vmatprep.subr.mxu0 0.0
    %5522 = vmatpush1.xpose.msra.mxu0 0.0
    %5523 = vmatprep.subr.mxu0 0.0
    %5524 = vmatpush1.xpose.msra.mxu0 0.0
    %5525 = vmatprep.subr.mxu0 0.0
    %5526 = vmatpush1.xpose.msra.mxu0 0.0
    %5527 = vmatprep.subr.mxu0 0.0
    %5528 = vmatpush1.xpose.msra.mxu0 0.0
    %5529 = vmatprep.subr.mxu0 0.0
    %5530 = vmatpush1.xpose.msra.mxu0 0.0
    %5531 = vmatprep.subr.mxu0 0.0
    %5532 = vmatpush1.xpose.msra.mxu0 0.0
    %5533 = vmatprep.subr.mxu0 0.0
    %5534 = vmatpush1.xpose.msra.mxu0 0.0
    %5535 = vmatprep.subr.mxu0 0.0
    %5536 = vmatpush1.xpose.msra.mxu0 0.0
    %5537 = vmatprep.subr.mxu0 0.0
    %5538 = vmatpush1.xpose.msra.mxu0 0.0
    %5539 = vmatprep.subr.mxu0 0.0
    %5540 = vmatpush1.xpose.msra.mxu0 0.0
    %5541 = vmatprep.subr.mxu0 0.0
    %5542 = vmatpush1.xpose.msra.mxu0 0.0
    %5543 = vmatprep.subr.mxu0 0.0
    %5544 = vmatpush1.xpose.msra.mxu0 0.0
    %5545 = vmatprep.subr.mxu0 0.0
    %5546 = vmatpush1.xpose.msra.mxu0 0.0
    %5547 = vmatprep.subr.mxu0 0.0
    %5548 = vmatpush1.xpose.msra.mxu0 0.0
    %5549 = vmatprep.subr.mxu0 0.0
    %5550 = vmatpush1.xpose.msra.mxu0 0.0
    %5551 = vmatprep.subr.mxu0 0.0
    %5552 = vmatpush1.xpose.msra.mxu0 0.0
    %5553 = vmatprep.subr.mxu0 0.0
    %5554 = vmatpush1.xpose.msra.mxu0 0.0
    %5555 = vmatprep.subr.mxu0 0.0
    %5556 = vmatpush1.xpose.msra.mxu0 0.0
    %5557 = vmatprep.subr.mxu0 0.0
    %5558 = vmatpush1.xpose.msra.mxu0 0.0
    %5559 = vmatprep.subr.mxu0 0.0
    %5560 = vmatpush1.xpose.msra.mxu0 0.0
    %5561 = vmatprep.subr.mxu0 0.0
    %5562 = vmatpush1.xpose.msra.mxu0 0.0
    %5563 = vmatprep.subr.mxu0 0.0
    %5564 = vmatpush1.xpose.msra.mxu0 0.0
    %5565 = vmatprep.subr.mxu0 0.0
    %5566 = vmatpush1.xpose.msra.mxu0 0.0
    %5567 = vmatprep.subr.mxu0 0.0
    %5568 = vmatpush1.xpose.msra.mxu0 0.0
    %5569 = vmatprep.subr.mxu0 0.0
    %5570 = vmatpush1.xpose.msra.mxu0 0.0
    %5571 = vmatprep.subr.mxu0 0.0
    %5572 = vmatpush1.xpose.msra.mxu0 0.0
    %5573 = vmatprep.mubr.f32.mxu0 0.0
    %5574 = vmatmul.mubr.f32.gmra.mrb[0].mxu0 %v5505
    %v5575 = vpop.f32.mrb[0].mxu0
    %v5576 = vadd.f32 0.0, %v5575
    %v5577 = vpop.f32.mrb[0].mxu0
    %5578 = vdwg.mxu0
    %v5579 = vmul.f32 %v5576, 0.17677669
    %v5580 = vadd.f32 %v5579, %v1981
    %v5581 = vsel %vm306, %v5580, -inf
    %5582 = vmax.xlane.f32.xlu0 %v5581
    %v5583 = vpop.xlane.xlu0 %5582
    %v5584 = vsub.f32 %v5580, %v5583
    %v5585 = vmul.f32 %v5584, 1.442695
    %v5586 = vpow.pop %v5585
    %v5587 = vsel %vm306, %v5586, 0.0
    %5588 = vadd.xlane.f32.xlu0 %v5587
    %v5589 = vpop.xlane.xlu0 %5588
    %v5590 = vrcp.pop %v5589
    %v5591 = vmul.f32 %v5586, %v5590
    %5592 = vrot.lane.b32.xlu0 %v5328, 88
    %v5593 = vpop.permute.xlu0 %5592
    %v5596 = vsel %vm306, %v5591, 0
    %5598 = vmatprep.subr.mxu0 0.0
    %5599 = vmatpush1.msra.mxu0 %v5593
    %5600 = vmatprep.subr.mxu0 0.0
    %5601 = vmatpush1.msra.mxu0 0.0
    %5602 = vmatprep.subr.mxu0 0.0
    %5603 = vmatpush1.msra.mxu0 0.0
    %5604 = vmatprep.subr.mxu0 0.0
    %5605 = vmatpush1.msra.mxu0 0.0
    %5606 = vmatprep.subr.mxu0 0.0
    %5607 = vmatpush1.msra.mxu0 0.0
    %5608 = vmatprep.subr.mxu0 0.0
    %5609 = vmatpush1.msra.mxu0 0.0
    %5610 = vmatprep.subr.mxu0 0.0
    %5611 = vmatpush1.msra.mxu0 0.0
    %5612 = vmatprep.subr.mxu0 0.0
    %5613 = vmatpush1.msra.mxu0 0.0
    %5614 = vmatprep.subr.mxu0 0.0
    %5615 = vmatpush1.msra.mxu0 0.0
    %5616 = vmatprep.subr.mxu0 0.0
    %5617 = vmatpush1.msra.mxu0 0.0
    %5618 = vmatprep.subr.mxu0 0.0
    %5619 = vmatpush1.msra.mxu0 0.0
    %5620 = vmatprep.subr.mxu0 0.0
    %5621 = vmatpush1.msra.mxu0 0.0
    %5622 = vmatprep.subr.mxu0 0.0
    %5623 = vmatpush1.msra.mxu0 0.0
    %5624 = vmatprep.subr.mxu0 0.0
    %5625 = vmatpush1.msra.mxu0 0.0
    %5626 = vmatprep.subr.mxu0 0.0
    %5627 = vmatpush1.msra.mxu0 0.0
    %5628 = vmatprep.subr.mxu0 0.0
    %5629 = vmatpush1.msra.mxu0 0.0
    %5630 = vmatprep.subr.mxu0 0.0
    %5631 = vmatpush1.msra.mxu0 0.0
    %5632 = vmatprep.subr.mxu0 0.0
    %5633 = vmatpush1.msra.mxu0 0.0
    %5634 = vmatprep.subr.mxu0 0.0
    %5635 = vmatpush1.msra.mxu0 0.0
    %5636 = vmatprep.subr.mxu0 0.0
    %5637 = vmatpush1.msra.mxu0 0.0
    %5638 = vmatprep.subr.mxu0 0.0
    %5639 = vmatpush1.msra.mxu0 0.0
    %5640 = vmatprep.subr.mxu0 0.0
    %5641 = vmatpush1.msra.mxu0 0.0
    %5642 = vmatprep.subr.mxu0 0.0
    %5643 = vmatpush1.msra.mxu0 0.0
    %5644 = vmatprep.subr.mxu0 0.0
    %5645 = vmatpush1.msra.mxu0 0.0
    %5646 = vmatprep.subr.mxu0 0.0
    %5647 = vmatpush1.msra.mxu0 0.0
    %5648 = vmatprep.subr.mxu0 0.0
    %5649 = vmatpush1.msra.mxu0 0.0
    %5650 = vmatprep.subr.mxu0 0.0
    %5651 = vmatpush1.msra.mxu0 0.0
    %5652 = vmatprep.subr.mxu0 0.0
    %5653 = vmatpush1.msra.mxu0 0.0
    %5654 = vmatprep.subr.mxu0 0.0
    %5655 = vmatpush1.msra.mxu0 0.0
    %5656 = vmatprep.subr.mxu0 0.0
    %5657 = vmatpush1.msra.mxu0 0.0
    %5658 = vmatprep.subr.mxu0 0.0
    %5659 = vmatpush1.msra.mxu0 0.0
    %5660 = vmatprep.subr.mxu0 0.0
    %5661 = vmatpush1.msra.mxu0 0.0
    %5662 = vmatprep.mubr.f32.mxu0 0.0
    %5663 = vmatmul.mubr.f32.gmra.mrb[0].mxu0 %v5596
    %v5664 = vpop.f32.mrb[0].mxu0
    %v5665 = vadd.f32 0.0, %v5664
    %v5666 = vpop.f32.mrb[0].mxu0
    %5667 = vdwg.mxu0
    %5668 = vrot.lane.b32.xlu0 %v5239, 112
    %v5669 = vpop.permute.xlu0 %5668
    %5670 = vrot.lane.b32.xlu0 %v5328, 112
    %v5671 = vpop.permute.xlu0 %5670
    %v5672 = vsel %vm306, %v5669, 0
    %v5674 = vsel %vm306, %v5671, 0
    %5676 = vmatprep.subr.mxu0 0.0
    %5677 = vmatpush1.xpose.msra.mxu0 %v5674
    %5678 = vmatprep.subr.mxu0 0.0
    %5679 = vmatpush1.xpose.msra.mxu0 0.0
    %5680 = vmatprep.subr.mxu0 0.0
    %5681 = vmatpush1.xpose.msra.mxu0 0.0
    %5682 = vmatprep.subr.mxu0 0.0
    %5683 = vmatpush1.xpose.msra.mxu0 0.0
    %5684 = vmatprep.subr.mxu0 0.0
    %5685 = vmatpush1.xpose.msra.mxu0 0.0
    %5686 = vmatprep.subr.mxu0 0.0
    %5687 = vmatpush1.xpose.msra.mxu0 0.0
    %5688 = vmatprep.subr.mxu0 0.0
    %5689 = vmatpush1.xpose.msra.mxu0 0.0
    %5690 = vmatprep.subr.mxu0 0.0
    %5691 = vmatpush1.xpose.msra.mxu0 0.0
    %5692 = vmatprep.subr.mxu0 0.0
    %5693 = vmatpush1.xpose.msra.mxu0 0.0
    %5694 = vmatprep.subr.mxu0 0.0
    %5695 = vmatpush1.xpose.msra.mxu0 0.0
    %5696 = vmatprep.subr.mxu0 0.0
    %5697 = vmatpush1.xpose.msra.mxu0 0.0
    %5698 = vmatprep.subr.mxu0 0.0
    %5699 = vmatpush1.xpose.msra.mxu0 0.0
    %5700 = vmatprep.subr.mxu0 0.0
    %5701 = vmatpush1.xpose.msra.mxu0 0.0
    %5702 = vmatprep.subr.mxu0 0.0
    %5703 = vmatpush1.xpose.msra.mxu0 0.0
    %5704 = vmatprep.subr.mxu0 0.0
    %5705 = vmatpush1.xpose.msra.mxu0 0.0
    %5706 = vmatprep.subr.mxu0 0.0
    %5707 = vmatpush1.xpose.msra.mxu0 0.0
    %5708 = vmatprep.subr.mxu0 0.0
    %5709 = vmatpush1.xpose.msra.mxu0 0.0
    %5710 = vmatprep.subr.mxu0 0.0
    %5711 = vmatpush1.xpose.msra.mxu0 0.0
    %5712 = vmatprep.subr.mxu0 0.0
    %5713 = vmatpush1.xpose.msra.mxu0 0.0
    %5714 = vmatprep.subr.mxu0 0.0
    %5715 = vmatpush1.xpose.msra.mxu0 0.0
    %5716 = vmatprep.subr.mxu0 0.0
    %5717 = vmatpush1.xpose.msra.mxu0 0.0
    %5718 = vmatprep.subr.mxu0 0.0
    %5719 = vmatpush1.xpose.msra.mxu0 0.0
    %5720 = vmatprep.subr.mxu0 0.0
    %5721 = vmatpush1.xpose.msra.mxu0 0.0
    %5722 = vmatprep.subr.mxu0 0.0
    %5723 = vmatpush1.xpose.msra.mxu0 0.0
    %5724 = vmatprep.subr.mxu0 0.0
    %5725 = vmatpush1.xpose.msra.mxu0 0.0
    %5726 = vmatprep.subr.mxu0 0.0
    %5727 = vmatpush1.xpose.msra.mxu0 0.0
    %5728 = vmatprep.subr.mxu0 0.0
    %5729 = vmatpush1.xpose.msra.mxu0 0.0
    %5730 = vmatprep.subr.mxu0 0.0
    %5731 = vmatpush1.xpose.msra.mxu0 0.0
    %5732 = vmatprep.subr.mxu0 0.0
    %5733 = vmatpush1.xpose.msra.mxu0 0.0
    %5734 = vmatprep.subr.mxu0 0.0
    %5735 = vmatpush1.xpose.msra.mxu0 0.0
    %5736 = vmatprep.subr.mxu0 0.0
    %5737 = vmatpush1.xpose.msra.mxu0 0.0
    %5738 = vmatprep.subr.mxu0 0.0
    %5739 = vmatpush1.xpose.msra.mxu0 0.0
    %5740 = vmatprep.mubr.f32.mxu0 0.0
    %5741 = vmatmul.mubr.f32.gmra.mrb[0].mxu0 %v5672
    %v5742 = vpop.f32.mrb[0].mxu0
    %v5743 = vadd.f32 0.0, %v5742
    %v5744 = vpop.f32.mrb[0].mxu0
    %5745 = vdwg.mxu0
    %v5746 = vmul.f32 %v5743, 0.17677669
    %v5747 = vadd.f32 %v5746, %v1981
    %v5748 = vsel %vm306, %v5747, -inf
    %5749 = vmax.xlane.f32.xlu0 %v5748
    %v5750 = vpop.xlane.xlu0 %5749
    %v5751 = vsub.f32 %v5747, %v5750
    %v5752 = vmul.f32 %v5751, 1.442695
    %v5753 = vpow.pop %v5752
    %v5754 = vsel %vm306, %v5753, 0.0
    %5755 = vadd.xlane.f32.xlu0 %v5754
    %v5756 = vpop.xlane.xlu0 %5755
    %v5757 = vrcp.pop %v5756
    %v5758 = vmul.f32 %v5753, %v5757
    %5759 = vrot.lane.b32.xlu0 %v5328, 80
    %v5760 = vpop.permute.xlu0 %5759
    %v5763 = vsel %vm306, %v5758, 0
    %5765 = vmatprep.subr.mxu0 0.0
    %5766 = vmatpush1.msra.mxu0 %v5760
    %5767 = vmatprep.subr.mxu0 0.0
    %5768 = vmatpush1.msra.mxu0 0.0
    %5769 = vmatprep.subr.mxu0 0.0
    %5770 = vmatpush1.msra.mxu0 0.0
    %5771 = vmatprep.subr.mxu0 0.0
    %5772 = vmatpush1.msra.mxu0 0.0
    %5773 = vmatprep.subr.mxu0 0.0
    %5774 = vmatpush1.msra.mxu0 0.0
    %5775 = vmatprep.subr.mxu0 0.0
    %5776 = vmatpush1.msra.mxu0 0.0
    %5777 = vmatprep.subr.mxu0 0.0
    %5778 = vmatpush1.msra.mxu0 0.0
    %5779 = vmatprep.subr.mxu0 0.0
    %5780 = vmatpush1.msra.mxu0 0.0
    %5781 = vmatprep.subr.mxu0 0.0
    %5782 = vmatpush1.msra.mxu0 0.0
    %5783 = vmatprep.subr.mxu0 0.0
    %5784 = vmatpush1.msra.mxu0 0.0
    %5785 = vmatprep.subr.mxu0 0.0
    %5786 = vmatpush1.msra.mxu0 0.0
    %5787 = vmatprep.subr.mxu0 0.0
    %5788 = vmatpush1.msra.mxu0 0.0
    %5789 = vmatprep.subr.mxu0 0.0
    %5790 = vmatpush1.msra.mxu0 0.0
    %5791 = vmatprep.subr.mxu0 0.0
    %5792 = vmatpush1.msra.mxu0 0.0
    %5793 = vmatprep.subr.mxu0 0.0
    %5794 = vmatpush1.msra.mxu0 0.0
    %5795 = vmatprep.subr.mxu0 0.0
    %5796 = vmatpush1.msra.mxu0 0.0
    %5797 = vmatprep.subr.mxu0 0.0
    %5798 = vmatpush1.msra.mxu0 0.0
    %5799 = vmatprep.subr.mxu0 0.0
    %5800 = vmatpush1.msra.mxu0 0.0
    %5801 = vmatprep.subr.mxu0 0.0
    %5802 = vmatpush1.msra.mxu0 0.0
    %5803 = vmatprep.subr.mxu0 0.0
    %5804 = vmatpush1.msra.mxu0 0.0
    %5805 = vmatprep.subr.mxu0 0.0
    %5806 = vmatpush1.msra.mxu0 0.0
    %5807 = vmatprep.subr.mxu0 0.0
    %5808 = vmatpush1.msra.mxu0 0.0
    %5809 = vmatprep.subr.mxu0 0.0
    %5810 = vmatpush1.msra.mxu0 0.0
    %5811 = vmatprep.subr.mxu0 0.0
    %5812 = vmatpush1.msra.mxu0 0.0
    %5813 = vmatprep.subr.mxu0 0.0
    %5814 = vmatpush1.msra.mxu0 0.0
    %5815 = vmatprep.subr.mxu0 0.0
    %5816 = vmatpush1.msra.mxu0 0.0
    %5817 = vmatprep.subr.mxu0 0.0
    %5818 = vmatpush1.msra.mxu0 0.0
    %5819 = vmatprep.subr.mxu0 0.0
    %5820 = vmatpush1.msra.mxu0 0.0
    %5821 = vmatprep.subr.mxu0 0.0
    %5822 = vmatpush1.msra.mxu0 0.0
    %5823 = vmatprep.subr.mxu0 0.0
    %5824 = vmatpush1.msra.mxu0 0.0
    %5825 = vmatprep.subr.mxu0 0.0
    %5826 = vmatpush1.msra.mxu0 0.0
    %5827 = vmatprep.subr.mxu0 0.0
    %5828 = vmatpush1.msra.mxu0 0.0
    %5829 = vmatprep.mubr.f32.mxu0 0.0
    %5830 = vmatmul.mubr.f32.gmra.mrb[0].mxu0 %v5763
    %v5831 = vpop.f32.mrb[0].mxu0
    %v5832 = vadd.f32 0.0, %v5831
    %v5833 = vpop.f32.mrb[0].mxu0
    %5834 = vdwg.mxu0
    %5835 = vrot.lane.b32.xlu0 %v5239, 104
    %v5836 = vpop.permute.xlu0 %5835
    %5837 = vrot.lane.b32.xlu0 %v5328, 104
    %v5838 = vpop.permute.xlu0 %5837
    %v5839 = vsel %vm306, %v5836, 0
    %v5841 = vsel %vm306, %v5838, 0
    %5843 = vmatprep.subr.mxu0 0.0
    %5844 = vmatpush1.xpose.msra.mxu0 %v5841
    %5845 = vmatprep.subr.mxu0 0.0
    %5846 = vmatpush1.xpose.msra.mxu0 0.0
    %5847 = vmatprep.subr.mxu0 0.0
    %5848 = vmatpush1.xpose.msra.mxu0 0.0
    %5849 = vmatprep.subr.mxu0 0.0
    %5850 = vmatpush1.xpose.msra.mxu0 0.0
    %5851 = vmatprep.subr.mxu0 0.0
    %5852 = vmatpush1.xpose.msra.mxu0 0.0
    %5853 = vmatprep.subr.mxu0 0.0
    %5854 = vmatpush1.xpose.msra.mxu0 0.0
    %5855 = vmatprep.subr.mxu0 0.0
    %5856 = vmatpush1.xpose.msra.mxu0 0.0
    %5857 = vmatprep.subr.mxu0 0.0
    %5858 = vmatpush1.xpose.msra.mxu0 0.0
    %5859 = vmatprep.subr.mxu0 0.0
    %5860 = vmatpush1.xpose.msra.mxu0 0.0
    %5861 = vmatprep.subr.mxu0 0.0
    %5862 = vmatpush1.xpose.msra.mxu0 0.0
    %5863 = vmatprep.subr.mxu0 0.0
    %5864 = vmatpush1.xpose.msra.mxu0 0.0
    %5865 = vmatprep.subr.mxu0 0.0
    %5866 = vmatpush1.xpose.msra.mxu0 0.0
    %5867 = vmatprep.subr.mxu0 0.0
    %5868 = vmatpush1.xpose.msra.mxu0 0.0
    %5869 = vmatprep.subr.mxu0 0.0
    %5870 = vmatpush1.xpose.msra.mxu0 0.0
    %5871 = vmatprep.subr.mxu0 0.0
    %5872 = vmatpush1.xpose.msra.mxu0 0.0
    %5873 = vmatprep.subr.mxu0 0.0
    %5874 = vmatpush1.xpose.msra.mxu0 0.0
    %5875 = vmatprep.subr.mxu0 0.0
    %5876 = vmatpush1.xpose.msra.mxu0 0.0
    %5877 = vmatprep.subr.mxu0 0.0
    %5878 = vmatpush1.xpose.msra.mxu0 0.0
    %5879 = vmatprep.subr.mxu0 0.0
    %5880 = vmatpush1.xpose.msra.mxu0 0.0
    %5881 = vmatprep.subr.mxu0 0.0
    %5882 = vmatpush1.xpose.msra.mxu0 0.0
    %5883 = vmatprep.subr.mxu0 0.0
    %5884 = vmatpush1.xpose.msra.mxu0 0.0
    %5885 = vmatprep.subr.mxu0 0.0
    %5886 = vmatpush1.xpose.msra.mxu0 0.0
    %5887 = vmatprep.subr.mxu0 0.0
    %5888 = vmatpush1.xpose.msra.mxu0 0.0
    %5889 = vmatprep.subr.mxu0 0.0
    %5890 = vmatpush1.xpose.msra.mxu0 0.0
    %5891 = vmatprep.subr.mxu0 0.0
    %5892 = vmatpush1.xpose.msra.mxu0 0.0
    %5893 = vmatprep.subr.mxu0 0.0
    %5894 = vmatpush1.xpose.msra.mxu0 0.0
    %5895 = vmatprep.subr.mxu0 0.0
    %5896 = vmatpush1.xpose.msra.mxu0 0.0
    %5897 = vmatprep.subr.mxu0 0.0
    %5898 = vmatpush1.xpose.msra.mxu0 0.0
    %5899 = vmatprep.subr.mxu0 0.0
    %5900 = vmatpush1.xpose.msra.mxu0 0.0
    %5901 = vmatprep.subr.mxu0 0.0
    %5902 = vmatpush1.xpose.msra.mxu0 0.0
    %5903 = vmatprep.subr.mxu0 0.0
    %5904 = vmatpush1.xpose.msra.mxu0 0.0
    %5905 = vmatprep.subr.mxu0 0.0
    %5906 = vmatpush1.xpose.msra.mxu0 0.0
    %5907 = vmatprep.mubr.f32.mxu0 0.0
    %5908 = vmatmul.mubr.f32.gmra.mrb[0].mxu0 %v5839
    %v5909 = vpop.f32.mrb[0].mxu0
    %v5910 = vadd.f32 0.0, %v5909
    %v5911 = vpop.f32.mrb[0].mxu0
    %5912 = vdwg.mxu0
    %v5913 = vmul.f32 %v5910, 0.17677669
    %v5914 = vadd.f32 %v5913, %v1981
    %v5915 = vsel %vm306, %v5914, -inf
    %5916 = vmax.xlane.f32.xlu0 %v5915
    %v5917 = vpop.xlane.xlu0 %5916
    %v5918 = vsub.f32 %v5914, %v5917
    %v5919 = vmul.f32 %v5918, 1.442695
    %v5920 = vpow.pop %v5919
    %v5921 = vsel %vm306, %v5920, 0.0
    %5922 = vadd.xlane.f32.xlu0 %v5921
    %v5923 = vpop.xlane.xlu0 %5922
    %v5924 = vrcp.pop %v5923
    %v5925 = vmul.f32 %v5920, %v5924
    %5926 = vrot.lane.b32.xlu0 %v5328, 72
    %v5927 = vpop.permute.xlu0 %5926
    %v5930 = vsel %vm306, %v5925, 0
    %5932 = vmatprep.subr.mxu0 0.0
    %5933 = vmatpush1.msra.mxu0 %v5927
    %5934 = vmatprep.subr.mxu0 0.0
    %5935 = vmatpush1.msra.mxu0 0.0
    %5936 = vmatprep.subr.mxu0 0.0
    %5937 = vmatpush1.msra.mxu0 0.0
    %5938 = vmatprep.subr.mxu0 0.0
    %5939 = vmatpush1.msra.mxu0 0.0
    %5940 = vmatprep.subr.mxu0 0.0
    %5941 = vmatpush1.msra.mxu0 0.0
    %5942 = vmatprep.subr.mxu0 0.0
    %5943 = vmatpush1.msra.mxu0 0.0
    %5944 = vmatprep.subr.mxu0 0.0
    %5945 = vmatpush1.msra.mxu0 0.0
    %5946 = vmatprep.subr.mxu0 0.0
    %5947 = vmatpush1.msra.mxu0 0.0
    %5948 = vmatprep.subr.mxu0 0.0
    %5949 = vmatpush1.msra.mxu0 0.0
    %5950 = vmatprep.subr.mxu0 0.0
    %5951 = vmatpush1.msra.mxu0 0.0
    %5952 = vmatprep.subr.mxu0 0.0
    %5953 = vmatpush1.msra.mxu0 0.0
    %5954 = vmatprep.subr.mxu0 0.0
    %5955 = vmatpush1.msra.mxu0 0.0
    %5956 = vmatprep.subr.mxu0 0.0
    %5957 = vmatpush1.msra.mxu0 0.0
    %5958 = vmatprep.subr.mxu0 0.0
    %5959 = vmatpush1.msra.mxu0 0.0
    %5960 = vmatprep.subr.mxu0 0.0
    %5961 = vmatpush1.msra.mxu0 0.0
    %5962 = vmatprep.subr.mxu0 0.0
    %5963 = vmatpush1.msra.mxu0 0.0
    %5964 = vmatprep.subr.mxu0 0.0
    %5965 = vmatpush1.msra.mxu0 0.0
    %5966 = vmatprep.subr.mxu0 0.0
    %5967 = vmatpush1.msra.mxu0 0.0
    %5968 = vmatprep.subr.mxu0 0.0
    %5969 = vmatpush1.msra.mxu0 0.0
    %5970 = vmatprep.subr.mxu0 0.0
    %5971 = vmatpush1.msra.mxu0 0.0
    %5972 = vmatprep.subr.mxu0 0.0
    %5973 = vmatpush1.msra.mxu0 0.0
    %5974 = vmatprep.subr.mxu0 0.0
    %5975 = vmatpush1.msra.mxu0 0.0
    %5976 = vmatprep.subr.mxu0 0.0
    %5977 = vmatpush1.msra.mxu0 0.0
    %5978 = vmatprep.subr.mxu0 0.0
    %5979 = vmatpush1.msra.mxu0 0.0
    %5980 = vmatprep.subr.mxu0 0.0
    %5981 = vmatpush1.msra.mxu0 0.0
    %5982 = vmatprep.subr.mxu0 0.0
    %5983 = vmatpush1.msra.mxu0 0.0
    %5984 = vmatprep.subr.mxu0 0.0
    %5985 = vmatpush1.msra.mxu0 0.0
    %5986 = vmatprep.subr.mxu0 0.0
    %5987 = vmatpush1.msra.mxu0 0.0
    %5988 = vmatprep.subr.mxu0 0.0
    %5989 = vmatpush1.msra.mxu0 0.0
    %5990 = vmatprep.subr.mxu0 0.0
    %5991 = vmatpush1.msra.mxu0 0.0
    %5992 = vmatprep.subr.mxu0 0.0
    %5993 = vmatpush1.msra.mxu0 0.0
    %5994 = vmatprep.subr.mxu0 0.0
    %5995 = vmatpush1.msra.mxu0 0.0
    %5996 = vmatprep.mubr.f32.mxu0 0.0
    %5997 = vmatmul.mubr.f32.gmra.mrb[0].mxu0 %v5930
    %v5998 = vpop.f32.mrb[0].mxu0
    %v5999 = vadd.f32 0.0, %v5998
    %v6000 = vpop.f32.mrb[0].mxu0
    %6001 = vdwg.mxu0
    %6003 = vrot.lane.b32.xlu0 %v5665, 8
    %v6004 = vpop.permute.xlu0 %6003
    %6007 = vrot.lane.b32.xlu0 %v5832, 16
    %v6008 = vpop.permute.xlu0 %6007
    %6011 = vrot.lane.b32.xlu0 %v5999, 24
    %v6012 = vpop.permute.xlu0 %6011
    %v6014 = vsel %vm306, %v5498, %v6004
    %v6015 = vsel %vm985, %v6014, %v6008
    %v6016 = vsel %vm987, %v6015, %v6012
    %v6018 = vsel %vm306, %v5240, 0
    %v6021 = vsel %vm306, %v5333, 0
    %6023 = vmatprep.subr.mxu0 0.0
    %6024 = vmatpush1.xpose.msra.mxu0 %v6021
    %6025 = vmatprep.subr.mxu0 0.0
    %6026 = vmatpush1.xpose.msra.mxu0 0.0
    %6027 = vmatprep.subr.mxu0 0.0
    %6028 = vmatpush1.xpose.msra.mxu0 0.0
    %6029 = vmatprep.subr.mxu0 0.0
    %6030 = vmatpush1.xpose.msra.mxu0 0.0
    %6031 = vmatprep.subr.mxu0 0.0
    %6032 = vmatpush1.xpose.msra.mxu0 0.0
    %6033 = vmatprep.subr.mxu0 0.0
    %6034 = vmatpush1.xpose.msra.mxu0 0.0
    %6035 = vmatprep.subr.mxu0 0.0
    %6036 = vmatpush1.xpose.msra.mxu0 0.0
    %6037 = vmatprep.subr.mxu0 0.0
    %6038 = vmatpush1.xpose.msra.mxu0 0.0
    %6039 = vmatprep.subr.mxu0 0.0
    %6040 = vmatpush1.xpose.msra.mxu0 0.0
    %6041 = vmatprep.subr.mxu0 0.0
    %6042 = vmatpush1.xpose.msra.mxu0 0.0
    %6043 = vmatprep.subr.mxu0 0.0
    %6044 = vmatpush1.xpose.msra.mxu0 0.0
    %6045 = vmatprep.subr.mxu0 0.0
    %6046 = vmatpush1.xpose.msra.mxu0 0.0
    %6047 = vmatprep.subr.mxu0 0.0
    %6048 = vmatpush1.xpose.msra.mxu0 0.0
    %6049 = vmatprep.subr.mxu0 0.0
    %6050 = vmatpush1.xpose.msra.mxu0 0.0
    %6051 = vmatprep.subr.mxu0 0.0
    %6052 = vmatpush1.xpose.msra.mxu0 0.0
    %6053 = vmatprep.subr.mxu0 0.0
    %6054 = vmatpush1.xpose.msra.mxu0 0.0
    %6055 = vmatprep.subr.mxu0 0.0
    %6056 = vmatpush1.xpose.msra.mxu0 0.0
    %6057 = vmatprep.subr.mxu0 0.0
    %6058 = vmatpush1.xpose.msra.mxu0 0.0
    %6059 = vmatprep.subr.mxu0 0.0
    %6060 = vmatpush1.xpose.msra.mxu0 0.0
    %6061 = vmatprep.subr.mxu0 0.0
    %6062 = vmatpush1.xpose.msra.mxu0 0.0
    %6063 = vmatprep.subr.mxu0 0.0
    %6064 = vmatpush1.xpose.msra.mxu0 0.0
    %6065 = vmatprep.subr.mxu0 0.0
    %6066 = vmatpush1.xpose.msra.mxu0 0.0
    %6067 = vmatprep.subr.mxu0 0.0
    %6068 = vmatpush1.xpose.msra.mxu0 0.0
    %6069 = vmatprep.subr.mxu0 0.0
    %6070 = vmatpush1.xpose.msra.mxu0 0.0
    %6071 = vmatprep.subr.mxu0 0.0
    %6072 = vmatpush1.xpose.msra.mxu0 0.0
    %6073 = vmatprep.subr.mxu0 0.0
    %6074 = vmatpush1.xpose.msra.mxu0 0.0
    %6075 = vmatprep.subr.mxu0 0.0
    %6076 = vmatpush1.xpose.msra.mxu0 0.0
    %6077 = vmatprep.subr.mxu0 0.0
    %6078 = vmatpush1.xpose.msra.mxu0 0.0
    %6079 = vmatprep.subr.mxu0 0.0
    %6080 = vmatpush1.xpose.msra.mxu0 0.0
    %6081 = vmatprep.subr.mxu0 0.0
    %6082 = vmatpush1.xpose.msra.mxu0 0.0
    %6083 = vmatprep.subr.mxu0 0.0
    %6084 = vmatpush1.xpose.msra.mxu0 0.0
    %6085 = vmatprep.subr.mxu0 0.0
    %6086 = vmatpush1.xpose.msra.mxu0 0.0
    %6087 = vmatprep.mubr.f32.mxu0 0.0
    %6088 = vmatmul.mubr.f32.gmra.mrb[0].mxu0 %v6018
    %v6089 = vpop.f32.mrb[0].mxu0
    %v6090 = vadd.f32 0.0, %v6089
    %v6091 = vpop.f32.mrb[0].mxu0
    %6092 = vdwg.mxu0
    %v6093 = vmul.f32 %v6090, 0.17677669
    %v6094 = vadd.f32 %v6093, %v2668
    %v6095 = vsel %vm306, %v6094, -inf
    %6096 = vmax.xlane.f32.xlu0 %v6095
    %v6097 = vpop.xlane.xlu0 %6096
    %v6098 = vsub.f32 %v6094, %v6097
    %v6099 = vmul.f32 %v6098, 1.442695
    %v6100 = vpow.pop %v6099
    %v6101 = vsel %vm306, %v6100, 0.0
    %6102 = vadd.xlane.f32.xlu0 %v6101
    %v6103 = vpop.xlane.xlu0 %6102
    %v6104 = vrcp.pop %v6103
    %v6105 = vmul.f32 %v6100, %v6104
    %6106 = vrot.lane.b32.xlu0 %v5333, 96
    %v6107 = vpop.permute.xlu0 %6106
    %v6110 = vsel %vm306, %v6105, 0
    %6112 = vmatprep.subr.mxu0 0.0
    %6113 = vmatpush1.msra.mxu0 %v6107
    %6114 = vmatprep.subr.mxu0 0.0
    %6115 = vmatpush1.msra.mxu0 0.0
    %6116 = vmatprep.subr.mxu0 0.0
    %6117 = vmatpush1.msra.mxu0 0.0
    %6118 = vmatprep.subr.mxu0 0.0
    %6119 = vmatpush1.msra.mxu0 0.0
    %6120 = vmatprep.subr.mxu0 0.0
    %6121 = vmatpush1.msra.mxu0 0.0
    %6122 = vmatprep.subr.mxu0 0.0
    %6123 = vmatpush1.msra.mxu0 0.0
    %6124 = vmatprep.subr.mxu0 0.0
    %6125 = vmatpush1.msra.mxu0 0.0
    %6126 = vmatprep.subr.mxu0 0.0
    %6127 = vmatpush1.msra.mxu0 0.0
    %6128 = vmatprep.subr.mxu0 0.0
    %6129 = vmatpush1.msra.mxu0 0.0
    %6130 = vmatprep.subr.mxu0 0.0
    %6131 = vmatpush1.msra.mxu0 0.0
    %6132 = vmatprep.subr.mxu0 0.0
    %6133 = vmatpush1.msra.mxu0 0.0
    %6134 = vmatprep.subr.mxu0 0.0
    %6135 = vmatpush1.msra.mxu0 0.0
    %6136 = vmatprep.subr.mxu0 0.0
    %6137 = vmatpush1.msra.mxu0 0.0
    %6138 = vmatprep.subr.mxu0 0.0
    %6139 = vmatpush1.msra.mxu0 0.0
    %6140 = vmatprep.subr.mxu0 0.0
    %6141 = vmatpush1.msra.mxu0 0.0
    %6142 = vmatprep.subr.mxu0 0.0
    %6143 = vmatpush1.msra.mxu0 0.0
    %6144 = vmatprep.subr.mxu0 0.0
    %6145 = vmatpush1.msra.mxu0 0.0
    %6146 = vmatprep.subr.mxu0 0.0
    %6147 = vmatpush1.msra.mxu0 0.0
    %6148 = vmatprep.subr.mxu0 0.0
    %6149 = vmatpush1.msra.mxu0 0.0
    %6150 = vmatprep.subr.mxu0 0.0
    %6151 = vmatpush1.msra.mxu0 0.0
    %6152 = vmatprep.subr.mxu0 0.0
    %6153 = vmatpush1.msra.mxu0 0.0
    %6154 = vmatprep.subr.mxu0 0.0
    %6155 = vmatpush1.msra.mxu0 0.0
    %6156 = vmatprep.subr.mxu0 0.0
    %6157 = vmatpush1.msra.mxu0 0.0
    %6158 = vmatprep.subr.mxu0 0.0
    %6159 = vmatpush1.msra.mxu0 0.0
    %6160 = vmatprep.subr.mxu0 0.0
    %6161 = vmatpush1.msra.mxu0 0.0
    %6162 = vmatprep.subr.mxu0 0.0
    %6163 = vmatpush1.msra.mxu0 0.0
    %6164 = vmatprep.subr.mxu0 0.0
    %6165 = vmatpush1.msra.mxu0 0.0
    %6166 = vmatprep.subr.mxu0 0.0
    %6167 = vmatpush1.msra.mxu0 0.0
    %6168 = vmatprep.subr.mxu0 0.0
    %6169 = vmatpush1.msra.mxu0 0.0
    %6170 = vmatprep.subr.mxu0 0.0
    %6171 = vmatpush1.msra.mxu0 0.0
    %6172 = vmatprep.subr.mxu0 0.0
    %6173 = vmatpush1.msra.mxu0 0.0
    %6174 = vmatprep.subr.mxu0 0.0
    %6175 = vmatpush1.msra.mxu0 0.0
    %6176 = vmatprep.mubr.f32.mxu0 0.0
    %6177 = vmatmul.mubr.f32.gmra.mrb[0].mxu0 %v6110
    %v6178 = vpop.f32.mrb[0].mxu0
    %v6179 = vadd.f32 0.0, %v6178
    %v6180 = vpop.f32.mrb[0].mxu0
    %6181 = vdwg.mxu0
    %6182 = vrot.lane.b32.xlu0 %v5240, 120
    %v6183 = vpop.permute.xlu0 %6182
    %6184 = vrot.lane.b32.xlu0 %v5333, 120
    %v6185 = vpop.permute.xlu0 %6184
    %v6186 = vsel %vm306, %v6183, 0
    %v6188 = vsel %vm306, %v6185, 0
    %6190 = vmatprep.subr.mxu0 0.0
    %6191 = vmatpush1.xpose.msra.mxu0 %v6188
    %6192 = vmatprep.subr.mxu0 0.0
    %6193 = vmatpush1.xpose.msra.mxu0 0.0
    %6194 = vmatprep.subr.mxu0 0.0
    %6195 = vmatpush1.xpose.msra.mxu0 0.0
    %6196 = vmatprep.subr.mxu0 0.0
    %6197 = vmatpush1.xpose.msra.mxu0 0.0
    %6198 = vmatprep.subr.mxu0 0.0
    %6199 = vmatpush1.xpose.msra.mxu0 0.0
    %6200 = vmatprep.subr.mxu0 0.0
    %6201 = vmatpush1.xpose.msra.mxu0 0.0
    %6202 = vmatprep.subr.mxu0 0.0
    %6203 = vmatpush1.xpose.msra.mxu0 0.0
    %6204 = vmatprep.subr.mxu0 0.0
    %6205 = vmatpush1.xpose.msra.mxu0 0.0
    %6206 = vmatprep.subr.mxu0 0.0
    %6207 = vmatpush1.xpose.msra.mxu0 0.0
    %6208 = vmatprep.subr.mxu0 0.0
    %6209 = vmatpush1.xpose.msra.mxu0 0.0
    %6210 = vmatprep.subr.mxu0 0.0
    %6211 = vmatpush1.xpose.msra.mxu0 0.0
    %6212 = vmatprep.subr.mxu0 0.0
    %6213 = vmatpush1.xpose.msra.mxu0 0.0
    %6214 = vmatprep.subr.mxu0 0.0
    %6215 = vmatpush1.xpose.msra.mxu0 0.0
    %6216 = vmatprep.subr.mxu0 0.0
    %6217 = vmatpush1.xpose.msra.mxu0 0.0
    %6218 = vmatprep.subr.mxu0 0.0
    %6219 = vmatpush1.xpose.msra.mxu0 0.0
    %6220 = vmatprep.subr.mxu0 0.0
    %6221 = vmatpush1.xpose.msra.mxu0 0.0
    %6222 = vmatprep.subr.mxu0 0.0
    %6223 = vmatpush1.xpose.msra.mxu0 0.0
    %6224 = vmatprep.subr.mxu0 0.0
    %6225 = vmatpush1.xpose.msra.mxu0 0.0
    %6226 = vmatprep.subr.mxu0 0.0
    %6227 = vmatpush1.xpose.msra.mxu0 0.0
    %6228 = vmatprep.subr.mxu0 0.0
    %6229 = vmatpush1.xpose.msra.mxu0 0.0
    %6230 = vmatprep.subr.mxu0 0.0
    %6231 = vmatpush1.xpose.msra.mxu0 0.0
    %6232 = vmatprep.subr.mxu0 0.0
    %6233 = vmatpush1.xpose.msra.mxu0 0.0
    %6234 = vmatprep.subr.mxu0 0.0
    %6235 = vmatpush1.xpose.msra.mxu0 0.0
    %6236 = vmatprep.subr.mxu0 0.0
    %6237 = vmatpush1.xpose.msra.mxu0 0.0
    %6238 = vmatprep.subr.mxu0 0.0
    %6239 = vmatpush1.xpose.msra.mxu0 0.0
    %6240 = vmatprep.subr.mxu0 0.0
    %6241 = vmatpush1.xpose.msra.mxu0 0.0
    %6242 = vmatprep.subr.mxu0 0.0
    %6243 = vmatpush1.xpose.msra.mxu0 0.0
    %6244 = vmatprep.subr.mxu0 0.0
    %6245 = vmatpush1.xpose.msra.mxu0 0.0
    %6246 = vmatprep.subr.mxu0 0.0
    %6247 = vmatpush1.xpose.msra.mxu0 0.0
    %6248 = vmatprep.subr.mxu0 0.0
    %6249 = vmatpush1.xpose.msra.mxu0 0.0
    %6250 = vmatprep.subr.mxu0 0.0
    %6251 = vmatpush1.xpose.msra.mxu0 0.0
    %6252 = vmatprep.subr.mxu0 0.0
    %6253 = vmatpush1.xpose.msra.mxu0 0.0
    %6254 = vmatprep.mubr.f32.mxu0 0.0
    %6255 = vmatmul.mubr.f32.gmra.mrb[0].mxu0 %v6186
    %v6256 = vpop.f32.mrb[0].mxu0
    %v6257 = vadd.f32 0.0, %v6256
    %v6258 = vpop.f32.mrb[0].mxu0
    %6259 = vdwg.mxu0
    %v6260 = vmul.f32 %v6257, 0.17677669
    %v6261 = vadd.f32 %v6260, %v2668
    %v6262 = vsel %vm306, %v6261, -inf
    %6263 = vmax.xlane.f32.xlu0 %v6262
    %v6264 = vpop.xlane.xlu0 %6263
    %v6265 = vsub.f32 %v6261, %v6264
    %v6266 = vmul.f32 %v6265, 1.442695
    %v6267 = vpow.pop %v6266
    %v6268 = vsel %vm306, %v6267, 0.0
    %6269 = vadd.xlane.f32.xlu0 %v6268
    %v6270 = vpop.xlane.xlu0 %6269
    %v6271 = vrcp.pop %v6270
    %v6272 = vmul.f32 %v6267, %v6271
    %6273 = vrot.lane.b32.xlu0 %v5333, 88
    %v6274 = vpop.permute.xlu0 %6273
    %v6277 = vsel %vm306, %v6272, 0
    %6279 = vmatprep.subr.mxu0 0.0
    %6280 = vmatpush1.msra.mxu0 %v6274
    %6281 = vmatprep.subr.mxu0 0.0
    %6282 = vmatpush1.msra.mxu0 0.0
    %6283 = vmatprep.subr.mxu0 0.0
    %6284 = vmatpush1.msra.mxu0 0.0
    %6285 = vmatprep.subr.mxu0 0.0
    %6286 = vmatpush1.msra.mxu0 0.0
    %6287 = vmatprep.subr.mxu0 0.0
    %6288 = vmatpush1.msra.mxu0 0.0
    %6289 = vmatprep.subr.mxu0 0.0
    %6290 = vmatpush1.msra.mxu0 0.0
    %6291 = vmatprep.subr.mxu0 0.0
    %6292 = vmatpush1.msra.mxu0 0.0
    %6293 = vmatprep.subr.mxu0 0.0
    %6294 = vmatpush1.msra.mxu0 0.0
    %6295 = vmatprep.subr.mxu0 0.0
    %6296 = vmatpush1.msra.mxu0 0.0
    %6297 = vmatprep.subr.mxu0 0.0
    %6298 = vmatpush1.msra.mxu0 0.0
    %6299 = vmatprep.subr.mxu0 0.0
    %6300 = vmatpush1.msra.mxu0 0.0
    %6301 = vmatprep.subr.mxu0 0.0
    %6302 = vmatpush1.msra.mxu0 0.0
    %6303 = vmatprep.subr.mxu0 0.0
    %6304 = vmatpush1.msra.mxu0 0.0
    %6305 = vmatprep.subr.mxu0 0.0
    %6306 = vmatpush1.msra.mxu0 0.0
    %6307 = vmatprep.subr.mxu0 0.0
    %6308 = vmatpush1.msra.mxu0 0.0
    %6309 = vmatprep.subr.mxu0 0.0
    %6310 = vmatpush1.msra.mxu0 0.0
    %6311 = vmatprep.subr.mxu0 0.0
    %6312 = vmatpush1.msra.mxu0 0.0
    %6313 = vmatprep.subr.mxu0 0.0
    %6314 = vmatpush1.msra.mxu0 0.0
    %6315 = vmatprep.subr.mxu0 0.0
    %6316 = vmatpush1.msra.mxu0 0.0
    %6317 = vmatprep.subr.mxu0 0.0
    %6318 = vmatpush1.msra.mxu0 0.0
    %6319 = vmatprep.subr.mxu0 0.0
    %6320 = vmatpush1.msra.mxu0 0.0
    %6321 = vmatprep.subr.mxu0 0.0
    %6322 = vmatpush1.msra.mxu0 0.0
    %6323 = vmatprep.subr.mxu0 0.0
    %6324 = vmatpush1.msra.mxu0 0.0
    %6325 = vmatprep.subr.mxu0 0.0
    %6326 = vmatpush1.msra.mxu0 0.0
    %6327 = vmatprep.subr.mxu0 0.0
    %6328 = vmatpush1.msra.mxu0 0.0
    %6329 = vmatprep.subr.mxu0 0.0
    %6330 = vmatpush1.msra.mxu0 0.0
    %6331 = vmatprep.subr.mxu0 0.0
    %6332 = vmatpush1.msra.mxu0 0.0
    %6333 = vmatprep.subr.mxu0 0.0
    %6334 = vmatpush1.msra.mxu0 0.0
    %6335 = vmatprep.subr.mxu0 0.0
    %6336 = vmatpush1.msra.mxu0 0.0
    %6337 = vmatprep.subr.mxu0 0.0
    %6338 = vmatpush1.msra.mxu0 0.0
    %6339 = vmatprep.subr.mxu0 0.0
    %6340 = vmatpush1.msra.mxu0 0.0
    %6341 = vmatprep.subr.mxu0 0.0
    %6342 = vmatpush1.msra.mxu0 0.0
    %6343 = vmatprep.mubr.f32.mxu0 0.0
    %6344 = vmatmul.mubr.f32.gmra.mrb[0].mxu0 %v6277
    %v6345 = vpop.f32.mrb[0].mxu0
    %v6346 = vadd.f32 0.0, %v6345
    %v6347 = vpop.f32.mrb[0].mxu0
    %6348 = vdwg.mxu0
    %6349 = vrot.lane.b32.xlu0 %v5240, 112
    %v6350 = vpop.permute.xlu0 %6349
    %6351 = vrot.lane.b32.xlu0 %v5333, 112
    %v6352 = vpop.permute.xlu0 %6351
    %v6353 = vsel %vm306, %v6350, 0
    %v6355 = vsel %vm306, %v6352, 0
    %6357 = vmatprep.subr.mxu0 0.0
    %6358 = vmatpush1.xpose.msra.mxu0 %v6355
    %6359 = vmatprep.subr.mxu0 0.0
    %6360 = vmatpush1.xpose.msra.mxu0 0.0
    %6361 = vmatprep.subr.mxu0 0.0
    %6362 = vmatpush1.xpose.msra.mxu0 0.0
    %6363 = vmatprep.subr.mxu0 0.0
    %6364 = vmatpush1.xpose.msra.mxu0 0.0
    %6365 = vmatprep.subr.mxu0 0.0
    %6366 = vmatpush1.xpose.msra.mxu0 0.0
    %6367 = vmatprep.subr.mxu0 0.0
    %6368 = vmatpush1.xpose.msra.mxu0 0.0
    %6369 = vmatprep.subr.mxu0 0.0
    %6370 = vmatpush1.xpose.msra.mxu0 0.0
    %6371 = vmatprep.subr.mxu0 0.0
    %6372 = vmatpush1.xpose.msra.mxu0 0.0
    %6373 = vmatprep.subr.mxu0 0.0
    %6374 = vmatpush1.xpose.msra.mxu0 0.0
    %6375 = vmatprep.subr.mxu0 0.0
    %6376 = vmatpush1.xpose.msra.mxu0 0.0
    %6377 = vmatprep.subr.mxu0 0.0
    %6378 = vmatpush1.xpose.msra.mxu0 0.0
    %6379 = vmatprep.subr.mxu0 0.0
    %6380 = vmatpush1.xpose.msra.mxu0 0.0
    %6381 = vmatprep.subr.mxu0 0.0
    %6382 = vmatpush1.xpose.msra.mxu0 0.0
    %6383 = vmatprep.subr.mxu0 0.0
    %6384 = vmatpush1.xpose.msra.mxu0 0.0
    %6385 = vmatprep.subr.mxu0 0.0
    %6386 = vmatpush1.xpose.msra.mxu0 0.0
    %6387 = vmatprep.subr.mxu0 0.0
    %6388 = vmatpush1.xpose.msra.mxu0 0.0
    %6389 = vmatprep.subr.mxu0 0.0
    %6390 = vmatpush1.xpose.msra.mxu0 0.0
    %6391 = vmatprep.subr.mxu0 0.0
    %6392 = vmatpush1.xpose.msra.mxu0 0.0
    %6393 = vmatprep.subr.mxu0 0.0
    %6394 = vmatpush1.xpose.msra.mxu0 0.0
    %6395 = vmatprep.subr.mxu0 0.0
    %6396 = vmatpush1.xpose.msra.mxu0 0.0
    %6397 = vmatprep.subr.mxu0 0.0
    %6398 = vmatpush1.xpose.msra.mxu0 0.0
    %6399 = vmatprep.subr.mxu0 0.0
    %6400 = vmatpush1.xpose.msra.mxu0 0.0
    %6401 = vmatprep.subr.mxu0 0.0
    %6402 = vmatpush1.xpose.msra.mxu0 0.0
    %6403 = vmatprep.subr.mxu0 0.0
    %6404 = vmatpush1.xpose.msra.mxu0 0.0
    %6405 = vmatprep.subr.mxu0 0.0
    %6406 = vmatpush1.xpose.msra.mxu0 0.0
    %6407 = vmatprep.subr.mxu0 0.0
    %6408 = vmatpush1.xpose.msra.mxu0 0.0
    %6409 = vmatprep.subr.mxu0 0.0
    %6410 = vmatpush1.xpose.msra.mxu0 0.0
    %6411 = vmatprep.subr.mxu0 0.0
    %6412 = vmatpush1.xpose.msra.mxu0 0.0
    %6413 = vmatprep.subr.mxu0 0.0
    %6414 = vmatpush1.xpose.msra.mxu0 0.0
    %6415 = vmatprep.subr.mxu0 0.0
    %6416 = vmatpush1.xpose.msra.mxu0 0.0
    %6417 = vmatprep.subr.mxu0 0.0
    %6418 = vmatpush1.xpose.msra.mxu0 0.0
    %6419 = vmatprep.subr.mxu0 0.0
    %6420 = vmatpush1.xpose.msra.mxu0 0.0
    %6421 = vmatprep.mubr.f32.mxu0 0.0
    %6422 = vmatmul.mubr.f32.gmra.mrb[0].mxu0 %v6353
    %v6423 = vpop.f32.mrb[0].mxu0
    %v6424 = vadd.f32 0.0, %v6423
    %v6425 = vpop.f32.mrb[0].mxu0
    %6426 = vdwg.mxu0
    %v6427 = vmul.f32 %v6424, 0.17677669
    %v6428 = vadd.f32 %v6427, %v2668
    %v6429 = vsel %vm306, %v6428, -inf
    %6430 = vmax.xlane.f32.xlu0 %v6429
    %v6431 = vpop.xlane.xlu0 %6430
    %v6432 = vsub.f32 %v6428, %v6431
    %v6433 = vmul.f32 %v6432, 1.442695
    %v6434 = vpow.pop %v6433
    %v6435 = vsel %vm306, %v6434, 0.0
    %6436 = vadd.xlane.f32.xlu0 %v6435
    %v6437 = vpop.xlane.xlu0 %6436
    %v6438 = vrcp.pop %v6437
    %v6439 = vmul.f32 %v6434, %v6438
    %6440 = vrot.lane.b32.xlu0 %v5333, 80
    %v6441 = vpop.permute.xlu0 %6440
    %v6444 = vsel %vm306, %v6439, 0
    %6446 = vmatprep.subr.mxu0 0.0
    %6447 = vmatpush1.msra.mxu0 %v6441
    %6448 = vmatprep.subr.mxu0 0.0
    %6449 = vmatpush1.msra.mxu0 0.0
    %6450 = vmatprep.subr.mxu0 0.0
    %6451 = vmatpush1.msra.mxu0 0.0
    %6452 = vmatprep.subr.mxu0 0.0
    %6453 = vmatpush1.msra.mxu0 0.0
    %6454 = vmatprep.subr.mxu0 0.0
    %6455 = vmatpush1.msra.mxu0 0.0
    %6456 = vmatprep.subr.mxu0 0.0
    %6457 = vmatpush1.msra.mxu0 0.0
    %6458 = vmatprep.subr.mxu0 0.0
    %6459 = vmatpush1.msra.mxu0 0.0
    %6460 = vmatprep.subr.mxu0 0.0
    %6461 = vmatpush1.msra.mxu0 0.0
    %6462 = vmatprep.subr.mxu0 0.0
    %6463 = vmatpush1.msra.mxu0 0.0
    %6464 = vmatprep.subr.mxu0 0.0
    %6465 = vmatpush1.msra.mxu0 0.0
    %6466 = vmatprep.subr.mxu0 0.0
    %6467 = vmatpush1.msra.mxu0 0.0
    %6468 = vmatprep.subr.mxu0 0.0
    %6469 = vmatpush1.msra.mxu0 0.0
    %6470 = vmatprep.subr.mxu0 0.0
    %6471 = vmatpush1.msra.mxu0 0.0
    %6472 = vmatprep.subr.mxu0 0.0
    %6473 = vmatpush1.msra.mxu0 0.0
    %6474 = vmatprep.subr.mxu0 0.0
    %6475 = vmatpush1.msra.mxu0 0.0
    %6476 = vmatprep.subr.mxu0 0.0
    %6477 = vmatpush1.msra.mxu0 0.0
    %6478 = vmatprep.subr.mxu0 0.0
    %6479 = vmatpush1.msra.mxu0 0.0
    %6480 = vmatprep.subr.mxu0 0.0
    %6481 = vmatpush1.msra.mxu0 0.0
    %6482 = vmatprep.subr.mxu0 0.0
    %6483 = vmatpush1.msra.mxu0 0.0
    %6484 = vmatprep.subr.mxu0 0.0
    %6485 = vmatpush1.msra.mxu0 0.0
    %6486 = vmatprep.subr.mxu0 0.0
    %6487 = vmatpush1.msra.mxu0 0.0
    %6488 = vmatprep.subr.mxu0 0.0
    %6489 = vmatpush1.msra.mxu0 0.0
    %6490 = vmatprep.subr.mxu0 0.0
    %6491 = vmatpush1.msra.mxu0 0.0
    %6492 = vmatprep.subr.mxu0 0.0
    %6493 = vmatpush1.msra.mxu0 0.0
    %6494 = vmatprep.subr.mxu0 0.0
    %6495 = vmatpush1.msra.mxu0 0.0
    %6496 = vmatprep.subr.mxu0 0.0
    %6497 = vmatpush1.msra.mxu0 0.0
    %6498 = vmatprep.subr.mxu0 0.0
    %6499 = vmatpush1.msra.mxu0 0.0
    %6500 = vmatprep.subr.mxu0 0.0
    %6501 = vmatpush1.msra.mxu0 0.0
    %6502 = vmatprep.subr.mxu0 0.0
    %6503 = vmatpush1.msra.mxu0 0.0
    %6504 = vmatprep.subr.mxu0 0.0
    %6505 = vmatpush1.msra.mxu0 0.0
    %6506 = vmatprep.subr.mxu0 0.0
    %6507 = vmatpush1.msra.mxu0 0.0
    %6508 = vmatprep.subr.mxu0 0.0
    %6509 = vmatpush1.msra.mxu0 0.0
    %6510 = vmatprep.mubr.f32.mxu0 0.0
    %6511 = vmatmul.mubr.f32.gmra.mrb[0].mxu0 %v6444
    %v6512 = vpop.f32.mrb[0].mxu0
    %v6513 = vadd.f32 0.0, %v6512
    %v6514 = vpop.f32.mrb[0].mxu0
    %6515 = vdwg.mxu0
    %6516 = vrot.lane.b32.xlu0 %v5240, 104
    %v6517 = vpop.permute.xlu0 %6516
    %6518 = vrot.lane.b32.xlu0 %v5333, 104
    %v6519 = vpop.permute.xlu0 %6518
    %v6520 = vsel %vm306, %v6517, 0
    %v6522 = vsel %vm306, %v6519, 0
    %6524 = vmatprep.subr.mxu0 0.0
    %6525 = vmatpush1.xpose.msra.mxu0 %v6522
    %6526 = vmatprep.subr.mxu0 0.0
    %6527 = vmatpush1.xpose.msra.mxu0 0.0
    %6528 = vmatprep.subr.mxu0 0.0
    %6529 = vmatpush1.xpose.msra.mxu0 0.0
    %6530 = vmatprep.subr.mxu0 0.0
    %6531 = vmatpush1.xpose.msra.mxu0 0.0
    %6532 = vmatprep.subr.mxu0 0.0
    %6533 = vmatpush1.xpose.msra.mxu0 0.0
    %6534 = vmatprep.subr.mxu0 0.0
    %6535 = vmatpush1.xpose.msra.mxu0 0.0
    %6536 = vmatprep.subr.mxu0 0.0
    %6537 = vmatpush1.xpose.msra.mxu0 0.0
    %6538 = vmatprep.subr.mxu0 0.0
    %6539 = vmatpush1.xpose.msra.mxu0 0.0
    %6540 = vmatprep.subr.mxu0 0.0
    %6541 = vmatpush1.xpose.msra.mxu0 0.0
    %6542 = vmatprep.subr.mxu0 0.0
    %6543 = vmatpush1.xpose.msra.mxu0 0.0
    %6544 = vmatprep.subr.mxu0 0.0
    %6545 = vmatpush1.xpose.msra.mxu0 0.0
    %6546 = vmatprep.subr.mxu0 0.0
    %6547 = vmatpush1.xpose.msra.mxu0 0.0
    %6548 = vmatprep.subr.mxu0 0.0
    %6549 = vmatpush1.xpose.msra.mxu0 0.0
    %6550 = vmatprep.subr.mxu0 0.0
    %6551 = vmatpush1.xpose.msra.mxu0 0.0
    %6552 = vmatprep.subr.mxu0 0.0
    %6553 = vmatpush1.xpose.msra.mxu0 0.0
    %6554 = vmatprep.subr.mxu0 0.0
    %6555 = vmatpush1.xpose.msra.mxu0 0.0
    %6556 = vmatprep.subr.mxu0 0.0
    %6557 = vmatpush1.xpose.msra.mxu0 0.0
    %6558 = vmatprep.subr.mxu0 0.0
    %6559 = vmatpush1.xpose.msra.mxu0 0.0
    %6560 = vmatprep.subr.mxu0 0.0
    %6561 = vmatpush1.xpose.msra.mxu0 0.0
    %6562 = vmatprep.subr.mxu0 0.0
    %6563 = vmatpush1.xpose.msra.mxu0 0.0
    %6564 = vmatprep.subr.mxu0 0.0
    %6565 = vmatpush1.xpose.msra.mxu0 0.0
    %6566 = vmatprep.subr.mxu0 0.0
    %6567 = vmatpush1.xpose.msra.mxu0 0.0
    %6568 = vmatprep.subr.mxu0 0.0
    %6569 = vmatpush1.xpose.msra.mxu0 0.0
    %6570 = vmatprep.subr.mxu0 0.0
    %6571 = vmatpush1.xpose.msra.mxu0 0.0
    %6572 = vmatprep.subr.mxu0 0.0
    %6573 = vmatpush1.xpose.msra.mxu0 0.0
    %6574 = vmatprep.subr.mxu0 0.0
    %6575 = vmatpush1.xpose.msra.mxu0 0.0
    %6576 = vmatprep.subr.mxu0 0.0
    %6577 = vmatpush1.xpose.msra.mxu0 0.0
    %6578 = vmatprep.subr.mxu0 0.0
    %6579 = vmatpush1.xpose.msra.mxu0 0.0
    %6580 = vmatprep.subr.mxu0 0.0
    %6581 = vmatpush1.xpose.msra.mxu0 0.0
    %6582 = vmatprep.subr.mxu0 0.0
    %6583 = vmatpush1.xpose.msra.mxu0 0.0
    %6584 = vmatprep.subr.mxu0 0.0
    %6585 = vmatpush1.xpose.msra.mxu0 0.0
    %6586 = vmatprep.subr.mxu0 0.0
    %6587 = vmatpush1.xpose.msra.mxu0 0.0
    %6588 = vmatprep.mubr.f32.mxu0 0.0
    %6589 = vmatmul.mubr.f32.gmra.mrb[0].mxu0 %v6520
    %v6590 = vpop.f32.mrb[0].mxu0
    %v6591 = vadd.f32 0.0, %v6590
    %v6592 = vpop.f32.mrb[0].mxu0
    %6593 = vdwg.mxu0
    %v6594 = vmul.f32 %v6591, 0.17677669
    %v6595 = vadd.f32 %v6594, %v2668
    %v6596 = vsel %vm306, %v6595, -inf
    %6597 = vmax.xlane.f32.xlu0 %v6596
    %v6598 = vpop.xlane.xlu0 %6597
    %v6599 = vsub.f32 %v6595, %v6598
    %v6600 = vmul.f32 %v6599, 1.442695
    %v6601 = vpow.pop %v6600
    %v6602 = vsel %vm306, %v6601, 0.0
    %6603 = vadd.xlane.f32.xlu0 %v6602
    %v6604 = vpop.xlane.xlu0 %6603
    %v6605 = vrcp.pop %v6604
    %v6606 = vmul.f32 %v6601, %v6605
    %6607 = vrot.lane.b32.xlu0 %v5333, 72
    %v6608 = vpop.permute.xlu0 %6607
    %v6611 = vsel %vm306, %v6606, 0
    %6613 = vmatprep.subr.mxu0 0.0
    %6614 = vmatpush1.msra.mxu0 %v6608
    %6615 = vmatprep.subr.mxu0 0.0
    %6616 = vmatpush1.msra.mxu0 0.0
    %6617 = vmatprep.subr.mxu0 0.0
    %6618 = vmatpush1.msra.mxu0 0.0
    %6619 = vmatprep.subr.mxu0 0.0
    %6620 = vmatpush1.msra.mxu0 0.0
    %6621 = vmatprep.subr.mxu0 0.0
    %6622 = vmatpush1.msra.mxu0 0.0
    %6623 = vmatprep.subr.mxu0 0.0
    %6624 = vmatpush1.msra.mxu0 0.0
    %6625 = vmatprep.subr.mxu0 0.0
    %6626 = vmatpush1.msra.mxu0 0.0
    %6627 = vmatprep.subr.mxu0 0.0
    %6628 = vmatpush1.msra.mxu0 0.0
    %6629 = vmatprep.subr.mxu0 0.0
    %6630 = vmatpush1.msra.mxu0 0.0
    %6631 = vmatprep.subr.mxu0 0.0
    %6632 = vmatpush1.msra.mxu0 0.0
    %6633 = vmatprep.subr.mxu0 0.0
    %6634 = vmatpush1.msra.mxu0 0.0
    %6635 = vmatprep.subr.mxu0 0.0
    %6636 = vmatpush1.msra.mxu0 0.0
    %6637 = vmatprep.subr.mxu0 0.0
    %6638 = vmatpush1.msra.mxu0 0.0
    %6639 = vmatprep.subr.mxu0 0.0
    %6640 = vmatpush1.msra.mxu0 0.0
    %6641 = vmatprep.subr.mxu0 0.0
    %6642 = vmatpush1.msra.mxu0 0.0
    %6643 = vmatprep.subr.mxu0 0.0
    %6644 = vmatpush1.msra.mxu0 0.0
    %6645 = vmatprep.subr.mxu0 0.0
    %6646 = vmatpush1.msra.mxu0 0.0
    %6647 = vmatprep.subr.mxu0 0.0
    %6648 = vmatpush1.msra.mxu0 0.0
    %6649 = vmatprep.subr.mxu0 0.0
    %6650 = vmatpush1.msra.mxu0 0.0
    %6651 = vmatprep.subr.mxu0 0.0
    %6652 = vmatpush1.msra.mxu0 0.0
    %6653 = vmatprep.subr.mxu0 0.0
    %6654 = vmatpush1.msra.mxu0 0.0
    %6655 = vmatprep.subr.mxu0 0.0
    %6656 = vmatpush1.msra.mxu0 0.0
    %6657 = vmatprep.subr.mxu0 0.0
    %6658 = vmatpush1.msra.mxu0 0.0
    %6659 = vmatprep.subr.mxu0 0.0
    %6660 = vmatpush1.msra.mxu0 0.0
    %6661 = vmatprep.subr.mxu0 0.0
    %6662 = vmatpush1.msra.mxu0 0.0
    %6663 = vmatprep.subr.mxu0 0.0
    %6664 = vmatpush1.msra.mxu0 0.0
    %6665 = vmatprep.subr.mxu0 0.0
    %6666 = vmatpush1.msra.mxu0 0.0
    %6667 = vmatprep.subr.mxu0 0.0
    %6668 = vmatpush1.msra.mxu0 0.0
    %6669 = vmatprep.subr.mxu0 0.0
    %6670 = vmatpush1.msra.mxu0 0.0
    %6671 = vmatprep.subr.mxu0 0.0
    %6672 = vmatpush1.msra.mxu0 0.0
    %6673 = vmatprep.subr.mxu0 0.0
    %6674 = vmatpush1.msra.mxu0 0.0
    %6675 = vmatprep.subr.mxu0 0.0
    %6676 = vmatpush1.msra.mxu0 0.0
    %6677 = vmatprep.mubr.f32.mxu0 0.0
    %6678 = vmatmul.mubr.f32.gmra.mrb[0].mxu0 %v6611
    %v6679 = vpop.f32.mrb[0].mxu0
    %v6680 = vadd.f32 0.0, %v6679
    %v6681 = vpop.f32.mrb[0].mxu0
    %6682 = vdwg.mxu0
    %6684 = vrot.lane.b32.xlu0 %v6346, 8
    %v6685 = vpop.permute.xlu0 %6684
    %6688 = vrot.lane.b32.xlu0 %v6513, 16
    %v6689 = vpop.permute.xlu0 %6688
    %6692 = vrot.lane.b32.xlu0 %v6680, 24
    %v6693 = vpop.permute.xlu0 %6692
    %v6695 = vsel %vm306, %v6179, %v6685
    %v6696 = vsel %vm985, %v6695, %v6689
    %v6697 = vsel %vm987, %v6696, %v6693
    %v6699 = vlaneseq
    %v6700 = vshrl.u32 %v6699, 7
    %v6701 = vsub.s32 0, %v6700
    %v6702 = vrot.slane %v5254, %v6701
    %v6705 = vsel %vm224, %v6016, 0
    %v6708 = vsel %vm224, %v6697, 0
    %6710 = vmatprep.subr.mxu0 0.0
    %6711 = vmatpush1.msra.mxu0 %v5249
    %6712 = vmatprep.subr.mxu0 0.0
    %6713 = vmatpush1.msra.mxu0 %v5250
    %6714 = vmatprep.subr.mxu0 0.0
    %6715 = vmatpush1.msra.mxu0 %v5251
    %6716 = vmatprep.subr.mxu0 0.0
    %6717 = vmatpush1.msra.mxu0 %v5252
    %6718 = vmatprep.subr.mxu0 0.0
    %6719 = vmatpush1.msra.mxu0 0.0
    %6720 = vmatprep.subr.mxu0 0.0
    %6721 = vmatpush1.msra.mxu0 0.0
    %6722 = vmatprep.subr.mxu0 0.0
    %6723 = vmatpush1.msra.mxu0 0.0
    %6724 = vmatprep.subr.mxu0 0.0
    %6725 = vmatpush1.msra.mxu0 0.0
    %6726 = vmatprep.subr.mxu0 0.0
    %6727 = vmatpush1.msra.mxu0 0.0
    %6728 = vmatprep.subr.mxu0 0.0
    %6729 = vmatpush1.msra.mxu0 0.0
    %6730 = vmatprep.subr.mxu0 0.0
    %6731 = vmatpush1.msra.mxu0 0.0
    %6732 = vmatprep.subr.mxu0 0.0
    %6733 = vmatpush1.msra.mxu0 0.0
    %6734 = vmatprep.subr.mxu0 0.0
    %6735 = vmatpush1.msra.mxu0 0.0
    %6736 = vmatprep.subr.mxu0 0.0
    %6737 = vmatpush1.msra.mxu0 0.0
    %6738 = vmatprep.subr.mxu0 0.0
    %6739 = vmatpush1.msra.mxu0 0.0
    %6740 = vmatprep.subr.mxu0 0.0
    %6741 = vmatpush1.msra.mxu0 0.0
    %6742 = vmatprep.subr.mxu0 0.0
    %6743 = vmatpush1.msra.mxu0 0.0
    %6744 = vmatprep.subr.mxu0 0.0
    %6745 = vmatpush1.msra.mxu0 0.0
    %6746 = vmatprep.subr.mxu0 0.0
    %6747 = vmatpush1.msra.mxu0 0.0
    %6748 = vmatprep.subr.mxu0 0.0
    %6749 = vmatpush1.msra.mxu0 0.0
    %6750 = vmatprep.subr.mxu0 0.0
    %6751 = vmatpush1.msra.mxu0 0.0
    %6752 = vmatprep.subr.mxu0 0.0
    %6753 = vmatpush1.msra.mxu0 0.0
    %6754 = vmatprep.subr.mxu0 0.0
    %6755 = vmatpush1.msra.mxu0 0.0
    %6756 = vmatprep.subr.mxu0 0.0
    %6757 = vmatpush1.msra.mxu0 0.0
    %6758 = vmatprep.subr.mxu0 0.0
    %6759 = vmatpush1.msra.mxu0 0.0
    %6760 = vmatprep.subr.mxu0 0.0
    %6761 = vmatpush1.msra.mxu0 0.0
    %6762 = vmatprep.subr.mxu0 0.0
    %6763 = vmatpush1.msra.mxu0 0.0
    %6764 = vmatprep.subr.mxu0 0.0
    %6765 = vmatpush1.msra.mxu0 0.0
    %6766 = vmatprep.subr.mxu0 0.0
    %6767 = vmatpush1.msra.mxu0 0.0
    %6768 = vmatprep.subr.mxu0 0.0
    %6769 = vmatpush1.msra.mxu0 0.0
    %6770 = vmatprep.subr.mxu0 0.0
    %6771 = vmatpush1.msra.mxu0 0.0
    %6772 = vmatprep.subr.mxu0 0.0
    %6773 = vmatpush1.msra.mxu0 0.0
    %6774 = vmatprep.mubr.f32.mxu0 0.0
    %6775 = vmatmul.mubr.f32.gmra.mrb[0].mxu0 %v6705
    %v6776 = vpop.f32.mrb[0].mxu0
    %v6777 = vadd.f32 %v6702, %v6776
    %v6778 = vpop.f32.mrb[0].mxu0
    %6779 = vmatprep.mubr.f32.mxu0 0.0
    %6780 = vmatmul.mubr.f32.gmra.mrb[0].mxu0 %v6708
    %v6781 = vpop.f32.mrb[0].mxu0
    %v6782 = vadd.f32 %v6702, %v6781
    %v6783 = vpop.f32.mrb[0].mxu0
    %6784 = vdwg.mxu0
    %v6785 = vadd.f32 %v6777, %v5239
    %v6786 = vadd.f32 %v6782, %v5240
    %s6787 = scalar_lea.vmem %s16, 1
    %v6788 = vld [vmem:[%s6787] sm:$0x1]
    %s6789 = scalar_lea.vmem %s17, 1
    %v6790 = vld [vmem:[%s6789] sm:$0x1]
    %v6791 = vsel %vm224, %v6785, 0.0
    %6792 = vadd.xlane.f32.xlu0 %v6791
    %v6793 = vpop.xlane.xlu0 %6792
    %v6794 = vsel %vm224, %v6786, 0.0
    %6795 = vadd.xlane.f32.xlu0 %v6794
    %v6796 = vpop.xlane.xlu0 %6795
    %v6797 = vmul.f32 %v6793, %v1766
    %v6798 = vmul.f32 %v6796, %v1766
    %v6799 = vsub.f32 %v6785, %v6797
    %v6800 = vsub.f32 %v6786, %v6798
    %v6801 = vmul.f32 %v6799, %v6799
    %v6802 = vmul.f32 %v6800, %v6800
    %v6803 = vsel %vm224, %v6801, 0.0
    %6804 = vadd.xlane.f32.xlu0 %v6803
    %v6805 = vpop.xlane.xlu0 %6804
    %v6806 = vsel %vm224, %v6802, 0.0
    %6807 = vadd.xlane.f32.xlu0 %v6806
    %v6808 = vpop.xlane.xlu0 %6807
    %v6809 = vmul.f32 %v6805, %v1766
    %v6810 = vmul.f32 %v6808, %v1766
    %v6811 = vadd.f32 %v6809, 1e-05
    %v6812 = vadd.f32 %v6810, 1e-05
    %v6813 = vrsqrt.pop %v6811
    %v6814 = vrsqrt.pop %v6812
    %v6815 = vmul.f32 %v6799, %v6813
    %v6816 = vmul.f32 %v6800, %v6814
    %v6818 = vlaneseq
    %v6819 = vshrl.u32 %v6818, 7
    %v6820 = vsub.s32 0, %v6819
    %v6821 = vrot.slane %v6788, %v6820
    %v6823 = vmul.f32 %v6815, %v6821
    %v6824 = vmul.f32 %v6816, %v6821
    %v6826 = vlaneseq
    %v6827 = vshrl.u32 %v6826, 7
    %v6828 = vsub.s32 0, %v6827
    %v6829 = vrot.slane %v6790, %v6828
    %v6831 = vadd.f32 %v6823, %v6829
    %v6832 = vadd.f32 %v6824, %v6829
    %s6833 = scalar_lea.vmem %s20, 32
    %v6834 = vld [vmem:[%s6833] sm:$0xff]
    %v6835 = vld [vmem:[%s6833 + $0x8] sm:$0xff]
    %v6836 = vld [vmem:[%s6833 + $0x10] sm:$0xff]
    %v6837 = vld [vmem:[%s6833 + $0x18] sm:$0xff]
    %s6838 = scalar_lea.vmem %s21, 1
    %v6839 = vld [vmem:[%s6838] sm:$0x1]
    %v6841 = vlaneseq
    %v6842 = vshrl.u32 %v6841, 7
    %v6843 = vsub.s32 0, %v6842
    %v6844 = vrot.slane %v6839, %v6843
    %v6847 = vsel %vm224, %v6831, 0
    %v6850 = vsel %vm224, %v6832, 0
    %6852 = vmatprep.subr.mxu0 0.0
    %6853 = vmatpush1.msra.mxu0 %v6834
    %6854 = vmatprep.subr.mxu0 0.0
    %6855 = vmatpush1.msra.mxu0 %v6835
    %6856 = vmatprep.subr.mxu0 0.0
    %6857 = vmatpush1.msra.mxu0 %v6836
    %6858 = vmatprep.subr.mxu0 0.0
    %6859 = vmatpush1.msra.mxu0 %v6837
    %6860 = vmatprep.subr.mxu0 0.0
    %6861 = vmatpush1.msra.mxu0 0.0
    %6862 = vmatprep.subr.mxu0 0.0
    %6863 = vmatpush1.msra.mxu0 0.0
    %6864 = vmatprep.subr.mxu0 0.0
    %6865 = vmatpush1.msra.mxu0 0.0
    %6866 = vmatprep.subr.mxu0 0.0
    %6867 = vmatpush1.msra.mxu0 0.0
    %6868 = vmatprep.subr.mxu0 0.0
    %6869 = vmatpush1.msra.mxu0 0.0
    %6870 = vmatprep.subr.mxu0 0.0
    %6871 = vmatpush1.msra.mxu0 0.0
    %6872 = vmatprep.subr.mxu0 0.0
    %6873 = vmatpush1.msra.mxu0 0.0
    %6874 = vmatprep.subr.mxu0 0.0
    %6875 = vmatpush1.msra.mxu0 0.0
    %6876 = vmatprep.subr.mxu0 0.0
    %6877 = vmatpush1.msra.mxu0 0.0
    %6878 = vmatprep.subr.mxu0 0.0
    %6879 = vmatpush1.msra.mxu0 0.0
    %6880 = vmatprep.subr.mxu0 0.0
    %6881 = vmatpush1.msra.mxu0 0.0
    %6882 = vmatprep.subr.mxu0 0.0
    %6883 = vmatpush1.msra.mxu0 0.0
    %6884 = vmatprep.subr.mxu0 0.0
    %6885 = vmatpush1.msra.mxu0 0.0
    %6886 = vmatprep.subr.mxu0 0.0
    %6887 = vmatpush1.msra.mxu0 0.0
    %6888 = vmatprep.subr.mxu0 0.0
    %6889 = vmatpush1.msra.mxu0 0.0
    %6890 = vmatprep.subr.mxu0 0.0
    %6891 = vmatpush1.msra.mxu0 0.0
    %6892 = vmatprep.subr.mxu0 0.0
    %6893 = vmatpush1.msra.mxu0 0.0
    %6894 = vmatprep.subr.mxu0 0.0
    %6895 = vmatpush1.msra.mxu0 0.0
    %6896 = vmatprep.subr.mxu0 0.0
    %6897 = vmatpush1.msra.mxu0 0.0
    %6898 = vmatprep.subr.mxu0 0.0
    %6899 = vmatpush1.msra.mxu0 0.0
    %6900 = vmatprep.subr.mxu0 0.0
    %6901 = vmatpush1.msra.mxu0 0.0
    %6902 = vmatprep.subr.mxu0 0.0
    %6903 = vmatpush1.msra.mxu0 0.0
    %6904 = vmatprep.subr.mxu0 0.0
    %6905 = vmatpush1.msra.mxu0 0.0
    %6906 = vmatprep.subr.mxu0 0.0
    %6907 = vmatpush1.msra.mxu0 0.0
    %6908 = vmatprep.subr.mxu0 0.0
    %6909 = vmatpush1.msra.mxu0 0.0
    %6910 = vmatprep.subr.mxu0 0.0
    %6911 = vmatpush1.msra.mxu0 0.0
    %6912 = vmatprep.subr.mxu0 0.0
    %6913 = vmatpush1.msra.mxu0 0.0
    %6914 = vmatprep.subr.mxu0 0.0
    %6915 = vmatpush1.msra.mxu0 0.0
    %6916 = vmatprep.mubr.f32.mxu0 0.0
    %6917 = vmatmul.mubr.f32.gmra.mrb[0].mxu0 %v6847
    %v6918 = vpop.f32.mrb[0].mxu0
    %v6919 = vadd.f32 %v6844, %v6918
    %v6920 = vpop.f32.mrb[0].mxu0
    %6921 = vmatprep.mubr.f32.mxu0 0.0
    %6922 = vmatmul.mubr.f32.gmra.mrb[0].mxu0 %v6850
    %v6923 = vpop.f32.mrb[0].mxu0
    %v6924 = vadd.f32 %v6844, %v6923
    %v6925 = vpop.f32.mrb[0].mxu0
    %6926 = vdwg.mxu0
    %v6927 = vmax.f32 %v6919, 0.0
    %v6928 = vmax.f32 %v6924, 0.0
    %s6929 = scalar_lea.vmem %s22, 128
    %v6930 = vld [vmem:[%s6929] sm:$0xff]
    %v6931 = vld [vmem:[%s6929 + $0x8] sm:$0xff]
    %v6932 = vld [vmem:[%s6929 + $0x10] sm:$0xff]
    %v6933 = vld [vmem:[%s6929 + $0x18] sm:$0xff]
    %v6934 = vld [vmem:[%s6929 + $0x20] sm:$0xff]
    %v6935 = vld [vmem:[%s6929 + $0x28] sm:$0xff]
    %v6936 = vld [vmem:[%s6929 + $0x30] sm:$0xff]
    %v6937 = vld [vmem:[%s6929 + $0x38] sm:$0xff]
    %v6938 = vld [vmem:[%s6929 + $0x40] sm:$0xff]
    %v6939 = vld [vmem:[%s6929 + $0x48] sm:$0xff]
    %v6940 = vld [vmem:[%s6929 + $0x50] sm:$0xff]
    %v6941 = vld [vmem:[%s6929 + $0x58] sm:$0xff]
    %v6942 = vld [vmem:[%s6929 + $0x60] sm:$0xff]
    %v6943 = vld [vmem:[%s6929 + $0x68] sm:$0xff]
    %v6944 = vld [vmem:[%s6929 + $0x70] sm:$0xff]
    %v6945 = vld [vmem:[%s6929 + $0x78] sm:$0xff]
    %s6946 = scalar_lea.vmem %s23, 1
    %v6947 = vld [vmem:[%s6946] sm:$0x1]
    %v6949 = vlaneseq
    %v6950 = vshrl.u32 %v6949, 7
    %v6951 = vsub.s32 0, %v6950
    %v6952 = vrot.slane %v6947, %v6951
    %6954 = vmatprep.subr.mxu0 0.0
    %6955 = vmatpush1.msra.mxu0 %v6930
    %6956 = vmatprep.subr.mxu0 0.0
    %6957 = vmatpush1.msra.mxu0 %v6931
    %6958 = vmatprep.subr.mxu0 0.0
    %6959 = vmatpush1.msra.mxu0 %v6932
    %6960 = vmatprep.subr.mxu0 0.0
    %6961 = vmatpush1.msra.mxu0 %v6933
    %6962 = vmatprep.subr.mxu0 0.0
    %6963 = vmatpush1.msra.mxu0 %v6934
    %6964 = vmatprep.subr.mxu0 0.0
    %6965 = vmatpush1.msra.mxu0 %v6935
    %6966 = vmatprep.subr.mxu0 0.0
    %6967 = vmatpush1.msra.mxu0 %v6936
    %6968 = vmatprep.subr.mxu0 0.0
    %6969 = vmatpush1.msra.mxu0 %v6937
    %6970 = vmatprep.subr.mxu0 0.0
    %6971 = vmatpush1.msra.mxu0 %v6938
    %6972 = vmatprep.subr.mxu0 0.0
    %6973 = vmatpush1.msra.mxu0 %v6939
    %6974 = vmatprep.subr.mxu0 0.0
    %6975 = vmatpush1.msra.mxu0 %v6940
    %6976 = vmatprep.subr.mxu0 0.0
    %6977 = vmatpush1.msra.mxu0 %v6941
    %6978 = vmatprep.subr.mxu0 0.0
    %6979 = vmatpush1.msra.mxu0 %v6942
    %6980 = vmatprep.subr.mxu0 0.0
    %6981 = vmatpush1.msra.mxu0 %v6943
    %6982 = vmatprep.subr.mxu0 0.0
    %6983 = vmatpush1.msra.mxu0 %v6944
    %6984 = vmatprep.subr.mxu0 0.0
    %6985 = vmatpush1.msra.mxu0 %v6945
    %6986 = vmatprep.subr.mxu0 0.0
    %6987 = vmatpush1.msra.mxu0 0.0
    %6988 = vmatprep.subr.mxu0 0.0
    %6989 = vmatpush1.msra.mxu0 0.0
    %6990 = vmatprep.subr.mxu0 0.0
    %6991 = vmatpush1.msra.mxu0 0.0
    %6992 = vmatprep.subr.mxu0 0.0
    %6993 = vmatpush1.msra.mxu0 0.0
    %6994 = vmatprep.subr.mxu0 0.0
    %6995 = vmatpush1.msra.mxu0 0.0
    %6996 = vmatprep.subr.mxu0 0.0
    %6997 = vmatpush1.msra.mxu0 0.0
    %6998 = vmatprep.subr.mxu0 0.0
    %6999 = vmatpush1.msra.mxu0 0.0
    %7000 = vmatprep.subr.mxu0 0.0
    %7001 = vmatpush1.msra.mxu0 0.0
    %7002 = vmatprep.subr.mxu0 0.0
    %7003 = vmatpush1.msra.mxu0 0.0
    %7004 = vmatprep.subr.mxu0 0.0
    %7005 = vmatpush1.msra.mxu0 0.0
    %7006 = vmatprep.subr.mxu0 0.0
    %7007 = vmatpush1.msra.mxu0 0.0
    %7008 = vmatprep.subr.mxu0 0.0
    %7009 = vmatpush1.msra.mxu0 0.0
    %7010 = vmatprep.subr.mxu0 0.0
    %7011 = vmatpush1.msra.mxu0 0.0
    %7012 = vmatprep.subr.mxu0 0.0
    %7013 = vmatpush1.msra.mxu0 0.0
    %7014 = vmatprep.subr.mxu0 0.0
    %7015 = vmatpush1.msra.mxu0 0.0
    %7016 = vmatprep.subr.mxu0 0.0
    %7017 = vmatpush1.msra.mxu0 0.0
    %7018 = vmatprep.mubr.f32.mxu0 0.0
    %7019 = vmatmul.mubr.f32.gmra.mrb[0].mxu0 %v6927
    %v7020 = vpop.f32.mrb[0].mxu0
    %v7021 = vadd.f32 %v6952, %v7020
    %v7022 = vpop.f32.mrb[0].mxu0
    %7023 = vmatprep.mubr.f32.mxu0 0.0
    %7024 = vmatmul.mubr.f32.gmra.mrb[0].mxu0 %v6928
    %v7025 = vpop.f32.mrb[0].mxu0
    %v7026 = vadd.f32 %v6952, %v7025
    %v7027 = vpop.f32.mrb[0].mxu0
    %7028 = vdwg.mxu0
    %v7029 = vadd.f32 %v7021, %v6831
    %v7030 = vadd.f32 %v7026, %v6832
    %s7031 = scalar_lea.vmem %s18, 1
    %v7032 = vld [vmem:[%s7031] sm:$0x1]
    %s7033 = scalar_lea.vmem %s19, 1
    %v7034 = vld [vmem:[%s7033] sm:$0x1]
    %v7035 = vsel %vm224, %v7029, 0.0
    %7036 = vadd.xlane.f32.xlu0 %v7035
    %v7037 = vpop.xlane.xlu0 %7036
    %v7038 = vsel %vm224, %v7030, 0.0
    %7039 = vadd.xlane.f32.xlu0 %v7038
    %v7040 = vpop.xlane.xlu0 %7039
    %v7041 = vmul.f32 %v7037, %v1766
    %v7042 = vmul.f32 %v7040, %v1766
    %v7043 = vsub.f32 %v7029, %v7041
    %v7044 = vsub.f32 %v7030, %v7042
    %v7045 = vmul.f32 %v7043, %v7043
    %v7046 = vmul.f32 %v7044, %v7044
    %v7047 = vsel %vm224, %v7045, 0.0
    %7048 = vadd.xlane.f32.xlu0 %v7047
    %v7049 = vpop.xlane.xlu0 %7048
    %v7050 = vsel %vm224, %v7046, 0.0
    %7051 = vadd.xlane.f32.xlu0 %v7050
    %v7052 = vpop.xlane.xlu0 %7051
    %v7053 = vmul.f32 %v7049, %v1766
    %v7054 = vmul.f32 %v7052, %v1766
    %v7055 = vadd.f32 %v7053, 1e-05
    %v7056 = vadd.f32 %v7054, 1e-05
    %v7057 = vrsqrt.pop %v7055
    %v7058 = vrsqrt.pop %v7056
    %v7059 = vmul.f32 %v7043, %v7057
    %v7060 = vmul.f32 %v7044, %v7058
    %v7062 = vlaneseq
    %v7063 = vshrl.u32 %v7062, 7
    %v7064 = vsub.s32 0, %v7063
    %v7065 = vrot.slane %v7032, %v7064
    %v7067 = vmul.f32 %v7059, %v7065
    %v7068 = vmul.f32 %v7060, %v7065
    %v7070 = vlaneseq
    %v7071 = vshrl.u32 %v7070, 7
    %v7072 = vsub.s32 0, %v7071
    %v7073 = vrot.slane %v7034, %v7072
    %v7075 = vadd.f32 %v7067, %v7073
    %v7076 = vadd.f32 %v7068, %v7073
    %v7077 = vld [vmem:[%s24] sm:$0xff]
    %v7078 = vld [vmem:[%s24 + $0x8] sm:$0xff]
    %v7079 = vld [vmem:[%s24 + $0x10] sm:$0xff]
    %v7080 = vld [vmem:[%s24 + $0x18] sm:$0xff]
    %v7081 = vld [vmem:[%s25] sm:$0x1]
    %v7083 = vlaneseq
    %v7084 = vshrl.u32 %v7083, 7
    %v7085 = vsub.s32 0, %v7084
    %v7086 = vrot.slane %v7081, %v7085
    %v7089 = vsel %vm224, %v7075, 0
    %v7092 = vsel %vm224, %v7076, 0
    %7094 = vmatprep.subr.mxu0 0.0
    %7095 = vmatpush1.msra.mxu0 %v7077
    %7096 = vmatprep.subr.mxu0 0.0
    %7097 = vmatpush1.msra.mxu0 %v7078
    %7098 = vmatprep.subr.mxu0 0.0
    %7099 = vmatpush1.msra.mxu0 %v7079
    %7100 = vmatprep.subr.mxu0 0.0
    %7101 = vmatpush1.msra.mxu0 %v7080
    %7102 = vmatprep.subr.mxu0 0.0
    %7103 = vmatpush1.msra.mxu0 0.0
    %7104 = vmatprep.subr.mxu0 0.0
    %7105 = vmatpush1.msra.mxu0 0.0
    %7106 = vmatprep.subr.mxu0 0.0
    %7107 = vmatpush1.msra.mxu0 0.0
    %7108 = vmatprep.subr.mxu0 0.0
    %7109 = vmatpush1.msra.mxu0 0.0
    %7110 = vmatprep.subr.mxu0 0.0
    %7111 = vmatpush1.msra.mxu0 0.0
    %7112 = vmatprep.subr.mxu0 0.0
    %7113 = vmatpush1.msra.mxu0 0.0
    %7114 = vmatprep.subr.mxu0 0.0
    %7115 = vmatpush1.msra.mxu0 0.0
    %7116 = vmatprep.subr.mxu0 0.0
    %7117 = vmatpush1.msra.mxu0 0.0
    %7118 = vmatprep.subr.mxu0 0.0
    %7119 = vmatpush1.msra.mxu0 0.0
    %7120 = vmatprep.subr.mxu0 0.0
    %7121 = vmatpush1.msra.mxu0 0.0
    %7122 = vmatprep.subr.mxu0 0.0
    %7123 = vmatpush1.msra.mxu0 0.0
    %7124 = vmatprep.subr.mxu0 0.0
    %7125 = vmatpush1.msra.mxu0 0.0
    %7126 = vmatprep.subr.mxu0 0.0
    %7127 = vmatpush1.msra.mxu0 0.0
    %7128 = vmatprep.subr.mxu0 0.0
    %7129 = vmatpush1.msra.mxu0 0.0
    %7130 = vmatprep.subr.mxu0 0.0
    %7131 = vmatpush1.msra.mxu0 0.0
    %7132 = vmatprep.subr.mxu0 0.0
    %7133 = vmatpush1.msra.mxu0 0.0
    %7134 = vmatprep.subr.mxu0 0.0
    %7135 = vmatpush1.msra.mxu0 0.0
    %7136 = vmatprep.subr.mxu0 0.0
    %7137 = vmatpush1.msra.mxu0 0.0
    %7138 = vmatprep.subr.mxu0 0.0
    %7139 = vmatpush1.msra.mxu0 0.0
    %7140 = vmatprep.subr.mxu0 0.0
    %7141 = vmatpush1.msra.mxu0 0.0
    %7142 = vmatprep.subr.mxu0 0.0
    %7143 = vmatpush1.msra.mxu0 0.0
    %7144 = vmatprep.subr.mxu0 0.0
    %7145 = vmatpush1.msra.mxu0 0.0
    %7146 = vmatprep.subr.mxu0 0.0
    %7147 = vmatpush1.msra.mxu0 0.0
    %7148 = vmatprep.subr.mxu0 0.0
    %7149 = vmatpush1.msra.mxu0 0.0
    %7150 = vmatprep.subr.mxu0 0.0
    %7151 = vmatpush1.msra.mxu0 0.0
    %7152 = vmatprep.subr.mxu0 0.0
    %7153 = vmatpush1.msra.mxu0 0.0
    %7154 = vmatprep.subr.mxu0 0.0
    %7155 = vmatpush1.msra.mxu0 0.0
    %7156 = vmatprep.subr.mxu0 0.0
    %7157 = vmatpush1.msra.mxu0 0.0
    %7158 = vmatprep.mubr.f32.mxu0 0.0
    %7159 = vmatmul.mubr.f32.gmra.mrb[0].mxu0 %v7089
    %v7160 = vpop.f32.mrb[0].mxu0
    %v7161 = vadd.f32 %v7086, %v7160
    %v7162 = vpop.f32.mrb[0].mxu0
    %7163 = vmatprep.mubr.f32.mxu0 0.0
    %7164 = vmatmul.mubr.f32.gmra.mrb[0].mxu0 %v7092
    %v7165 = vpop.f32.mrb[0].mxu0
    %v7166 = vadd.f32 %v7086, %v7165
    %v7167 = vpop.f32.mrb[0].mxu0
    %7168 = vdwg.mxu0
    %7169 = vst [vmem:[#allocation2] sm:$0xff] %v7161
    %7170 = vst [vmem:[#allocation2 + $0x8] sm:$0xff] %v7166
    // Predicated region
    $region106: #{decoder_fwd.1} parent=1 // pred_check
      _
    $region107: #{decoder_fwd.1} parent=1 // pred_check_branch
      %7172 = sbr.rel (0) target = $region109
    $region108: #{decoder_fwd.1} parent=1 // pred_region
      %s7174 = ssub.s32 256, 256
      %7175 = vsyncadd [#allocation3], %s7174
      %s7176 = sshll.u32 [#allocation2], 4
      %s7177 = int_to_ptr.vmem [resolvable:$true] %s7176
      %7182 = dma.vmem_to_hbm [thread:$0]  %s7177, 256, %s26, [#allocation3], 128, 128, 8
    $region109: #{decoder_fwd.1} parent=1 // pred_fallthru
      _
    // Predicated region
    $region110: #{decoder_fwd.1} parent=1 // pred_check
      _
    $region111: #{decoder_fwd.1} parent=1 // pred_check_branch
      %7184 = sbr.rel (0) target = $region113
    $region112: #{decoder_fwd.1} parent=1 // pred_region
      %7185 = dma.done [#allocation3], 256
    $region113: #{decoder_fwd.1} parent=1 // pred_fallthru
      _
    %7186 = vsyncpa [#allocation3], 1

</llo_original>
